<compile_context>
chip_gen: v6e
topology: v6e:2x2x1
jax: 0.10.0
libtpu: 0.0.40
codegen_flags: <defaults>
</compile_context>

<pallas_src>
import functools

import jax
import jax.numpy as jnp
from jax.experimental import pallas as pl
from jax.experimental.pallas import tpu as pltpu


_NEG_INF = -1e30                       # finite "minus infinity" for masked (padded) keys
_VMEM_LIMIT_BYTES = 32 * 1024 * 1024   # explicit scoped-VMEM budget: safe on v7x (64 MiB
                                       # physical) and raises v5e's 16 MiB scoped default.


def _round_up(x, m):
    return (x + m - 1) // m * m


# ------------------------- fused QKV projection kernel ------------------------- #

def _matmul_bias_kernel(x_ref, w_ref, b_ref, o_ref):
    # 1x1x1 Conv3d == row-tiled matmul over the channel axis + broadcast bias.
    acc = jnp.dot(x_ref[...], w_ref[...], preferred_element_type=jnp.float32)
    o_ref[...] = (acc + b_ref[...]).astype(o_ref.dtype)


def tiled_linear_pallas(x, w, b, *, block_rows):
    """x: [Mp, Cin] (Mp % block_rows == 0), w: [Cin, F], b: [F] -> [Mp, F]."""
    Mp, C = x.shape
    F = w.shape[1]
    return pl.pallas_call(
        _matmul_bias_kernel,
        out_shape=jax.ShapeDtypeStruct((Mp, F), x.dtype),
        grid=(Mp // block_rows,),
        in_specs=[
            pl.BlockSpec((block_rows, C), lambda i: (i, 0)),   # streamed activation rows
            pl.BlockSpec((C, F), lambda i: (0, 0)),            # resident fused weights
            pl.BlockSpec((1, F), lambda i: (0, 0)),            # resident fused bias
        ],
        out_specs=pl.BlockSpec((block_rows, F), lambda i: (i, 0)),
        compiler_params=pltpu.CompilerParams(
            dimension_semantics=("parallel",),
            vmem_limit_bytes=_VMEM_LIMIT_BYTES),
    )(x, w, b.reshape(1, F))


# --------------------- flash attention + fused output conv --------------------- #

def _make_flash_attention_kernel(*, num_heads, key_filters, value_filters,
                                 m_actual, m_padded, kv_rows):
    kph = key_filters // num_heads
    vph = value_filters // num_heads
    k_off = key_filters
    v_off = 2 * key_filters
    needs_mask = m_padded != m_actual

    def kernel(qkv_q_ref, qkv_kv_ref, wo_ref, bo_ref, o_ref, m_sc, l_sc, acc_sc):
        ki = pl.program_id(1)

        @pl.when(ki == 0)
        def _init():
            m_sc[...] = jnp.full_like(m_sc, _NEG_INF)
            l_sc[...] = jnp.zeros_like(l_sc)
            acc_sc[...] = jnp.zeros_like(acc_sc)

        qkv_q = qkv_q_ref[...]       # [tq,  2*Kf + Vf]  (lane-dense fused q|k|v tile)
        qkv_kv = qkv_kv_ref[...]     # [tkv, 2*Kf + Vf]

        if needs_mask:
            kv_ids = ki * kv_rows + jax.lax.broadcasted_iota(jnp.int32, (1, kv_rows), 1)
            kv_valid = kv_ids < m_actual   # padded rows contribute zero probability

        # The PyTorch module flattens the head axis into the attention axis, so
        # query head h attends to keys/values of EVERY head h'.  Online-softmax
        # state is kept per query head; chunk order (kv tiles x heads) is
        # associative so the result equals a full softmax over all N keys.
        for h in range(num_heads):
            q_h = qkv_q[:, h * kph:(h + 1) * kph]                              # [tq, kph]
            for hp in range(num_heads):
                k_hp = qkv_kv[:, k_off + hp * kph:k_off + (hp + 1) * kph]      # [tkv, kph]
                v_hp = qkv_kv[:, v_off + hp * vph:v_off + (hp + 1) * vph]      # [tkv, vph]
                s = jax.lax.dot_general(q_h, k_hp, (((1,), (1,)), ((), ())),
                                        preferred_element_type=jnp.float32)    # [tq, tkv]
                if needs_mask:
                    s = jnp.where(kv_valid, s, _NEG_INF)
                m_prev = m_sc[:, h:h + 1]
                m_new = jnp.maximum(m_prev, jnp.max(s, axis=-1, keepdims=True))
                alpha = jnp.exp(m_prev - m_new)
                p = jnp.exp(s - m_new)
                l_sc[:, h:h + 1] = alpha * l_sc[:, h:h + 1] + jnp.sum(p, axis=-1, keepdims=True)
                acc_sc[:, h * vph:(h + 1) * vph] = (
                    alpha * acc_sc[:, h * vph:(h + 1) * vph]
                    + jnp.dot(p, v_hp, preferred_element_type=jnp.float32))
                m_sc[:, h:h + 1] = m_new

        @pl.when(ki == pl.num_programs(1) - 1)
        def _finalize():
            # Normalize once (no N^2 divide), merge heads into a lane-dense
            # [rows, total_value_filters] slab, and fuse the output 1x1x1 conv.
            for h in range(num_heads):
                inv_l = pl.reciprocal(l_sc[:, h:h + 1], approx=False)
                acc_sc[:, h * vph:(h + 1) * vph] = acc_sc[:, h * vph:(h + 1) * vph] * inv_l
            ctx = acc_sc[...]                                                  # [tq, Vf]
            out = jnp.dot(ctx, wo_ref[...], preferred_element_type=jnp.float32) + bo_ref[...]
            o_ref[...] = out.astype(o_ref.dtype)
            # TODO(synk): attention-weight dropout is identity (eval mode); training-mode RNG dropout omitted.

    return kernel


def flash_attention_outproj_pallas(qkv, wo, bo, *, num_heads, key_filters,
                                   value_filters, m_actual, block_rows):
    """qkv: [Mp, 2*Kf+Vf] fused projections; returns outconv(attention) : [Mp, out_c]."""
    Mp, f_tot = qkv.shape
    out_c = wo.shape[1]
    kernel = _make_flash_attention_kernel(
        num_heads=num_heads, key_filters=key_filters, value_filters=value_filters,
        m_actual=m_actual, m_padded=Mp, kv_rows=block_rows)
    return pl.pallas_call(
        kernel,
        out_shape=jax.ShapeDtypeStruct((Mp, out_c), qkv.dtype),
        grid=(Mp // block_rows, Mp // block_rows),          # (query tiles, kv tiles)
        in_specs=[
            pl.BlockSpec((block_rows, f_tot), lambda qi, ki: (qi, 0)),   # query rows
            pl.BlockSpec((block_rows, f_tot), lambda qi, ki: (ki, 0)),   # streamed kv rows
            pl.BlockSpec((value_filters, out_c), lambda qi, ki: (0, 0)),  # resident outconv W
            pl.BlockSpec((1, out_c), lambda qi, ki: (0, 0)),              # resident outconv b
        ],
        out_specs=pl.BlockSpec((block_rows, out_c), lambda qi, ki: (qi, 0)),
        scratch_shapes=[
            pltpu.VMEM((block_rows, num_heads), jnp.float32),      # running max per query head
            pltpu.VMEM((block_rows, num_heads), jnp.float32),      # running sum per query head
            pltpu.VMEM((block_rows, value_filters), jnp.float32),  # running context (heads merged)
        ],
        compiler_params=pltpu.CompilerParams(
            dimension_semantics=("parallel", "arbitrary"),
            vmem_limit_bytes=_VMEM_LIMIT_BYTES),
    )(qkv, qkv, wo, bo.reshape(1, out_c))


# ------------------------------ model wrapper (glue) ------------------------------ #

def init_params(key, in_channels, total_key_filters, total_value_filters, out_channels):
    ks = jax.random.split(key, 8)

    def w_init(k, cin, cout):
        return jax.random.normal(k, (cin, cout), jnp.float32) / jnp.sqrt(float(cin))

    def b_init(k, cout):
        return jax.random.normal(k, (cout,), jnp.float32) * 0.01

    return {
        "wq": w_init(ks[0], in_channels, total_key_filters),
        "bq": b_init(ks[1], total_key_filters),
        "wk": w_init(ks[2], in_channels, total_key_filters),
        "bk": b_init(ks[3], total_key_filters),
        "wv": w_init(ks[4], in_channels, total_value_filters),
        "bv": b_init(ks[5], total_value_filters),
        "wo": w_init(ks[6], total_value_filters, out_channels),
        "bo": b_init(ks[7], out_channels),
    }


def multi_head_attention_3d(x, params, num_heads, total_key_filters, total_value_filters,
                            *, block_rows=256):
    """x: [B, C, D, H, W] (NCDHW) -> [B, out_channels, D, H, W]."""
    B, C, D, H, W = x.shape
    M = B * D * H * W
    Kf, Vf = total_key_filters, total_value_filters
    out_c = params["wo"].shape[1]

    # Channels-last, flattened activations (NCDHW -> [M, C]).
    x_flat = jnp.transpose(x, (0, 2, 3, 4, 1)).reshape(M, C)

    # Fold the attention scale into the query projection (free) and fuse the
    # q/k/v 1x1x1 convs into one weight so the activation is read once.
    kph = Kf // num_heads
    scale = float(kph) ** (-0.5)
    w_qkv = jnp.concatenate([params["wq"] * scale, params["wk"], params["wv"]], axis=1)
    b_qkv = jnp.concatenate([params["bq"] * scale, params["bk"], params["bv"]], axis=0)

    # Row tiling: 256 rows = multiple of both 128 (v5e MXU) and 256 (v6e/v7x MXU).
    # Pad M up to a tile multiple; padded keys are masked inside the kernel and
    # padded query rows are sliced off afterwards.
    blk = block_rows if M >= block_rows else _round_up(M, 8)
    Mp = _round_up(M, blk)
    if Mp != M:
        x_flat = jnp.pad(x_flat, ((0, Mp - M), (0, 0)))

    qkv = tiled_linear_pallas(x_flat, w_qkv, b_qkv, block_rows=blk)       # [Mp, 2*Kf+Vf]

    out_flat = flash_attention_outproj_pallas(
        qkv, params["wo"], params["bo"], num_heads=num_heads,
        key_filters=Kf, value_filters=Vf, m_actual=M, block_rows=blk)     # [Mp, out_c]

    out = out_flat[:M].reshape(B, D, H, W, out_c)
    return jnp.transpose(out, (0, 4, 1, 2, 3))


# --------------------------------- pure-JAX ref --------------------------------- #

def reference(x, params, num_heads, total_key_filters, total_value_filters):
    hp = jax.lax.Precision.HIGHEST
    B, C, D, H, W = x.shape
    xf = jnp.transpose(x, (0, 2, 3, 4, 1)).reshape(-1, C)
    q = jnp.dot(xf, params["wq"], precision=hp) + params["bq"]
    k = jnp.dot(xf, params["wk"], precision=hp) + params["bk"]
    v = jnp.dot(xf, params["wv"], precision=hp) + params["bv"]
    kph = total_key_filters // num_heads
    vph = total_value_filters // num_heads
    q = q.reshape(-1, kph) * (float(kph) ** (-0.5))
    k = k.reshape(-1, kph)
    v = v.reshape(-1, vph)
    w = jax.nn.softmax(jnp.dot(q, k.T, precision=hp), axis=-1)
    o = jnp.dot(w, v, precision=hp).reshape(-1, total_value_filters)
    o = jnp.dot(o, params["wo"], precision=hp) + params["bo"]
    out_c = params["wo"].shape[1]
    return jnp.transpose(o.reshape(B, D, H, W, out_c), (0, 4, 1, 2, 3))


# -------------------------------------- main ------------------------------------- #

if __name__ == "__main__":
    key = jax.random.PRNGKey(0)
    kx, kp = jax.random.split(key)

    B, C, D, H, W = 2, 4, 8, 8, 8            # M = 1024 rows, N = 2048 attention rows
    total_key_filters = 8
    total_value_filters = 8
    out_channels = 4
    num_heads = 2

    x = jax.random.normal(kx, (B, C, D, H, W), jnp.float32)
    params = init_params(kp, C, total_key_filters, total_value_filters, out_channels)

    fwd = jax.jit(functools.partial(
        multi_head_attention_3d, num_heads=num_heads,
        total_key_filters=total_key_filters, total_value_filters=total_value_filters))

    out = jax.block_until_ready(fwd(x, params))

    ref = jax.block_until_ready(
        reference(x, params, num_heads, total_key_filters, total_value_filters))

    assert out.shape == (B, out_channels, D, H, W), out.shape
    max_err = float(jnp.max(jnp.abs(out - ref)))
    assert jnp.allclose(out, ref, atol=1e-3, rtol=1e-3), max_err

    print("KERNEL_OK")
</pallas_src>

<mosaic_0001>
module attributes {stable_mosaic.version = 11 : i64} {
  func.func @kernel(%arg0: i32, %arg1: i32, %arg2: memref<256x24xf32, #tpu.memory_space<vmem>>, %arg3: memref<256x24xf32, #tpu.memory_space<vmem>>, %arg4: memref<8x4xf32, #tpu.memory_space<vmem>>, %arg5: memref<1x4xf32, #tpu.memory_space<vmem>>, %arg6: memref<256x4xf32, #tpu.memory_space<vmem>>, %arg7: memref<256x2xf32, #tpu.memory_space<vmem>>, %arg8: memref<256x2xf32, #tpu.memory_space<vmem>>, %arg9: memref<256x8xf32, #tpu.memory_space<vmem>>) attributes {dimension_semantics = [#tpu.dimension_semantics<parallel>, #tpu.dimension_semantics<arbitrary>], iteration_bounds = array<i64: 4, 4>, scalar_prefetch = 0 : i64, scratch_operands = 3 : i64, tpu.core_type = #tpu.core_type<tc>, window_params = [{transform_indices = @transform_0, window_bounds = array<i64: 256, 24>}, {transform_indices = @transform_1, window_bounds = array<i64: 256, 24>}, {pipeline_mode = #tpu.pipeline_mode<synchronous>, transform_indices = @transform_2, window_bounds = array<i64: 8, 4>}, {pipeline_mode = #tpu.pipeline_mode<synchronous>, transform_indices = @transform_3, window_bounds = array<i64: 1, 4>}, {transform_indices = @transform_4, window_bounds = array<i64: 256, 4>}]} {
    %c0_i32 = arith.constant 0 : i32
    %0 = arith.cmpi eq, %arg1, %c0_i32 : i32
    %1 = arith.extui %0 : i1 to i32
    %c0_i32_0 = arith.constant 0 : i32
    %2 = arith.cmpi ne, %1, %c0_i32_0 : i32
    scf.if %2 {
      %cst_66 = arith.constant -1.000000e+30 : f32
      %110 = vector.broadcast %cst_66 : f32 to vector<256x2xf32>
      %c0_67 = arith.constant 0 : index
      %c0_68 = arith.constant 0 : index
      %111 = vector.load %arg7[%c0_67, %c0_68] : memref<256x2xf32, #tpu.memory_space<vmem>>, vector<256x2xf32>
      tpu.vector_store %arg7[%c0_67, %c0_68], %110 {strides = array<i32>} : memref<256x2xf32, #tpu.memory_space<vmem>>, vector<256x2xf32>,
      %cst_69 = arith.constant 0.000000e+00 : f32
      %112 = vector.broadcast %cst_69 : f32 to vector<256x2xf32>
      %c0_70 = arith.constant 0 : index
      %c0_71 = arith.constant 0 : index
      %113 = vector.load %arg8[%c0_70, %c0_71] : memref<256x2xf32, #tpu.memory_space<vmem>>, vector<256x2xf32>
      tpu.vector_store %arg8[%c0_70, %c0_71], %112 {strides = array<i32>} : memref<256x2xf32, #tpu.memory_space<vmem>>, vector<256x2xf32>,
      %cst_72 = arith.constant 0.000000e+00 : f32
      %114 = vector.broadcast %cst_72 : f32 to vector<256x8xf32>
      %c0_73 = arith.constant 0 : index
      %c0_74 = arith.constant 0 : index
      %115 = vector.load %arg9[%c0_73, %c0_74] : memref<256x8xf32, #tpu.memory_space<vmem>>, vector<256x8xf32>
      tpu.vector_store %arg9[%c0_73, %c0_74], %114 {strides = array<i32>} : memref<256x8xf32, #tpu.memory_space<vmem>>, vector<256x8xf32>,
    } else {
    }
    %c0 = arith.constant 0 : index
    %c0_1 = arith.constant 0 : index
    %3 = vector.load %arg2[%c0, %c0_1] : memref<256x24xf32, #tpu.memory_space<vmem>>, vector<256x24xf32>
    %c0_2 = arith.constant 0 : index
    %c0_3 = arith.constant 0 : index
    %4 = vector.load %arg3[%c0_2, %c0_3] : memref<256x24xf32, #tpu.memory_space<vmem>>, vector<256x24xf32>
    %5 = vector.extract_strided_slice %3 {offsets = [0, 0], sizes = [256, 4], strides = [1, 1]} : vector<256x24xf32> to vector<256x4xf32>
    %6 = vector.extract_strided_slice %4 {offsets = [0, 8], sizes = [256, 4], strides = [1, 1]} : vector<256x24xf32> to vector<256x4xf32>
    %7 = vector.extract_strided_slice %4 {offsets = [0, 16], sizes = [256, 4], strides = [1, 1]} : vector<256x24xf32> to vector<256x4xf32>
    %cst = arith.constant dense<0.000000e+00> : vector<256x256xf32>
    %8 = tpu.matmul %5, %6, %cst {dimension_numbers = #tpu.dot_dimension_numbers<[1], [1], [0], [0], [0, 0, 1, 0], [], []>} : vector<256x4xf32>, vector<256x4xf32>, vector<256x256xf32> -> vector<256x256xf32>
    %c0_4 = arith.constant 0 : index
    %c0_5 = arith.constant 0 : index
    %9 = vector.load %arg7[%c0_4, %c0_5] : memref<256x2xf32, #tpu.memory_space<vmem>>, vector<256x1xf32>
    %cst_6 = arith.constant dense<0xFF800000> : vector<256xf32>
    %10 = vector.multi_reduction <maximumf>, %8, %cst_6 [1] : vector<256x256xf32> to vector<256xf32>
    %11 = vector.shape_cast %10 : vector<256xf32> to vector<256x1xf32>
    %12 = arith.maximumf %9, %11 : vector<256x1xf32>
    %13 = arith.subf %9, %12 : vector<256x1xf32>
    %14 = math.exp %13 : vector<256x1xf32>
    %15 = vector.broadcast %12 : vector<256x1xf32> to vector<256x256xf32>
    %16 = arith.subf %8, %15 : vector<256x256xf32>
    %17 = math.exp %16 : vector<256x256xf32>
    %c0_7 = arith.constant 0 : index
    %c0_8 = arith.constant 0 : index
    %18 = vector.load %arg8[%c0_7, %c0_8] : memref<256x2xf32, #tpu.memory_space<vmem>>, vector<256x1xf32>
    %19 = arith.mulf %14, %18 : vector<256x1xf32>
    %cst_9 = arith.constant dense<0.000000e+00> : vector<256xf32>
    %20 = vector.multi_reduction <add>, %17, %cst_9 [1] : vector<256x256xf32> to vector<256xf32>
    %21 = vector.shape_cast %20 : vector<256xf32> to vector<256x1xf32>
    %22 = arith.addf %19, %21 : vector<256x1xf32>
    %c0_10 = arith.constant 0 : index
    %c0_11 = arith.constant 0 : index
    %23 = vector.load %arg8[%c0_10, %c0_11] : memref<256x2xf32, #tpu.memory_space<vmem>>, vector<256x1xf32>
    tpu.vector_store %arg8[%c0_10, %c0_11], %22 {strides = array<i32>} : memref<256x2xf32, #tpu.memory_space<vmem>>, vector<256x1xf32>,
    %c0_12 = arith.constant 0 : index
    %c0_13 = arith.constant 0 : index
    %24 = vector.load %arg9[%c0_12, %c0_13] : memref<256x8xf32, #tpu.memory_space<vmem>>, vector<256x4xf32>
    %25 = vector.broadcast %14 : vector<256x1xf32> to vector<256x4xf32>
    %26 = arith.mulf %25, %24 : vector<256x4xf32>
    %cst_14 = arith.constant dense<0.000000e+00> : vector<256x4xf32>
    %27 = tpu.matmul %17, %7, %cst_14 {dimension_numbers = #tpu.dot_dimension_numbers<[1], [0], [0], [1], [0, 0, 1, 1], [], []>} : vector<256x256xf32>, vector<256x4xf32>, vector<256x4xf32> -> vector<256x4xf32>
    %28 = arith.addf %26, %27 : vector<256x4xf32>
    %c0_15 = arith.constant 0 : index
    %c0_16 = arith.constant 0 : index
    %29 = vector.load %arg9[%c0_15, %c0_16] : memref<256x8xf32, #tpu.memory_space<vmem>>, vector<256x4xf32>
    tpu.vector_store %arg9[%c0_15, %c0_16], %28 {strides = array<i32>} : memref<256x8xf32, #tpu.memory_space<vmem>>, vector<256x4xf32>,
    %c0_17 = arith.constant 0 : index
    %c0_18 = arith.constant 0 : index
    %30 = vector.load %arg7[%c0_17, %c0_18] : memref<256x2xf32, #tpu.memory_space<vmem>>, vector<256x1xf32>
    tpu.vector_store %arg7[%c0_17, %c0_18], %12 {strides = array<i32>} : memref<256x2xf32, #tpu.memory_space<vmem>>, vector<256x1xf32>,
    %31 = vector.extract_strided_slice %4 {offsets = [0, 12], sizes = [256, 4], strides = [1, 1]} : vector<256x24xf32> to vector<256x4xf32>
    %32 = vector.extract_strided_slice %4 {offsets = [0, 20], sizes = [256, 4], strides = [1, 1]} : vector<256x24xf32> to vector<256x4xf32>
    %cst_19 = arith.constant dense<0.000000e+00> : vector<256x256xf32>
    %33 = tpu.matmul %5, %31, %cst_19 {dimension_numbers = #tpu.dot_dimension_numbers<[1], [1], [0], [0], [0, 0, 1, 0], [], []>} : vector<256x4xf32>, vector<256x4xf32>, vector<256x256xf32> -> vector<256x256xf32>
    %c0_20 = arith.constant 0 : index
    %c0_21 = arith.constant 0 : index
    %34 = vector.load %arg7[%c0_20, %c0_21] : memref<256x2xf32, #tpu.memory_space<vmem>>, vector<256x1xf32>
    %cst_22 = arith.constant dense<0xFF800000> : vector<256xf32>
    %35 = vector.multi_reduction <maximumf>, %33, %cst_22 [1] : vector<256x256xf32> to vector<256xf32>
    %36 = vector.shape_cast %35 : vector<256xf32> to vector<256x1xf32>
    %37 = arith.maximumf %34, %36 : vector<256x1xf32>
    %38 = arith.subf %34, %37 : vector<256x1xf32>
    %39 = math.exp %38 : vector<256x1xf32>
    %40 = vector.broadcast %37 : vector<256x1xf32> to vector<256x256xf32>
    %41 = arith.subf %33, %40 : vector<256x256xf32>
    %42 = math.exp %41 : vector<256x256xf32>
    %c0_23 = arith.constant 0 : index
    %c0_24 = arith.constant 0 : index
    %43 = vector.load %arg8[%c0_23, %c0_24] : memref<256x2xf32, #tpu.memory_space<vmem>>, vector<256x1xf32>
    %44 = arith.mulf %39, %43 : vector<256x1xf32>
    %cst_25 = arith.constant dense<0.000000e+00> : vector<256xf32>
    %45 = vector.multi_reduction <add>, %42, %cst_25 [1] : vector<256x256xf32> to vector<256xf32>
    %46 = vector.shape_cast %45 : vector<256xf32> to vector<256x1xf32>
    %47 = arith.addf %44, %46 : vector<256x1xf32>
    %c0_26 = arith.constant 0 : index
    %c0_27 = arith.constant 0 : index
    %48 = vector.load %arg8[%c0_26, %c0_27] : memref<256x2xf32, #tpu.memory_space<vmem>>, vector<256x1xf32>
    tpu.vector_store %arg8[%c0_26, %c0_27], %47 {strides = array<i32>} : memref<256x2xf32, #tpu.memory_space<vmem>>, vector<256x1xf32>,
    %c0_28 = arith.constant 0 : index
    %c0_29 = arith.constant 0 : index
    %49 = vector.load %arg9[%c0_28, %c0_29] : memref<256x8xf32, #tpu.memory_space<vmem>>, vector<256x4xf32>
    %50 = vector.broadcast %39 : vector<256x1xf32> to vector<256x4xf32>
    %51 = arith.mulf %50, %49 : vector<256x4xf32>
    %cst_30 = arith.constant dense<0.000000e+00> : vector<256x4xf32>
    %52 = tpu.matmul %42, %32, %cst_30 {dimension_numbers = #tpu.dot_dimension_numbers<[1], [0], [0], [1], [0, 0, 1, 1], [], []>} : vector<256x256xf32>, vector<256x4xf32>, vector<256x4xf32> -> vector<256x4xf32>
    %53 = arith.addf %51, %52 : vector<256x4xf32>
    %c0_31 = arith.constant 0 : index
    %c0_32 = arith.constant 0 : index
    %54 = vector.load %arg9[%c0_31, %c0_32] : memref<256x8xf32, #tpu.memory_space<vmem>>, vector<256x4xf32>
    tpu.vector_store %arg9[%c0_31, %c0_32], %53 {strides = array<i32>} : memref<256x8xf32, #tpu.memory_space<vmem>>, vector<256x4xf32>,
    %c0_33 = arith.constant 0 : index
    %c0_34 = arith.constant 0 : index
    %55 = vector.load %arg7[%c0_33, %c0_34] : memref<256x2xf32, #tpu.memory_space<vmem>>, vector<256x1xf32>
    tpu.vector_store %arg7[%c0_33, %c0_34], %37 {strides = array<i32>} : memref<256x2xf32, #tpu.memory_space<vmem>>, vector<256x1xf32>,
    %56 = vector.extract_strided_slice %3 {offsets = [0, 4], sizes = [256, 4], strides = [1, 1]} : vector<256x24xf32> to vector<256x4xf32>
    %57 = vector.extract_strided_slice %4 {offsets = [0, 8], sizes = [256, 4], strides = [1, 1]} : vector<256x24xf32> to vector<256x4xf32>
    %58 = vector.extract_strided_slice %4 {offsets = [0, 16], sizes = [256, 4], strides = [1, 1]} : vector<256x24xf32> to vector<256x4xf32>
    %cst_35 = arith.constant dense<0.000000e+00> : vector<256x256xf32>
    %59 = tpu.matmul %56, %57, %cst_35 {dimension_numbers = #tpu.dot_dimension_numbers<[1], [1], [0], [0], [0, 0, 1, 0], [], []>} : vector<256x4xf32>, vector<256x4xf32>, vector<256x256xf32> -> vector<256x256xf32>
    %c0_36 = arith.constant 0 : index
    %c1 = arith.constant 1 : index
    %60 = vector.load %arg7[%c0_36, %c1] : memref<256x2xf32, #tpu.memory_space<vmem>>, vector<256x1xf32>
    %cst_37 = arith.constant dense<0xFF800000> : vector<256xf32>
    %61 = vector.multi_reduction <maximumf>, %59, %cst_37 [1] : vector<256x256xf32> to vector<256xf32>
    %62 = vector.shape_cast %61 : vector<256xf32> to vector<256x1xf32>
    %63 = arith.maximumf %60, %62 : vector<256x1xf32>
    %64 = arith.subf %60, %63 : vector<256x1xf32>
    %65 = math.exp %64 : vector<256x1xf32>
    %66 = vector.broadcast %63 : vector<256x1xf32> to vector<256x256xf32>
    %67 = arith.subf %59, %66 : vector<256x256xf32>
    %68 = math.exp %67 : vector<256x256xf32>
    %c0_38 = arith.constant 0 : index
    %c1_39 = arith.constant 1 : index
    %69 = vector.load %arg8[%c0_38, %c1_39] : memref<256x2xf32, #tpu.memory_space<vmem>>, vector<256x1xf32>
    %70 = arith.mulf %65, %69 : vector<256x1xf32>
    %cst_40 = arith.constant dense<0.000000e+00> : vector<256xf32>
    %71 = vector.multi_reduction <add>, %68, %cst_40 [1] : vector<256x256xf32> to vector<256xf32>
    %72 = vector.shape_cast %71 : vector<256xf32> to vector<256x1xf32>
    %73 = arith.addf %70, %72 : vector<256x1xf32>
    %c0_41 = arith.constant 0 : index
    %c1_42 = arith.constant 1 : index
    %74 = vector.load %arg8[%c0_41, %c1_42] : memref<256x2xf32, #tpu.memory_space<vmem>>, vector<256x1xf32>
    tpu.vector_store %arg8[%c0_41, %c1_42], %73 {strides = array<i32>} : memref<256x2xf32, #tpu.memory_space<vmem>>, vector<256x1xf32>,
    %c0_43 = arith.constant 0 : index
    %c4 = arith.constant 4 : index
    %75 = vector.load %arg9[%c0_43, %c4] : memref<256x8xf32, #tpu.memory_space<vmem>>, vector<256x4xf32>
    %76 = vector.broadcast %65 : vector<256x1xf32> to vector<256x4xf32>
    %77 = arith.mulf %76, %75 : vector<256x4xf32>
    %cst_44 = arith.constant dense<0.000000e+00> : vector<256x4xf32>
    %78 = tpu.matmul %68, %58, %cst_44 {dimension_numbers = #tpu.dot_dimension_numbers<[1], [0], [0], [1], [0, 0, 1, 1], [], []>} : vector<256x256xf32>, vector<256x4xf32>, vector<256x4xf32> -> vector<256x4xf32>
    %79 = arith.addf %77, %78 : vector<256x4xf32>
    %c0_45 = arith.constant 0 : index
    %c4_46 = arith.constant 4 : index
    %80 = vector.load %arg9[%c0_45, %c4_46] : memref<256x8xf32, #tpu.memory_space<vmem>>, vector<256x4xf32>
    tpu.vector_store %arg9[%c0_45, %c4_46], %79 {strides = array<i32>} : memref<256x8xf32, #tpu.memory_space<vmem>>, vector<256x4xf32>,
    %c0_47 = arith.constant 0 : index
    %c1_48 = arith.constant 1 : index
    %81 = vector.load %arg7[%c0_47, %c1_48] : memref<256x2xf32, #tpu.memory_space<vmem>>, vector<256x1xf32>
    tpu.vector_store %arg7[%c0_47, %c1_48], %63 {strides = array<i32>} : memref<256x2xf32, #tpu.memory_space<vmem>>, vector<256x1xf32>,
    %82 = vector.extract_strided_slice %4 {offsets = [0, 12], sizes = [256, 4], strides = [1, 1]} : vector<256x24xf32> to vector<256x4xf32>
    %83 = vector.extract_strided_slice %4 {offsets = [0, 20], sizes = [256, 4], strides = [1, 1]} : vector<256x24xf32> to vector<256x4xf32>
    %cst_49 = arith.constant dense<0.000000e+00> : vector<256x256xf32>
    %84 = tpu.matmul %56, %82, %cst_49 {dimension_numbers = #tpu.dot_dimension_numbers<[1], [1], [0], [0], [0, 0, 1, 0], [], []>} : vector<256x4xf32>, vector<256x4xf32>, vector<256x256xf32> -> vector<256x256xf32>
    %c0_50 = arith.constant 0 : index
    %c1_51 = arith.constant 1 : index
    %85 = vector.load %arg7[%c0_50, %c1_51] : memref<256x2xf32, #tpu.memory_space<vmem>>, vector<256x1xf32>
    %cst_52 = arith.constant dense<0xFF800000> : vector<256xf32>
    %86 = vector.multi_reduction <maximumf>, %84, %cst_52 [1] : vector<256x256xf32> to vector<256xf32>
    %87 = vector.shape_cast %86 : vector<256xf32> to vector<256x1xf32>
    %88 = arith.maximumf %85, %87 : vector<256x1xf32>
    %89 = arith.subf %85, %88 : vector<256x1xf32>
    %90 = math.exp %89 : vector<256x1xf32>
    %91 = vector.broadcast %88 : vector<256x1xf32> to vector<256x256xf32>
    %92 = arith.subf %84, %91 : vector<256x256xf32>
    %93 = math.exp %92 : vector<256x256xf32>
    %c0_53 = arith.constant 0 : index
    %c1_54 = arith.constant 1 : index
    %94 = vector.load %arg8[%c0_53, %c1_54] : memref<256x2xf32, #tpu.memory_space<vmem>>, vector<256x1xf32>
    %95 = arith.mulf %90, %94 : vector<256x1xf32>
    %cst_55 = arith.constant dense<0.000000e+00> : vector<256xf32>
    %96 = vector.multi_reduction <add>, %93, %cst_55 [1] : vector<256x256xf32> to vector<256xf32>
    %97 = vector.shape_cast %96 : vector<256xf32> to vector<256x1xf32>
    %98 = arith.addf %95, %97 : vector<256x1xf32>
    %c0_56 = arith.constant 0 : index
    %c1_57 = arith.constant 1 : index
    %99 = vector.load %arg8[%c0_56, %c1_57] : memref<256x2xf32, #tpu.memory_space<vmem>>, vector<256x1xf32>
    tpu.vector_store %arg8[%c0_56, %c1_57], %98 {strides = array<i32>} : memref<256x2xf32, #tpu.memory_space<vmem>>, vector<256x1xf32>,
    %c0_58 = arith.constant 0 : index
    %c4_59 = arith.constant 4 : index
    %100 = vector.load %arg9[%c0_58, %c4_59] : memref<256x8xf32, #tpu.memory_space<vmem>>, vector<256x4xf32>
    %101 = vector.broadcast %90 : vector<256x1xf32> to vector<256x4xf32>
    %102 = arith.mulf %101, %100 : vector<256x4xf32>
    %cst_60 = arith.constant dense<0.000000e+00> : vector<256x4xf32>
    %103 = tpu.matmul %93, %83, %cst_60 {dimension_numbers = #tpu.dot_dimension_numbers<[1], [0], [0], [1], [0, 0, 1, 1], [], []>} : vector<256x256xf32>, vector<256x4xf32>, vector<256x4xf32> -> vector<256x4xf32>
    %104 = arith.addf %102, %103 : vector<256x4xf32>
    %c0_61 = arith.constant 0 : index
    %c4_62 = arith.constant 4 : index
    %105 = vector.load %arg9[%c0_61, %c4_62] : memref<256x8xf32, #tpu.memory_space<vmem>>, vector<256x4xf32>
    tpu.vector_store %arg9[%c0_61, %c4_62], %104 {strides = array<i32>} : memref<256x8xf32, #tpu.memory_space<vmem>>, vector<256x4xf32>,
    %c0_63 = arith.constant 0 : index
    %c1_64 = arith.constant 1 : index
    %106 = vector.load %arg7[%c0_63, %c1_64] : memref<256x2xf32, #tpu.memory_space<vmem>>, vector<256x1xf32>
    tpu.vector_store %arg7[%c0_63, %c1_64], %88 {strides = array<i32>} : memref<256x2xf32, #tpu.memory_space<vmem>>, vector<256x1xf32>,
    %c3_i32 = arith.constant 3 : i32
    %107 = arith.cmpi eq, %arg1, %c3_i32 : i32
    %108 = arith.extui %107 : i1 to i32
    %c0_i32_65 = arith.constant 0 : i32
    %109 = arith.cmpi ne, %108, %c0_i32_65 : i32
    scf.if %109 {
      %c0_66 = arith.constant 0 : index
      %c0_67 = arith.constant 0 : index
      %110 = vector.load %arg8[%c0_66, %c0_67] : memref<256x2xf32, #tpu.memory_space<vmem>>, vector<256x1xf32>
      %111 = tpu.reciprocal %110 : vector<256x1xf32> -> vector<256x1xf32>
      %c0_68 = arith.constant 0 : index
      %c0_69 = arith.constant 0 : index
      %112 = vector.load %arg9[%c0_68, %c0_69] : memref<256x8xf32, #tpu.memory_space<vmem>>, vector<256x4xf32>
      %113 = vector.broadcast %111 : vector<256x1xf32> to vector<256x4xf32>
      %114 = arith.mulf %112, %113 : vector<256x4xf32>
      %c0_70 = arith.constant 0 : index
      %c0_71 = arith.constant 0 : index
      %115 = vector.load %arg9[%c0_70, %c0_71] : memref<256x8xf32, #tpu.memory_space<vmem>>, vector<256x4xf32>
      tpu.vector_store %arg9[%c0_70, %c0_71], %114 {strides = array<i32>} : memref<256x8xf32, #tpu.memory_space<vmem>>, vector<256x4xf32>,
      %c0_72 = arith.constant 0 : index
      %c1_73 = arith.constant 1 : index
      %116 = vector.load %arg8[%c0_72, %c1_73] : memref<256x2xf32, #tpu.memory_space<vmem>>, vector<256x1xf32>
      %117 = tpu.reciprocal %116 : vector<256x1xf32> -> vector<256x1xf32>
      %c0_74 = arith.constant 0 : index
      %c4_75 = arith.constant 4 : index
      %118 = vector.load %arg9[%c0_74, %c4_75] : memref<256x8xf32, #tpu.memory_space<vmem>>, vector<256x4xf32>
      %119 = vector.broadcast %117 : vector<256x1xf32> to vector<256x4xf32>
      %120 = arith.mulf %118, %119 : vector<256x4xf32>
      %c0_76 = arith.constant 0 : index
      %c4_77 = arith.constant 4 : index
      %121 = vector.load %arg9[%c0_76, %c4_77] : memref<256x8xf32, #tpu.memory_space<vmem>>, vector<256x4xf32>
      tpu.vector_store %arg9[%c0_76, %c4_77], %120 {strides = array<i32>} : memref<256x8xf32, #tpu.memory_space<vmem>>, vector<256x4xf32>,
      %c0_78 = arith.constant 0 : index
      %c0_79 = arith.constant 0 : index
      %122 = vector.load %arg9[%c0_78, %c0_79] : memref<256x8xf32, #tpu.memory_space<vmem>>, vector<256x8xf32>
      %c0_80 = arith.constant 0 : index
      %c0_81 = arith.constant 0 : index
      %123 = vector.load %arg4[%c0_80, %c0_81] : memref<8x4xf32, #tpu.memory_space<vmem>>, vector<8x4xf32>
      %cst_82 = arith.constant dense<0.000000e+00> : vector<256x4xf32>
      %124 = tpu.matmul %122, %123, %cst_82 {dimension_numbers = #tpu.dot_dimension_numbers<[1], [0], [0], [1], [0, 0, 1, 1], [], []>} : vector<256x8xf32>, vector<8x4xf32>, vector<256x4xf32> -> vector<256x4xf32>
      %c0_83 = arith.constant 0 : index
      %c0_84 = arith.constant 0 : index
      %125 = vector.load %arg5[%c0_83, %c0_84] : memref<1x4xf32, #tpu.memory_space<vmem>>, vector<1x4xf32>
      %126 = vector.broadcast %125 : vector<1x4xf32> to vector<256x4xf32>
      %127 = arith.addf %124, %126 : vector<256x4xf32>
      %c0_85 = arith.constant 0 : index
      %c0_86 = arith.constant 0 : index
      %128 = vector.load %arg6[%c0_85, %c0_86] : memref<256x4xf32, #tpu.memory_space<vmem>>, vector<256x4xf32>
      tpu.vector_store %arg6[%c0_85, %c0_86], %127 {strides = array<i32>} : memref<256x4xf32, #tpu.memory_space<vmem>>, vector<256x4xf32>,
    } else {
    }
    return
  }
  func.func @transform_0(%arg0: i32, %arg1: i32) -> (i32, i32) {
    %c0_i32 = arith.constant 0 : i32
    %c0_i32_0 = arith.constant 0 : i32
    return %arg0, %c0_i32 : i32, i32
  }
  func.func @transform_1(%arg0: i32, %arg1: i32) -> (i32, i32) {
    %c0_i32 = arith.constant 0 : i32
    %c0_i32_0 = arith.constant 0 : i32
    return %arg1, %c0_i32 : i32, i32
  }
  func.func @transform_2(%arg0: i32, %arg1: i32) -> (i32, i32) {
    %c0_i32 = arith.constant 0 : i32
    %c0_i32_0 = arith.constant 0 : i32
    %c0_i32_1 = arith.constant 0 : i32
    return %c0_i32, %c0_i32_0 : i32, i32
  }
  func.func @transform_3(%arg0: i32, %arg1: i32) -> (i32, i32) {
    %c0_i32 = arith.constant 0 : i32
    %c0_i32_0 = arith.constant 0 : i32
    %c0_i32_1 = arith.constant 0 : i32
    return %c0_i32, %c0_i32_0 : i32, i32
  }
  func.func @transform_4(%arg0: i32, %arg1: i32) -> (i32, i32) {
    %c0_i32 = arith.constant 0 : i32
    %c0_i32_0 = arith.constant 0 : i32
    return %arg0, %c0_i32 : i32, i32
  }
}

module attributes {stable_mosaic.version = 11 : i64} {
  func.func @_matmul_bias_kernel(%arg0: i32, %arg1: memref<256x4xf32, #tpu.memory_space<vmem>>, %arg2: memref<4x24xf32, #tpu.memory_space<vmem>>, %arg3: memref<1x24xf32, #tpu.memory_space<vmem>>, %arg4: memref<256x24xf32, #tpu.memory_space<vmem>>) attributes {dimension_semantics = [#tpu.dimension_semantics<parallel>], iteration_bounds = array<i64: 4>, scalar_prefetch = 0 : i64, scratch_operands = 0 : i64, tpu.core_type = #tpu.core_type<tc>, window_params = [{transform_indices = @transform_0, window_bounds = array<i64: 256, 4>}, {pipeline_mode = #tpu.pipeline_mode<synchronous>, transform_indices = @transform_1, window_bounds = array<i64: 4, 24>}, {pipeline_mode = #tpu.pipeline_mode<synchronous>, transform_indices = @transform_2, window_bounds = array<i64: 1, 24>}, {transform_indices = @transform_3, window_bounds = array<i64: 256, 24>}]} {
    %c0 = arith.constant 0 : index
    %c0_0 = arith.constant 0 : index
    %0 = vector.load %arg1[%c0, %c0_0] : memref<256x4xf32, #tpu.memory_space<vmem>>, vector<256x4xf32>
    %c0_1 = arith.constant 0 : index
    %c0_2 = arith.constant 0 : index
    %1 = vector.load %arg2[%c0_1, %c0_2] : memref<4x24xf32, #tpu.memory_space<vmem>>, vector<4x24xf32>
    %cst = arith.constant dense<0.000000e+00> : vector<256x24xf32>
    %2 = tpu.matmul %0, %1, %cst {dimension_numbers = #tpu.dot_dimension_numbers<[1], [0], [0], [1], [0, 0, 1, 1], [], []>} : vector<256x4xf32>, vector<4x24xf32>, vector<256x24xf32> -> vector<256x24xf32>
    %c0_3 = arith.constant 0 : index
    %c0_4 = arith.constant 0 : index
    %3 = vector.load %arg3[%c0_3, %c0_4] : memref<1x24xf32, #tpu.memory_space<vmem>>, vector<1x24xf32>
    %4 = vector.broadcast %3 : vector<1x24xf32> to vector<256x24xf32>
    %5 = arith.addf %2, %4 : vector<256x24xf32>
    %c0_5 = arith.constant 0 : index
    %c0_6 = arith.constant 0 : index
    %6 = vector.load %arg4[%c0_5, %c0_6] : memref<256x24xf32, #tpu.memory_space<vmem>>, vector<256x24xf32>
    tpu.vector_store %arg4[%c0_5, %c0_6], %5 {strides = array<i32>} : memref<256x24xf32, #tpu.memory_space<vmem>>, vector<256x24xf32>,
    return
  }
  func.func @transform_0(%arg0: i32) -> (i32, i32) {
    %c0_i32 = arith.constant 0 : i32
    %c0_i32_0 = arith.constant 0 : i32
    return %arg0, %c0_i32 : i32, i32
  }
  func.func @transform_1(%arg0: i32) -> (i32, i32) {
    %c0_i32 = arith.constant 0 : i32
    %c0_i32_0 = arith.constant 0 : i32
    %c0_i32_1 = arith.constant 0 : i32
    return %c0_i32, %c0_i32_0 : i32, i32
  }
  func.func @transform_2(%arg0: i32) -> (i32, i32) {
    %c0_i32 = arith.constant 0 : i32
    %c0_i32_0 = arith.constant 0 : i32
    %c0_i32_1 = arith.constant 0 : i32
    return %c0_i32, %c0_i32_0 : i32, i32
  }
  func.func @transform_3(%arg0: i32) -> (i32, i32) {
    %c0_i32 = arith.constant 0 : i32
    %c0_i32_0 = arith.constant 0 : i32
    return %arg0, %c0_i32 : i32, i32
  }
}

</mosaic_0001>

<llo_original>
// kernel: multi_head_attention_3d.2
$region0: #{multi_head_attention_3d.2}
  #allocation0 [shape = 'u32[]', space=smem, size = 0x4, offset = 0x4, fixed_abs, tag = 'smem constant byte address 0x4 - core index']
  #allocation1 [shape = 'u32[144,128]{1,0:T(1,128)}', space=vmem, size = 0x12000, scoped, tag = 'internal scratch']
  %s0 = inlined_call_operand.vmem [shape: f32[1024,4], index: 0, kind: input, shape index: {}]
  %s1 = inlined_call_operand.vmem [shape: f32[4,24], index: 1, kind: input, shape index: {}]
  %s2 = inlined_call_operand.vmem [shape: f32[1,24], index: 2, kind: input, shape index: {}]
  %s3 = inlined_call_operand.vmem [shape: f32[1024,24], index: 3, kind: output, shape index: {}]
  %s4 = sld [smem:[#allocation0]]
  $region45: #{multi_head_attention_3d.2} parent=0
    _
  %s6 = ssub.s32 1, %s4
  %s7 = scalar_select 0, %s6, %s4
  loop: start=0, step=1, limit=6
  $region2: #{multi_head_attention_3d.2} parent=0 // loop_pre_header
    _
  $region3: #{multi_head_attention_3d.2} parent=0 // loop_header
    %s9 = sphi 0, %s13
    %p10 = scmp.ge.s32.totalorder %s9, 6
    %s19 = sphi 0, %s21
    %s22 = sphi 0, %s19
    %s23 = sphi 0, %s22
    %s39 = sphi 0, %s23
    %s43 = sphi 0, %s43
    %s45 = sphi 0, %s43
    %s46 = sphi 0, %s45
    %s60 = sphi 0, %s46
    %s64 = sphi 0, %s64
    %s66 = sphi 0, %s64
    %s67 = sphi 0, %s66
    %s81 = sphi 0, %s67
    %s87 = sphi 0, %s89
    %s90 = sphi 0, %s87
    %s91 = sphi 0, %s90
    %s107 = sphi 0, %s91
  $region4: #{multi_head_attention_3d.2} parent=0 // loop_header_branch
    %12 = sbr.rel (%p10) target = $region8
  $region5: #{multi_head_attention_3d.2} parent=0 // loop_body
    %s14 = ssub.s32 %s9, 1
    %s15 = ssub.s32 %s9, 2
    %s16 = sadd.s32 %s9, 1
    %s17 = ssub.s32 %s9, %s16
    %p18 = scmp.eq.s32.totalorder %s17, 0
    %s20 = sadd.s32 %s19, 1
    %s21 = scalar_select %p18, %s19, %s20
    %p24 = pneg %p18
    %p25 = scmp.eq.s32.totalorder %s9, 3
    %p26 = por %p24, %p25
    %p27 = scmp.ne.s32.totalorder %s19, %s22
    %p28 = scmp.eq.s32.totalorder %s9, 0
    %p29 = por %p27, %p28
    %p30 = scmp.ne.s32.totalorder %s19, %s22
    %p31 = scmp.eq.s32.totalorder %s14, 3
    %p32 = por %p30, %p31
    %p33 = scmp.ne.s32.totalorder %s22, %s23
    %p34 = scmp.eq.s32.totalorder %s14, 0
    %p35 = por %p33, %p34
    %p36 = scmp.ne.s32.totalorder %s22, %s23
    %p37 = scmp.eq.s32.totalorder %s15, 3
    %p38 = por %p36, %p37
    %p40 = scmp.ne.s32.totalorder %s23, %s39
    %p41 = scmp.eq.s32.totalorder %s15, 0
    %p42 = por %p40, %p41
    %s44 = sadd.s32 %s43, 1
    %p47 = scmp.eq.s32.totalorder %s9, 3
    %p48 = scmp.ne.s32.totalorder %s43, %s45
    %p49 = scmp.eq.s32.totalorder %s9, 0
    %p50 = por %p48, %p49
    %p51 = scmp.ne.s32.totalorder %s43, %s45
    %p52 = scmp.eq.s32.totalorder %s14, 3
    %p53 = por %p51, %p52
    %p54 = scmp.ne.s32.totalorder %s45, %s46
    %p55 = scmp.eq.s32.totalorder %s14, 0
    %p56 = por %p54, %p55
    %p57 = scmp.ne.s32.totalorder %s45, %s46
    %p58 = scmp.eq.s32.totalorder %s15, 3
    %p59 = por %p57, %p58
    %p61 = scmp.ne.s32.totalorder %s46, %s60
    %p62 = scmp.eq.s32.totalorder %s15, 0
    %p63 = por %p61, %p62
    %s65 = sadd.s32 %s64, 1
    %p68 = scmp.eq.s32.totalorder %s9, 3
    %p69 = scmp.ne.s32.totalorder %s64, %s66
    %p70 = scmp.eq.s32.totalorder %s9, 0
    %p71 = por %p69, %p70
    %p72 = scmp.ne.s32.totalorder %s64, %s66
    %p73 = scmp.eq.s32.totalorder %s14, 3
    %p74 = por %p72, %p73
    %p75 = scmp.ne.s32.totalorder %s66, %s67
    %p76 = scmp.eq.s32.totalorder %s14, 0
    %p77 = por %p75, %p76
    %p78 = scmp.ne.s32.totalorder %s66, %s67
    %p79 = scmp.eq.s32.totalorder %s15, 3
    %p80 = por %p78, %p79
    %p82 = scmp.ne.s32.totalorder %s67, %s81
    %p83 = scmp.eq.s32.totalorder %s15, 0
    %p84 = por %p82, %p83
    %s85 = ssub.s32 %s9, %s16
    %p86 = scmp.eq.s32.totalorder %s85, 0
    %s88 = sadd.s32 %s87, 1
    %s89 = scalar_select %p86, %s87, %s88
    %p92 = pneg %p86
    %p93 = scmp.eq.s32.totalorder %s9, 3
    %p94 = por %p92, %p93
    %p95 = scmp.ne.s32.totalorder %s87, %s90
    %p96 = scmp.eq.s32.totalorder %s9, 0
    %p97 = por %p95, %p96
    %p98 = scmp.ne.s32.totalorder %s87, %s90
    %p99 = scmp.eq.s32.totalorder %s14, 3
    %p100 = por %p98, %p99
    %p101 = scmp.ne.s32.totalorder %s90, %s91
    %p102 = scmp.eq.s32.totalorder %s14, 0
    %p103 = por %p101, %p102
    %p104 = scmp.ne.s32.totalorder %s90, %s91
    %p105 = scmp.eq.s32.totalorder %s15, 3
    %p106 = por %p104, %p105
    %p108 = scmp.ne.s32.totalorder %s91, %s107
    %p109 = scmp.eq.s32.totalorder %s15, 0
    %p110 = por %p108, %p109
    %p111 = scmp.le.s32.totalorder 1, %s9
    %p112 = scmp.lt.s32.totalorder %s9, 5
    %p113 = pnand %p111, %p112
    %p114 = pneg %p113
    // Predicated region
    $region9: #{multi_head_attention_3d.2} parent=5 // pred_check
      _
    $region10: #{multi_head_attention_3d.2} parent=5 // pred_check_branch
      %116 = sbr.rel (%p113) target = $region12
    $region11: #{multi_head_attention_3d.2} parent=5 // pred_region
      %s117 = ssub.s32 %s9, 1
      // Predicated region
      $region13: #{multi_head_attention_3d.2} parent=11 // pred_check
        %p118 = pneg %p56
      $region14: #{multi_head_attention_3d.2} parent=11 // pred_check_branch
        %120 = sbr.rel (%p118) target = $region16
      $region15: #{multi_head_attention_3d.2} parent=11 // pred_region
        _
      $region16: #{multi_head_attention_3d.2} parent=11 // pred_fallthru
        _
      // Predicated region
      $region17: #{multi_head_attention_3d.2} parent=11 // pred_check
        %p121 = pneg %p77
      $region18: #{multi_head_attention_3d.2} parent=11 // pred_check_branch
        %123 = sbr.rel (%p121) target = $region20
      $region19: #{multi_head_attention_3d.2} parent=11 // pred_region
        _
      $region20: #{multi_head_attention_3d.2} parent=11 // pred_fallthru
        _
    $region12: #{multi_head_attention_3d.2} parent=5 // pred_fallthru
      _
    %p124 = scmp.lt.s32.totalorder %s9, 4
    // Predicated region
    $region21: #{multi_head_attention_3d.2} parent=5 // pred_check
      %p125 = pneg %p124
    $region22: #{multi_head_attention_3d.2} parent=5 // pred_check_branch
      %127 = sbr.rel (%p125) target = $region24
    $region23: #{multi_head_attention_3d.2} parent=5 // pred_region
      // Predicated region
      $region25: #{multi_head_attention_3d.2} parent=23 // pred_check
        %p128 = pneg %p29
      $region26: #{multi_head_attention_3d.2} parent=23 // pred_check_branch
        %130 = sbr.rel (%p128) target = $region28
      $region27: #{multi_head_attention_3d.2} parent=23 // pred_region
        %s131 = smul.u32 32, %s9
        %p132 = scmp.lt.s32.totalorder %s131, 127
        %s133 = scalar_select %p132, %s131, 127
        %s134 = smul.addr %s133, 8
        %s135 = scalar_lea.vmem %s0, %s134
        %s136 = smul.u32 32, %s9
      $region28: #{multi_head_attention_3d.2} parent=23 // pred_fallthru
        _
    $region24: #{multi_head_attention_3d.2} parent=5 // pred_fallthru
      _
    %p137 = scmp.le.s32.totalorder 1, %s9
    %p138 = scmp.lt.s32.totalorder %s9, 5
    %p139 = pnand %p137, %p138
    %p140 = pneg %p139
    // Predicated region
    $region29: #{multi_head_attention_3d.2} parent=5 // pred_check
      _
    $region30: #{multi_head_attention_3d.2} parent=5 // pred_check_branch
      %142 = sbr.rel (%p139) target = $region32
    $region31: #{multi_head_attention_3d.2} parent=5 // pred_region
      %s143 = ssub.s32 %s9, 1
      %s144 = smul.u32 32, %s14
      %p145 = scmp.lt.s32.totalorder %s144, 127
      %s146 = scalar_select %p145, %s144, 127
      %s147 = smul.addr %s146, 8
      %s148 = scalar_lea.vmem %s0, %s147
      %p149 = pneg %p35
      %p150 = pneg %p32
      %p151 = pneg %p56
      %p152 = pneg %p53
      %p153 = pneg %p77
      %p154 = pneg %p74
      %p155 = pneg %p103
      %p156 = pneg %p100
      %s157 = smul.u32 32, %s14
      %p158 = scmp.lt.s32.totalorder %s157, 127
      %s159 = scalar_select %p158, %s157, 127
      %s160 = smul.addr %s159, 8
      %s161 = scalar_lea.vmem %s3, %s160
      %s162 = smul.u32 32, %s14
      %p163 = scmp.lt.s32.totalorder %s162, 127
      %s164 = scalar_select %p163, %s162, 127
      %s165 = smul.addr %s164, 8
      %s166 = scalar_lea.vmem %s0, %s165
      %s167 = smul.u32 32, %s14
      %s168 = smul.u32 32, %s14
      %p169 = scmp.lt.s32.totalorder %s168, 127
      %s170 = scalar_select %p169, %s168, 127
      %s171 = smul.addr %s170, 8
      %s172 = scalar_lea.vmem %s3, %s171
      %s173 = smul.u32 32, %s14
      %v174 = vld [vmem:[%s166] sm:$0xff]
      %v175 = vld [vmem:[%s166 + $0x8] sm:$0xff]
      %v176 = vld [vmem:[%s166 + $0x10] sm:$0xff]
      %v177 = vld [vmem:[%s166 + $0x18] sm:$0xff]
      %v178 = vld [vmem:[%s166 + $0x20] sm:$0xff]
      %v179 = vld [vmem:[%s166 + $0x28] sm:$0xff]
      %v180 = vld [vmem:[%s166 + $0x30] sm:$0xff]
      %v181 = vld [vmem:[%s166 + $0x38] sm:$0xff]
      %v182 = vld [vmem:[%s166 + $0x40] sm:$0xff]
      %v183 = vld [vmem:[%s166 + $0x48] sm:$0xff]
      %v184 = vld [vmem:[%s166 + $0x50] sm:$0xff]
      %v185 = vld [vmem:[%s166 + $0x58] sm:$0xff]
      %v186 = vld [vmem:[%s166 + $0x60] sm:$0xff]
      %v187 = vld [vmem:[%s166 + $0x68] sm:$0xff]
      %v188 = vld [vmem:[%s166 + $0x70] sm:$0xff]
      %v189 = vld [vmem:[%s166 + $0x78] sm:$0xff]
      %v190 = vld [vmem:[%s166 + $0x80] sm:$0xff]
      %v191 = vld [vmem:[%s166 + $0x88] sm:$0xff]
      %v192 = vld [vmem:[%s166 + $0x90] sm:$0xff]
      %v193 = vld [vmem:[%s166 + $0x98] sm:$0xff]
      %v194 = vld [vmem:[%s166 + $0xa0] sm:$0xff]
      %v195 = vld [vmem:[%s166 + $0xa8] sm:$0xff]
      %v196 = vld [vmem:[%s166 + $0xb0] sm:$0xff]
      %v197 = vld [vmem:[%s166 + $0xb8] sm:$0xff]
      %v198 = vld [vmem:[%s166 + $0xc0] sm:$0xff]
      %v199 = vld [vmem:[%s166 + $0xc8] sm:$0xff]
      %v200 = vld [vmem:[%s166 + $0xd0] sm:$0xff]
      %v201 = vld [vmem:[%s166 + $0xd8] sm:$0xff]
      %v202 = vld [vmem:[%s166 + $0xe0] sm:$0xff]
      %v203 = vld [vmem:[%s166 + $0xe8] sm:$0xff]
      %v204 = vld [vmem:[%s166 + $0xf0] sm:$0xff]
      %v205 = vld [vmem:[%s166 + $0xf8] sm:$0xff]
      %v206 = vld [vmem:[%s1] sm:$0xf]
      %v207 = vld [vmem:[%s2] sm:$0x1]
      %v209 = vlaneseq
      %v210 = vshrl.u32 %v209, 7
      %v211 = vsub.s32 0, %v210
      %v212 = vrot.slane %v207, %v211
      %vm214 = vcmask 31744
      %v216 = vsel %vm214, %v174, 0
      %v219 = vsel %vm214, %v175, 0
      %v222 = vsel %vm214, %v176, 0
      %v225 = vsel %vm214, %v177, 0
      %v228 = vsel %vm214, %v178, 0
      %v231 = vsel %vm214, %v179, 0
      %v234 = vsel %vm214, %v180, 0
      %v237 = vsel %vm214, %v181, 0
      %v240 = vsel %vm214, %v182, 0
      %v243 = vsel %vm214, %v183, 0
      %v246 = vsel %vm214, %v184, 0
      %v249 = vsel %vm214, %v185, 0
      %v252 = vsel %vm214, %v186, 0
      %v255 = vsel %vm214, %v187, 0
      %v258 = vsel %vm214, %v188, 0
      %v261 = vsel %vm214, %v189, 0
      %v264 = vsel %vm214, %v190, 0
      %v267 = vsel %vm214, %v191, 0
      %v270 = vsel %vm214, %v192, 0
      %v273 = vsel %vm214, %v193, 0
      %v276 = vsel %vm214, %v194, 0
      %v279 = vsel %vm214, %v195, 0
      %v282 = vsel %vm214, %v196, 0
      %v285 = vsel %vm214, %v197, 0
      %v288 = vsel %vm214, %v198, 0
      %v291 = vsel %vm214, %v199, 0
      %v294 = vsel %vm214, %v200, 0
      %v297 = vsel %vm214, %v201, 0
      %v300 = vsel %vm214, %v202, 0
      %v303 = vsel %vm214, %v203, 0
      %v306 = vsel %vm214, %v204, 0
      %v309 = vsel %vm214, %v205, 0
      %vm311 = vcmask 1043456
      %v313 = vsel %vm311, %v206, 0
      %315 = vmatprep.subr.mxu0 0.0
      %316 = vmatpush1.msra.mxu0 0.0
      %317 = vmatprep.subr.mxu0 0.0
      %318 = vmatpush1.msra.mxu0 0.0
      %319 = vmatprep.subr.mxu0 0.0
      %320 = vmatpush1.msra.mxu0 0.0
      %321 = vmatprep.subr.mxu0 0.0
      %322 = vmatpush1.msra.mxu0 0.0
      %323 = vmatprep.subr.mxu0 0.0
      %324 = vmatpush1.msra.mxu0 0.0
      %325 = vmatprep.subr.mxu0 0.0
      %326 = vmatpush1.msra.mxu0 0.0
      %327 = vmatprep.subr.mxu0 0.0
      %328 = vmatpush1.msra.mxu0 0.0
      %329 = vmatprep.subr.mxu0 0.0
      %330 = vmatpush1.msra.mxu0 0.0
      %331 = vmatprep.subr.mxu0 0.0
      %332 = vmatpush1.msra.mxu0 0.0
      %333 = vmatprep.subr.mxu0 0.0
      %334 = vmatpush1.msra.mxu0 0.0
      %335 = vmatprep.subr.mxu0 0.0
      %336 = vmatpush1.msra.mxu0 0.0
      %337 = vmatprep.subr.mxu0 0.0
      %338 = vmatpush1.msra.mxu0 0.0
      %339 = vmatprep.subr.mxu0 0.0
      %340 = vmatpush1.msra.mxu0 0.0
      %341 = vmatprep.subr.mxu0 0.0
      %342 = vmatpush1.msra.mxu0 0.0
      %343 = vmatprep.subr.mxu0 0.0
      %344 = vmatpush1.msra.mxu0 0.0
      %345 = vmatprep.subr.mxu0 0.0
      %346 = vmatpush1.msra.mxu0 %v313
      %347 = vmatprep.subr.mxu0 0.0
      %348 = vmatpush2.msra.mxu0 0.0
      %349 = vmatprep.subr.mxu0 0.0
      %350 = vmatpush2.msra.mxu0 0.0
      %351 = vmatprep.subr.mxu0 0.0
      %352 = vmatpush2.msra.mxu0 0.0
      %353 = vmatprep.subr.mxu0 0.0
      %354 = vmatpush2.msra.mxu0 0.0
      %355 = vmatprep.subr.mxu0 0.0
      %356 = vmatpush2.msra.mxu0 0.0
      %357 = vmatprep.subr.mxu0 0.0
      %358 = vmatpush2.msra.mxu0 0.0
      %359 = vmatprep.subr.mxu0 0.0
      %360 = vmatpush2.msra.mxu0 0.0
      %361 = vmatprep.subr.mxu0 0.0
      %362 = vmatpush2.msra.mxu0 0.0
      %363 = vmatprep.subr.mxu0 0.0
      %364 = vmatpush2.msra.mxu0 0.0
      %365 = vmatprep.subr.mxu0 0.0
      %366 = vmatpush2.msra.mxu0 0.0
      %367 = vmatprep.subr.mxu0 0.0
      %368 = vmatpush2.msra.mxu0 0.0
      %369 = vmatprep.subr.mxu0 0.0
      %370 = vmatpush2.msra.mxu0 0.0
      %371 = vmatprep.subr.mxu0 0.0
      %372 = vmatpush2.msra.mxu0 0.0
      %373 = vmatprep.subr.mxu0 0.0
      %374 = vmatpush2.msra.mxu0 0.0
      %375 = vmatprep.subr.mxu0 0.0
      %376 = vmatpush2.msra.mxu0 0.0
      %377 = vmatprep.subr.mxu0 0.0
      %378 = vmatpush2.msra.mxu0 0.0
      %379 = vmatprep.mubr.f32.mxu0 0.0
      %380 = vmatmul.mubr.f32.gmra.mxu0 %v216
      %v381 = vpop.f32.mrf.mxu0
      %v382 = vadd.f32 %v212, %v381
      %v383 = vpop.f32.mrf.mxu0
      %384 = vmatprep.mubr.f32.mxu0 0.0
      %385 = vmatmul.mubr.f32.gmra.mxu0 %v219
      %v386 = vpop.f32.mrf.mxu0
      %v387 = vadd.f32 %v212, %v386
      %v388 = vpop.f32.mrf.mxu0
      %389 = vmatprep.mubr.f32.mxu0 0.0
      %390 = vmatmul.mubr.f32.gmra.mxu0 %v222
      %v391 = vpop.f32.mrf.mxu0
      %v392 = vadd.f32 %v212, %v391
      %v393 = vpop.f32.mrf.mxu0
      %394 = vmatprep.mubr.f32.mxu0 0.0
      %395 = vmatmul.mubr.f32.gmra.mxu0 %v225
      %v396 = vpop.f32.mrf.mxu0
      %v397 = vadd.f32 %v212, %v396
      %v398 = vpop.f32.mrf.mxu0
      %399 = vmatprep.mubr.f32.mxu0 0.0
      %400 = vmatmul.mubr.f32.gmra.mxu0 %v228
      %v401 = vpop.f32.mrf.mxu0
      %v402 = vadd.f32 %v212, %v401
      %v403 = vpop.f32.mrf.mxu0
      %404 = vmatprep.mubr.f32.mxu0 0.0
      %405 = vmatmul.mubr.f32.gmra.mxu0 %v231
      %v406 = vpop.f32.mrf.mxu0
      %v407 = vadd.f32 %v212, %v406
      %v408 = vpop.f32.mrf.mxu0
      %409 = vmatprep.mubr.f32.mxu0 0.0
      %410 = vmatmul.mubr.f32.gmra.mxu0 %v234
      %v411 = vpop.f32.mrf.mxu0
      %v412 = vadd.f32 %v212, %v411
      %v413 = vpop.f32.mrf.mxu0
      %414 = vmatprep.mubr.f32.mxu0 0.0
      %415 = vmatmul.mubr.f32.gmra.mxu0 %v237
      %v416 = vpop.f32.mrf.mxu0
      %v417 = vadd.f32 %v212, %v416
      %v418 = vpop.f32.mrf.mxu0
      %419 = vmatprep.mubr.f32.mxu0 0.0
      %420 = vmatmul.mubr.f32.gmra.mxu0 %v240
      %v421 = vpop.f32.mrf.mxu0
      %v422 = vadd.f32 %v212, %v421
      %v423 = vpop.f32.mrf.mxu0
      %424 = vmatprep.mubr.f32.mxu0 0.0
      %425 = vmatmul.mubr.f32.gmra.mxu0 %v243
      %v426 = vpop.f32.mrf.mxu0
      %v427 = vadd.f32 %v212, %v426
      %v428 = vpop.f32.mrf.mxu0
      %429 = vmatprep.mubr.f32.mxu0 0.0
      %430 = vmatmul.mubr.f32.gmra.mxu0 %v246
      %v431 = vpop.f32.mrf.mxu0
      %v432 = vadd.f32 %v212, %v431
      %v433 = vpop.f32.mrf.mxu0
      %434 = vmatprep.mubr.f32.mxu0 0.0
      %435 = vmatmul.mubr.f32.gmra.mxu0 %v249
      %v436 = vpop.f32.mrf.mxu0
      %v437 = vadd.f32 %v212, %v436
      %v438 = vpop.f32.mrf.mxu0
      %439 = vmatprep.mubr.f32.mxu0 0.0
      %440 = vmatmul.mubr.f32.gmra.mxu0 %v252
      %v441 = vpop.f32.mrf.mxu0
      %v442 = vadd.f32 %v212, %v441
      %v443 = vpop.f32.mrf.mxu0
      %444 = vmatprep.mubr.f32.mxu0 0.0
      %445 = vmatmul.mubr.f32.gmra.mxu0 %v255
      %v446 = vpop.f32.mrf.mxu0
      %v447 = vadd.f32 %v212, %v446
      %v448 = vpop.f32.mrf.mxu0
      %449 = vmatprep.mubr.f32.mxu0 0.0
      %450 = vmatmul.mubr.f32.gmra.mxu0 %v258
      %v451 = vpop.f32.mrf.mxu0
      %v452 = vadd.f32 %v212, %v451
      %v453 = vpop.f32.mrf.mxu0
      %454 = vmatprep.mubr.f32.mxu0 0.0
      %455 = vmatmul.mubr.f32.gmra.mxu0 %v261
      %v456 = vpop.f32.mrf.mxu0
      %v457 = vadd.f32 %v212, %v456
      %v458 = vpop.f32.mrf.mxu0
      %459 = vmatprep.mubr.f32.mxu0 0.0
      %460 = vmatmul.mubr.f32.gmra.mxu0 %v264
      %v461 = vpop.f32.mrf.mxu0
      %v462 = vadd.f32 %v212, %v461
      %v463 = vpop.f32.mrf.mxu0
      %464 = vmatprep.mubr.f32.mxu0 0.0
      %465 = vmatmul.mubr.f32.gmra.mxu0 %v267
      %v466 = vpop.f32.mrf.mxu0
      %v467 = vadd.f32 %v212, %v466
      %v468 = vpop.f32.mrf.mxu0
      %469 = vmatprep.mubr.f32.mxu0 0.0
      %470 = vmatmul.mubr.f32.gmra.mxu0 %v270
      %v471 = vpop.f32.mrf.mxu0
      %v472 = vadd.f32 %v212, %v471
      %v473 = vpop.f32.mrf.mxu0
      %474 = vmatprep.mubr.f32.mxu0 0.0
      %475 = vmatmul.mubr.f32.gmra.mxu0 %v273
      %v476 = vpop.f32.mrf.mxu0
      %v477 = vadd.f32 %v212, %v476
      %v478 = vpop.f32.mrf.mxu0
      %479 = vmatprep.mubr.f32.mxu0 0.0
      %480 = vmatmul.mubr.f32.gmra.mxu0 %v276
      %v481 = vpop.f32.mrf.mxu0
      %v482 = vadd.f32 %v212, %v481
      %v483 = vpop.f32.mrf.mxu0
      %484 = vmatprep.mubr.f32.mxu0 0.0
      %485 = vmatmul.mubr.f32.gmra.mxu0 %v279
      %v486 = vpop.f32.mrf.mxu0
      %v487 = vadd.f32 %v212, %v486
      %v488 = vpop.f32.mrf.mxu0
      %489 = vmatprep.mubr.f32.mxu0 0.0
      %490 = vmatmul.mubr.f32.gmra.mxu0 %v282
      %v491 = vpop.f32.mrf.mxu0
      %v492 = vadd.f32 %v212, %v491
      %v493 = vpop.f32.mrf.mxu0
      %494 = vmatprep.mubr.f32.mxu0 0.0
      %495 = vmatmul.mubr.f32.gmra.mxu0 %v285
      %v496 = vpop.f32.mrf.mxu0
      %v497 = vadd.f32 %v212, %v496
      %v498 = vpop.f32.mrf.mxu0
      %499 = vmatprep.mubr.f32.mxu0 0.0
      %500 = vmatmul.mubr.f32.gmra.mxu0 %v288
      %v501 = vpop.f32.mrf.mxu0
      %v502 = vadd.f32 %v212, %v501
      %v503 = vpop.f32.mrf.mxu0
      %504 = vmatprep.mubr.f32.mxu0 0.0
      %505 = vmatmul.mubr.f32.gmra.mxu0 %v291
      %v506 = vpop.f32.mrf.mxu0
      %v507 = vadd.f32 %v212, %v506
      %v508 = vpop.f32.mrf.mxu0
      %509 = vmatprep.mubr.f32.mxu0 0.0
      %510 = vmatmul.mubr.f32.gmra.mxu0 %v294
      %v511 = vpop.f32.mrf.mxu0
      %v512 = vadd.f32 %v212, %v511
      %v513 = vpop.f32.mrf.mxu0
      %514 = vmatprep.mubr.f32.mxu0 0.0
      %515 = vmatmul.mubr.f32.gmra.mxu0 %v297
      %v516 = vpop.f32.mrf.mxu0
      %v517 = vadd.f32 %v212, %v516
      %v518 = vpop.f32.mrf.mxu0
      %519 = vmatprep.mubr.f32.mxu0 0.0
      %520 = vmatmul.mubr.f32.gmra.mxu0 %v300
      %v521 = vpop.f32.mrf.mxu0
      %v522 = vadd.f32 %v212, %v521
      %v523 = vpop.f32.mrf.mxu0
      %524 = vmatprep.mubr.f32.mxu0 0.0
      %525 = vmatmul.mubr.f32.gmra.mxu0 %v303
      %v526 = vpop.f32.mrf.mxu0
      %v527 = vadd.f32 %v212, %v526
      %v528 = vpop.f32.mrf.mxu0
      %529 = vmatprep.mubr.f32.mxu0 0.0
      %530 = vmatmul.mubr.f32.gmra.mxu0 %v306
      %v531 = vpop.f32.mrf.mxu0
      %v532 = vadd.f32 %v212, %v531
      %v533 = vpop.f32.mrf.mxu0
      %534 = vmatprep.mubr.f32.mxu0 0.0
      %535 = vmatmul.mubr.f32.gmra.mxu0 %v309
      %v536 = vpop.f32.mrf.mxu0
      %v537 = vadd.f32 %v212, %v536
      %v538 = vpop.f32.mrf.mxu0
      %539 = vdwg.mxu0
      %vm540 = vcmask 195584
      %541 = vst.msk [vmem:[%s172] sm:$0xff] %vm540, %v382
      %542 = vst.msk [vmem:[%s172 + $0x8] sm:$0xff] %vm540, %v387
      %543 = vst.msk [vmem:[%s172 + $0x10] sm:$0xff] %vm540, %v392
      %544 = vst.msk [vmem:[%s172 + $0x18] sm:$0xff] %vm540, %v397
      %545 = vst.msk [vmem:[%s172 + $0x20] sm:$0xff] %vm540, %v402
      %546 = vst.msk [vmem:[%s172 + $0x28] sm:$0xff] %vm540, %v407
      %547 = vst.msk [vmem:[%s172 + $0x30] sm:$0xff] %vm540, %v412
      %548 = vst.msk [vmem:[%s172 + $0x38] sm:$0xff] %vm540, %v417
      %549 = vst.msk [vmem:[%s172 + $0x40] sm:$0xff] %vm540, %v422
      %550 = vst.msk [vmem:[%s172 + $0x48] sm:$0xff] %vm540, %v427
      %551 = vst.msk [vmem:[%s172 + $0x50] sm:$0xff] %vm540, %v432
      %552 = vst.msk [vmem:[%s172 + $0x58] sm:$0xff] %vm540, %v437
      %553 = vst.msk [vmem:[%s172 + $0x60] sm:$0xff] %vm540, %v442
      %554 = vst.msk [vmem:[%s172 + $0x68] sm:$0xff] %vm540, %v447
      %555 = vst.msk [vmem:[%s172 + $0x70] sm:$0xff] %vm540, %v452
      %556 = vst.msk [vmem:[%s172 + $0x78] sm:$0xff] %vm540, %v457
      %557 = vst.msk [vmem:[%s172 + $0x80] sm:$0xff] %vm540, %v462
      %558 = vst.msk [vmem:[%s172 + $0x88] sm:$0xff] %vm540, %v467
      %559 = vst.msk [vmem:[%s172 + $0x90] sm:$0xff] %vm540, %v472
      %560 = vst.msk [vmem:[%s172 + $0x98] sm:$0xff] %vm540, %v477
      %561 = vst.msk [vmem:[%s172 + $0xa0] sm:$0xff] %vm540, %v482
      %562 = vst.msk [vmem:[%s172 + $0xa8] sm:$0xff] %vm540, %v487
      %563 = vst.msk [vmem:[%s172 + $0xb0] sm:$0xff] %vm540, %v492
      %564 = vst.msk [vmem:[%s172 + $0xb8] sm:$0xff] %vm540, %v497
      %565 = vst.msk [vmem:[%s172 + $0xc0] sm:$0xff] %vm540, %v502
      %566 = vst.msk [vmem:[%s172 + $0xc8] sm:$0xff] %vm540, %v507
      %567 = vst.msk [vmem:[%s172 + $0xd0] sm:$0xff] %vm540, %v512
      %568 = vst.msk [vmem:[%s172 + $0xd8] sm:$0xff] %vm540, %v517
      %569 = vst.msk [vmem:[%s172 + $0xe0] sm:$0xff] %vm540, %v522
      %570 = vst.msk [vmem:[%s172 + $0xe8] sm:$0xff] %vm540, %v527
      %571 = vst.msk [vmem:[%s172 + $0xf0] sm:$0xff] %vm540, %v532
      %572 = vst.msk [vmem:[%s172 + $0xf8] sm:$0xff] %vm540, %v537
      %s573 = smul.u32 32, %s14
      %p574 = scmp.lt.s32.totalorder %s573, 127
      %s575 = scalar_select %p574, %s573, 127
      %s576 = smul.addr %s575, 8
      %s577 = scalar_lea.vmem %s3, %s576
      // Predicated region
      $region33: #{multi_head_attention_3d.2} parent=31 // pred_check
        %p578 = pneg %p100
      $region34: #{multi_head_attention_3d.2} parent=31 // pred_check_branch
        %580 = sbr.rel (%p578) target = $region36
      $region35: #{multi_head_attention_3d.2} parent=31 // pred_region
        %s581 = smul.u32 32, %s14
      $region36: #{multi_head_attention_3d.2} parent=31 // pred_fallthru
        _
    $region32: #{multi_head_attention_3d.2} parent=5 // pred_fallthru
      _
    %p582 = scmp.le.s32.totalorder 2, %s9
    // Predicated region
    $region37: #{multi_head_attention_3d.2} parent=5 // pred_check
      %p583 = pneg %p582
    $region38: #{multi_head_attention_3d.2} parent=5 // pred_check_branch
      %585 = sbr.rel (%p583) target = $region40
    $region39: #{multi_head_attention_3d.2} parent=5 // pred_region
      %s586 = ssub.s32 %s9, 2
      // Predicated region
      $region41: #{multi_head_attention_3d.2} parent=39 // pred_check
        %p587 = pneg %p106
      $region42: #{multi_head_attention_3d.2} parent=39 // pred_check_branch
        %589 = sbr.rel (%p587) target = $region44
      $region43: #{multi_head_attention_3d.2} parent=39 // pred_region
        %s590 = smul.u32 32, %s15
        %p591 = scmp.lt.s32.totalorder %s590, 127
        %s592 = scalar_select %p591, %s590, 127
        %s593 = smul.addr %s592, 8
        %s594 = scalar_lea.vmem %s3, %s593
      $region44: #{multi_head_attention_3d.2} parent=39 // pred_fallthru
        _
    $region40: #{multi_head_attention_3d.2} parent=5 // pred_fallthru
      _
  $region6: #{multi_head_attention_3d.2} parent=0 // loop_footer
    %s13 = sadd.s32 1, %s9
  $region7: #{multi_head_attention_3d.2} parent=0 // loop_footer_branch
    %8 = sbr.rel target = $region3
  $region8: #{multi_head_attention_3d.2} parent=0 // loop_exit
    _

// kernel: multi_head_attention_3d.3
$region0: #{multi_head_attention_3d.3}
  #allocation0 [shape = 'u32[]', space=smem, size = 0x4, offset = 0x4, fixed_abs, tag = 'smem constant byte address 0x4 - core index']
  #allocation1 [shape = 'u32[144,128]{1,0:T(1,128)}', space=vmem, size = 0x12000, scoped, tag = 'internal scratch']
  #allocation2 [shape = 'f32[256,2]{1,0:T(8,128)}', space=vmem, size = 0x20000, scoped, tag = 'scratch operand']
  #allocation3 [shape = 'f32[256,2]{1,0:T(8,128)}', space=vmem, size = 0x20000, scoped, tag = 'scratch operand']
  #allocation4 [shape = 'f32[256,8]{1,0:T(8,128)}', space=vmem, size = 0x20000, scoped, tag = 'scratch operand']
  %s0 = inlined_call_operand.vmem [shape: f32[1024,24], index: 0, kind: input, shape index: {}, may-alias: {0,1}]
  %s1 = inlined_call_operand.vmem [shape: f32[1024,24], index: 1, kind: input, shape index: {}, may-alias: {0,1}]
  %s2 = inlined_call_operand.vmem [shape: f32[8,4], index: 2, kind: input, shape index: {}]
  %s3 = inlined_call_operand.vmem [shape: f32[1,4], index: 3, kind: input, shape index: {}]
  %s4 = inlined_call_operand.vmem [shape: f32[1024,4], index: 4, kind: output, shape index: {}]
  %s5 = sld [smem:[#allocation0]]
  $region57: #{multi_head_attention_3d.3} parent=0
    _
  %s7 = ssub.s32 1, %s5
  %s8 = scalar_select 0, %s7, %s5
  loop: start=0, step=1, limit=18
  $region2: #{multi_head_attention_3d.3} parent=0 // loop_pre_header
    _
  $region3: #{multi_head_attention_3d.3} parent=0 // loop_header
    %s10 = sphi 0, %s14
    %p11 = scmp.ge.s32.totalorder %s10, 18
    %s17 = sphi 0, %s29
    %s18 = sphi 0, %s25
    %s19 = sphi 0, %s17
    %s20 = sphi 0, %s18
    %s21 = sphi 0, %s19
    %s22 = sphi 0, %s20
    %s32 = sphi 0, %s34
    %s35 = sphi 0, %s32
    %s36 = sphi 0, %s35
    %s52 = sphi 0, %s36
    %s58 = sphi 0, %s60
    %s61 = sphi 0, %s58
    %s62 = sphi 0, %s61
    %s78 = sphi 0, %s62
    %s82 = sphi 0, %s82
    %s84 = sphi 0, %s82
    %s85 = sphi 0, %s84
    %s99 = sphi 0, %s85
    %s103 = sphi 0, %s103
    %s105 = sphi 0, %s103
    %s106 = sphi 0, %s105
    %s120 = sphi 0, %s106
    %s126 = sphi 0, %s128
    %s129 = sphi 0, %s126
    %s130 = sphi 0, %s129
    %s146 = sphi 0, %s130
  $region4: #{multi_head_attention_3d.3} parent=0 // loop_header_branch
    %13 = sbr.rel (%p11) target = $region8
  $region5: #{multi_head_attention_3d.3} parent=0 // loop_body
    %s15 = ssub.s32 %s10, 1
    %s16 = ssub.s32 %s10, 2
    %s23 = sadd.s32 1, %s18
    %p24 = scmp.ge.s32.totalorder %s23, 4
    %s25 = scalar_select %p24, 0, %s23
    %s26 = sadd.s32 1, %s17
    %s27 = scalar_select %p24, %s26, %s17
    %p28 = scmp.ge.s32.totalorder %s27, 4
    %s29 = scalar_select %p28, 0, %s27
    %s30 = ssub.s32 %s17, %s29
    %p31 = scmp.eq.s32.totalorder %s30, 0
    %s33 = sadd.s32 %s32, 1
    %s34 = scalar_select %p31, %s32, %s33
    %p37 = pneg %p31
    %p38 = scmp.eq.s32.totalorder %s10, 15
    %p39 = por %p37, %p38
    %p40 = scmp.ne.s32.totalorder %s32, %s35
    %p41 = scmp.eq.s32.totalorder %s10, 0
    %p42 = por %p40, %p41
    %p43 = scmp.ne.s32.totalorder %s32, %s35
    %p44 = scmp.eq.s32.totalorder %s15, 15
    %p45 = por %p43, %p44
    %p46 = scmp.ne.s32.totalorder %s35, %s36
    %p47 = scmp.eq.s32.totalorder %s15, 0
    %p48 = por %p46, %p47
    %p49 = scmp.ne.s32.totalorder %s35, %s36
    %p50 = scmp.eq.s32.totalorder %s16, 15
    %p51 = por %p49, %p50
    %p53 = scmp.ne.s32.totalorder %s36, %s52
    %p54 = scmp.eq.s32.totalorder %s16, 0
    %p55 = por %p53, %p54
    %s56 = ssub.s32 %s18, %s25
    %p57 = scmp.eq.s32.totalorder %s56, 0
    %s59 = sadd.s32 %s58, 1
    %s60 = scalar_select %p57, %s58, %s59
    %p63 = pneg %p57
    %p64 = scmp.eq.s32.totalorder %s10, 15
    %p65 = por %p63, %p64
    %p66 = scmp.ne.s32.totalorder %s58, %s61
    %p67 = scmp.eq.s32.totalorder %s10, 0
    %p68 = por %p66, %p67
    %p69 = scmp.ne.s32.totalorder %s58, %s61
    %p70 = scmp.eq.s32.totalorder %s15, 15
    %p71 = por %p69, %p70
    %p72 = scmp.ne.s32.totalorder %s61, %s62
    %p73 = scmp.eq.s32.totalorder %s15, 0
    %p74 = por %p72, %p73
    %p75 = scmp.ne.s32.totalorder %s61, %s62
    %p76 = scmp.eq.s32.totalorder %s16, 15
    %p77 = por %p75, %p76
    %p79 = scmp.ne.s32.totalorder %s62, %s78
    %p80 = scmp.eq.s32.totalorder %s16, 0
    %p81 = por %p79, %p80
    %s83 = sadd.s32 %s82, 1
    %p86 = scmp.eq.s32.totalorder %s10, 15
    %p87 = scmp.ne.s32.totalorder %s82, %s84
    %p88 = scmp.eq.s32.totalorder %s10, 0
    %p89 = por %p87, %p88
    %p90 = scmp.ne.s32.totalorder %s82, %s84
    %p91 = scmp.eq.s32.totalorder %s15, 15
    %p92 = por %p90, %p91
    %p93 = scmp.ne.s32.totalorder %s84, %s85
    %p94 = scmp.eq.s32.totalorder %s15, 0
    %p95 = por %p93, %p94
    %p96 = scmp.ne.s32.totalorder %s84, %s85
    %p97 = scmp.eq.s32.totalorder %s16, 15
    %p98 = por %p96, %p97
    %p100 = scmp.ne.s32.totalorder %s85, %s99
    %p101 = scmp.eq.s32.totalorder %s16, 0
    %p102 = por %p100, %p101
    %s104 = sadd.s32 %s103, 1
    %p107 = scmp.eq.s32.totalorder %s10, 15
    %p108 = scmp.ne.s32.totalorder %s103, %s105
    %p109 = scmp.eq.s32.totalorder %s10, 0
    %p110 = por %p108, %p109
    %p111 = scmp.ne.s32.totalorder %s103, %s105
    %p112 = scmp.eq.s32.totalorder %s15, 15
    %p113 = por %p111, %p112
    %p114 = scmp.ne.s32.totalorder %s105, %s106
    %p115 = scmp.eq.s32.totalorder %s15, 0
    %p116 = por %p114, %p115
    %p117 = scmp.ne.s32.totalorder %s105, %s106
    %p118 = scmp.eq.s32.totalorder %s16, 15
    %p119 = por %p117, %p118
    %p121 = scmp.ne.s32.totalorder %s106, %s120
    %p122 = scmp.eq.s32.totalorder %s16, 0
    %p123 = por %p121, %p122
    %s124 = ssub.s32 %s17, %s29
    %p125 = scmp.eq.s32.totalorder %s124, 0
    %s127 = sadd.s32 %s126, 1
    %s128 = scalar_select %p125, %s126, %s127
    %p131 = pneg %p125
    %p132 = scmp.eq.s32.totalorder %s10, 15
    %p133 = por %p131, %p132
    %p134 = scmp.ne.s32.totalorder %s126, %s129
    %p135 = scmp.eq.s32.totalorder %s10, 0
    %p136 = por %p134, %p135
    %p137 = scmp.ne.s32.totalorder %s126, %s129
    %p138 = scmp.eq.s32.totalorder %s15, 15
    %p139 = por %p137, %p138
    %p140 = scmp.ne.s32.totalorder %s129, %s130
    %p141 = scmp.eq.s32.totalorder %s15, 0
    %p142 = por %p140, %p141
    %p143 = scmp.ne.s32.totalorder %s129, %s130
    %p144 = scmp.eq.s32.totalorder %s16, 15
    %p145 = por %p143, %p144
    %p147 = scmp.ne.s32.totalorder %s130, %s146
    %p148 = scmp.eq.s32.totalorder %s16, 0
    %p149 = por %p147, %p148
    %p150 = scmp.le.s32.totalorder 1, %s10
    %p151 = scmp.lt.s32.totalorder %s10, 17
    %p152 = pnand %p150, %p151
    %p153 = pneg %p152
    // Predicated region
    $region9: #{multi_head_attention_3d.3} parent=5 // pred_check
      _
    $region10: #{multi_head_attention_3d.3} parent=5 // pred_check_branch
      %155 = sbr.rel (%p152) target = $region12
    $region11: #{multi_head_attention_3d.3} parent=5 // pred_region
      %s156 = ssub.s32 %s10, 1
      // Predicated region
      $region13: #{multi_head_attention_3d.3} parent=11 // pred_check
        %p157 = pneg %p95
      $region14: #{multi_head_attention_3d.3} parent=11 // pred_check_branch
        %159 = sbr.rel (%p157) target = $region16
      $region15: #{multi_head_attention_3d.3} parent=11 // pred_region
        _
      $region16: #{multi_head_attention_3d.3} parent=11 // pred_fallthru
        _
      // Predicated region
      $region17: #{multi_head_attention_3d.3} parent=11 // pred_check
        %p160 = pneg %p116
      $region18: #{multi_head_attention_3d.3} parent=11 // pred_check_branch
        %162 = sbr.rel (%p160) target = $region20
      $region19: #{multi_head_attention_3d.3} parent=11 // pred_region
        _
      $region20: #{multi_head_attention_3d.3} parent=11 // pred_fallthru
        _
    $region12: #{multi_head_attention_3d.3} parent=5 // pred_fallthru
      _
    %p163 = scmp.lt.s32.totalorder %s10, 16
    // Predicated region
    $region21: #{multi_head_attention_3d.3} parent=5 // pred_check
      %p164 = pneg %p163
    $region22: #{multi_head_attention_3d.3} parent=5 // pred_check_branch
      %166 = sbr.rel (%p164) target = $region24
    $region23: #{multi_head_attention_3d.3} parent=5 // pred_region
      // Predicated region
      $region25: #{multi_head_attention_3d.3} parent=23 // pred_check
        %p167 = pneg %p42
      $region26: #{multi_head_attention_3d.3} parent=23 // pred_check_branch
        %169 = sbr.rel (%p167) target = $region28
      $region27: #{multi_head_attention_3d.3} parent=23 // pred_region
        %s170 = smul.u32 32, %s17
        %p171 = scmp.lt.s32.totalorder %s170, 127
        %s172 = scalar_select %p171, %s170, 127
        %s173 = smul.addr %s172, 8
        %s174 = scalar_lea.vmem %s0, %s173
        %s175 = smul.u32 32, %s17
      $region28: #{multi_head_attention_3d.3} parent=23 // pred_fallthru
        _
      // Predicated region
      $region29: #{multi_head_attention_3d.3} parent=23 // pred_check
        %p176 = pneg %p68
      $region30: #{multi_head_attention_3d.3} parent=23 // pred_check_branch
        %178 = sbr.rel (%p176) target = $region32
      $region31: #{multi_head_attention_3d.3} parent=23 // pred_region
        %s179 = smul.u32 32, %s18
        %p180 = scmp.lt.s32.totalorder %s179, 127
        %s181 = scalar_select %p180, %s179, 127
        %s182 = smul.addr %s181, 8
        %s183 = scalar_lea.vmem %s1, %s182
        %s184 = smul.u32 32, %s18
      $region32: #{multi_head_attention_3d.3} parent=23 // pred_fallthru
        _
    $region24: #{multi_head_attention_3d.3} parent=5 // pred_fallthru
      _
    %p185 = scmp.le.s32.totalorder 1, %s10
    %p186 = scmp.lt.s32.totalorder %s10, 17
    %p187 = pnand %p185, %p186
    %p188 = pneg %p187
    // Predicated region
    $region33: #{multi_head_attention_3d.3} parent=5 // pred_check
      _
    $region34: #{multi_head_attention_3d.3} parent=5 // pred_check_branch
      %190 = sbr.rel (%p187) target = $region36
    $region35: #{multi_head_attention_3d.3} parent=5 // pred_region
      %s191 = ssub.s32 %s10, 1
      %s192 = smul.u32 32, %s19
      %p193 = scmp.lt.s32.totalorder %s192, 127
      %s194 = scalar_select %p193, %s192, 127
      %s195 = smul.addr %s194, 8
      %s196 = scalar_lea.vmem %s0, %s195
      %p197 = pneg %p48
      %p198 = pneg %p45
      %s199 = smul.u32 32, %s20
      %p200 = scmp.lt.s32.totalorder %s199, 127
      %s201 = scalar_select %p200, %s199, 127
      %s202 = smul.addr %s201, 8
      %s203 = scalar_lea.vmem %s1, %s202
      %p204 = pneg %p74
      %p205 = pneg %p71
      %p206 = pneg %p95
      %p207 = pneg %p92
      %p208 = pneg %p116
      %p209 = pneg %p113
      %p210 = pneg %p142
      %p211 = pneg %p139
      %s212 = smul.u32 32, %s19
      %p213 = scmp.lt.s32.totalorder %s212, 127
      %s214 = scalar_select %p213, %s212, 127
      %s215 = smul.addr %s214, 8
      %s216 = scalar_lea.vmem %s4, %s215
      %s217 = smul.u32 32, %s19
      %p218 = scmp.lt.s32.totalorder %s217, 127
      %s219 = scalar_select %p218, %s217, 127
      %s220 = smul.addr %s219, 8
      %s221 = scalar_lea.vmem %s0, %s220
      %s222 = smul.u32 32, %s19
      %s223 = smul.u32 32, %s20
      %p224 = scmp.lt.s32.totalorder %s223, 127
      %s225 = scalar_select %p224, %s223, 127
      %s226 = smul.addr %s225, 8
      %s227 = scalar_lea.vmem %s1, %s226
      %s228 = smul.u32 32, %s20
      %s229 = smul.u32 32, %s19
      %p230 = scmp.lt.s32.totalorder %s229, 127
      %s231 = scalar_select %p230, %s229, 127
      %s232 = smul.addr %s231, 8
      %s233 = scalar_lea.vmem %s4, %s232
      %s234 = smul.u32 32, %s19
      %p235 = scmp.eq.s32.totalorder %s20, 0
      // Predicated region
      $region37: #{multi_head_attention_3d.3} parent=35 // pred_check
        %p236 = pneg %p235
      $region38: #{multi_head_attention_3d.3} parent=35 // pred_check_branch
        %238 = sbr.rel (%p236) target = $region40
      $region39: #{multi_head_attention_3d.3} parent=35 // pred_region
        %vm239 = vcmask 15360
        %240 = vst.msk [vmem:[#allocation2] sm:$0xff] %vm239, -1e+30
        %241 = vst.msk [vmem:[#allocation2 + $0x8] sm:$0xff] %vm239, -1e+30
        %242 = vst.msk [vmem:[#allocation2 + $0x10] sm:$0xff] %vm239, -1e+30
        %243 = vst.msk [vmem:[#allocation2 + $0x18] sm:$0xff] %vm239, -1e+30
        %244 = vst.msk [vmem:[#allocation2 + $0x20] sm:$0xff] %vm239, -1e+30
        %245 = vst.msk [vmem:[#allocation2 + $0x28] sm:$0xff] %vm239, -1e+30
        %246 = vst.msk [vmem:[#allocation2 + $0x30] sm:$0xff] %vm239, -1e+30
        %247 = vst.msk [vmem:[#allocation2 + $0x38] sm:$0xff] %vm239, -1e+30
        %248 = vst.msk [vmem:[#allocation2 + $0x40] sm:$0xff] %vm239, -1e+30
        %249 = vst.msk [vmem:[#allocation2 + $0x48] sm:$0xff] %vm239, -1e+30
        %250 = vst.msk [vmem:[#allocation2 + $0x50] sm:$0xff] %vm239, -1e+30
        %251 = vst.msk [vmem:[#allocation2 + $0x58] sm:$0xff] %vm239, -1e+30
        %252 = vst.msk [vmem:[#allocation2 + $0x60] sm:$0xff] %vm239, -1e+30
        %253 = vst.msk [vmem:[#allocation2 + $0x68] sm:$0xff] %vm239, -1e+30
        %254 = vst.msk [vmem:[#allocation2 + $0x70] sm:$0xff] %vm239, -1e+30
        %255 = vst.msk [vmem:[#allocation2 + $0x78] sm:$0xff] %vm239, -1e+30
        %256 = vst.msk [vmem:[#allocation2 + $0x80] sm:$0xff] %vm239, -1e+30
        %257 = vst.msk [vmem:[#allocation2 + $0x88] sm:$0xff] %vm239, -1e+30
        %258 = vst.msk [vmem:[#allocation2 + $0x90] sm:$0xff] %vm239, -1e+30
        %259 = vst.msk [vmem:[#allocation2 + $0x98] sm:$0xff] %vm239, -1e+30
        %260 = vst.msk [vmem:[#allocation2 + $0xa0] sm:$0xff] %vm239, -1e+30
        %261 = vst.msk [vmem:[#allocation2 + $0xa8] sm:$0xff] %vm239, -1e+30
        %262 = vst.msk [vmem:[#allocation2 + $0xb0] sm:$0xff] %vm239, -1e+30
        %263 = vst.msk [vmem:[#allocation2 + $0xb8] sm:$0xff] %vm239, -1e+30
        %264 = vst.msk [vmem:[#allocation2 + $0xc0] sm:$0xff] %vm239, -1e+30
        %265 = vst.msk [vmem:[#allocation2 + $0xc8] sm:$0xff] %vm239, -1e+30
        %266 = vst.msk [vmem:[#allocation2 + $0xd0] sm:$0xff] %vm239, -1e+30
        %267 = vst.msk [vmem:[#allocation2 + $0xd8] sm:$0xff] %vm239, -1e+30
        %268 = vst.msk [vmem:[#allocation2 + $0xe0] sm:$0xff] %vm239, -1e+30
        %269 = vst.msk [vmem:[#allocation2 + $0xe8] sm:$0xff] %vm239, -1e+30
        %270 = vst.msk [vmem:[#allocation2 + $0xf0] sm:$0xff] %vm239, -1e+30
        %271 = vst.msk [vmem:[#allocation2 + $0xf8] sm:$0xff] %vm239, -1e+30
        %272 = vst.msk [vmem:[#allocation3] sm:$0xff] %vm239, 0.0
        %273 = vst.msk [vmem:[#allocation3 + $0x8] sm:$0xff] %vm239, 0.0
        %274 = vst.msk [vmem:[#allocation3 + $0x10] sm:$0xff] %vm239, 0.0
        %275 = vst.msk [vmem:[#allocation3 + $0x18] sm:$0xff] %vm239, 0.0
        %276 = vst.msk [vmem:[#allocation3 + $0x20] sm:$0xff] %vm239, 0.0
        %277 = vst.msk [vmem:[#allocation3 + $0x28] sm:$0xff] %vm239, 0.0
        %278 = vst.msk [vmem:[#allocation3 + $0x30] sm:$0xff] %vm239, 0.0
        %279 = vst.msk [vmem:[#allocation3 + $0x38] sm:$0xff] %vm239, 0.0
        %280 = vst.msk [vmem:[#allocation3 + $0x40] sm:$0xff] %vm239, 0.0
        %281 = vst.msk [vmem:[#allocation3 + $0x48] sm:$0xff] %vm239, 0.0
        %282 = vst.msk [vmem:[#allocation3 + $0x50] sm:$0xff] %vm239, 0.0
        %283 = vst.msk [vmem:[#allocation3 + $0x58] sm:$0xff] %vm239, 0.0
        %284 = vst.msk [vmem:[#allocation3 + $0x60] sm:$0xff] %vm239, 0.0
        %285 = vst.msk [vmem:[#allocation3 + $0x68] sm:$0xff] %vm239, 0.0
        %286 = vst.msk [vmem:[#allocation3 + $0x70] sm:$0xff] %vm239, 0.0
        %287 = vst.msk [vmem:[#allocation3 + $0x78] sm:$0xff] %vm239, 0.0
        %288 = vst.msk [vmem:[#allocation3 + $0x80] sm:$0xff] %vm239, 0.0
        %289 = vst.msk [vmem:[#allocation3 + $0x88] sm:$0xff] %vm239, 0.0
        %290 = vst.msk [vmem:[#allocation3 + $0x90] sm:$0xff] %vm239, 0.0
        %291 = vst.msk [vmem:[#allocation3 + $0x98] sm:$0xff] %vm239, 0.0
        %292 = vst.msk [vmem:[#allocation3 + $0xa0] sm:$0xff] %vm239, 0.0
        %293 = vst.msk [vmem:[#allocation3 + $0xa8] sm:$0xff] %vm239, 0.0
        %294 = vst.msk [vmem:[#allocation3 + $0xb0] sm:$0xff] %vm239, 0.0
        %295 = vst.msk [vmem:[#allocation3 + $0xb8] sm:$0xff] %vm239, 0.0
        %296 = vst.msk [vmem:[#allocation3 + $0xc0] sm:$0xff] %vm239, 0.0
        %297 = vst.msk [vmem:[#allocation3 + $0xc8] sm:$0xff] %vm239, 0.0
        %298 = vst.msk [vmem:[#allocation3 + $0xd0] sm:$0xff] %vm239, 0.0
        %299 = vst.msk [vmem:[#allocation3 + $0xd8] sm:$0xff] %vm239, 0.0
        %300 = vst.msk [vmem:[#allocation3 + $0xe0] sm:$0xff] %vm239, 0.0
        %301 = vst.msk [vmem:[#allocation3 + $0xe8] sm:$0xff] %vm239, 0.0
        %302 = vst.msk [vmem:[#allocation3 + $0xf0] sm:$0xff] %vm239, 0.0
        %303 = vst.msk [vmem:[#allocation3 + $0xf8] sm:$0xff] %vm239, 0.0
        %vm304 = vcmask 64512
        %305 = vst.msk [vmem:[#allocation4] sm:$0xff] %vm304, 0.0
        %306 = vst.msk [vmem:[#allocation4 + $0x8] sm:$0xff] %vm304, 0.0
        %307 = vst.msk [vmem:[#allocation4 + $0x10] sm:$0xff] %vm304, 0.0
        %308 = vst.msk [vmem:[#allocation4 + $0x18] sm:$0xff] %vm304, 0.0
        %309 = vst.msk [vmem:[#allocation4 + $0x20] sm:$0xff] %vm304, 0.0
        %310 = vst.msk [vmem:[#allocation4 + $0x28] sm:$0xff] %vm304, 0.0
        %311 = vst.msk [vmem:[#allocation4 + $0x30] sm:$0xff] %vm304, 0.0
        %312 = vst.msk [vmem:[#allocation4 + $0x38] sm:$0xff] %vm304, 0.0
        %313 = vst.msk [vmem:[#allocation4 + $0x40] sm:$0xff] %vm304, 0.0
        %314 = vst.msk [vmem:[#allocation4 + $0x48] sm:$0xff] %vm304, 0.0
        %315 = vst.msk [vmem:[#allocation4 + $0x50] sm:$0xff] %vm304, 0.0
        %316 = vst.msk [vmem:[#allocation4 + $0x58] sm:$0xff] %vm304, 0.0
        %317 = vst.msk [vmem:[#allocation4 + $0x60] sm:$0xff] %vm304, 0.0
        %318 = vst.msk [vmem:[#allocation4 + $0x68] sm:$0xff] %vm304, 0.0
        %319 = vst.msk [vmem:[#allocation4 + $0x70] sm:$0xff] %vm304, 0.0
        %320 = vst.msk [vmem:[#allocation4 + $0x78] sm:$0xff] %vm304, 0.0
        %321 = vst.msk [vmem:[#allocation4 + $0x80] sm:$0xff] %vm304, 0.0
        %322 = vst.msk [vmem:[#allocation4 + $0x88] sm:$0xff] %vm304, 0.0
        %323 = vst.msk [vmem:[#allocation4 + $0x90] sm:$0xff] %vm304, 0.0
        %324 = vst.msk [vmem:[#allocation4 + $0x98] sm:$0xff] %vm304, 0.0
        %325 = vst.msk [vmem:[#allocation4 + $0xa0] sm:$0xff] %vm304, 0.0
        %326 = vst.msk [vmem:[#allocation4 + $0xa8] sm:$0xff] %vm304, 0.0
        %327 = vst.msk [vmem:[#allocation4 + $0xb0] sm:$0xff] %vm304, 0.0
        %328 = vst.msk [vmem:[#allocation4 + $0xb8] sm:$0xff] %vm304, 0.0
        %329 = vst.msk [vmem:[#allocation4 + $0xc0] sm:$0xff] %vm304, 0.0
        %330 = vst.msk [vmem:[#allocation4 + $0xc8] sm:$0xff] %vm304, 0.0
        %331 = vst.msk [vmem:[#allocation4 + $0xd0] sm:$0xff] %vm304, 0.0
        %332 = vst.msk [vmem:[#allocation4 + $0xd8] sm:$0xff] %vm304, 0.0
        %333 = vst.msk [vmem:[#allocation4 + $0xe0] sm:$0xff] %vm304, 0.0
        %334 = vst.msk [vmem:[#allocation4 + $0xe8] sm:$0xff] %vm304, 0.0
        %335 = vst.msk [vmem:[#allocation4 + $0xf0] sm:$0xff] %vm304, 0.0
        %336 = vst.msk [vmem:[#allocation4 + $0xf8] sm:$0xff] %vm304, 0.0
      $region40: #{multi_head_attention_3d.3} parent=35 // pred_fallthru
        _
      %v337 = vld [vmem:[%s221] sm:$0xff]
      %v338 = vld [vmem:[%s221 + $0x8] sm:$0xff]
      %v339 = vld [vmem:[%s221 + $0x10] sm:$0xff]
      %v340 = vld [vmem:[%s221 + $0x18] sm:$0xff]
      %v341 = vld [vmem:[%s221 + $0x20] sm:$0xff]
      %v342 = vld [vmem:[%s221 + $0x28] sm:$0xff]
      %v343 = vld [vmem:[%s221 + $0x30] sm:$0xff]
      %v344 = vld [vmem:[%s221 + $0x38] sm:$0xff]
      %v345 = vld [vmem:[%s221 + $0x40] sm:$0xff]
      %v346 = vld [vmem:[%s221 + $0x48] sm:$0xff]
      %v347 = vld [vmem:[%s221 + $0x50] sm:$0xff]
      %v348 = vld [vmem:[%s221 + $0x58] sm:$0xff]
      %v349 = vld [vmem:[%s221 + $0x60] sm:$0xff]
      %v350 = vld [vmem:[%s221 + $0x68] sm:$0xff]
      %v351 = vld [vmem:[%s221 + $0x70] sm:$0xff]
      %v352 = vld [vmem:[%s221 + $0x78] sm:$0xff]
      %v353 = vld [vmem:[%s221 + $0x80] sm:$0xff]
      %v354 = vld [vmem:[%s221 + $0x88] sm:$0xff]
      %v355 = vld [vmem:[%s221 + $0x90] sm:$0xff]
      %v356 = vld [vmem:[%s221 + $0x98] sm:$0xff]
      %v357 = vld [vmem:[%s221 + $0xa0] sm:$0xff]
      %v358 = vld [vmem:[%s221 + $0xa8] sm:$0xff]
      %v359 = vld [vmem:[%s221 + $0xb0] sm:$0xff]
      %v360 = vld [vmem:[%s221 + $0xb8] sm:$0xff]
      %v361 = vld [vmem:[%s221 + $0xc0] sm:$0xff]
      %v362 = vld [vmem:[%s221 + $0xc8] sm:$0xff]
      %v363 = vld [vmem:[%s221 + $0xd0] sm:$0xff]
      %v364 = vld [vmem:[%s221 + $0xd8] sm:$0xff]
      %v365 = vld [vmem:[%s221 + $0xe0] sm:$0xff]
      %v366 = vld [vmem:[%s221 + $0xe8] sm:$0xff]
      %v367 = vld [vmem:[%s221 + $0xf0] sm:$0xff]
      %v368 = vld [vmem:[%s221 + $0xf8] sm:$0xff]
      %v369 = vld [vmem:[%s227] sm:$0xff]
      %v370 = vld [vmem:[%s227 + $0x8] sm:$0xff]
      %v371 = vld [vmem:[%s227 + $0x10] sm:$0xff]
      %v372 = vld [vmem:[%s227 + $0x18] sm:$0xff]
      %v373 = vld [vmem:[%s227 + $0x20] sm:$0xff]
      %v374 = vld [vmem:[%s227 + $0x28] sm:$0xff]
      %v375 = vld [vmem:[%s227 + $0x30] sm:$0xff]
      %v376 = vld [vmem:[%s227 + $0x38] sm:$0xff]
      %v377 = vld [vmem:[%s227 + $0x40] sm:$0xff]
      %v378 = vld [vmem:[%s227 + $0x48] sm:$0xff]
      %v379 = vld [vmem:[%s227 + $0x50] sm:$0xff]
      %v380 = vld [vmem:[%s227 + $0x58] sm:$0xff]
      %v381 = vld [vmem:[%s227 + $0x60] sm:$0xff]
      %v382 = vld [vmem:[%s227 + $0x68] sm:$0xff]
      %v383 = vld [vmem:[%s227 + $0x70] sm:$0xff]
      %v384 = vld [vmem:[%s227 + $0x78] sm:$0xff]
      %v385 = vld [vmem:[%s227 + $0x80] sm:$0xff]
      %v386 = vld [vmem:[%s227 + $0x88] sm:$0xff]
      %v387 = vld [vmem:[%s227 + $0x90] sm:$0xff]
      %v388 = vld [vmem:[%s227 + $0x98] sm:$0xff]
      %v389 = vld [vmem:[%s227 + $0xa0] sm:$0xff]
      %v390 = vld [vmem:[%s227 + $0xa8] sm:$0xff]
      %v391 = vld [vmem:[%s227 + $0xb0] sm:$0xff]
      %v392 = vld [vmem:[%s227 + $0xb8] sm:$0xff]
      %v393 = vld [vmem:[%s227 + $0xc0] sm:$0xff]
      %v394 = vld [vmem:[%s227 + $0xc8] sm:$0xff]
      %v395 = vld [vmem:[%s227 + $0xd0] sm:$0xff]
      %v396 = vld [vmem:[%s227 + $0xd8] sm:$0xff]
      %v397 = vld [vmem:[%s227 + $0xe0] sm:$0xff]
      %v398 = vld [vmem:[%s227 + $0xe8] sm:$0xff]
      %v399 = vld [vmem:[%s227 + $0xf0] sm:$0xff]
      %v400 = vld [vmem:[%s227 + $0xf8] sm:$0xff]
      %433 = vrot.lane.b32.xlu0 %v369, 120
      %v434 = vpop.permute.xlu0 %433
      %435 = vrot.lane.b32.xlu0 %v370, 120
      %v436 = vpop.permute.xlu0 %435
      %437 = vrot.lane.b32.xlu0 %v371, 120
      %v438 = vpop.permute.xlu0 %437
      %439 = vrot.lane.b32.xlu0 %v372, 120
      %v440 = vpop.permute.xlu0 %439
      %441 = vrot.lane.b32.xlu0 %v373, 120
      %v442 = vpop.permute.xlu0 %441
      %443 = vrot.lane.b32.xlu0 %v374, 120
      %v444 = vpop.permute.xlu0 %443
      %445 = vrot.lane.b32.xlu0 %v375, 120
      %v446 = vpop.permute.xlu0 %445
      %447 = vrot.lane.b32.xlu0 %v376, 120
      %v448 = vpop.permute.xlu0 %447
      %449 = vrot.lane.b32.xlu0 %v377, 120
      %v450 = vpop.permute.xlu0 %449
      %451 = vrot.lane.b32.xlu0 %v378, 120
      %v452 = vpop.permute.xlu0 %451
      %453 = vrot.lane.b32.xlu0 %v379, 120
      %v454 = vpop.permute.xlu0 %453
      %455 = vrot.lane.b32.xlu0 %v380, 120
      %v456 = vpop.permute.xlu0 %455
      %457 = vrot.lane.b32.xlu0 %v381, 120
      %v458 = vpop.permute.xlu0 %457
      %459 = vrot.lane.b32.xlu0 %v382, 120
      %v460 = vpop.permute.xlu0 %459
      %461 = vrot.lane.b32.xlu0 %v383, 120
      %v462 = vpop.permute.xlu0 %461
      %463 = vrot.lane.b32.xlu0 %v384, 120
      %v464 = vpop.permute.xlu0 %463
      %465 = vrot.lane.b32.xlu0 %v385, 120
      %v466 = vpop.permute.xlu0 %465
      %467 = vrot.lane.b32.xlu0 %v386, 120
      %v468 = vpop.permute.xlu0 %467
      %469 = vrot.lane.b32.xlu0 %v387, 120
      %v470 = vpop.permute.xlu0 %469
      %471 = vrot.lane.b32.xlu0 %v388, 120
      %v472 = vpop.permute.xlu0 %471
      %473 = vrot.lane.b32.xlu0 %v389, 120
      %v474 = vpop.permute.xlu0 %473
      %475 = vrot.lane.b32.xlu0 %v390, 120
      %v476 = vpop.permute.xlu0 %475
      %477 = vrot.lane.b32.xlu0 %v391, 120
      %v478 = vpop.permute.xlu0 %477
      %479 = vrot.lane.b32.xlu0 %v392, 120
      %v480 = vpop.permute.xlu0 %479
      %481 = vrot.lane.b32.xlu0 %v393, 120
      %v482 = vpop.permute.xlu0 %481
      %483 = vrot.lane.b32.xlu0 %v394, 120
      %v484 = vpop.permute.xlu0 %483
      %485 = vrot.lane.b32.xlu0 %v395, 120
      %v486 = vpop.permute.xlu0 %485
      %487 = vrot.lane.b32.xlu0 %v396, 120
      %v488 = vpop.permute.xlu0 %487
      %489 = vrot.lane.b32.xlu0 %v397, 120
      %v490 = vpop.permute.xlu0 %489
      %491 = vrot.lane.b32.xlu0 %v398, 120
      %v492 = vpop.permute.xlu0 %491
      %493 = vrot.lane.b32.xlu0 %v399, 120
      %v494 = vpop.permute.xlu0 %493
      %495 = vrot.lane.b32.xlu0 %v400, 120
      %v496 = vpop.permute.xlu0 %495
      %vm497 = vcmask 31744
      %v499 = vsel %vm497, %v337, 0
      %v502 = vsel %vm497, %v338, 0
      %v505 = vsel %vm497, %v339, 0
      %v508 = vsel %vm497, %v340, 0
      %v511 = vsel %vm497, %v341, 0
      %v514 = vsel %vm497, %v342, 0
      %v517 = vsel %vm497, %v343, 0
      %v520 = vsel %vm497, %v344, 0
      %v523 = vsel %vm497, %v345, 0
      %v526 = vsel %vm497, %v346, 0
      %v529 = vsel %vm497, %v347, 0
      %v532 = vsel %vm497, %v348, 0
      %v535 = vsel %vm497, %v349, 0
      %v538 = vsel %vm497, %v350, 0
      %v541 = vsel %vm497, %v351, 0
      %v544 = vsel %vm497, %v352, 0
      %v547 = vsel %vm497, %v353, 0
      %v550 = vsel %vm497, %v354, 0
      %v553 = vsel %vm497, %v355, 0
      %v556 = vsel %vm497, %v356, 0
      %v559 = vsel %vm497, %v357, 0
      %v562 = vsel %vm497, %v358, 0
      %v565 = vsel %vm497, %v359, 0
      %v568 = vsel %vm497, %v360, 0
      %v571 = vsel %vm497, %v361, 0
      %v574 = vsel %vm497, %v362, 0
      %v577 = vsel %vm497, %v363, 0
      %v580 = vsel %vm497, %v364, 0
      %v583 = vsel %vm497, %v365, 0
      %v586 = vsel %vm497, %v366, 0
      %v589 = vsel %vm497, %v367, 0
      %v592 = vsel %vm497, %v368, 0
      %v594 = vsel %vm497, %v434, 0
      %v596 = vsel %vm497, %v436, 0
      %v598 = vsel %vm497, %v438, 0
      %v600 = vsel %vm497, %v440, 0
      %v602 = vsel %vm497, %v442, 0
      %v604 = vsel %vm497, %v444, 0
      %v606 = vsel %vm497, %v446, 0
      %v608 = vsel %vm497, %v448, 0
      %v610 = vsel %vm497, %v450, 0
      %v612 = vsel %vm497, %v452, 0
      %v614 = vsel %vm497, %v454, 0
      %v616 = vsel %vm497, %v456, 0
      %v618 = vsel %vm497, %v458, 0
      %v620 = vsel %vm497, %v460, 0
      %v622 = vsel %vm497, %v462, 0
      %v624 = vsel %vm497, %v464, 0
      %v626 = vsel %vm497, %v466, 0
      %v628 = vsel %vm497, %v468, 0
      %v630 = vsel %vm497, %v470, 0
      %v632 = vsel %vm497, %v472, 0
      %v634 = vsel %vm497, %v474, 0
      %v636 = vsel %vm497, %v476, 0
      %v638 = vsel %vm497, %v478, 0
      %v640 = vsel %vm497, %v480, 0
      %v642 = vsel %vm497, %v482, 0
      %v644 = vsel %vm497, %v484, 0
      %v646 = vsel %vm497, %v486, 0
      %v648 = vsel %vm497, %v488, 0
      %v650 = vsel %vm497, %v490, 0
      %v652 = vsel %vm497, %v492, 0
      %v654 = vsel %vm497, %v494, 0
      %v656 = vsel %vm497, %v496, 0
      %658 = vmatprep.subr.mxu0 0.0
      %659 = vmatpush1.xpose.msra.mxu0 %v624
      %660 = vmatprep.subr.mxu0 0.0
      %661 = vmatpush1.xpose.msra.mxu0 %v622
      %662 = vmatprep.subr.mxu0 0.0
      %663 = vmatpush1.xpose.msra.mxu0 %v620
      %664 = vmatprep.subr.mxu0 0.0
      %665 = vmatpush1.xpose.msra.mxu0 %v618
      %666 = vmatprep.subr.mxu0 0.0
      %667 = vmatpush1.xpose.msra.mxu0 %v616
      %668 = vmatprep.subr.mxu0 0.0
      %669 = vmatpush1.xpose.msra.mxu0 %v614
      %670 = vmatprep.subr.mxu0 0.0
      %671 = vmatpush1.xpose.msra.mxu0 %v612
      %672 = vmatprep.subr.mxu0 0.0
      %673 = vmatpush1.xpose.msra.mxu0 %v610
      %674 = vmatprep.subr.mxu0 0.0
      %675 = vmatpush1.xpose.msra.mxu0 %v608
      %676 = vmatprep.subr.mxu0 0.0
      %677 = vmatpush1.xpose.msra.mxu0 %v606
      %678 = vmatprep.subr.mxu0 0.0
      %679 = vmatpush1.xpose.msra.mxu0 %v604
      %680 = vmatprep.subr.mxu0 0.0
      %681 = vmatpush1.xpose.msra.mxu0 %v602
      %682 = vmatprep.subr.mxu0 0.0
      %683 = vmatpush1.xpose.msra.mxu0 %v600
      %684 = vmatprep.subr.mxu0 0.0
      %685 = vmatpush1.xpose.msra.mxu0 %v598
      %686 = vmatprep.subr.mxu0 0.0
      %687 = vmatpush1.xpose.msra.mxu0 %v596
      %688 = vmatprep.subr.mxu0 0.0
      %689 = vmatpush1.xpose.msra.mxu0 %v594
      %690 = vmatprep.subr.mxu0 0.0
      %691 = vmatpush2.xpose.msra.mxu0 %v656
      %692 = vmatprep.subr.mxu0 0.0
      %693 = vmatpush2.xpose.msra.mxu0 %v654
      %694 = vmatprep.subr.mxu0 0.0
      %695 = vmatpush2.xpose.msra.mxu0 %v652
      %696 = vmatprep.subr.mxu0 0.0
      %697 = vmatpush2.xpose.msra.mxu0 %v650
      %698 = vmatprep.subr.mxu0 0.0
      %699 = vmatpush2.xpose.msra.mxu0 %v648
      %700 = vmatprep.subr.mxu0 0.0
      %701 = vmatpush2.xpose.msra.mxu0 %v646
      %702 = vmatprep.subr.mxu0 0.0
      %703 = vmatpush2.xpose.msra.mxu0 %v644
      %704 = vmatprep.subr.mxu0 0.0
      %705 = vmatpush2.xpose.msra.mxu0 %v642
      %706 = vmatprep.subr.mxu0 0.0
      %707 = vmatpush2.xpose.msra.mxu0 %v640
      %708 = vmatprep.subr.mxu0 0.0
      %709 = vmatpush2.xpose.msra.mxu0 %v638
      %710 = vmatprep.subr.mxu0 0.0
      %711 = vmatpush2.xpose.msra.mxu0 %v636
      %712 = vmatprep.subr.mxu0 0.0
      %713 = vmatpush2.xpose.msra.mxu0 %v634
      %714 = vmatprep.subr.mxu0 0.0
      %715 = vmatpush2.xpose.msra.mxu0 %v632
      %716 = vmatprep.subr.mxu0 0.0
      %717 = vmatpush2.xpose.msra.mxu0 %v630
      %718 = vmatprep.subr.mxu0 0.0
      %719 = vmatpush2.xpose.msra.mxu0 %v628
      %720 = vmatprep.subr.mxu0 0.0
      %721 = vmatpush2.xpose.msra.mxu0 %v626
      %722 = vmatprep.mubr.f32.mxu0 0.0
      %723 = vmatmul.mubr.f32.gmra.mxu0 %v499
      %v724 = vpop.f32.mrf.mxu0
      %v725 = vadd.f32 0.0, %v724
      %v726 = vpop.f32.mrf.mxu0
      %v727 = vadd.f32 0.0, %v726
      %728 = vmatprep.mubr.f32.mxu0 0.0
      %729 = vmatmul.mubr.f32.gmra.mxu0 %v502
      %v730 = vpop.f32.mrf.mxu0
      %v731 = vadd.f32 0.0, %v730
      %v732 = vpop.f32.mrf.mxu0
      %v733 = vadd.f32 0.0, %v732
      %734 = vmatprep.mubr.f32.mxu0 0.0
      %735 = vmatmul.mubr.f32.gmra.mxu0 %v505
      %v736 = vpop.f32.mrf.mxu0
      %v737 = vadd.f32 0.0, %v736
      %v738 = vpop.f32.mrf.mxu0
      %v739 = vadd.f32 0.0, %v738
      %740 = vmatprep.mubr.f32.mxu0 0.0
      %741 = vmatmul.mubr.f32.gmra.mxu0 %v508
      %v742 = vpop.f32.mrf.mxu0
      %v743 = vadd.f32 0.0, %v742
      %v744 = vpop.f32.mrf.mxu0
      %v745 = vadd.f32 0.0, %v744
      %746 = vmatprep.mubr.f32.mxu0 0.0
      %747 = vmatmul.mubr.f32.gmra.mxu0 %v511
      %v748 = vpop.f32.mrf.mxu0
      %v749 = vadd.f32 0.0, %v748
      %v750 = vpop.f32.mrf.mxu0
      %v751 = vadd.f32 0.0, %v750
      %752 = vmatprep.mubr.f32.mxu0 0.0
      %753 = vmatmul.mubr.f32.gmra.mxu0 %v514
      %v754 = vpop.f32.mrf.mxu0
      %v755 = vadd.f32 0.0, %v754
      %v756 = vpop.f32.mrf.mxu0
      %v757 = vadd.f32 0.0, %v756
      %758 = vmatprep.mubr.f32.mxu0 0.0
      %759 = vmatmul.mubr.f32.gmra.mxu0 %v517
      %v760 = vpop.f32.mrf.mxu0
      %v761 = vadd.f32 0.0, %v760
      %v762 = vpop.f32.mrf.mxu0
      %v763 = vadd.f32 0.0, %v762
      %764 = vmatprep.mubr.f32.mxu0 0.0
      %765 = vmatmul.mubr.f32.gmra.mxu0 %v520
      %v766 = vpop.f32.mrf.mxu0
      %v767 = vadd.f32 0.0, %v766
      %v768 = vpop.f32.mrf.mxu0
      %v769 = vadd.f32 0.0, %v768
      %770 = vmatprep.mubr.f32.mxu0 0.0
      %771 = vmatmul.mubr.f32.gmra.mxu0 %v523
      %v772 = vpop.f32.mrf.mxu0
      %v773 = vadd.f32 0.0, %v772
      %v774 = vpop.f32.mrf.mxu0
      %v775 = vadd.f32 0.0, %v774
      %776 = vmatprep.mubr.f32.mxu0 0.0
      %777 = vmatmul.mubr.f32.gmra.mxu0 %v526
      %v778 = vpop.f32.mrf.mxu0
      %v779 = vadd.f32 0.0, %v778
      %v780 = vpop.f32.mrf.mxu0
      %v781 = vadd.f32 0.0, %v780
      %782 = vmatprep.mubr.f32.mxu0 0.0
      %783 = vmatmul.mubr.f32.gmra.mxu0 %v529
      %v784 = vpop.f32.mrf.mxu0
      %v785 = vadd.f32 0.0, %v784
      %v786 = vpop.f32.mrf.mxu0
      %v787 = vadd.f32 0.0, %v786
      %788 = vmatprep.mubr.f32.mxu0 0.0
      %789 = vmatmul.mubr.f32.gmra.mxu0 %v532
      %v790 = vpop.f32.mrf.mxu0
      %v791 = vadd.f32 0.0, %v790
      %v792 = vpop.f32.mrf.mxu0
      %v793 = vadd.f32 0.0, %v792
      %794 = vmatprep.mubr.f32.mxu0 0.0
      %795 = vmatmul.mubr.f32.gmra.mxu0 %v535
      %v796 = vpop.f32.mrf.mxu0
      %v797 = vadd.f32 0.0, %v796
      %v798 = vpop.f32.mrf.mxu0
      %v799 = vadd.f32 0.0, %v798
      %800 = vmatprep.mubr.f32.mxu0 0.0
      %801 = vmatmul.mubr.f32.gmra.mxu0 %v538
      %v802 = vpop.f32.mrf.mxu0
      %v803 = vadd.f32 0.0, %v802
      %v804 = vpop.f32.mrf.mxu0
      %v805 = vadd.f32 0.0, %v804
      %806 = vmatprep.mubr.f32.mxu0 0.0
      %807 = vmatmul.mubr.f32.gmra.mxu0 %v541
      %v808 = vpop.f32.mrf.mxu0
      %v809 = vadd.f32 0.0, %v808
      %v810 = vpop.f32.mrf.mxu0
      %v811 = vadd.f32 0.0, %v810
      %812 = vmatprep.mubr.f32.mxu0 0.0
      %813 = vmatmul.mubr.f32.gmra.mxu0 %v544
      %v814 = vpop.f32.mrf.mxu0
      %v815 = vadd.f32 0.0, %v814
      %v816 = vpop.f32.mrf.mxu0
      %v817 = vadd.f32 0.0, %v816
      %818 = vmatprep.mubr.f32.mxu0 0.0
      %819 = vmatmul.mubr.f32.gmra.mxu0 %v547
      %v820 = vpop.f32.mrf.mxu0
      %v821 = vadd.f32 0.0, %v820
      %v822 = vpop.f32.mrf.mxu0
      %v823 = vadd.f32 0.0, %v822
      %824 = vmatprep.mubr.f32.mxu0 0.0
      %825 = vmatmul.mubr.f32.gmra.mxu0 %v550
      %v826 = vpop.f32.mrf.mxu0
      %v827 = vadd.f32 0.0, %v826
      %v828 = vpop.f32.mrf.mxu0
      %v829 = vadd.f32 0.0, %v828
      %830 = vmatprep.mubr.f32.mxu0 0.0
      %831 = vmatmul.mubr.f32.gmra.mxu0 %v553
      %v832 = vpop.f32.mrf.mxu0
      %v833 = vadd.f32 0.0, %v832
      %v834 = vpop.f32.mrf.mxu0
      %v835 = vadd.f32 0.0, %v834
      %836 = vmatprep.mubr.f32.mxu0 0.0
      %837 = vmatmul.mubr.f32.gmra.mxu0 %v556
      %v838 = vpop.f32.mrf.mxu0
      %v839 = vadd.f32 0.0, %v838
      %v840 = vpop.f32.mrf.mxu0
      %v841 = vadd.f32 0.0, %v840
      %842 = vmatprep.mubr.f32.mxu0 0.0
      %843 = vmatmul.mubr.f32.gmra.mxu0 %v559
      %v844 = vpop.f32.mrf.mxu0
      %v845 = vadd.f32 0.0, %v844
      %v846 = vpop.f32.mrf.mxu0
      %v847 = vadd.f32 0.0, %v846
      %848 = vmatprep.mubr.f32.mxu0 0.0
      %849 = vmatmul.mubr.f32.gmra.mxu0 %v562
      %v850 = vpop.f32.mrf.mxu0
      %v851 = vadd.f32 0.0, %v850
      %v852 = vpop.f32.mrf.mxu0
      %v853 = vadd.f32 0.0, %v852
      %854 = vmatprep.mubr.f32.mxu0 0.0
      %855 = vmatmul.mubr.f32.gmra.mxu0 %v565
      %v856 = vpop.f32.mrf.mxu0
      %v857 = vadd.f32 0.0, %v856
      %v858 = vpop.f32.mrf.mxu0
      %v859 = vadd.f32 0.0, %v858
      %860 = vmatprep.mubr.f32.mxu0 0.0
      %861 = vmatmul.mubr.f32.gmra.mxu0 %v568
      %v862 = vpop.f32.mrf.mxu0
      %v863 = vadd.f32 0.0, %v862
      %v864 = vpop.f32.mrf.mxu0
      %v865 = vadd.f32 0.0, %v864
      %866 = vmatprep.mubr.f32.mxu0 0.0
      %867 = vmatmul.mubr.f32.gmra.mxu0 %v571
      %v868 = vpop.f32.mrf.mxu0
      %v869 = vadd.f32 0.0, %v868
      %v870 = vpop.f32.mrf.mxu0
      %v871 = vadd.f32 0.0, %v870
      %872 = vmatprep.mubr.f32.mxu0 0.0
      %873 = vmatmul.mubr.f32.gmra.mxu0 %v574
      %v874 = vpop.f32.mrf.mxu0
      %v875 = vadd.f32 0.0, %v874
      %v876 = vpop.f32.mrf.mxu0
      %v877 = vadd.f32 0.0, %v876
      %878 = vmatprep.mubr.f32.mxu0 0.0
      %879 = vmatmul.mubr.f32.gmra.mxu0 %v577
      %v880 = vpop.f32.mrf.mxu0
      %v881 = vadd.f32 0.0, %v880
      %v882 = vpop.f32.mrf.mxu0
      %v883 = vadd.f32 0.0, %v882
      %884 = vmatprep.mubr.f32.mxu0 0.0
      %885 = vmatmul.mubr.f32.gmra.mxu0 %v580
      %v886 = vpop.f32.mrf.mxu0
      %v887 = vadd.f32 0.0, %v886
      %v888 = vpop.f32.mrf.mxu0
      %v889 = vadd.f32 0.0, %v888
      %890 = vmatprep.mubr.f32.mxu0 0.0
      %891 = vmatmul.mubr.f32.gmra.mxu0 %v583
      %v892 = vpop.f32.mrf.mxu0
      %v893 = vadd.f32 0.0, %v892
      %v894 = vpop.f32.mrf.mxu0
      %v895 = vadd.f32 0.0, %v894
      %896 = vmatprep.mubr.f32.mxu0 0.0
      %897 = vmatmul.mubr.f32.gmra.mxu0 %v586
      %v898 = vpop.f32.mrf.mxu0
      %v899 = vadd.f32 0.0, %v898
      %v900 = vpop.f32.mrf.mxu0
      %v901 = vadd.f32 0.0, %v900
      %902 = vmatprep.mubr.f32.mxu0 0.0
      %903 = vmatmul.mubr.f32.gmra.mxu0 %v589
      %v904 = vpop.f32.mrf.mxu0
      %v905 = vadd.f32 0.0, %v904
      %v906 = vpop.f32.mrf.mxu0
      %v907 = vadd.f32 0.0, %v906
      %908 = vmatprep.mubr.f32.mxu0 0.0
      %909 = vmatmul.mubr.f32.gmra.mxu0 %v592
      %v910 = vpop.f32.mrf.mxu0
      %v911 = vadd.f32 0.0, %v910
      %v912 = vpop.f32.mrf.mxu0
      %v913 = vadd.f32 0.0, %v912
      %914 = vdwg.mxu0
      %v915 = vld [vmem:[#allocation2] sm:$0xff]
      %v916 = vld [vmem:[#allocation2 + $0x8] sm:$0xff]
      %v917 = vld [vmem:[#allocation2 + $0x10] sm:$0xff]
      %v918 = vld [vmem:[#allocation2 + $0x18] sm:$0xff]
      %v919 = vld [vmem:[#allocation2 + $0x20] sm:$0xff]
      %v920 = vld [vmem:[#allocation2 + $0x28] sm:$0xff]
      %v921 = vld [vmem:[#allocation2 + $0x30] sm:$0xff]
      %v922 = vld [vmem:[#allocation2 + $0x38] sm:$0xff]
      %v923 = vld [vmem:[#allocation2 + $0x40] sm:$0xff]
      %v924 = vld [vmem:[#allocation2 + $0x48] sm:$0xff]
      %v925 = vld [vmem:[#allocation2 + $0x50] sm:$0xff]
      %v926 = vld [vmem:[#allocation2 + $0x58] sm:$0xff]
      %v927 = vld [vmem:[#allocation2 + $0x60] sm:$0xff]
      %v928 = vld [vmem:[#allocation2 + $0x68] sm:$0xff]
      %v929 = vld [vmem:[#allocation2 + $0x70] sm:$0xff]
      %v930 = vld [vmem:[#allocation2 + $0x78] sm:$0xff]
      %v931 = vld [vmem:[#allocation2 + $0x80] sm:$0xff]
      %v932 = vld [vmem:[#allocation2 + $0x88] sm:$0xff]
      %v933 = vld [vmem:[#allocation2 + $0x90] sm:$0xff]
      %v934 = vld [vmem:[#allocation2 + $0x98] sm:$0xff]
      %v935 = vld [vmem:[#allocation2 + $0xa0] sm:$0xff]
      %v936 = vld [vmem:[#allocation2 + $0xa8] sm:$0xff]
      %v937 = vld [vmem:[#allocation2 + $0xb0] sm:$0xff]
      %v938 = vld [vmem:[#allocation2 + $0xb8] sm:$0xff]
      %v939 = vld [vmem:[#allocation2 + $0xc0] sm:$0xff]
      %v940 = vld [vmem:[#allocation2 + $0xc8] sm:$0xff]
      %v941 = vld [vmem:[#allocation2 + $0xd0] sm:$0xff]
      %v942 = vld [vmem:[#allocation2 + $0xd8] sm:$0xff]
      %v943 = vld [vmem:[#allocation2 + $0xe0] sm:$0xff]
      %v944 = vld [vmem:[#allocation2 + $0xe8] sm:$0xff]
      %v945 = vld [vmem:[#allocation2 + $0xf0] sm:$0xff]
      %v946 = vld [vmem:[#allocation2 + $0xf8] sm:$0xff]
      %v947 = vmax.f32 %v725, %v727
      %948 = vmax.xlane.f32.xlu0 %v947
      %v949 = vpop.xlane.xlu0 %948
      %v950 = vmax.f32 %v731, %v733
      %951 = vmax.xlane.f32.xlu0 %v950
      %v952 = vpop.xlane.xlu0 %951
      %v953 = vmax.f32 %v737, %v739
      %954 = vmax.xlane.f32.xlu0 %v953
      %v955 = vpop.xlane.xlu0 %954
      %v956 = vmax.f32 %v743, %v745
      %957 = vmax.xlane.f32.xlu0 %v956
      %v958 = vpop.xlane.xlu0 %957
      %v959 = vmax.f32 %v749, %v751
      %960 = vmax.xlane.f32.xlu0 %v959
      %v961 = vpop.xlane.xlu0 %960
      %v962 = vmax.f32 %v755, %v757
      %963 = vmax.xlane.f32.xlu0 %v962
      %v964 = vpop.xlane.xlu0 %963
      %v965 = vmax.f32 %v761, %v763
      %966 = vmax.xlane.f32.xlu0 %v965
      %v967 = vpop.xlane.xlu0 %966
      %v968 = vmax.f32 %v767, %v769
      %969 = vmax.xlane.f32.xlu0 %v968
      %v970 = vpop.xlane.xlu0 %969
      %v971 = vmax.f32 %v773, %v775
      %972 = vmax.xlane.f32.xlu0 %v971
      %v973 = vpop.xlane.xlu0 %972
      %v974 = vmax.f32 %v779, %v781
      %975 = vmax.xlane.f32.xlu0 %v974
      %v976 = vpop.xlane.xlu0 %975
      %v977 = vmax.f32 %v785, %v787
      %978 = vmax.xlane.f32.xlu0 %v977
      %v979 = vpop.xlane.xlu0 %978
      %v980 = vmax.f32 %v791, %v793
      %981 = vmax.xlane.f32.xlu0 %v980
      %v982 = vpop.xlane.xlu0 %981
      %v983 = vmax.f32 %v797, %v799
      %984 = vmax.xlane.f32.xlu0 %v983
      %v985 = vpop.xlane.xlu0 %984
      %v986 = vmax.f32 %v803, %v805
      %987 = vmax.xlane.f32.xlu0 %v986
      %v988 = vpop.xlane.xlu0 %987
      %v989 = vmax.f32 %v809, %v811
      %990 = vmax.xlane.f32.xlu0 %v989
      %v991 = vpop.xlane.xlu0 %990
      %v992 = vmax.f32 %v815, %v817
      %993 = vmax.xlane.f32.xlu0 %v992
      %v994 = vpop.xlane.xlu0 %993
      %v995 = vmax.f32 %v821, %v823
      %996 = vmax.xlane.f32.xlu0 %v995
      %v997 = vpop.xlane.xlu0 %996
      %v998 = vmax.f32 %v827, %v829
      %999 = vmax.xlane.f32.xlu0 %v998
      %v1000 = vpop.xlane.xlu0 %999
      %v1001 = vmax.f32 %v833, %v835
      %1002 = vmax.xlane.f32.xlu0 %v1001
      %v1003 = vpop.xlane.xlu0 %1002
      %v1004 = vmax.f32 %v839, %v841
      %1005 = vmax.xlane.f32.xlu0 %v1004
      %v1006 = vpop.xlane.xlu0 %1005
      %v1007 = vmax.f32 %v845, %v847
      %1008 = vmax.xlane.f32.xlu0 %v1007
      %v1009 = vpop.xlane.xlu0 %1008
      %v1010 = vmax.f32 %v851, %v853
      %1011 = vmax.xlane.f32.xlu0 %v1010
      %v1012 = vpop.xlane.xlu0 %1011
      %v1013 = vmax.f32 %v857, %v859
      %1014 = vmax.xlane.f32.xlu0 %v1013
      %v1015 = vpop.xlane.xlu0 %1014
      %v1016 = vmax.f32 %v863, %v865
      %1017 = vmax.xlane.f32.xlu0 %v1016
      %v1018 = vpop.xlane.xlu0 %1017
      %v1019 = vmax.f32 %v869, %v871
      %1020 = vmax.xlane.f32.xlu0 %v1019
      %v1021 = vpop.xlane.xlu0 %1020
      %v1022 = vmax.f32 %v875, %v877
      %1023 = vmax.xlane.f32.xlu0 %v1022
      %v1024 = vpop.xlane.xlu0 %1023
      %v1025 = vmax.f32 %v881, %v883
      %1026 = vmax.xlane.f32.xlu0 %v1025
      %v1027 = vpop.xlane.xlu0 %1026
      %v1028 = vmax.f32 %v887, %v889
      %1029 = vmax.xlane.f32.xlu0 %v1028
      %v1030 = vpop.xlane.xlu0 %1029
      %v1031 = vmax.f32 %v893, %v895
      %1032 = vmax.xlane.f32.xlu0 %v1031
      %v1033 = vpop.xlane.xlu0 %1032
      %v1034 = vmax.f32 %v899, %v901
      %1035 = vmax.xlane.f32.xlu0 %v1034
      %v1036 = vpop.xlane.xlu0 %1035
      %v1037 = vmax.f32 %v905, %v907
      %1038 = vmax.xlane.f32.xlu0 %v1037
      %v1039 = vpop.xlane.xlu0 %1038
      %v1040 = vmax.f32 %v911, %v913
      %1041 = vmax.xlane.f32.xlu0 %v1040
      %v1042 = vpop.xlane.xlu0 %1041
      %v1043 = vmax.f32 %v915, %v949
      %v1044 = vmax.f32 %v916, %v952
      %v1045 = vmax.f32 %v917, %v955
      %v1046 = vmax.f32 %v918, %v958
      %v1047 = vmax.f32 %v919, %v961
      %v1048 = vmax.f32 %v920, %v964
      %v1049 = vmax.f32 %v921, %v967
      %v1050 = vmax.f32 %v922, %v970
      %v1051 = vmax.f32 %v923, %v973
      %v1052 = vmax.f32 %v924, %v976
      %v1053 = vmax.f32 %v925, %v979
      %v1054 = vmax.f32 %v926, %v982
      %v1055 = vmax.f32 %v927, %v985
      %v1056 = vmax.f32 %v928, %v988
      %v1057 = vmax.f32 %v929, %v991
      %v1058 = vmax.f32 %v930, %v994
      %v1059 = vmax.f32 %v931, %v997
      %v1060 = vmax.f32 %v932, %v1000
      %v1061 = vmax.f32 %v933, %v1003
      %v1062 = vmax.f32 %v934, %v1006
      %v1063 = vmax.f32 %v935, %v1009
      %v1064 = vmax.f32 %v936, %v1012
      %v1065 = vmax.f32 %v937, %v1015
      %v1066 = vmax.f32 %v938, %v1018
      %v1067 = vmax.f32 %v939, %v1021
      %v1068 = vmax.f32 %v940, %v1024
      %v1069 = vmax.f32 %v941, %v1027
      %v1070 = vmax.f32 %v942, %v1030
      %v1071 = vmax.f32 %v943, %v1033
      %v1072 = vmax.f32 %v944, %v1036
      %v1073 = vmax.f32 %v945, %v1039
      %v1074 = vmax.f32 %v946, %v1042
      %v1075 = vsub.f32 %v915, %v1043
      %v1076 = vsub.f32 %v916, %v1044
      %v1077 = vsub.f32 %v917, %v1045
      %v1078 = vsub.f32 %v918, %v1046
      %v1079 = vsub.f32 %v919, %v1047
      %v1080 = vsub.f32 %v920, %v1048
      %v1081 = vsub.f32 %v921, %v1049
      %v1082 = vsub.f32 %v922, %v1050
      %v1083 = vsub.f32 %v923, %v1051
      %v1084 = vsub.f32 %v924, %v1052
      %v1085 = vsub.f32 %v925, %v1053
      %v1086 = vsub.f32 %v926, %v1054
      %v1087 = vsub.f32 %v927, %v1055
      %v1088 = vsub.f32 %v928, %v1056
      %v1089 = vsub.f32 %v929, %v1057
      %v1090 = vsub.f32 %v930, %v1058
      %v1091 = vsub.f32 %v931, %v1059
      %v1092 = vsub.f32 %v932, %v1060
      %v1093 = vsub.f32 %v933, %v1061
      %v1094 = vsub.f32 %v934, %v1062
      %v1095 = vsub.f32 %v935, %v1063
      %v1096 = vsub.f32 %v936, %v1064
      %v1097 = vsub.f32 %v937, %v1065
      %v1098 = vsub.f32 %v938, %v1066
      %v1099 = vsub.f32 %v939, %v1067
      %v1100 = vsub.f32 %v940, %v1068
      %v1101 = vsub.f32 %v941, %v1069
      %v1102 = vsub.f32 %v942, %v1070
      %v1103 = vsub.f32 %v943, %v1071
      %v1104 = vsub.f32 %v944, %v1072
      %v1105 = vsub.f32 %v945, %v1073
      %v1106 = vsub.f32 %v946, %v1074
      %v1107 = vmul.f32 %v1075, 1.442695
      %v1108 = vpow.pop %v1107
      %v1109 = vmul.f32 %v1076, 1.442695
      %v1110 = vpow.pop %v1109
      %v1111 = vmul.f32 %v1077, 1.442695
      %v1112 = vpow.pop %v1111
      %v1113 = vmul.f32 %v1078, 1.442695
      %v1114 = vpow.pop %v1113
      %v1115 = vmul.f32 %v1079, 1.442695
      %v1116 = vpow.pop %v1115
      %v1117 = vmul.f32 %v1080, 1.442695
      %v1118 = vpow.pop %v1117
      %v1119 = vmul.f32 %v1081, 1.442695
      %v1120 = vpow.pop %v1119
      %v1121 = vmul.f32 %v1082, 1.442695
      %v1122 = vpow.pop %v1121
      %v1123 = vmul.f32 %v1083, 1.442695
      %v1124 = vpow.pop %v1123
      %v1125 = vmul.f32 %v1084, 1.442695
      %v1126 = vpow.pop %v1125
      %v1127 = vmul.f32 %v1085, 1.442695
      %v1128 = vpow.pop %v1127
      %v1129 = vmul.f32 %v1086, 1.442695
      %v1130 = vpow.pop %v1129
      %v1131 = vmul.f32 %v1087, 1.442695
      %v1132 = vpow.pop %v1131
      %v1133 = vmul.f32 %v1088, 1.442695
      %v1134 = vpow.pop %v1133
      %v1135 = vmul.f32 %v1089, 1.442695
      %v1136 = vpow.pop %v1135
      %v1137 = vmul.f32 %v1090, 1.442695
      %v1138 = vpow.pop %v1137
      %v1139 = vmul.f32 %v1091, 1.442695
      %v1140 = vpow.pop %v1139
      %v1141 = vmul.f32 %v1092, 1.442695
      %v1142 = vpow.pop %v1141
      %v1143 = vmul.f32 %v1093, 1.442695
      %v1144 = vpow.pop %v1143
      %v1145 = vmul.f32 %v1094, 1.442695
      %v1146 = vpow.pop %v1145
      %v1147 = vmul.f32 %v1095, 1.442695
      %v1148 = vpow.pop %v1147
      %v1149 = vmul.f32 %v1096, 1.442695
      %v1150 = vpow.pop %v1149
      %v1151 = vmul.f32 %v1097, 1.442695
      %v1152 = vpow.pop %v1151
      %v1153 = vmul.f32 %v1098, 1.442695
      %v1154 = vpow.pop %v1153
      %v1155 = vmul.f32 %v1099, 1.442695
      %v1156 = vpow.pop %v1155
      %v1157 = vmul.f32 %v1100, 1.442695
      %v1158 = vpow.pop %v1157
      %v1159 = vmul.f32 %v1101, 1.442695
      %v1160 = vpow.pop %v1159
      %v1161 = vmul.f32 %v1102, 1.442695
      %v1162 = vpow.pop %v1161
      %v1163 = vmul.f32 %v1103, 1.442695
      %v1164 = vpow.pop %v1163
      %v1165 = vmul.f32 %v1104, 1.442695
      %v1166 = vpow.pop %v1165
      %v1167 = vmul.f32 %v1105, 1.442695
      %v1168 = vpow.pop %v1167
      %v1169 = vmul.f32 %v1106, 1.442695
      %v1170 = vpow.pop %v1169
      %1172 = vset.pattern.permute.xlu0 0
      %1173 = vperm.xlu0 %1172, %v1043
      %v1174 = vpop.permute.xlu0 %1173
      %1177 = vset.pattern.permute.xlu0 0
      %1178 = vperm.xlu0 %1177, %v1044
      %v1179 = vpop.permute.xlu0 %1178
      %1182 = vset.pattern.permute.xlu0 0
      %1183 = vperm.xlu0 %1182, %v1045
      %v1184 = vpop.permute.xlu0 %1183
      %1187 = vset.pattern.permute.xlu0 0
      %1188 = vperm.xlu0 %1187, %v1046
      %v1189 = vpop.permute.xlu0 %1188
      %1192 = vset.pattern.permute.xlu0 0
      %1193 = vperm.xlu0 %1192, %v1047
      %v1194 = vpop.permute.xlu0 %1193
      %1197 = vset.pattern.permute.xlu0 0
      %1198 = vperm.xlu0 %1197, %v1048
      %v1199 = vpop.permute.xlu0 %1198
      %1202 = vset.pattern.permute.xlu0 0
      %1203 = vperm.xlu0 %1202, %v1049
      %v1204 = vpop.permute.xlu0 %1203
      %1207 = vset.pattern.permute.xlu0 0
      %1208 = vperm.xlu0 %1207, %v1050
      %v1209 = vpop.permute.xlu0 %1208
      %1212 = vset.pattern.permute.xlu0 0
      %1213 = vperm.xlu0 %1212, %v1051
      %v1214 = vpop.permute.xlu0 %1213
      %1217 = vset.pattern.permute.xlu0 0
      %1218 = vperm.xlu0 %1217, %v1052
      %v1219 = vpop.permute.xlu0 %1218
      %1222 = vset.pattern.permute.xlu0 0
      %1223 = vperm.xlu0 %1222, %v1053
      %v1224 = vpop.permute.xlu0 %1223
      %1227 = vset.pattern.permute.xlu0 0
      %1228 = vperm.xlu0 %1227, %v1054
      %v1229 = vpop.permute.xlu0 %1228
      %1232 = vset.pattern.permute.xlu0 0
      %1233 = vperm.xlu0 %1232, %v1055
      %v1234 = vpop.permute.xlu0 %1233
      %1237 = vset.pattern.permute.xlu0 0
      %1238 = vperm.xlu0 %1237, %v1056
      %v1239 = vpop.permute.xlu0 %1238
      %1242 = vset.pattern.permute.xlu0 0
      %1243 = vperm.xlu0 %1242, %v1057
      %v1244 = vpop.permute.xlu0 %1243
      %1247 = vset.pattern.permute.xlu0 0
      %1248 = vperm.xlu0 %1247, %v1058
      %v1249 = vpop.permute.xlu0 %1248
      %1252 = vset.pattern.permute.xlu0 0
      %1253 = vperm.xlu0 %1252, %v1059
      %v1254 = vpop.permute.xlu0 %1253
      %1257 = vset.pattern.permute.xlu0 0
      %1258 = vperm.xlu0 %1257, %v1060
      %v1259 = vpop.permute.xlu0 %1258
      %1262 = vset.pattern.permute.xlu0 0
      %1263 = vperm.xlu0 %1262, %v1061
      %v1264 = vpop.permute.xlu0 %1263
      %1267 = vset.pattern.permute.xlu0 0
      %1268 = vperm.xlu0 %1267, %v1062
      %v1269 = vpop.permute.xlu0 %1268
      %1272 = vset.pattern.permute.xlu0 0
      %1273 = vperm.xlu0 %1272, %v1063
      %v1274 = vpop.permute.xlu0 %1273
      %1277 = vset.pattern.permute.xlu0 0
      %1278 = vperm.xlu0 %1277, %v1064
      %v1279 = vpop.permute.xlu0 %1278
      %1282 = vset.pattern.permute.xlu0 0
      %1283 = vperm.xlu0 %1282, %v1065
      %v1284 = vpop.permute.xlu0 %1283
      %1287 = vset.pattern.permute.xlu0 0
      %1288 = vperm.xlu0 %1287, %v1066
      %v1289 = vpop.permute.xlu0 %1288
      %1292 = vset.pattern.permute.xlu0 0
      %1293 = vperm.xlu0 %1292, %v1067
      %v1294 = vpop.permute.xlu0 %1293
      %1297 = vset.pattern.permute.xlu0 0
      %1298 = vperm.xlu0 %1297, %v1068
      %v1299 = vpop.permute.xlu0 %1298
      %1302 = vset.pattern.permute.xlu0 0
      %1303 = vperm.xlu0 %1302, %v1069
      %v1304 = vpop.permute.xlu0 %1303
      %1307 = vset.pattern.permute.xlu0 0
      %1308 = vperm.xlu0 %1307, %v1070
      %v1309 = vpop.permute.xlu0 %1308
      %1312 = vset.pattern.permute.xlu0 0
      %1313 = vperm.xlu0 %1312, %v1071
      %v1314 = vpop.permute.xlu0 %1313
      %1317 = vset.pattern.permute.xlu0 0
      %1318 = vperm.xlu0 %1317, %v1072
      %v1319 = vpop.permute.xlu0 %1318
      %1322 = vset.pattern.permute.xlu0 0
      %1323 = vperm.xlu0 %1322, %v1073
      %v1324 = vpop.permute.xlu0 %1323
      %1327 = vset.pattern.permute.xlu0 0
      %1328 = vperm.xlu0 %1327, %v1074
      %v1329 = vpop.permute.xlu0 %1328
      %v1331 = vsub.f32 %v725, %v1174
      %v1332 = vsub.f32 %v727, %v1174
      %v1333 = vsub.f32 %v731, %v1179
      %v1334 = vsub.f32 %v733, %v1179
      %v1335 = vsub.f32 %v737, %v1184
      %v1336 = vsub.f32 %v739, %v1184
      %v1337 = vsub.f32 %v743, %v1189
      %v1338 = vsub.f32 %v745, %v1189
      %v1339 = vsub.f32 %v749, %v1194
      %v1340 = vsub.f32 %v751, %v1194
      %v1341 = vsub.f32 %v755, %v1199
      %v1342 = vsub.f32 %v757, %v1199
      %v1343 = vsub.f32 %v761, %v1204
      %v1344 = vsub.f32 %v763, %v1204
      %v1345 = vsub.f32 %v767, %v1209
      %v1346 = vsub.f32 %v769, %v1209
      %v1347 = vsub.f32 %v773, %v1214
      %v1348 = vsub.f32 %v775, %v1214
      %v1349 = vsub.f32 %v779, %v1219
      %v1350 = vsub.f32 %v781, %v1219
      %v1351 = vsub.f32 %v785, %v1224
      %v1352 = vsub.f32 %v787, %v1224
      %v1353 = vsub.f32 %v791, %v1229
      %v1354 = vsub.f32 %v793, %v1229
      %v1355 = vsub.f32 %v797, %v1234
      %v1356 = vsub.f32 %v799, %v1234
      %v1357 = vsub.f32 %v803, %v1239
      %v1358 = vsub.f32 %v805, %v1239
      %v1359 = vsub.f32 %v809, %v1244
      %v1360 = vsub.f32 %v811, %v1244
      %v1361 = vsub.f32 %v815, %v1249
      %v1362 = vsub.f32 %v817, %v1249
      %v1363 = vsub.f32 %v821, %v1254
      %v1364 = vsub.f32 %v823, %v1254
      %v1365 = vsub.f32 %v827, %v1259
      %v1366 = vsub.f32 %v829, %v1259
      %v1367 = vsub.f32 %v833, %v1264
      %v1368 = vsub.f32 %v835, %v1264
      %v1369 = vsub.f32 %v839, %v1269
      %v1370 = vsub.f32 %v841, %v1269
      %v1371 = vsub.f32 %v845, %v1274
      %v1372 = vsub.f32 %v847, %v1274
      %v1373 = vsub.f32 %v851, %v1279
      %v1374 = vsub.f32 %v853, %v1279
      %v1375 = vsub.f32 %v857, %v1284
      %v1376 = vsub.f32 %v859, %v1284
      %v1377 = vsub.f32 %v863, %v1289
      %v1378 = vsub.f32 %v865, %v1289
      %v1379 = vsub.f32 %v869, %v1294
      %v1380 = vsub.f32 %v871, %v1294
      %v1381 = vsub.f32 %v875, %v1299
      %v1382 = vsub.f32 %v877, %v1299
      %v1383 = vsub.f32 %v881, %v1304
      %v1384 = vsub.f32 %v883, %v1304
      %v1385 = vsub.f32 %v887, %v1309
      %v1386 = vsub.f32 %v889, %v1309
      %v1387 = vsub.f32 %v893, %v1314
      %v1388 = vsub.f32 %v895, %v1314
      %v1389 = vsub.f32 %v899, %v1319
      %v1390 = vsub.f32 %v901, %v1319
      %v1391 = vsub.f32 %v905, %v1324
      %v1392 = vsub.f32 %v907, %v1324
      %v1393 = vsub.f32 %v911, %v1329
      %v1394 = vsub.f32 %v913, %v1329
      %v1395 = vmul.f32 %v1331, 1.442695
      %v1396 = vpow.pop %v1395
      %v1397 = vmul.f32 %v1332, 1.442695
      %v1398 = vpow.pop %v1397
      %v1399 = vmul.f32 %v1333, 1.442695
      %v1400 = vpow.pop %v1399
      %v1401 = vmul.f32 %v1334, 1.442695
      %v1402 = vpow.pop %v1401
      %v1403 = vmul.f32 %v1335, 1.442695
      %v1404 = vpow.pop %v1403
      %v1405 = vmul.f32 %v1336, 1.442695
      %v1406 = vpow.pop %v1405
      %v1407 = vmul.f32 %v1337, 1.442695
      %v1408 = vpow.pop %v1407
      %v1409 = vmul.f32 %v1338, 1.442695
      %v1410 = vpow.pop %v1409
      %v1411 = vmul.f32 %v1339, 1.442695
      %v1412 = vpow.pop %v1411
      %v1413 = vmul.f32 %v1340, 1.442695
      %v1414 = vpow.pop %v1413
      %v1415 = vmul.f32 %v1341, 1.442695
      %v1416 = vpow.pop %v1415
      %v1417 = vmul.f32 %v1342, 1.442695
      %v1418 = vpow.pop %v1417
      %v1419 = vmul.f32 %v1343, 1.442695
      %v1420 = vpow.pop %v1419
      %v1421 = vmul.f32 %v1344, 1.442695
      %v1422 = vpow.pop %v1421
      %v1423 = vmul.f32 %v1345, 1.442695
      %v1424 = vpow.pop %v1423
      %v1425 = vmul.f32 %v1346, 1.442695
      %v1426 = vpow.pop %v1425
      %v1427 = vmul.f32 %v1347, 1.442695
      %v1428 = vpow.pop %v1427
      %v1429 = vmul.f32 %v1348, 1.442695
      %v1430 = vpow.pop %v1429
      %v1431 = vmul.f32 %v1349, 1.442695
      %v1432 = vpow.pop %v1431
      %v1433 = vmul.f32 %v1350, 1.442695
      %v1434 = vpow.pop %v1433
      %v1435 = vmul.f32 %v1351, 1.442695
      %v1436 = vpow.pop %v1435
      %v1437 = vmul.f32 %v1352, 1.442695
      %v1438 = vpow.pop %v1437
      %v1439 = vmul.f32 %v1353, 1.442695
      %v1440 = vpow.pop %v1439
      %v1441 = vmul.f32 %v1354, 1.442695
      %v1442 = vpow.pop %v1441
      %v1443 = vmul.f32 %v1355, 1.442695
      %v1444 = vpow.pop %v1443
      %v1445 = vmul.f32 %v1356, 1.442695
      %v1446 = vpow.pop %v1445
      %v1447 = vmul.f32 %v1357, 1.442695
      %v1448 = vpow.pop %v1447
      %v1449 = vmul.f32 %v1358, 1.442695
      %v1450 = vpow.pop %v1449
      %v1451 = vmul.f32 %v1359, 1.442695
      %v1452 = vpow.pop %v1451
      %v1453 = vmul.f32 %v1360, 1.442695
      %v1454 = vpow.pop %v1453
      %v1455 = vmul.f32 %v1361, 1.442695
      %v1456 = vpow.pop %v1455
      %v1457 = vmul.f32 %v1362, 1.442695
      %v1458 = vpow.pop %v1457
      %v1459 = vmul.f32 %v1363, 1.442695
      %v1460 = vpow.pop %v1459
      %v1461 = vmul.f32 %v1364, 1.442695
      %v1462 = vpow.pop %v1461
      %v1463 = vmul.f32 %v1365, 1.442695
      %v1464 = vpow.pop %v1463
      %v1465 = vmul.f32 %v1366, 1.442695
      %v1466 = vpow.pop %v1465
      %v1467 = vmul.f32 %v1367, 1.442695
      %v1468 = vpow.pop %v1467
      %v1469 = vmul.f32 %v1368, 1.442695
      %v1470 = vpow.pop %v1469
      %v1471 = vmul.f32 %v1369, 1.442695
      %v1472 = vpow.pop %v1471
      %v1473 = vmul.f32 %v1370, 1.442695
      %v1474 = vpow.pop %v1473
      %v1475 = vmul.f32 %v1371, 1.442695
      %v1476 = vpow.pop %v1475
      %v1477 = vmul.f32 %v1372, 1.442695
      %v1478 = vpow.pop %v1477
      %v1479 = vmul.f32 %v1373, 1.442695
      %v1480 = vpow.pop %v1479
      %v1481 = vmul.f32 %v1374, 1.442695
      %v1482 = vpow.pop %v1481
      %v1483 = vmul.f32 %v1375, 1.442695
      %v1484 = vpow.pop %v1483
      %v1485 = vmul.f32 %v1376, 1.442695
      %v1486 = vpow.pop %v1485
      %v1487 = vmul.f32 %v1377, 1.442695
      %v1488 = vpow.pop %v1487
      %v1489 = vmul.f32 %v1378, 1.442695
      %v1490 = vpow.pop %v1489
      %v1491 = vmul.f32 %v1379, 1.442695
      %v1492 = vpow.pop %v1491
      %v1493 = vmul.f32 %v1380, 1.442695
      %v1494 = vpow.pop %v1493
      %v1495 = vmul.f32 %v1381, 1.442695
      %v1496 = vpow.pop %v1495
      %v1497 = vmul.f32 %v1382, 1.442695
      %v1498 = vpow.pop %v1497
      %v1499 = vmul.f32 %v1383, 1.442695
      %v1500 = vpow.pop %v1499
      %v1501 = vmul.f32 %v1384, 1.442695
      %v1502 = vpow.pop %v1501
      %v1503 = vmul.f32 %v1385, 1.442695
      %v1504 = vpow.pop %v1503
      %v1505 = vmul.f32 %v1386, 1.442695
      %v1506 = vpow.pop %v1505
      %v1507 = vmul.f32 %v1387, 1.442695
      %v1508 = vpow.pop %v1507
      %v1509 = vmul.f32 %v1388, 1.442695
      %v1510 = vpow.pop %v1509
      %v1511 = vmul.f32 %v1389, 1.442695
      %v1512 = vpow.pop %v1511
      %v1513 = vmul.f32 %v1390, 1.442695
      %v1514 = vpow.pop %v1513
      %v1515 = vmul.f32 %v1391, 1.442695
      %v1516 = vpow.pop %v1515
      %v1517 = vmul.f32 %v1392, 1.442695
      %v1518 = vpow.pop %v1517
      %v1519 = vmul.f32 %v1393, 1.442695
      %v1520 = vpow.pop %v1519
      %v1521 = vmul.f32 %v1394, 1.442695
      %v1522 = vpow.pop %v1521
      %v1523 = vld [vmem:[#allocation3] sm:$0xff]
      %v1524 = vld [vmem:[#allocation3 + $0x8] sm:$0xff]
      %v1525 = vld [vmem:[#allocation3 + $0x10] sm:$0xff]
      %v1526 = vld [vmem:[#allocation3 + $0x18] sm:$0xff]
      %v1527 = vld [vmem:[#allocation3 + $0x20] sm:$0xff]
      %v1528 = vld [vmem:[#allocation3 + $0x28] sm:$0xff]
      %v1529 = vld [vmem:[#allocation3 + $0x30] sm:$0xff]
      %v1530 = vld [vmem:[#allocation3 + $0x38] sm:$0xff]
      %v1531 = vld [vmem:[#allocation3 + $0x40] sm:$0xff]
      %v1532 = vld [vmem:[#allocation3 + $0x48] sm:$0xff]
      %v1533 = vld [vmem:[#allocation3 + $0x50] sm:$0xff]
      %v1534 = vld [vmem:[#allocation3 + $0x58] sm:$0xff]
      %v1535 = vld [vmem:[#allocation3 + $0x60] sm:$0xff]
      %v1536 = vld [vmem:[#allocation3 + $0x68] sm:$0xff]
      %v1537 = vld [vmem:[#allocation3 + $0x70] sm:$0xff]
      %v1538 = vld [vmem:[#allocation3 + $0x78] sm:$0xff]
      %v1539 = vld [vmem:[#allocation3 + $0x80] sm:$0xff]
      %v1540 = vld [vmem:[#allocation3 + $0x88] sm:$0xff]
      %v1541 = vld [vmem:[#allocation3 + $0x90] sm:$0xff]
      %v1542 = vld [vmem:[#allocation3 + $0x98] sm:$0xff]
      %v1543 = vld [vmem:[#allocation3 + $0xa0] sm:$0xff]
      %v1544 = vld [vmem:[#allocation3 + $0xa8] sm:$0xff]
      %v1545 = vld [vmem:[#allocation3 + $0xb0] sm:$0xff]
      %v1546 = vld [vmem:[#allocation3 + $0xb8] sm:$0xff]
      %v1547 = vld [vmem:[#allocation3 + $0xc0] sm:$0xff]
      %v1548 = vld [vmem:[#allocation3 + $0xc8] sm:$0xff]
      %v1549 = vld [vmem:[#allocation3 + $0xd0] sm:$0xff]
      %v1550 = vld [vmem:[#allocation3 + $0xd8] sm:$0xff]
      %v1551 = vld [vmem:[#allocation3 + $0xe0] sm:$0xff]
      %v1552 = vld [vmem:[#allocation3 + $0xe8] sm:$0xff]
      %v1553 = vld [vmem:[#allocation3 + $0xf0] sm:$0xff]
      %v1554 = vld [vmem:[#allocation3 + $0xf8] sm:$0xff]
      %v1555 = vmul.f32 %v1108, %v1523
      %v1556 = vmul.f32 %v1110, %v1524
      %v1557 = vmul.f32 %v1112, %v1525
      %v1558 = vmul.f32 %v1114, %v1526
      %v1559 = vmul.f32 %v1116, %v1527
      %v1560 = vmul.f32 %v1118, %v1528
      %v1561 = vmul.f32 %v1120, %v1529
      %v1562 = vmul.f32 %v1122, %v1530
      %v1563 = vmul.f32 %v1124, %v1531
      %v1564 = vmul.f32 %v1126, %v1532
      %v1565 = vmul.f32 %v1128, %v1533
      %v1566 = vmul.f32 %v1130, %v1534
      %v1567 = vmul.f32 %v1132, %v1535
      %v1568 = vmul.f32 %v1134, %v1536
      %v1569 = vmul.f32 %v1136, %v1537
      %v1570 = vmul.f32 %v1138, %v1538
      %v1571 = vmul.f32 %v1140, %v1539
      %v1572 = vmul.f32 %v1142, %v1540
      %v1573 = vmul.f32 %v1144, %v1541
      %v1574 = vmul.f32 %v1146, %v1542
      %v1575 = vmul.f32 %v1148, %v1543
      %v1576 = vmul.f32 %v1150, %v1544
      %v1577 = vmul.f32 %v1152, %v1545
      %v1578 = vmul.f32 %v1154, %v1546
      %v1579 = vmul.f32 %v1156, %v1547
      %v1580 = vmul.f32 %v1158, %v1548
      %v1581 = vmul.f32 %v1160, %v1549
      %v1582 = vmul.f32 %v1162, %v1550
      %v1583 = vmul.f32 %v1164, %v1551
      %v1584 = vmul.f32 %v1166, %v1552
      %v1585 = vmul.f32 %v1168, %v1553
      %v1586 = vmul.f32 %v1170, %v1554
      %v1587 = vadd.f32 %v1396, %v1398
      %1588 = vadd.xlane.f32.xlu0 %v1587
      %v1589 = vpop.xlane.xlu0 %1588
      %v1590 = vadd.f32 %v1400, %v1402
      %1591 = vadd.xlane.f32.xlu0 %v1590
      %v1592 = vpop.xlane.xlu0 %1591
      %v1593 = vadd.f32 %v1404, %v1406
      %1594 = vadd.xlane.f32.xlu0 %v1593
      %v1595 = vpop.xlane.xlu0 %1594
      %v1596 = vadd.f32 %v1408, %v1410
      %1597 = vadd.xlane.f32.xlu0 %v1596
      %v1598 = vpop.xlane.xlu0 %1597
      %v1599 = vadd.f32 %v1412, %v1414
      %1600 = vadd.xlane.f32.xlu0 %v1599
      %v1601 = vpop.xlane.xlu0 %1600
      %v1602 = vadd.f32 %v1416, %v1418
      %1603 = vadd.xlane.f32.xlu0 %v1602
      %v1604 = vpop.xlane.xlu0 %1603
      %v1605 = vadd.f32 %v1420, %v1422
      %1606 = vadd.xlane.f32.xlu0 %v1605
      %v1607 = vpop.xlane.xlu0 %1606
      %v1608 = vadd.f32 %v1424, %v1426
      %1609 = vadd.xlane.f32.xlu0 %v1608
      %v1610 = vpop.xlane.xlu0 %1609
      %v1611 = vadd.f32 %v1428, %v1430
      %1612 = vadd.xlane.f32.xlu0 %v1611
      %v1613 = vpop.xlane.xlu0 %1612
      %v1614 = vadd.f32 %v1432, %v1434
      %1615 = vadd.xlane.f32.xlu0 %v1614
      %v1616 = vpop.xlane.xlu0 %1615
      %v1617 = vadd.f32 %v1436, %v1438
      %1618 = vadd.xlane.f32.xlu0 %v1617
      %v1619 = vpop.xlane.xlu0 %1618
      %v1620 = vadd.f32 %v1440, %v1442
      %1621 = vadd.xlane.f32.xlu0 %v1620
      %v1622 = vpop.xlane.xlu0 %1621
      %v1623 = vadd.f32 %v1444, %v1446
      %1624 = vadd.xlane.f32.xlu0 %v1623
      %v1625 = vpop.xlane.xlu0 %1624
      %v1626 = vadd.f32 %v1448, %v1450
      %1627 = vadd.xlane.f32.xlu0 %v1626
      %v1628 = vpop.xlane.xlu0 %1627
      %v1629 = vadd.f32 %v1452, %v1454
      %1630 = vadd.xlane.f32.xlu0 %v1629
      %v1631 = vpop.xlane.xlu0 %1630
      %v1632 = vadd.f32 %v1456, %v1458
      %1633 = vadd.xlane.f32.xlu0 %v1632
      %v1634 = vpop.xlane.xlu0 %1633
      %v1635 = vadd.f32 %v1460, %v1462
      %1636 = vadd.xlane.f32.xlu0 %v1635
      %v1637 = vpop.xlane.xlu0 %1636
      %v1638 = vadd.f32 %v1464, %v1466
      %1639 = vadd.xlane.f32.xlu0 %v1638
      %v1640 = vpop.xlane.xlu0 %1639
      %v1641 = vadd.f32 %v1468, %v1470
      %1642 = vadd.xlane.f32.xlu0 %v1641
      %v1643 = vpop.xlane.xlu0 %1642
      %v1644 = vadd.f32 %v1472, %v1474
      %1645 = vadd.xlane.f32.xlu0 %v1644
      %v1646 = vpop.xlane.xlu0 %1645
      %v1647 = vadd.f32 %v1476, %v1478
      %1648 = vadd.xlane.f32.xlu0 %v1647
      %v1649 = vpop.xlane.xlu0 %1648
      %v1650 = vadd.f32 %v1480, %v1482
      %1651 = vadd.xlane.f32.xlu0 %v1650
      %v1652 = vpop.xlane.xlu0 %1651
      %v1653 = vadd.f32 %v1484, %v1486
      %1654 = vadd.xlane.f32.xlu0 %v1653
      %v1655 = vpop.xlane.xlu0 %1654
      %v1656 = vadd.f32 %v1488, %v1490
      %1657 = vadd.xlane.f32.xlu0 %v1656
      %v1658 = vpop.xlane.xlu0 %1657
      %v1659 = vadd.f32 %v1492, %v1494
      %1660 = vadd.xlane.f32.xlu0 %v1659
      %v1661 = vpop.xlane.xlu0 %1660
      %v1662 = vadd.f32 %v1496, %v1498
      %1663 = vadd.xlane.f32.xlu0 %v1662
      %v1664 = vpop.xlane.xlu0 %1663
      %v1665 = vadd.f32 %v1500, %v1502
      %1666 = vadd.xlane.f32.xlu0 %v1665
      %v1667 = vpop.xlane.xlu0 %1666
      %v1668 = vadd.f32 %v1504, %v1506
      %1669 = vadd.xlane.f32.xlu0 %v1668
      %v1670 = vpop.xlane.xlu0 %1669
      %v1671 = vadd.f32 %v1508, %v1510
      %1672 = vadd.xlane.f32.xlu0 %v1671
      %v1673 = vpop.xlane.xlu0 %1672
      %v1674 = vadd.f32 %v1512, %v1514
      %1675 = vadd.xlane.f32.xlu0 %v1674
      %v1676 = vpop.xlane.xlu0 %1675
      %v1677 = vadd.f32 %v1516, %v1518
      %1678 = vadd.xlane.f32.xlu0 %v1677
      %v1679 = vpop.xlane.xlu0 %1678
      %v1680 = vadd.f32 %v1520, %v1522
      %1681 = vadd.xlane.f32.xlu0 %v1680
      %v1682 = vpop.xlane.xlu0 %1681
      %v1683 = vadd.f32 %v1555, %v1589
      %v1684 = vadd.f32 %v1556, %v1592
      %v1685 = vadd.f32 %v1557, %v1595
      %v1686 = vadd.f32 %v1558, %v1598
      %v1687 = vadd.f32 %v1559, %v1601
      %v1688 = vadd.f32 %v1560, %v1604
      %v1689 = vadd.f32 %v1561, %v1607
      %v1690 = vadd.f32 %v1562, %v1610
      %v1691 = vadd.f32 %v1563, %v1613
      %v1692 = vadd.f32 %v1564, %v1616
      %v1693 = vadd.f32 %v1565, %v1619
      %v1694 = vadd.f32 %v1566, %v1622
      %v1695 = vadd.f32 %v1567, %v1625
      %v1696 = vadd.f32 %v1568, %v1628
      %v1697 = vadd.f32 %v1569, %v1631
      %v1698 = vadd.f32 %v1570, %v1634
      %v1699 = vadd.f32 %v1571, %v1637
      %v1700 = vadd.f32 %v1572, %v1640
      %v1701 = vadd.f32 %v1573, %v1643
      %v1702 = vadd.f32 %v1574, %v1646
      %v1703 = vadd.f32 %v1575, %v1649
      %v1704 = vadd.f32 %v1576, %v1652
      %v1705 = vadd.f32 %v1577, %v1655
      %v1706 = vadd.f32 %v1578, %v1658
      %v1707 = vadd.f32 %v1579, %v1661
      %v1708 = vadd.f32 %v1580, %v1664
      %v1709 = vadd.f32 %v1581, %v1667
      %v1710 = vadd.f32 %v1582, %v1670
      %v1711 = vadd.f32 %v1583, %v1673
      %v1712 = vadd.f32 %v1584, %v1676
      %v1713 = vadd.f32 %v1585, %v1679
      %v1714 = vadd.f32 %v1586, %v1682
      %vm1715 = vcmask 7168
      %1716 = vst.msk [vmem:[#allocation3] sm:$0xff] %vm1715, %v1683
      %1717 = vst.msk [vmem:[#allocation3 + $0x8] sm:$0xff] %vm1715, %v1684
      %1718 = vst.msk [vmem:[#allocation3 + $0x10] sm:$0xff] %vm1715, %v1685
      %1719 = vst.msk [vmem:[#allocation3 + $0x18] sm:$0xff] %vm1715, %v1686
      %1720 = vst.msk [vmem:[#allocation3 + $0x20] sm:$0xff] %vm1715, %v1687
      %1721 = vst.msk [vmem:[#allocation3 + $0x28] sm:$0xff] %vm1715, %v1688
      %1722 = vst.msk [vmem:[#allocation3 + $0x30] sm:$0xff] %vm1715, %v1689
      %1723 = vst.msk [vmem:[#allocation3 + $0x38] sm:$0xff] %vm1715, %v1690
      %1724 = vst.msk [vmem:[#allocation3 + $0x40] sm:$0xff] %vm1715, %v1691
      %1725 = vst.msk [vmem:[#allocation3 + $0x48] sm:$0xff] %vm1715, %v1692
      %1726 = vst.msk [vmem:[#allocation3 + $0x50] sm:$0xff] %vm1715, %v1693
      %1727 = vst.msk [vmem:[#allocation3 + $0x58] sm:$0xff] %vm1715, %v1694
      %1728 = vst.msk [vmem:[#allocation3 + $0x60] sm:$0xff] %vm1715, %v1695
      %1729 = vst.msk [vmem:[#allocation3 + $0x68] sm:$0xff] %vm1715, %v1696
      %1730 = vst.msk [vmem:[#allocation3 + $0x70] sm:$0xff] %vm1715, %v1697
      %1731 = vst.msk [vmem:[#allocation3 + $0x78] sm:$0xff] %vm1715, %v1698
      %1732 = vst.msk [vmem:[#allocation3 + $0x80] sm:$0xff] %vm1715, %v1699
      %1733 = vst.msk [vmem:[#allocation3 + $0x88] sm:$0xff] %vm1715, %v1700
      %1734 = vst.msk [vmem:[#allocation3 + $0x90] sm:$0xff] %vm1715, %v1701
      %1735 = vst.msk [vmem:[#allocation3 + $0x98] sm:$0xff] %vm1715, %v1702
      %1736 = vst.msk [vmem:[#allocation3 + $0xa0] sm:$0xff] %vm1715, %v1703
      %1737 = vst.msk [vmem:[#allocation3 + $0xa8] sm:$0xff] %vm1715, %v1704
      %1738 = vst.msk [vmem:[#allocation3 + $0xb0] sm:$0xff] %vm1715, %v1705
      %1739 = vst.msk [vmem:[#allocation3 + $0xb8] sm:$0xff] %vm1715, %v1706
      %1740 = vst.msk [vmem:[#allocation3 + $0xc0] sm:$0xff] %vm1715, %v1707
      %1741 = vst.msk [vmem:[#allocation3 + $0xc8] sm:$0xff] %vm1715, %v1708
      %1742 = vst.msk [vmem:[#allocation3 + $0xd0] sm:$0xff] %vm1715, %v1709
      %1743 = vst.msk [vmem:[#allocation3 + $0xd8] sm:$0xff] %vm1715, %v1710
      %1744 = vst.msk [vmem:[#allocation3 + $0xe0] sm:$0xff] %vm1715, %v1711
      %1745 = vst.msk [vmem:[#allocation3 + $0xe8] sm:$0xff] %vm1715, %v1712
      %1746 = vst.msk [vmem:[#allocation3 + $0xf0] sm:$0xff] %vm1715, %v1713
      %1747 = vst.msk [vmem:[#allocation3 + $0xf8] sm:$0xff] %vm1715, %v1714
      %v1748 = vld [vmem:[#allocation4] sm:$0xff]
      %v1749 = vld [vmem:[#allocation4 + $0x8] sm:$0xff]
      %v1750 = vld [vmem:[#allocation4 + $0x10] sm:$0xff]
      %v1751 = vld [vmem:[#allocation4 + $0x18] sm:$0xff]
      %v1752 = vld [vmem:[#allocation4 + $0x20] sm:$0xff]
      %v1753 = vld [vmem:[#allocation4 + $0x28] sm:$0xff]
      %v1754 = vld [vmem:[#allocation4 + $0x30] sm:$0xff]
      %v1755 = vld [vmem:[#allocation4 + $0x38] sm:$0xff]
      %v1756 = vld [vmem:[#allocation4 + $0x40] sm:$0xff]
      %v1757 = vld [vmem:[#allocation4 + $0x48] sm:$0xff]
      %v1758 = vld [vmem:[#allocation4 + $0x50] sm:$0xff]
      %v1759 = vld [vmem:[#allocation4 + $0x58] sm:$0xff]
      %v1760 = vld [vmem:[#allocation4 + $0x60] sm:$0xff]
      %v1761 = vld [vmem:[#allocation4 + $0x68] sm:$0xff]
      %v1762 = vld [vmem:[#allocation4 + $0x70] sm:$0xff]
      %v1763 = vld [vmem:[#allocation4 + $0x78] sm:$0xff]
      %v1764 = vld [vmem:[#allocation4 + $0x80] sm:$0xff]
      %v1765 = vld [vmem:[#allocation4 + $0x88] sm:$0xff]
      %v1766 = vld [vmem:[#allocation4 + $0x90] sm:$0xff]
      %v1767 = vld [vmem:[#allocation4 + $0x98] sm:$0xff]
      %v1768 = vld [vmem:[#allocation4 + $0xa0] sm:$0xff]
      %v1769 = vld [vmem:[#allocation4 + $0xa8] sm:$0xff]
      %v1770 = vld [vmem:[#allocation4 + $0xb0] sm:$0xff]
      %v1771 = vld [vmem:[#allocation4 + $0xb8] sm:$0xff]
      %v1772 = vld [vmem:[#allocation4 + $0xc0] sm:$0xff]
      %v1773 = vld [vmem:[#allocation4 + $0xc8] sm:$0xff]
      %v1774 = vld [vmem:[#allocation4 + $0xd0] sm:$0xff]
      %v1775 = vld [vmem:[#allocation4 + $0xd8] sm:$0xff]
      %v1776 = vld [vmem:[#allocation4 + $0xe0] sm:$0xff]
      %v1777 = vld [vmem:[#allocation4 + $0xe8] sm:$0xff]
      %v1778 = vld [vmem:[#allocation4 + $0xf0] sm:$0xff]
      %v1779 = vld [vmem:[#allocation4 + $0xf8] sm:$0xff]
      %1781 = vset.pattern.permute.xlu0 0
      %1782 = vperm.xlu0 %1781, %v1108
      %v1783 = vpop.permute.xlu0 %1782
      %1786 = vset.pattern.permute.xlu0 0
      %1787 = vperm.xlu0 %1786, %v1110
      %v1788 = vpop.permute.xlu0 %1787
      %1791 = vset.pattern.permute.xlu0 0
      %1792 = vperm.xlu0 %1791, %v1112
      %v1793 = vpop.permute.xlu0 %1792
      %1796 = vset.pattern.permute.xlu0 0
      %1797 = vperm.xlu0 %1796, %v1114
      %v1798 = vpop.permute.xlu0 %1797
      %1801 = vset.pattern.permute.xlu0 0
      %1802 = vperm.xlu0 %1801, %v1116
      %v1803 = vpop.permute.xlu0 %1802
      %1806 = vset.pattern.permute.xlu0 0
      %1807 = vperm.xlu0 %1806, %v1118
      %v1808 = vpop.permute.xlu0 %1807
      %1811 = vset.pattern.permute.xlu0 0
      %1812 = vperm.xlu0 %1811, %v1120
      %v1813 = vpop.permute.xlu0 %1812
      %1816 = vset.pattern.permute.xlu0 0
      %1817 = vperm.xlu0 %1816, %v1122
      %v1818 = vpop.permute.xlu0 %1817
      %1821 = vset.pattern.permute.xlu0 0
      %1822 = vperm.xlu0 %1821, %v1124
      %v1823 = vpop.permute.xlu0 %1822
      %1826 = vset.pattern.permute.xlu0 0
      %1827 = vperm.xlu0 %1826, %v1126
      %v1828 = vpop.permute.xlu0 %1827
      %1831 = vset.pattern.permute.xlu0 0
      %1832 = vperm.xlu0 %1831, %v1128
      %v1833 = vpop.permute.xlu0 %1832
      %1836 = vset.pattern.permute.xlu0 0
      %1837 = vperm.xlu0 %1836, %v1130
      %v1838 = vpop.permute.xlu0 %1837
      %1841 = vset.pattern.permute.xlu0 0
      %1842 = vperm.xlu0 %1841, %v1132
      %v1843 = vpop.permute.xlu0 %1842
      %1846 = vset.pattern.permute.xlu0 0
      %1847 = vperm.xlu0 %1846, %v1134
      %v1848 = vpop.permute.xlu0 %1847
      %1851 = vset.pattern.permute.xlu0 0
      %1852 = vperm.xlu0 %1851, %v1136
      %v1853 = vpop.permute.xlu0 %1852
      %1856 = vset.pattern.permute.xlu0 0
      %1857 = vperm.xlu0 %1856, %v1138
      %v1858 = vpop.permute.xlu0 %1857
      %1861 = vset.pattern.permute.xlu0 0
      %1862 = vperm.xlu0 %1861, %v1140
      %v1863 = vpop.permute.xlu0 %1862
      %1866 = vset.pattern.permute.xlu0 0
      %1867 = vperm.xlu0 %1866, %v1142
      %v1868 = vpop.permute.xlu0 %1867
      %1871 = vset.pattern.permute.xlu0 0
      %1872 = vperm.xlu0 %1871, %v1144
      %v1873 = vpop.permute.xlu0 %1872
      %1876 = vset.pattern.permute.xlu0 0
      %1877 = vperm.xlu0 %1876, %v1146
      %v1878 = vpop.permute.xlu0 %1877
      %1881 = vset.pattern.permute.xlu0 0
      %1882 = vperm.xlu0 %1881, %v1148
      %v1883 = vpop.permute.xlu0 %1882
      %1886 = vset.pattern.permute.xlu0 0
      %1887 = vperm.xlu0 %1886, %v1150
      %v1888 = vpop.permute.xlu0 %1887
      %1891 = vset.pattern.permute.xlu0 0
      %1892 = vperm.xlu0 %1891, %v1152
      %v1893 = vpop.permute.xlu0 %1892
      %1896 = vset.pattern.permute.xlu0 0
      %1897 = vperm.xlu0 %1896, %v1154
      %v1898 = vpop.permute.xlu0 %1897
      %1901 = vset.pattern.permute.xlu0 0
      %1902 = vperm.xlu0 %1901, %v1156
      %v1903 = vpop.permute.xlu0 %1902
      %1906 = vset.pattern.permute.xlu0 0
      %1907 = vperm.xlu0 %1906, %v1158
      %v1908 = vpop.permute.xlu0 %1907
      %1911 = vset.pattern.permute.xlu0 0
      %1912 = vperm.xlu0 %1911, %v1160
      %v1913 = vpop.permute.xlu0 %1912
      %1916 = vset.pattern.permute.xlu0 0
      %1917 = vperm.xlu0 %1916, %v1162
      %v1918 = vpop.permute.xlu0 %1917
      %1921 = vset.pattern.permute.xlu0 0
      %1922 = vperm.xlu0 %1921, %v1164
      %v1923 = vpop.permute.xlu0 %1922
      %1926 = vset.pattern.permute.xlu0 0
      %1927 = vperm.xlu0 %1926, %v1166
      %v1928 = vpop.permute.xlu0 %1927
      %1931 = vset.pattern.permute.xlu0 0
      %1932 = vperm.xlu0 %1931, %v1168
      %v1933 = vpop.permute.xlu0 %1932
      %1936 = vset.pattern.permute.xlu0 0
      %1937 = vperm.xlu0 %1936, %v1170
      %v1938 = vpop.permute.xlu0 %1937
      %v1940 = vmul.f32 %v1783, %v1748
      %v1941 = vmul.f32 %v1788, %v1749
      %v1942 = vmul.f32 %v1793, %v1750
      %v1943 = vmul.f32 %v1798, %v1751
      %v1944 = vmul.f32 %v1803, %v1752
      %v1945 = vmul.f32 %v1808, %v1753
      %v1946 = vmul.f32 %v1813, %v1754
      %v1947 = vmul.f32 %v1818, %v1755
      %v1948 = vmul.f32 %v1823, %v1756
      %v1949 = vmul.f32 %v1828, %v1757
      %v1950 = vmul.f32 %v1833, %v1758
      %v1951 = vmul.f32 %v1838, %v1759
      %v1952 = vmul.f32 %v1843, %v1760
      %v1953 = vmul.f32 %v1848, %v1761
      %v1954 = vmul.f32 %v1853, %v1762
      %v1955 = vmul.f32 %v1858, %v1763
      %v1956 = vmul.f32 %v1863, %v1764
      %v1957 = vmul.f32 %v1868, %v1765
      %v1958 = vmul.f32 %v1873, %v1766
      %v1959 = vmul.f32 %v1878, %v1767
      %v1960 = vmul.f32 %v1883, %v1768
      %v1961 = vmul.f32 %v1888, %v1769
      %v1962 = vmul.f32 %v1893, %v1770
      %v1963 = vmul.f32 %v1898, %v1771
      %v1964 = vmul.f32 %v1903, %v1772
      %v1965 = vmul.f32 %v1908, %v1773
      %v1966 = vmul.f32 %v1913, %v1774
      %v1967 = vmul.f32 %v1918, %v1775
      %v1968 = vmul.f32 %v1923, %v1776
      %v1969 = vmul.f32 %v1928, %v1777
      %v1970 = vmul.f32 %v1933, %v1778
      %v1971 = vmul.f32 %v1938, %v1779
      %1972 = vrot.lane.b32.xlu0 %v369, 112
      %v1973 = vpop.permute.xlu0 %1972
      %1974 = vrot.lane.b32.xlu0 %v370, 112
      %v1975 = vpop.permute.xlu0 %1974
      %1976 = vrot.lane.b32.xlu0 %v371, 112
      %v1977 = vpop.permute.xlu0 %1976
      %1978 = vrot.lane.b32.xlu0 %v372, 112
      %v1979 = vpop.permute.xlu0 %1978
      %1980 = vrot.lane.b32.xlu0 %v373, 112
      %v1981 = vpop.permute.xlu0 %1980
      %1982 = vrot.lane.b32.xlu0 %v374, 112
      %v1983 = vpop.permute.xlu0 %1982
      %1984 = vrot.lane.b32.xlu0 %v375, 112
      %v1985 = vpop.permute.xlu0 %1984
      %1986 = vrot.lane.b32.xlu0 %v376, 112
      %v1987 = vpop.permute.xlu0 %1986
      %1988 = vrot.lane.b32.xlu0 %v377, 112
      %v1989 = vpop.permute.xlu0 %1988
      %1990 = vrot.lane.b32.xlu0 %v378, 112
      %v1991 = vpop.permute.xlu0 %1990
      %1992 = vrot.lane.b32.xlu0 %v379, 112
      %v1993 = vpop.permute.xlu0 %1992
      %1994 = vrot.lane.b32.xlu0 %v380, 112
      %v1995 = vpop.permute.xlu0 %1994
      %1996 = vrot.lane.b32.xlu0 %v381, 112
      %v1997 = vpop.permute.xlu0 %1996
      %1998 = vrot.lane.b32.xlu0 %v382, 112
      %v1999 = vpop.permute.xlu0 %1998
      %2000 = vrot.lane.b32.xlu0 %v383, 112
      %v2001 = vpop.permute.xlu0 %2000
      %2002 = vrot.lane.b32.xlu0 %v384, 112
      %v2003 = vpop.permute.xlu0 %2002
      %2004 = vrot.lane.b32.xlu0 %v385, 112
      %v2005 = vpop.permute.xlu0 %2004
      %2006 = vrot.lane.b32.xlu0 %v386, 112
      %v2007 = vpop.permute.xlu0 %2006
      %2008 = vrot.lane.b32.xlu0 %v387, 112
      %v2009 = vpop.permute.xlu0 %2008
      %2010 = vrot.lane.b32.xlu0 %v388, 112
      %v2011 = vpop.permute.xlu0 %2010
      %2012 = vrot.lane.b32.xlu0 %v389, 112
      %v2013 = vpop.permute.xlu0 %2012
      %2014 = vrot.lane.b32.xlu0 %v390, 112
      %v2015 = vpop.permute.xlu0 %2014
      %2016 = vrot.lane.b32.xlu0 %v391, 112
      %v2017 = vpop.permute.xlu0 %2016
      %2018 = vrot.lane.b32.xlu0 %v392, 112
      %v2019 = vpop.permute.xlu0 %2018
      %2020 = vrot.lane.b32.xlu0 %v393, 112
      %v2021 = vpop.permute.xlu0 %2020
      %2022 = vrot.lane.b32.xlu0 %v394, 112
      %v2023 = vpop.permute.xlu0 %2022
      %2024 = vrot.lane.b32.xlu0 %v395, 112
      %v2025 = vpop.permute.xlu0 %2024
      %2026 = vrot.lane.b32.xlu0 %v396, 112
      %v2027 = vpop.permute.xlu0 %2026
      %2028 = vrot.lane.b32.xlu0 %v397, 112
      %v2029 = vpop.permute.xlu0 %2028
      %2030 = vrot.lane.b32.xlu0 %v398, 112
      %v2031 = vpop.permute.xlu0 %2030
      %2032 = vrot.lane.b32.xlu0 %v399, 112
      %v2033 = vpop.permute.xlu0 %2032
      %2034 = vrot.lane.b32.xlu0 %v400, 112
      %v2035 = vpop.permute.xlu0 %2034
      %2068 = vmatprep.subr.mxu0 0.0
      %2069 = vmatpush1.msra.mxu0 %v2003
      %2070 = vmatprep.subr.mxu0 0.0
      %2071 = vmatpush1.msra.mxu0 %v2001
      %2072 = vmatprep.subr.mxu0 0.0
      %2073 = vmatpush1.msra.mxu0 %v1999
      %2074 = vmatprep.subr.mxu0 0.0
      %2075 = vmatpush1.msra.mxu0 %v1997
      %2076 = vmatprep.subr.mxu0 0.0
      %2077 = vmatpush1.msra.mxu0 %v1995
      %2078 = vmatprep.subr.mxu0 0.0
      %2079 = vmatpush1.msra.mxu0 %v1993
      %2080 = vmatprep.subr.mxu0 0.0
      %2081 = vmatpush1.msra.mxu0 %v1991
      %2082 = vmatprep.subr.mxu0 0.0
      %2083 = vmatpush1.msra.mxu0 %v1989
      %2084 = vmatprep.subr.mxu0 0.0
      %2085 = vmatpush1.msra.mxu0 %v1987
      %2086 = vmatprep.subr.mxu0 0.0
      %2087 = vmatpush1.msra.mxu0 %v1985
      %2088 = vmatprep.subr.mxu0 0.0
      %2089 = vmatpush1.msra.mxu0 %v1983
      %2090 = vmatprep.subr.mxu0 0.0
      %2091 = vmatpush1.msra.mxu0 %v1981
      %2092 = vmatprep.subr.mxu0 0.0
      %2093 = vmatpush1.msra.mxu0 %v1979
      %2094 = vmatprep.subr.mxu0 0.0
      %2095 = vmatpush1.msra.mxu0 %v1977
      %2096 = vmatprep.subr.mxu0 0.0
      %2097 = vmatpush1.msra.mxu0 %v1975
      %2098 = vmatprep.subr.mxu0 0.0
      %2099 = vmatpush1.msra.mxu0 %v1973
      %2100 = vmatprep.subr.mxu0 0.0
      %2101 = vmatpush2.msra.mxu0 %v2035
      %2102 = vmatprep.subr.mxu0 0.0
      %2103 = vmatpush2.msra.mxu0 %v2033
      %2104 = vmatprep.subr.mxu0 0.0
      %2105 = vmatpush2.msra.mxu0 %v2031
      %2106 = vmatprep.subr.mxu0 0.0
      %2107 = vmatpush2.msra.mxu0 %v2029
      %2108 = vmatprep.subr.mxu0 0.0
      %2109 = vmatpush2.msra.mxu0 %v2027
      %2110 = vmatprep.subr.mxu0 0.0
      %2111 = vmatpush2.msra.mxu0 %v2025
      %2112 = vmatprep.subr.mxu0 0.0
      %2113 = vmatpush2.msra.mxu0 %v2023
      %2114 = vmatprep.subr.mxu0 0.0
      %2115 = vmatpush2.msra.mxu0 %v2021
      %2116 = vmatprep.subr.mxu0 0.0
      %2117 = vmatpush2.msra.mxu0 %v2019
      %2118 = vmatprep.subr.mxu0 0.0
      %2119 = vmatpush2.msra.mxu0 %v2017
      %2120 = vmatprep.subr.mxu0 0.0
      %2121 = vmatpush2.msra.mxu0 %v2015
      %2122 = vmatprep.subr.mxu0 0.0
      %2123 = vmatpush2.msra.mxu0 %v2013
      %2124 = vmatprep.subr.mxu0 0.0
      %2125 = vmatpush2.msra.mxu0 %v2011
      %2126 = vmatprep.subr.mxu0 0.0
      %2127 = vmatpush2.msra.mxu0 %v2009
      %2128 = vmatprep.subr.mxu0 0.0
      %2129 = vmatpush2.msra.mxu0 %v2007
      %2130 = vmatprep.subr.mxu0 0.0
      %2131 = vmatpush2.msra.mxu0 %v2005
      %2132 = vmatprep.mubr.f32.mxu0 %v1398
      %2133 = vmatmul.mubr.f32.gmra.mxu0 %v1396
      %v2134 = vpop.f32.mrf.mxu0
      %v2135 = vadd.f32 0.0, %v2134
      %v2136 = vpop.f32.mrf.mxu0
      %2137 = vmatprep.mubr.f32.mxu0 %v1402
      %2138 = vmatmul.mubr.f32.gmra.mxu0 %v1400
      %v2139 = vpop.f32.mrf.mxu0
      %v2140 = vadd.f32 0.0, %v2139
      %v2141 = vpop.f32.mrf.mxu0
      %2142 = vmatprep.mubr.f32.mxu0 %v1406
      %2143 = vmatmul.mubr.f32.gmra.mxu0 %v1404
      %v2144 = vpop.f32.mrf.mxu0
      %v2145 = vadd.f32 0.0, %v2144
      %v2146 = vpop.f32.mrf.mxu0
      %2147 = vmatprep.mubr.f32.mxu0 %v1410
      %2148 = vmatmul.mubr.f32.gmra.mxu0 %v1408
      %v2149 = vpop.f32.mrf.mxu0
      %v2150 = vadd.f32 0.0, %v2149
      %v2151 = vpop.f32.mrf.mxu0
      %2152 = vmatprep.mubr.f32.mxu0 %v1414
      %2153 = vmatmul.mubr.f32.gmra.mxu0 %v1412
      %v2154 = vpop.f32.mrf.mxu0
      %v2155 = vadd.f32 0.0, %v2154
      %v2156 = vpop.f32.mrf.mxu0
      %2157 = vmatprep.mubr.f32.mxu0 %v1418
      %2158 = vmatmul.mubr.f32.gmra.mxu0 %v1416
      %v2159 = vpop.f32.mrf.mxu0
      %v2160 = vadd.f32 0.0, %v2159
      %v2161 = vpop.f32.mrf.mxu0
      %2162 = vmatprep.mubr.f32.mxu0 %v1422
      %2163 = vmatmul.mubr.f32.gmra.mxu0 %v1420
      %v2164 = vpop.f32.mrf.mxu0
      %v2165 = vadd.f32 0.0, %v2164
      %v2166 = vpop.f32.mrf.mxu0
      %2167 = vmatprep.mubr.f32.mxu0 %v1426
      %2168 = vmatmul.mubr.f32.gmra.mxu0 %v1424
      %v2169 = vpop.f32.mrf.mxu0
      %v2170 = vadd.f32 0.0, %v2169
      %v2171 = vpop.f32.mrf.mxu0
      %2172 = vmatprep.mubr.f32.mxu0 %v1430
      %2173 = vmatmul.mubr.f32.gmra.mxu0 %v1428
      %v2174 = vpop.f32.mrf.mxu0
      %v2175 = vadd.f32 0.0, %v2174
      %v2176 = vpop.f32.mrf.mxu0
      %2177 = vmatprep.mubr.f32.mxu0 %v1434
      %2178 = vmatmul.mubr.f32.gmra.mxu0 %v1432
      %v2179 = vpop.f32.mrf.mxu0
      %v2180 = vadd.f32 0.0, %v2179
      %v2181 = vpop.f32.mrf.mxu0
      %2182 = vmatprep.mubr.f32.mxu0 %v1438
      %2183 = vmatmul.mubr.f32.gmra.mxu0 %v1436
      %v2184 = vpop.f32.mrf.mxu0
      %v2185 = vadd.f32 0.0, %v2184
      %v2186 = vpop.f32.mrf.mxu0
      %2187 = vmatprep.mubr.f32.mxu0 %v1442
      %2188 = vmatmul.mubr.f32.gmra.mxu0 %v1440
      %v2189 = vpop.f32.mrf.mxu0
      %v2190 = vadd.f32 0.0, %v2189
      %v2191 = vpop.f32.mrf.mxu0
      %2192 = vmatprep.mubr.f32.mxu0 %v1446
      %2193 = vmatmul.mubr.f32.gmra.mxu0 %v1444
      %v2194 = vpop.f32.mrf.mxu0
      %v2195 = vadd.f32 0.0, %v2194
      %v2196 = vpop.f32.mrf.mxu0
      %2197 = vmatprep.mubr.f32.mxu0 %v1450
      %2198 = vmatmul.mubr.f32.gmra.mxu0 %v1448
      %v2199 = vpop.f32.mrf.mxu0
      %v2200 = vadd.f32 0.0, %v2199
      %v2201 = vpop.f32.mrf.mxu0
      %2202 = vmatprep.mubr.f32.mxu0 %v1454
      %2203 = vmatmul.mubr.f32.gmra.mxu0 %v1452
      %v2204 = vpop.f32.mrf.mxu0
      %v2205 = vadd.f32 0.0, %v2204
      %v2206 = vpop.f32.mrf.mxu0
      %2207 = vmatprep.mubr.f32.mxu0 %v1458
      %2208 = vmatmul.mubr.f32.gmra.mxu0 %v1456
      %v2209 = vpop.f32.mrf.mxu0
      %v2210 = vadd.f32 0.0, %v2209
      %v2211 = vpop.f32.mrf.mxu0
      %2212 = vmatprep.mubr.f32.mxu0 %v1462
      %2213 = vmatmul.mubr.f32.gmra.mxu0 %v1460
      %v2214 = vpop.f32.mrf.mxu0
      %v2215 = vadd.f32 0.0, %v2214
      %v2216 = vpop.f32.mrf.mxu0
      %2217 = vmatprep.mubr.f32.mxu0 %v1466
      %2218 = vmatmul.mubr.f32.gmra.mxu0 %v1464
      %v2219 = vpop.f32.mrf.mxu0
      %v2220 = vadd.f32 0.0, %v2219
      %v2221 = vpop.f32.mrf.mxu0
      %2222 = vmatprep.mubr.f32.mxu0 %v1470
      %2223 = vmatmul.mubr.f32.gmra.mxu0 %v1468
      %v2224 = vpop.f32.mrf.mxu0
      %v2225 = vadd.f32 0.0, %v2224
      %v2226 = vpop.f32.mrf.mxu0
      %2227 = vmatprep.mubr.f32.mxu0 %v1474
      %2228 = vmatmul.mubr.f32.gmra.mxu0 %v1472
      %v2229 = vpop.f32.mrf.mxu0
      %v2230 = vadd.f32 0.0, %v2229
      %v2231 = vpop.f32.mrf.mxu0
      %2232 = vmatprep.mubr.f32.mxu0 %v1478
      %2233 = vmatmul.mubr.f32.gmra.mxu0 %v1476
      %v2234 = vpop.f32.mrf.mxu0
      %v2235 = vadd.f32 0.0, %v2234
      %v2236 = vpop.f32.mrf.mxu0
      %2237 = vmatprep.mubr.f32.mxu0 %v1482
      %2238 = vmatmul.mubr.f32.gmra.mxu0 %v1480
      %v2239 = vpop.f32.mrf.mxu0
      %v2240 = vadd.f32 0.0, %v2239
      %v2241 = vpop.f32.mrf.mxu0
      %2242 = vmatprep.mubr.f32.mxu0 %v1486
      %2243 = vmatmul.mubr.f32.gmra.mxu0 %v1484
      %v2244 = vpop.f32.mrf.mxu0
      %v2245 = vadd.f32 0.0, %v2244
      %v2246 = vpop.f32.mrf.mxu0
      %2247 = vmatprep.mubr.f32.mxu0 %v1490
      %2248 = vmatmul.mubr.f32.gmra.mxu0 %v1488
      %v2249 = vpop.f32.mrf.mxu0
      %v2250 = vadd.f32 0.0, %v2249
      %v2251 = vpop.f32.mrf.mxu0
      %2252 = vmatprep.mubr.f32.mxu0 %v1494
      %2253 = vmatmul.mubr.f32.gmra.mxu0 %v1492
      %v2254 = vpop.f32.mrf.mxu0
      %v2255 = vadd.f32 0.0, %v2254
      %v2256 = vpop.f32.mrf.mxu0
      %2257 = vmatprep.mubr.f32.mxu0 %v1498
      %2258 = vmatmul.mubr.f32.gmra.mxu0 %v1496
      %v2259 = vpop.f32.mrf.mxu0
      %v2260 = vadd.f32 0.0, %v2259
      %v2261 = vpop.f32.mrf.mxu0
      %2262 = vmatprep.mubr.f32.mxu0 %v1502
      %2263 = vmatmul.mubr.f32.gmra.mxu0 %v1500
      %v2264 = vpop.f32.mrf.mxu0
      %v2265 = vadd.f32 0.0, %v2264
      %v2266 = vpop.f32.mrf.mxu0
      %2267 = vmatprep.mubr.f32.mxu0 %v1506
      %2268 = vmatmul.mubr.f32.gmra.mxu0 %v1504
      %v2269 = vpop.f32.mrf.mxu0
      %v2270 = vadd.f32 0.0, %v2269
      %v2271 = vpop.f32.mrf.mxu0
      %2272 = vmatprep.mubr.f32.mxu0 %v1510
      %2273 = vmatmul.mubr.f32.gmra.mxu0 %v1508
      %v2274 = vpop.f32.mrf.mxu0
      %v2275 = vadd.f32 0.0, %v2274
      %v2276 = vpop.f32.mrf.mxu0
      %2277 = vmatprep.mubr.f32.mxu0 %v1514
      %2278 = vmatmul.mubr.f32.gmra.mxu0 %v1512
      %v2279 = vpop.f32.mrf.mxu0
      %v2280 = vadd.f32 0.0, %v2279
      %v2281 = vpop.f32.mrf.mxu0
      %2282 = vmatprep.mubr.f32.mxu0 %v1518
      %2283 = vmatmul.mubr.f32.gmra.mxu0 %v1516
      %v2284 = vpop.f32.mrf.mxu0
      %v2285 = vadd.f32 0.0, %v2284
      %v2286 = vpop.f32.mrf.mxu0
      %2287 = vmatprep.mubr.f32.mxu0 %v1522
      %2288 = vmatmul.mubr.f32.gmra.mxu0 %v1520
      %v2289 = vpop.f32.mrf.mxu0
      %v2290 = vadd.f32 0.0, %v2289
      %v2291 = vpop.f32.mrf.mxu0
      %2292 = vdwg.mxu0
      %v2293 = vadd.f32 %v1940, %v2135
      %v2294 = vadd.f32 %v1941, %v2140
      %v2295 = vadd.f32 %v1942, %v2145
      %v2296 = vadd.f32 %v1943, %v2150
      %v2297 = vadd.f32 %v1944, %v2155
      %v2298 = vadd.f32 %v1945, %v2160
      %v2299 = vadd.f32 %v1946, %v2165
      %v2300 = vadd.f32 %v1947, %v2170
      %v2301 = vadd.f32 %v1948, %v2175
      %v2302 = vadd.f32 %v1949, %v2180
      %v2303 = vadd.f32 %v1950, %v2185
      %v2304 = vadd.f32 %v1951, %v2190
      %v2305 = vadd.f32 %v1952, %v2195
      %v2306 = vadd.f32 %v1953, %v2200
      %v2307 = vadd.f32 %v1954, %v2205
      %v2308 = vadd.f32 %v1955, %v2210
      %v2309 = vadd.f32 %v1956, %v2215
      %v2310 = vadd.f32 %v1957, %v2220
      %v2311 = vadd.f32 %v1958, %v2225
      %v2312 = vadd.f32 %v1959, %v2230
      %v2313 = vadd.f32 %v1960, %v2235
      %v2314 = vadd.f32 %v1961, %v2240
      %v2315 = vadd.f32 %v1962, %v2245
      %v2316 = vadd.f32 %v1963, %v2250
      %v2317 = vadd.f32 %v1964, %v2255
      %v2318 = vadd.f32 %v1965, %v2260
      %v2319 = vadd.f32 %v1966, %v2265
      %v2320 = vadd.f32 %v1967, %v2270
      %v2321 = vadd.f32 %v1968, %v2275
      %v2322 = vadd.f32 %v1969, %v2280
      %v2323 = vadd.f32 %v1970, %v2285
      %v2324 = vadd.f32 %v1971, %v2290
      %2325 = vst.msk [vmem:[#allocation4] sm:$0xff] %vm497, %v2293
      %2326 = vst.msk [vmem:[#allocation4 + $0x8] sm:$0xff] %vm497, %v2294
      %2327 = vst.msk [vmem:[#allocation4 + $0x10] sm:$0xff] %vm497, %v2295
      %2328 = vst.msk [vmem:[#allocation4 + $0x18] sm:$0xff] %vm497, %v2296
      %2329 = vst.msk [vmem:[#allocation4 + $0x20] sm:$0xff] %vm497, %v2297
      %2330 = vst.msk [vmem:[#allocation4 + $0x28] sm:$0xff] %vm497, %v2298
      %2331 = vst.msk [vmem:[#allocation4 + $0x30] sm:$0xff] %vm497, %v2299
      %2332 = vst.msk [vmem:[#allocation4 + $0x38] sm:$0xff] %vm497, %v2300
      %2333 = vst.msk [vmem:[#allocation4 + $0x40] sm:$0xff] %vm497, %v2301
      %2334 = vst.msk [vmem:[#allocation4 + $0x48] sm:$0xff] %vm497, %v2302
      %2335 = vst.msk [vmem:[#allocation4 + $0x50] sm:$0xff] %vm497, %v2303
      %2336 = vst.msk [vmem:[#allocation4 + $0x58] sm:$0xff] %vm497, %v2304
      %2337 = vst.msk [vmem:[#allocation4 + $0x60] sm:$0xff] %vm497, %v2305
      %2338 = vst.msk [vmem:[#allocation4 + $0x68] sm:$0xff] %vm497, %v2306
      %2339 = vst.msk [vmem:[#allocation4 + $0x70] sm:$0xff] %vm497, %v2307
      %2340 = vst.msk [vmem:[#allocation4 + $0x78] sm:$0xff] %vm497, %v2308
      %2341 = vst.msk [vmem:[#allocation4 + $0x80] sm:$0xff] %vm497, %v2309
      %2342 = vst.msk [vmem:[#allocation4 + $0x88] sm:$0xff] %vm497, %v2310
      %2343 = vst.msk [vmem:[#allocation4 + $0x90] sm:$0xff] %vm497, %v2311
      %2344 = vst.msk [vmem:[#allocation4 + $0x98] sm:$0xff] %vm497, %v2312
      %2345 = vst.msk [vmem:[#allocation4 + $0xa0] sm:$0xff] %vm497, %v2313
      %2346 = vst.msk [vmem:[#allocation4 + $0xa8] sm:$0xff] %vm497, %v2314
      %2347 = vst.msk [vmem:[#allocation4 + $0xb0] sm:$0xff] %vm497, %v2315
      %2348 = vst.msk [vmem:[#allocation4 + $0xb8] sm:$0xff] %vm497, %v2316
      %2349 = vst.msk [vmem:[#allocation4 + $0xc0] sm:$0xff] %vm497, %v2317
      %2350 = vst.msk [vmem:[#allocation4 + $0xc8] sm:$0xff] %vm497, %v2318
      %2351 = vst.msk [vmem:[#allocation4 + $0xd0] sm:$0xff] %vm497, %v2319
      %2352 = vst.msk [vmem:[#allocation4 + $0xd8] sm:$0xff] %vm497, %v2320
      %2353 = vst.msk [vmem:[#allocation4 + $0xe0] sm:$0xff] %vm497, %v2321
      %2354 = vst.msk [vmem:[#allocation4 + $0xe8] sm:$0xff] %vm497, %v2322
      %2355 = vst.msk [vmem:[#allocation4 + $0xf0] sm:$0xff] %vm497, %v2323
      %2356 = vst.msk [vmem:[#allocation4 + $0xf8] sm:$0xff] %vm497, %v2324
      %2357 = vst.msk [vmem:[#allocation2] sm:$0xff] %vm1715, %v1043
      %2358 = vst.msk [vmem:[#allocation2 + $0x8] sm:$0xff] %vm1715, %v1044
      %2359 = vst.msk [vmem:[#allocation2 + $0x10] sm:$0xff] %vm1715, %v1045
      %2360 = vst.msk [vmem:[#allocation2 + $0x18] sm:$0xff] %vm1715, %v1046
      %2361 = vst.msk [vmem:[#allocation2 + $0x20] sm:$0xff] %vm1715, %v1047
      %2362 = vst.msk [vmem:[#allocation2 + $0x28] sm:$0xff] %vm1715, %v1048
      %2363 = vst.msk [vmem:[#allocation2 + $0x30] sm:$0xff] %vm1715, %v1049
      %2364 = vst.msk [vmem:[#allocation2 + $0x38] sm:$0xff] %vm1715, %v1050
      %2365 = vst.msk [vmem:[#allocation2 + $0x40] sm:$0xff] %vm1715, %v1051
      %2366 = vst.msk [vmem:[#allocation2 + $0x48] sm:$0xff] %vm1715, %v1052
      %2367 = vst.msk [vmem:[#allocation2 + $0x50] sm:$0xff] %vm1715, %v1053
      %2368 = vst.msk [vmem:[#allocation2 + $0x58] sm:$0xff] %vm1715, %v1054
      %2369 = vst.msk [vmem:[#allocation2 + $0x60] sm:$0xff] %vm1715, %v1055
      %2370 = vst.msk [vmem:[#allocation2 + $0x68] sm:$0xff] %vm1715, %v1056
      %2371 = vst.msk [vmem:[#allocation2 + $0x70] sm:$0xff] %vm1715, %v1057
      %2372 = vst.msk [vmem:[#allocation2 + $0x78] sm:$0xff] %vm1715, %v1058
      %2373 = vst.msk [vmem:[#allocation2 + $0x80] sm:$0xff] %vm1715, %v1059
      %2374 = vst.msk [vmem:[#allocation2 + $0x88] sm:$0xff] %vm1715, %v1060
      %2375 = vst.msk [vmem:[#allocation2 + $0x90] sm:$0xff] %vm1715, %v1061
      %2376 = vst.msk [vmem:[#allocation2 + $0x98] sm:$0xff] %vm1715, %v1062
      %2377 = vst.msk [vmem:[#allocation2 + $0xa0] sm:$0xff] %vm1715, %v1063
      %2378 = vst.msk [vmem:[#allocation2 + $0xa8] sm:$0xff] %vm1715, %v1064
      %2379 = vst.msk [vmem:[#allocation2 + $0xb0] sm:$0xff] %vm1715, %v1065
      %2380 = vst.msk [vmem:[#allocation2 + $0xb8] sm:$0xff] %vm1715, %v1066
      %2381 = vst.msk [vmem:[#allocation2 + $0xc0] sm:$0xff] %vm1715, %v1067
      %2382 = vst.msk [vmem:[#allocation2 + $0xc8] sm:$0xff] %vm1715, %v1068
      %2383 = vst.msk [vmem:[#allocation2 + $0xd0] sm:$0xff] %vm1715, %v1069
      %2384 = vst.msk [vmem:[#allocation2 + $0xd8] sm:$0xff] %vm1715, %v1070
      %2385 = vst.msk [vmem:[#allocation2 + $0xe0] sm:$0xff] %vm1715, %v1071
      %2386 = vst.msk [vmem:[#allocation2 + $0xe8] sm:$0xff] %vm1715, %v1072
      %2387 = vst.msk [vmem:[#allocation2 + $0xf0] sm:$0xff] %vm1715, %v1073
      %2388 = vst.msk [vmem:[#allocation2 + $0xf8] sm:$0xff] %vm1715, %v1074
      %2389 = vrot.lane.b32.xlu0 %v369, 116
      %v2390 = vpop.permute.xlu0 %2389
      %2391 = vrot.lane.b32.xlu0 %v370, 116
      %v2392 = vpop.permute.xlu0 %2391
      %2393 = vrot.lane.b32.xlu0 %v371, 116
      %v2394 = vpop.permute.xlu0 %2393
      %2395 = vrot.lane.b32.xlu0 %v372, 116
      %v2396 = vpop.permute.xlu0 %2395
      %2397 = vrot.lane.b32.xlu0 %v373, 116
      %v2398 = vpop.permute.xlu0 %2397
      %2399 = vrot.lane.b32.xlu0 %v374, 116
      %v2400 = vpop.permute.xlu0 %2399
      %2401 = vrot.lane.b32.xlu0 %v375, 116
      %v2402 = vpop.permute.xlu0 %2401
      %2403 = vrot.lane.b32.xlu0 %v376, 116
      %v2404 = vpop.permute.xlu0 %2403
      %2405 = vrot.lane.b32.xlu0 %v377, 116
      %v2406 = vpop.permute.xlu0 %2405
      %2407 = vrot.lane.b32.xlu0 %v378, 116
      %v2408 = vpop.permute.xlu0 %2407
      %2409 = vrot.lane.b32.xlu0 %v379, 116
      %v2410 = vpop.permute.xlu0 %2409
      %2411 = vrot.lane.b32.xlu0 %v380, 116
      %v2412 = vpop.permute.xlu0 %2411
      %2413 = vrot.lane.b32.xlu0 %v381, 116
      %v2414 = vpop.permute.xlu0 %2413
      %2415 = vrot.lane.b32.xlu0 %v382, 116
      %v2416 = vpop.permute.xlu0 %2415
      %2417 = vrot.lane.b32.xlu0 %v383, 116
      %v2418 = vpop.permute.xlu0 %2417
      %2419 = vrot.lane.b32.xlu0 %v384, 116
      %v2420 = vpop.permute.xlu0 %2419
      %2421 = vrot.lane.b32.xlu0 %v385, 116
      %v2422 = vpop.permute.xlu0 %2421
      %2423 = vrot.lane.b32.xlu0 %v386, 116
      %v2424 = vpop.permute.xlu0 %2423
      %2425 = vrot.lane.b32.xlu0 %v387, 116
      %v2426 = vpop.permute.xlu0 %2425
      %2427 = vrot.lane.b32.xlu0 %v388, 116
      %v2428 = vpop.permute.xlu0 %2427
      %2429 = vrot.lane.b32.xlu0 %v389, 116
      %v2430 = vpop.permute.xlu0 %2429
      %2431 = vrot.lane.b32.xlu0 %v390, 116
      %v2432 = vpop.permute.xlu0 %2431
      %2433 = vrot.lane.b32.xlu0 %v391, 116
      %v2434 = vpop.permute.xlu0 %2433
      %2435 = vrot.lane.b32.xlu0 %v392, 116
      %v2436 = vpop.permute.xlu0 %2435
      %2437 = vrot.lane.b32.xlu0 %v393, 116
      %v2438 = vpop.permute.xlu0 %2437
      %2439 = vrot.lane.b32.xlu0 %v394, 116
      %v2440 = vpop.permute.xlu0 %2439
      %2441 = vrot.lane.b32.xlu0 %v395, 116
      %v2442 = vpop.permute.xlu0 %2441
      %2443 = vrot.lane.b32.xlu0 %v396, 116
      %v2444 = vpop.permute.xlu0 %2443
      %2445 = vrot.lane.b32.xlu0 %v397, 116
      %v2446 = vpop.permute.xlu0 %2445
      %2447 = vrot.lane.b32.xlu0 %v398, 116
      %v2448 = vpop.permute.xlu0 %2447
      %2449 = vrot.lane.b32.xlu0 %v399, 116
      %v2450 = vpop.permute.xlu0 %2449
      %2451 = vrot.lane.b32.xlu0 %v400, 116
      %v2452 = vpop.permute.xlu0 %2451
      %v2453 = vsel %vm497, %v2390, 0
      %v2455 = vsel %vm497, %v2392, 0
      %v2457 = vsel %vm497, %v2394, 0
      %v2459 = vsel %vm497, %v2396, 0
      %v2461 = vsel %vm497, %v2398, 0
      %v2463 = vsel %vm497, %v2400, 0
      %v2465 = vsel %vm497, %v2402, 0
      %v2467 = vsel %vm497, %v2404, 0
      %v2469 = vsel %vm497, %v2406, 0
      %v2471 = vsel %vm497, %v2408, 0
      %v2473 = vsel %vm497, %v2410, 0
      %v2475 = vsel %vm497, %v2412, 0
      %v2477 = vsel %vm497, %v2414, 0
      %v2479 = vsel %vm497, %v2416, 0
      %v2481 = vsel %vm497, %v2418, 0
      %v2483 = vsel %vm497, %v2420, 0
      %v2485 = vsel %vm497, %v2422, 0
      %v2487 = vsel %vm497, %v2424, 0
      %v2489 = vsel %vm497, %v2426, 0
      %v2491 = vsel %vm497, %v2428, 0
      %v2493 = vsel %vm497, %v2430, 0
      %v2495 = vsel %vm497, %v2432, 0
      %v2497 = vsel %vm497, %v2434, 0
      %v2499 = vsel %vm497, %v2436, 0
      %v2501 = vsel %vm497, %v2438, 0
      %v2503 = vsel %vm497, %v2440, 0
      %v2505 = vsel %vm497, %v2442, 0
      %v2507 = vsel %vm497, %v2444, 0
      %v2509 = vsel %vm497, %v2446, 0
      %v2511 = vsel %vm497, %v2448, 0
      %v2513 = vsel %vm497, %v2450, 0
      %v2515 = vsel %vm497, %v2452, 0
      %2517 = vmatprep.subr.mxu0 0.0
      %2518 = vmatpush1.xpose.msra.mxu0 %v2483
      %2519 = vmatprep.subr.mxu0 0.0
      %2520 = vmatpush1.xpose.msra.mxu0 %v2481
      %2521 = vmatprep.subr.mxu0 0.0
      %2522 = vmatpush1.xpose.msra.mxu0 %v2479
      %2523 = vmatprep.subr.mxu0 0.0
      %2524 = vmatpush1.xpose.msra.mxu0 %v2477
      %2525 = vmatprep.subr.mxu0 0.0
      %2526 = vmatpush1.xpose.msra.mxu0 %v2475
      %2527 = vmatprep.subr.mxu0 0.0
      %2528 = vmatpush1.xpose.msra.mxu0 %v2473
      %2529 = vmatprep.subr.mxu0 0.0
      %2530 = vmatpush1.xpose.msra.mxu0 %v2471
      %2531 = vmatprep.subr.mxu0 0.0
      %2532 = vmatpush1.xpose.msra.mxu0 %v2469
      %2533 = vmatprep.subr.mxu0 0.0
      %2534 = vmatpush1.xpose.msra.mxu0 %v2467
      %2535 = vmatprep.subr.mxu0 0.0
      %2536 = vmatpush1.xpose.msra.mxu0 %v2465
      %2537 = vmatprep.subr.mxu0 0.0
      %2538 = vmatpush1.xpose.msra.mxu0 %v2463
      %2539 = vmatprep.subr.mxu0 0.0
      %2540 = vmatpush1.xpose.msra.mxu0 %v2461
      %2541 = vmatprep.subr.mxu0 0.0
      %2542 = vmatpush1.xpose.msra.mxu0 %v2459
      %2543 = vmatprep.subr.mxu0 0.0
      %2544 = vmatpush1.xpose.msra.mxu0 %v2457
      %2545 = vmatprep.subr.mxu0 0.0
      %2546 = vmatpush1.xpose.msra.mxu0 %v2455
      %2547 = vmatprep.subr.mxu0 0.0
      %2548 = vmatpush1.xpose.msra.mxu0 %v2453
      %2549 = vmatprep.subr.mxu0 0.0
      %2550 = vmatpush2.xpose.msra.mxu0 %v2515
      %2551 = vmatprep.subr.mxu0 0.0
      %2552 = vmatpush2.xpose.msra.mxu0 %v2513
      %2553 = vmatprep.subr.mxu0 0.0
      %2554 = vmatpush2.xpose.msra.mxu0 %v2511
      %2555 = vmatprep.subr.mxu0 0.0
      %2556 = vmatpush2.xpose.msra.mxu0 %v2509
      %2557 = vmatprep.subr.mxu0 0.0
      %2558 = vmatpush2.xpose.msra.mxu0 %v2507
      %2559 = vmatprep.subr.mxu0 0.0
      %2560 = vmatpush2.xpose.msra.mxu0 %v2505
      %2561 = vmatprep.subr.mxu0 0.0
      %2562 = vmatpush2.xpose.msra.mxu0 %v2503
      %2563 = vmatprep.subr.mxu0 0.0
      %2564 = vmatpush2.xpose.msra.mxu0 %v2501
      %2565 = vmatprep.subr.mxu0 0.0
      %2566 = vmatpush2.xpose.msra.mxu0 %v2499
      %2567 = vmatprep.subr.mxu0 0.0
      %2568 = vmatpush2.xpose.msra.mxu0 %v2497
      %2569 = vmatprep.subr.mxu0 0.0
      %2570 = vmatpush2.xpose.msra.mxu0 %v2495
      %2571 = vmatprep.subr.mxu0 0.0
      %2572 = vmatpush2.xpose.msra.mxu0 %v2493
      %2573 = vmatprep.subr.mxu0 0.0
      %2574 = vmatpush2.xpose.msra.mxu0 %v2491
      %2575 = vmatprep.subr.mxu0 0.0
      %2576 = vmatpush2.xpose.msra.mxu0 %v2489
      %2577 = vmatprep.subr.mxu0 0.0
      %2578 = vmatpush2.xpose.msra.mxu0 %v2487
      %2579 = vmatprep.subr.mxu0 0.0
      %2580 = vmatpush2.xpose.msra.mxu0 %v2485
      %2581 = vmatprep.mubr.f32.mxu0 0.0
      %2582 = vmatmul.mubr.f32.gmra.mxu0 %v499
      %v2583 = vpop.f32.mrf.mxu0
      %v2584 = vadd.f32 0.0, %v2583
      %v2585 = vpop.f32.mrf.mxu0
      %v2586 = vadd.f32 0.0, %v2585
      %2587 = vmatprep.mubr.f32.mxu0 0.0
      %2588 = vmatmul.mubr.f32.gmra.mxu0 %v502
      %v2589 = vpop.f32.mrf.mxu0
      %v2590 = vadd.f32 0.0, %v2589
      %v2591 = vpop.f32.mrf.mxu0
      %v2592 = vadd.f32 0.0, %v2591
      %2593 = vmatprep.mubr.f32.mxu0 0.0
      %2594 = vmatmul.mubr.f32.gmra.mxu0 %v505
      %v2595 = vpop.f32.mrf.mxu0
      %v2596 = vadd.f32 0.0, %v2595
      %v2597 = vpop.f32.mrf.mxu0
      %v2598 = vadd.f32 0.0, %v2597
      %2599 = vmatprep.mubr.f32.mxu0 0.0
      %2600 = vmatmul.mubr.f32.gmra.mxu0 %v508
      %v2601 = vpop.f32.mrf.mxu0
      %v2602 = vadd.f32 0.0, %v2601
      %v2603 = vpop.f32.mrf.mxu0
      %v2604 = vadd.f32 0.0, %v2603
      %2605 = vmatprep.mubr.f32.mxu0 0.0
      %2606 = vmatmul.mubr.f32.gmra.mxu0 %v511
      %v2607 = vpop.f32.mrf.mxu0
      %v2608 = vadd.f32 0.0, %v2607
      %v2609 = vpop.f32.mrf.mxu0
      %v2610 = vadd.f32 0.0, %v2609
      %2611 = vmatprep.mubr.f32.mxu0 0.0
      %2612 = vmatmul.mubr.f32.gmra.mxu0 %v514
      %v2613 = vpop.f32.mrf.mxu0
      %v2614 = vadd.f32 0.0, %v2613
      %v2615 = vpop.f32.mrf.mxu0
      %v2616 = vadd.f32 0.0, %v2615
      %2617 = vmatprep.mubr.f32.mxu0 0.0
      %2618 = vmatmul.mubr.f32.gmra.mxu0 %v517
      %v2619 = vpop.f32.mrf.mxu0
      %v2620 = vadd.f32 0.0, %v2619
      %v2621 = vpop.f32.mrf.mxu0
      %v2622 = vadd.f32 0.0, %v2621
      %2623 = vmatprep.mubr.f32.mxu0 0.0
      %2624 = vmatmul.mubr.f32.gmra.mxu0 %v520
      %v2625 = vpop.f32.mrf.mxu0
      %v2626 = vadd.f32 0.0, %v2625
      %v2627 = vpop.f32.mrf.mxu0
      %v2628 = vadd.f32 0.0, %v2627
      %2629 = vmatprep.mubr.f32.mxu0 0.0
      %2630 = vmatmul.mubr.f32.gmra.mxu0 %v523
      %v2631 = vpop.f32.mrf.mxu0
      %v2632 = vadd.f32 0.0, %v2631
      %v2633 = vpop.f32.mrf.mxu0
      %v2634 = vadd.f32 0.0, %v2633
      %2635 = vmatprep.mubr.f32.mxu0 0.0
      %2636 = vmatmul.mubr.f32.gmra.mxu0 %v526
      %v2637 = vpop.f32.mrf.mxu0
      %v2638 = vadd.f32 0.0, %v2637
      %v2639 = vpop.f32.mrf.mxu0
      %v2640 = vadd.f32 0.0, %v2639
      %2641 = vmatprep.mubr.f32.mxu0 0.0
      %2642 = vmatmul.mubr.f32.gmra.mxu0 %v529
      %v2643 = vpop.f32.mrf.mxu0
      %v2644 = vadd.f32 0.0, %v2643
      %v2645 = vpop.f32.mrf.mxu0
      %v2646 = vadd.f32 0.0, %v2645
      %2647 = vmatprep.mubr.f32.mxu0 0.0
      %2648 = vmatmul.mubr.f32.gmra.mxu0 %v532
      %v2649 = vpop.f32.mrf.mxu0
      %v2650 = vadd.f32 0.0, %v2649
      %v2651 = vpop.f32.mrf.mxu0
      %v2652 = vadd.f32 0.0, %v2651
      %2653 = vmatprep.mubr.f32.mxu0 0.0
      %2654 = vmatmul.mubr.f32.gmra.mxu0 %v535
      %v2655 = vpop.f32.mrf.mxu0
      %v2656 = vadd.f32 0.0, %v2655
      %v2657 = vpop.f32.mrf.mxu0
      %v2658 = vadd.f32 0.0, %v2657
      %2659 = vmatprep.mubr.f32.mxu0 0.0
      %2660 = vmatmul.mubr.f32.gmra.mxu0 %v538
      %v2661 = vpop.f32.mrf.mxu0
      %v2662 = vadd.f32 0.0, %v2661
      %v2663 = vpop.f32.mrf.mxu0
      %v2664 = vadd.f32 0.0, %v2663
      %2665 = vmatprep.mubr.f32.mxu0 0.0
      %2666 = vmatmul.mubr.f32.gmra.mxu0 %v541
      %v2667 = vpop.f32.mrf.mxu0
      %v2668 = vadd.f32 0.0, %v2667
      %v2669 = vpop.f32.mrf.mxu0
      %v2670 = vadd.f32 0.0, %v2669
      %2671 = vmatprep.mubr.f32.mxu0 0.0
      %2672 = vmatmul.mubr.f32.gmra.mxu0 %v544
      %v2673 = vpop.f32.mrf.mxu0
      %v2674 = vadd.f32 0.0, %v2673
      %v2675 = vpop.f32.mrf.mxu0
      %v2676 = vadd.f32 0.0, %v2675
      %2677 = vmatprep.mubr.f32.mxu0 0.0
      %2678 = vmatmul.mubr.f32.gmra.mxu0 %v547
      %v2679 = vpop.f32.mrf.mxu0
      %v2680 = vadd.f32 0.0, %v2679
      %v2681 = vpop.f32.mrf.mxu0
      %v2682 = vadd.f32 0.0, %v2681
      %2683 = vmatprep.mubr.f32.mxu0 0.0
      %2684 = vmatmul.mubr.f32.gmra.mxu0 %v550
      %v2685 = vpop.f32.mrf.mxu0
      %v2686 = vadd.f32 0.0, %v2685
      %v2687 = vpop.f32.mrf.mxu0
      %v2688 = vadd.f32 0.0, %v2687
      %2689 = vmatprep.mubr.f32.mxu0 0.0
      %2690 = vmatmul.mubr.f32.gmra.mxu0 %v553
      %v2691 = vpop.f32.mrf.mxu0
      %v2692 = vadd.f32 0.0, %v2691
      %v2693 = vpop.f32.mrf.mxu0
      %v2694 = vadd.f32 0.0, %v2693
      %2695 = vmatprep.mubr.f32.mxu0 0.0
      %2696 = vmatmul.mubr.f32.gmra.mxu0 %v556
      %v2697 = vpop.f32.mrf.mxu0
      %v2698 = vadd.f32 0.0, %v2697
      %v2699 = vpop.f32.mrf.mxu0
      %v2700 = vadd.f32 0.0, %v2699
      %2701 = vmatprep.mubr.f32.mxu0 0.0
      %2702 = vmatmul.mubr.f32.gmra.mxu0 %v559
      %v2703 = vpop.f32.mrf.mxu0
      %v2704 = vadd.f32 0.0, %v2703
      %v2705 = vpop.f32.mrf.mxu0
      %v2706 = vadd.f32 0.0, %v2705
      %2707 = vmatprep.mubr.f32.mxu0 0.0
      %2708 = vmatmul.mubr.f32.gmra.mxu0 %v562
      %v2709 = vpop.f32.mrf.mxu0
      %v2710 = vadd.f32 0.0, %v2709
      %v2711 = vpop.f32.mrf.mxu0
      %v2712 = vadd.f32 0.0, %v2711
      %2713 = vmatprep.mubr.f32.mxu0 0.0
      %2714 = vmatmul.mubr.f32.gmra.mxu0 %v565
      %v2715 = vpop.f32.mrf.mxu0
      %v2716 = vadd.f32 0.0, %v2715
      %v2717 = vpop.f32.mrf.mxu0
      %v2718 = vadd.f32 0.0, %v2717
      %2719 = vmatprep.mubr.f32.mxu0 0.0
      %2720 = vmatmul.mubr.f32.gmra.mxu0 %v568
      %v2721 = vpop.f32.mrf.mxu0
      %v2722 = vadd.f32 0.0, %v2721
      %v2723 = vpop.f32.mrf.mxu0
      %v2724 = vadd.f32 0.0, %v2723
      %2725 = vmatprep.mubr.f32.mxu0 0.0
      %2726 = vmatmul.mubr.f32.gmra.mxu0 %v571
      %v2727 = vpop.f32.mrf.mxu0
      %v2728 = vadd.f32 0.0, %v2727
      %v2729 = vpop.f32.mrf.mxu0
      %v2730 = vadd.f32 0.0, %v2729
      %2731 = vmatprep.mubr.f32.mxu0 0.0
      %2732 = vmatmul.mubr.f32.gmra.mxu0 %v574
      %v2733 = vpop.f32.mrf.mxu0
      %v2734 = vadd.f32 0.0, %v2733
      %v2735 = vpop.f32.mrf.mxu0
      %v2736 = vadd.f32 0.0, %v2735
      %2737 = vmatprep.mubr.f32.mxu0 0.0
      %2738 = vmatmul.mubr.f32.gmra.mxu0 %v577
      %v2739 = vpop.f32.mrf.mxu0
      %v2740 = vadd.f32 0.0, %v2739
      %v2741 = vpop.f32.mrf.mxu0
      %v2742 = vadd.f32 0.0, %v2741
      %2743 = vmatprep.mubr.f32.mxu0 0.0
      %2744 = vmatmul.mubr.f32.gmra.mxu0 %v580
      %v2745 = vpop.f32.mrf.mxu0
      %v2746 = vadd.f32 0.0, %v2745
      %v2747 = vpop.f32.mrf.mxu0
      %v2748 = vadd.f32 0.0, %v2747
      %2749 = vmatprep.mubr.f32.mxu0 0.0
      %2750 = vmatmul.mubr.f32.gmra.mxu0 %v583
      %v2751 = vpop.f32.mrf.mxu0
      %v2752 = vadd.f32 0.0, %v2751
      %v2753 = vpop.f32.mrf.mxu0
      %v2754 = vadd.f32 0.0, %v2753
      %2755 = vmatprep.mubr.f32.mxu0 0.0
      %2756 = vmatmul.mubr.f32.gmra.mxu0 %v586
      %v2757 = vpop.f32.mrf.mxu0
      %v2758 = vadd.f32 0.0, %v2757
      %v2759 = vpop.f32.mrf.mxu0
      %v2760 = vadd.f32 0.0, %v2759
      %2761 = vmatprep.mubr.f32.mxu0 0.0
      %2762 = vmatmul.mubr.f32.gmra.mxu0 %v589
      %v2763 = vpop.f32.mrf.mxu0
      %v2764 = vadd.f32 0.0, %v2763
      %v2765 = vpop.f32.mrf.mxu0
      %v2766 = vadd.f32 0.0, %v2765
      %2767 = vmatprep.mubr.f32.mxu0 0.0
      %2768 = vmatmul.mubr.f32.gmra.mxu0 %v592
      %v2769 = vpop.f32.mrf.mxu0
      %v2770 = vadd.f32 0.0, %v2769
      %v2771 = vpop.f32.mrf.mxu0
      %v2772 = vadd.f32 0.0, %v2771
      %2773 = vdwg.mxu0
      %v2774 = vld [vmem:[#allocation2] sm:$0xff]
      %v2775 = vld [vmem:[#allocation2 + $0x8] sm:$0xff]
      %v2776 = vld [vmem:[#allocation2 + $0x10] sm:$0xff]
      %v2777 = vld [vmem:[#allocation2 + $0x18] sm:$0xff]
      %v2778 = vld [vmem:[#allocation2 + $0x20] sm:$0xff]
      %v2779 = vld [vmem:[#allocation2 + $0x28] sm:$0xff]
      %v2780 = vld [vmem:[#allocation2 + $0x30] sm:$0xff]
      %v2781 = vld [vmem:[#allocation2 + $0x38] sm:$0xff]
      %v2782 = vld [vmem:[#allocation2 + $0x40] sm:$0xff]
      %v2783 = vld [vmem:[#allocation2 + $0x48] sm:$0xff]
      %v2784 = vld [vmem:[#allocation2 + $0x50] sm:$0xff]
      %v2785 = vld [vmem:[#allocation2 + $0x58] sm:$0xff]
      %v2786 = vld [vmem:[#allocation2 + $0x60] sm:$0xff]
      %v2787 = vld [vmem:[#allocation2 + $0x68] sm:$0xff]
      %v2788 = vld [vmem:[#allocation2 + $0x70] sm:$0xff]
      %v2789 = vld [vmem:[#allocation2 + $0x78] sm:$0xff]
      %v2790 = vld [vmem:[#allocation2 + $0x80] sm:$0xff]
      %v2791 = vld [vmem:[#allocation2 + $0x88] sm:$0xff]
      %v2792 = vld [vmem:[#allocation2 + $0x90] sm:$0xff]
      %v2793 = vld [vmem:[#allocation2 + $0x98] sm:$0xff]
      %v2794 = vld [vmem:[#allocation2 + $0xa0] sm:$0xff]
      %v2795 = vld [vmem:[#allocation2 + $0xa8] sm:$0xff]
      %v2796 = vld [vmem:[#allocation2 + $0xb0] sm:$0xff]
      %v2797 = vld [vmem:[#allocation2 + $0xb8] sm:$0xff]
      %v2798 = vld [vmem:[#allocation2 + $0xc0] sm:$0xff]
      %v2799 = vld [vmem:[#allocation2 + $0xc8] sm:$0xff]
      %v2800 = vld [vmem:[#allocation2 + $0xd0] sm:$0xff]
      %v2801 = vld [vmem:[#allocation2 + $0xd8] sm:$0xff]
      %v2802 = vld [vmem:[#allocation2 + $0xe0] sm:$0xff]
      %v2803 = vld [vmem:[#allocation2 + $0xe8] sm:$0xff]
      %v2804 = vld [vmem:[#allocation2 + $0xf0] sm:$0xff]
      %v2805 = vld [vmem:[#allocation2 + $0xf8] sm:$0xff]
      %v2806 = vmax.f32 %v2584, %v2586
      %2807 = vmax.xlane.f32.xlu0 %v2806
      %v2808 = vpop.xlane.xlu0 %2807
      %v2809 = vmax.f32 %v2590, %v2592
      %2810 = vmax.xlane.f32.xlu0 %v2809
      %v2811 = vpop.xlane.xlu0 %2810
      %v2812 = vmax.f32 %v2596, %v2598
      %2813 = vmax.xlane.f32.xlu0 %v2812
      %v2814 = vpop.xlane.xlu0 %2813
      %v2815 = vmax.f32 %v2602, %v2604
      %2816 = vmax.xlane.f32.xlu0 %v2815
      %v2817 = vpop.xlane.xlu0 %2816
      %v2818 = vmax.f32 %v2608, %v2610
      %2819 = vmax.xlane.f32.xlu0 %v2818
      %v2820 = vpop.xlane.xlu0 %2819
      %v2821 = vmax.f32 %v2614, %v2616
      %2822 = vmax.xlane.f32.xlu0 %v2821
      %v2823 = vpop.xlane.xlu0 %2822
      %v2824 = vmax.f32 %v2620, %v2622
      %2825 = vmax.xlane.f32.xlu0 %v2824
      %v2826 = vpop.xlane.xlu0 %2825
      %v2827 = vmax.f32 %v2626, %v2628
      %2828 = vmax.xlane.f32.xlu0 %v2827
      %v2829 = vpop.xlane.xlu0 %2828
      %v2830 = vmax.f32 %v2632, %v2634
      %2831 = vmax.xlane.f32.xlu0 %v2830
      %v2832 = vpop.xlane.xlu0 %2831
      %v2833 = vmax.f32 %v2638, %v2640
      %2834 = vmax.xlane.f32.xlu0 %v2833
      %v2835 = vpop.xlane.xlu0 %2834
      %v2836 = vmax.f32 %v2644, %v2646
      %2837 = vmax.xlane.f32.xlu0 %v2836
      %v2838 = vpop.xlane.xlu0 %2837
      %v2839 = vmax.f32 %v2650, %v2652
      %2840 = vmax.xlane.f32.xlu0 %v2839
      %v2841 = vpop.xlane.xlu0 %2840
      %v2842 = vmax.f32 %v2656, %v2658
      %2843 = vmax.xlane.f32.xlu0 %v2842
      %v2844 = vpop.xlane.xlu0 %2843
      %v2845 = vmax.f32 %v2662, %v2664
      %2846 = vmax.xlane.f32.xlu0 %v2845
      %v2847 = vpop.xlane.xlu0 %2846
      %v2848 = vmax.f32 %v2668, %v2670
      %2849 = vmax.xlane.f32.xlu0 %v2848
      %v2850 = vpop.xlane.xlu0 %2849
      %v2851 = vmax.f32 %v2674, %v2676
      %2852 = vmax.xlane.f32.xlu0 %v2851
      %v2853 = vpop.xlane.xlu0 %2852
      %v2854 = vmax.f32 %v2680, %v2682
      %2855 = vmax.xlane.f32.xlu0 %v2854
      %v2856 = vpop.xlane.xlu0 %2855
      %v2857 = vmax.f32 %v2686, %v2688
      %2858 = vmax.xlane.f32.xlu0 %v2857
      %v2859 = vpop.xlane.xlu0 %2858
      %v2860 = vmax.f32 %v2692, %v2694
      %2861 = vmax.xlane.f32.xlu0 %v2860
      %v2862 = vpop.xlane.xlu0 %2861
      %v2863 = vmax.f32 %v2698, %v2700
      %2864 = vmax.xlane.f32.xlu0 %v2863
      %v2865 = vpop.xlane.xlu0 %2864
      %v2866 = vmax.f32 %v2704, %v2706
      %2867 = vmax.xlane.f32.xlu0 %v2866
      %v2868 = vpop.xlane.xlu0 %2867
      %v2869 = vmax.f32 %v2710, %v2712
      %2870 = vmax.xlane.f32.xlu0 %v2869
      %v2871 = vpop.xlane.xlu0 %2870
      %v2872 = vmax.f32 %v2716, %v2718
      %2873 = vmax.xlane.f32.xlu0 %v2872
      %v2874 = vpop.xlane.xlu0 %2873
      %v2875 = vmax.f32 %v2722, %v2724
      %2876 = vmax.xlane.f32.xlu0 %v2875
      %v2877 = vpop.xlane.xlu0 %2876
      %v2878 = vmax.f32 %v2728, %v2730
      %2879 = vmax.xlane.f32.xlu0 %v2878
      %v2880 = vpop.xlane.xlu0 %2879
      %v2881 = vmax.f32 %v2734, %v2736
      %2882 = vmax.xlane.f32.xlu0 %v2881
      %v2883 = vpop.xlane.xlu0 %2882
      %v2884 = vmax.f32 %v2740, %v2742
      %2885 = vmax.xlane.f32.xlu0 %v2884
      %v2886 = vpop.xlane.xlu0 %2885
      %v2887 = vmax.f32 %v2746, %v2748
      %2888 = vmax.xlane.f32.xlu0 %v2887
      %v2889 = vpop.xlane.xlu0 %2888
      %v2890 = vmax.f32 %v2752, %v2754
      %2891 = vmax.xlane.f32.xlu0 %v2890
      %v2892 = vpop.xlane.xlu0 %2891
      %v2893 = vmax.f32 %v2758, %v2760
      %2894 = vmax.xlane.f32.xlu0 %v2893
      %v2895 = vpop.xlane.xlu0 %2894
      %v2896 = vmax.f32 %v2764, %v2766
      %2897 = vmax.xlane.f32.xlu0 %v2896
      %v2898 = vpop.xlane.xlu0 %2897
      %v2899 = vmax.f32 %v2770, %v2772
      %2900 = vmax.xlane.f32.xlu0 %v2899
      %v2901 = vpop.xlane.xlu0 %2900
      %v2902 = vmax.f32 %v2774, %v2808
      %v2903 = vmax.f32 %v2775, %v2811
      %v2904 = vmax.f32 %v2776, %v2814
      %v2905 = vmax.f32 %v2777, %v2817
      %v2906 = vmax.f32 %v2778, %v2820
      %v2907 = vmax.f32 %v2779, %v2823
      %v2908 = vmax.f32 %v2780, %v2826
      %v2909 = vmax.f32 %v2781, %v2829
      %v2910 = vmax.f32 %v2782, %v2832
      %v2911 = vmax.f32 %v2783, %v2835
      %v2912 = vmax.f32 %v2784, %v2838
      %v2913 = vmax.f32 %v2785, %v2841
      %v2914 = vmax.f32 %v2786, %v2844
      %v2915 = vmax.f32 %v2787, %v2847
      %v2916 = vmax.f32 %v2788, %v2850
      %v2917 = vmax.f32 %v2789, %v2853
      %v2918 = vmax.f32 %v2790, %v2856
      %v2919 = vmax.f32 %v2791, %v2859
      %v2920 = vmax.f32 %v2792, %v2862
      %v2921 = vmax.f32 %v2793, %v2865
      %v2922 = vmax.f32 %v2794, %v2868
      %v2923 = vmax.f32 %v2795, %v2871
      %v2924 = vmax.f32 %v2796, %v2874
      %v2925 = vmax.f32 %v2797, %v2877
      %v2926 = vmax.f32 %v2798, %v2880
      %v2927 = vmax.f32 %v2799, %v2883
      %v2928 = vmax.f32 %v2800, %v2886
      %v2929 = vmax.f32 %v2801, %v2889
      %v2930 = vmax.f32 %v2802, %v2892
      %v2931 = vmax.f32 %v2803, %v2895
      %v2932 = vmax.f32 %v2804, %v2898
      %v2933 = vmax.f32 %v2805, %v2901
      %v2934 = vsub.f32 %v2774, %v2902
      %v2935 = vsub.f32 %v2775, %v2903
      %v2936 = vsub.f32 %v2776, %v2904
      %v2937 = vsub.f32 %v2777, %v2905
      %v2938 = vsub.f32 %v2778, %v2906
      %v2939 = vsub.f32 %v2779, %v2907
      %v2940 = vsub.f32 %v2780, %v2908
      %v2941 = vsub.f32 %v2781, %v2909
      %v2942 = vsub.f32 %v2782, %v2910
      %v2943 = vsub.f32 %v2783, %v2911
      %v2944 = vsub.f32 %v2784, %v2912
      %v2945 = vsub.f32 %v2785, %v2913
      %v2946 = vsub.f32 %v2786, %v2914
      %v2947 = vsub.f32 %v2787, %v2915
      %v2948 = vsub.f32 %v2788, %v2916
      %v2949 = vsub.f32 %v2789, %v2917
      %v2950 = vsub.f32 %v2790, %v2918
      %v2951 = vsub.f32 %v2791, %v2919
      %v2952 = vsub.f32 %v2792, %v2920
      %v2953 = vsub.f32 %v2793, %v2921
      %v2954 = vsub.f32 %v2794, %v2922
      %v2955 = vsub.f32 %v2795, %v2923
      %v2956 = vsub.f32 %v2796, %v2924
      %v2957 = vsub.f32 %v2797, %v2925
      %v2958 = vsub.f32 %v2798, %v2926
      %v2959 = vsub.f32 %v2799, %v2927
      %v2960 = vsub.f32 %v2800, %v2928
      %v2961 = vsub.f32 %v2801, %v2929
      %v2962 = vsub.f32 %v2802, %v2930
      %v2963 = vsub.f32 %v2803, %v2931
      %v2964 = vsub.f32 %v2804, %v2932
      %v2965 = vsub.f32 %v2805, %v2933
      %v2966 = vmul.f32 %v2934, 1.442695
      %v2967 = vpow.pop %v2966
      %v2968 = vmul.f32 %v2935, 1.442695
      %v2969 = vpow.pop %v2968
      %v2970 = vmul.f32 %v2936, 1.442695
      %v2971 = vpow.pop %v2970
      %v2972 = vmul.f32 %v2937, 1.442695
      %v2973 = vpow.pop %v2972
      %v2974 = vmul.f32 %v2938, 1.442695
      %v2975 = vpow.pop %v2974
      %v2976 = vmul.f32 %v2939, 1.442695
      %v2977 = vpow.pop %v2976
      %v2978 = vmul.f32 %v2940, 1.442695
      %v2979 = vpow.pop %v2978
      %v2980 = vmul.f32 %v2941, 1.442695
      %v2981 = vpow.pop %v2980
      %v2982 = vmul.f32 %v2942, 1.442695
      %v2983 = vpow.pop %v2982
      %v2984 = vmul.f32 %v2943, 1.442695
      %v2985 = vpow.pop %v2984
      %v2986 = vmul.f32 %v2944, 1.442695
      %v2987 = vpow.pop %v2986
      %v2988 = vmul.f32 %v2945, 1.442695
      %v2989 = vpow.pop %v2988
      %v2990 = vmul.f32 %v2946, 1.442695
      %v2991 = vpow.pop %v2990
      %v2992 = vmul.f32 %v2947, 1.442695
      %v2993 = vpow.pop %v2992
      %v2994 = vmul.f32 %v2948, 1.442695
      %v2995 = vpow.pop %v2994
      %v2996 = vmul.f32 %v2949, 1.442695
      %v2997 = vpow.pop %v2996
      %v2998 = vmul.f32 %v2950, 1.442695
      %v2999 = vpow.pop %v2998
      %v3000 = vmul.f32 %v2951, 1.442695
      %v3001 = vpow.pop %v3000
      %v3002 = vmul.f32 %v2952, 1.442695
      %v3003 = vpow.pop %v3002
      %v3004 = vmul.f32 %v2953, 1.442695
      %v3005 = vpow.pop %v3004
      %v3006 = vmul.f32 %v2954, 1.442695
      %v3007 = vpow.pop %v3006
      %v3008 = vmul.f32 %v2955, 1.442695
      %v3009 = vpow.pop %v3008
      %v3010 = vmul.f32 %v2956, 1.442695
      %v3011 = vpow.pop %v3010
      %v3012 = vmul.f32 %v2957, 1.442695
      %v3013 = vpow.pop %v3012
      %v3014 = vmul.f32 %v2958, 1.442695
      %v3015 = vpow.pop %v3014
      %v3016 = vmul.f32 %v2959, 1.442695
      %v3017 = vpow.pop %v3016
      %v3018 = vmul.f32 %v2960, 1.442695
      %v3019 = vpow.pop %v3018
      %v3020 = vmul.f32 %v2961, 1.442695
      %v3021 = vpow.pop %v3020
      %v3022 = vmul.f32 %v2962, 1.442695
      %v3023 = vpow.pop %v3022
      %v3024 = vmul.f32 %v2963, 1.442695
      %v3025 = vpow.pop %v3024
      %v3026 = vmul.f32 %v2964, 1.442695
      %v3027 = vpow.pop %v3026
      %v3028 = vmul.f32 %v2965, 1.442695
      %v3029 = vpow.pop %v3028
      %3031 = vset.pattern.permute.xlu0 0
      %3032 = vperm.xlu0 %3031, %v2902
      %v3033 = vpop.permute.xlu0 %3032
      %3036 = vset.pattern.permute.xlu0 0
      %3037 = vperm.xlu0 %3036, %v2903
      %v3038 = vpop.permute.xlu0 %3037
      %3041 = vset.pattern.permute.xlu0 0
      %3042 = vperm.xlu0 %3041, %v2904
      %v3043 = vpop.permute.xlu0 %3042
      %3046 = vset.pattern.permute.xlu0 0
      %3047 = vperm.xlu0 %3046, %v2905
      %v3048 = vpop.permute.xlu0 %3047
      %3051 = vset.pattern.permute.xlu0 0
      %3052 = vperm.xlu0 %3051, %v2906
      %v3053 = vpop.permute.xlu0 %3052
      %3056 = vset.pattern.permute.xlu0 0
      %3057 = vperm.xlu0 %3056, %v2907
      %v3058 = vpop.permute.xlu0 %3057
      %3061 = vset.pattern.permute.xlu0 0
      %3062 = vperm.xlu0 %3061, %v2908
      %v3063 = vpop.permute.xlu0 %3062
      %3066 = vset.pattern.permute.xlu0 0
      %3067 = vperm.xlu0 %3066, %v2909
      %v3068 = vpop.permute.xlu0 %3067
      %3071 = vset.pattern.permute.xlu0 0
      %3072 = vperm.xlu0 %3071, %v2910
      %v3073 = vpop.permute.xlu0 %3072
      %3076 = vset.pattern.permute.xlu0 0
      %3077 = vperm.xlu0 %3076, %v2911
      %v3078 = vpop.permute.xlu0 %3077
      %3081 = vset.pattern.permute.xlu0 0
      %3082 = vperm.xlu0 %3081, %v2912
      %v3083 = vpop.permute.xlu0 %3082
      %3086 = vset.pattern.permute.xlu0 0
      %3087 = vperm.xlu0 %3086, %v2913
      %v3088 = vpop.permute.xlu0 %3087
      %3091 = vset.pattern.permute.xlu0 0
      %3092 = vperm.xlu0 %3091, %v2914
      %v3093 = vpop.permute.xlu0 %3092
      %3096 = vset.pattern.permute.xlu0 0
      %3097 = vperm.xlu0 %3096, %v2915
      %v3098 = vpop.permute.xlu0 %3097
      %3101 = vset.pattern.permute.xlu0 0
      %3102 = vperm.xlu0 %3101, %v2916
      %v3103 = vpop.permute.xlu0 %3102
      %3106 = vset.pattern.permute.xlu0 0
      %3107 = vperm.xlu0 %3106, %v2917
      %v3108 = vpop.permute.xlu0 %3107
      %3111 = vset.pattern.permute.xlu0 0
      %3112 = vperm.xlu0 %3111, %v2918
      %v3113 = vpop.permute.xlu0 %3112
      %3116 = vset.pattern.permute.xlu0 0
      %3117 = vperm.xlu0 %3116, %v2919
      %v3118 = vpop.permute.xlu0 %3117
      %3121 = vset.pattern.permute.xlu0 0
      %3122 = vperm.xlu0 %3121, %v2920
      %v3123 = vpop.permute.xlu0 %3122
      %3126 = vset.pattern.permute.xlu0 0
      %3127 = vperm.xlu0 %3126, %v2921
      %v3128 = vpop.permute.xlu0 %3127
      %3131 = vset.pattern.permute.xlu0 0
      %3132 = vperm.xlu0 %3131, %v2922
      %v3133 = vpop.permute.xlu0 %3132
      %3136 = vset.pattern.permute.xlu0 0
      %3137 = vperm.xlu0 %3136, %v2923
      %v3138 = vpop.permute.xlu0 %3137
      %3141 = vset.pattern.permute.xlu0 0
      %3142 = vperm.xlu0 %3141, %v2924
      %v3143 = vpop.permute.xlu0 %3142
      %3146 = vset.pattern.permute.xlu0 0
      %3147 = vperm.xlu0 %3146, %v2925
      %v3148 = vpop.permute.xlu0 %3147
      %3151 = vset.pattern.permute.xlu0 0
      %3152 = vperm.xlu0 %3151, %v2926
      %v3153 = vpop.permute.xlu0 %3152
      %3156 = vset.pattern.permute.xlu0 0
      %3157 = vperm.xlu0 %3156, %v2927
      %v3158 = vpop.permute.xlu0 %3157
      %3161 = vset.pattern.permute.xlu0 0
      %3162 = vperm.xlu0 %3161, %v2928
      %v3163 = vpop.permute.xlu0 %3162
      %3166 = vset.pattern.permute.xlu0 0
      %3167 = vperm.xlu0 %3166, %v2929
      %v3168 = vpop.permute.xlu0 %3167
      %3171 = vset.pattern.permute.xlu0 0
      %3172 = vperm.xlu0 %3171, %v2930
      %v3173 = vpop.permute.xlu0 %3172
      %3176 = vset.pattern.permute.xlu0 0
      %3177 = vperm.xlu0 %3176, %v2931
      %v3178 = vpop.permute.xlu0 %3177
      %3181 = vset.pattern.permute.xlu0 0
      %3182 = vperm.xlu0 %3181, %v2932
      %v3183 = vpop.permute.xlu0 %3182
      %3186 = vset.pattern.permute.xlu0 0
      %3187 = vperm.xlu0 %3186, %v2933
      %v3188 = vpop.permute.xlu0 %3187
      %v3190 = vsub.f32 %v2584, %v3033
      %v3191 = vsub.f32 %v2586, %v3033
      %v3192 = vsub.f32 %v2590, %v3038
      %v3193 = vsub.f32 %v2592, %v3038
      %v3194 = vsub.f32 %v2596, %v3043
      %v3195 = vsub.f32 %v2598, %v3043
      %v3196 = vsub.f32 %v2602, %v3048
      %v3197 = vsub.f32 %v2604, %v3048
      %v3198 = vsub.f32 %v2608, %v3053
      %v3199 = vsub.f32 %v2610, %v3053
      %v3200 = vsub.f32 %v2614, %v3058
      %v3201 = vsub.f32 %v2616, %v3058
      %v3202 = vsub.f32 %v2620, %v3063
      %v3203 = vsub.f32 %v2622, %v3063
      %v3204 = vsub.f32 %v2626, %v3068
      %v3205 = vsub.f32 %v2628, %v3068
      %v3206 = vsub.f32 %v2632, %v3073
      %v3207 = vsub.f32 %v2634, %v3073
      %v3208 = vsub.f32 %v2638, %v3078
      %v3209 = vsub.f32 %v2640, %v3078
      %v3210 = vsub.f32 %v2644, %v3083
      %v3211 = vsub.f32 %v2646, %v3083
      %v3212 = vsub.f32 %v2650, %v3088
      %v3213 = vsub.f32 %v2652, %v3088
      %v3214 = vsub.f32 %v2656, %v3093
      %v3215 = vsub.f32 %v2658, %v3093
      %v3216 = vsub.f32 %v2662, %v3098
      %v3217 = vsub.f32 %v2664, %v3098
      %v3218 = vsub.f32 %v2668, %v3103
      %v3219 = vsub.f32 %v2670, %v3103
      %v3220 = vsub.f32 %v2674, %v3108
      %v3221 = vsub.f32 %v2676, %v3108
      %v3222 = vsub.f32 %v2680, %v3113
      %v3223 = vsub.f32 %v2682, %v3113
      %v3224 = vsub.f32 %v2686, %v3118
      %v3225 = vsub.f32 %v2688, %v3118
      %v3226 = vsub.f32 %v2692, %v3123
      %v3227 = vsub.f32 %v2694, %v3123
      %v3228 = vsub.f32 %v2698, %v3128
      %v3229 = vsub.f32 %v2700, %v3128
      %v3230 = vsub.f32 %v2704, %v3133
      %v3231 = vsub.f32 %v2706, %v3133
      %v3232 = vsub.f32 %v2710, %v3138
      %v3233 = vsub.f32 %v2712, %v3138
      %v3234 = vsub.f32 %v2716, %v3143
      %v3235 = vsub.f32 %v2718, %v3143
      %v3236 = vsub.f32 %v2722, %v3148
      %v3237 = vsub.f32 %v2724, %v3148
      %v3238 = vsub.f32 %v2728, %v3153
      %v3239 = vsub.f32 %v2730, %v3153
      %v3240 = vsub.f32 %v2734, %v3158
      %v3241 = vsub.f32 %v2736, %v3158
      %v3242 = vsub.f32 %v2740, %v3163
      %v3243 = vsub.f32 %v2742, %v3163
      %v3244 = vsub.f32 %v2746, %v3168
      %v3245 = vsub.f32 %v2748, %v3168
      %v3246 = vsub.f32 %v2752, %v3173
      %v3247 = vsub.f32 %v2754, %v3173
      %v3248 = vsub.f32 %v2758, %v3178
      %v3249 = vsub.f32 %v2760, %v3178
      %v3250 = vsub.f32 %v2764, %v3183
      %v3251 = vsub.f32 %v2766, %v3183
      %v3252 = vsub.f32 %v2770, %v3188
      %v3253 = vsub.f32 %v2772, %v3188
      %v3254 = vmul.f32 %v3190, 1.442695
      %v3255 = vpow.pop %v3254
      %v3256 = vmul.f32 %v3191, 1.442695
      %v3257 = vpow.pop %v3256
      %v3258 = vmul.f32 %v3192, 1.442695
      %v3259 = vpow.pop %v3258
      %v3260 = vmul.f32 %v3193, 1.442695
      %v3261 = vpow.pop %v3260
      %v3262 = vmul.f32 %v3194, 1.442695
      %v3263 = vpow.pop %v3262
      %v3264 = vmul.f32 %v3195, 1.442695
      %v3265 = vpow.pop %v3264
      %v3266 = vmul.f32 %v3196, 1.442695
      %v3267 = vpow.pop %v3266
      %v3268 = vmul.f32 %v3197, 1.442695
      %v3269 = vpow.pop %v3268
      %v3270 = vmul.f32 %v3198, 1.442695
      %v3271 = vpow.pop %v3270
      %v3272 = vmul.f32 %v3199, 1.442695
      %v3273 = vpow.pop %v3272
      %v3274 = vmul.f32 %v3200, 1.442695
      %v3275 = vpow.pop %v3274
      %v3276 = vmul.f32 %v3201, 1.442695
      %v3277 = vpow.pop %v3276
      %v3278 = vmul.f32 %v3202, 1.442695
      %v3279 = vpow.pop %v3278
      %v3280 = vmul.f32 %v3203, 1.442695
      %v3281 = vpow.pop %v3280
      %v3282 = vmul.f32 %v3204, 1.442695
      %v3283 = vpow.pop %v3282
      %v3284 = vmul.f32 %v3205, 1.442695
      %v3285 = vpow.pop %v3284
      %v3286 = vmul.f32 %v3206, 1.442695
      %v3287 = vpow.pop %v3286
      %v3288 = vmul.f32 %v3207, 1.442695
      %v3289 = vpow.pop %v3288
      %v3290 = vmul.f32 %v3208, 1.442695
      %v3291 = vpow.pop %v3290
      %v3292 = vmul.f32 %v3209, 1.442695
      %v3293 = vpow.pop %v3292
      %v3294 = vmul.f32 %v3210, 1.442695
      %v3295 = vpow.pop %v3294
      %v3296 = vmul.f32 %v3211, 1.442695
      %v3297 = vpow.pop %v3296
      %v3298 = vmul.f32 %v3212, 1.442695
      %v3299 = vpow.pop %v3298
      %v3300 = vmul.f32 %v3213, 1.442695
      %v3301 = vpow.pop %v3300
      %v3302 = vmul.f32 %v3214, 1.442695
      %v3303 = vpow.pop %v3302
      %v3304 = vmul.f32 %v3215, 1.442695
      %v3305 = vpow.pop %v3304
      %v3306 = vmul.f32 %v3216, 1.442695
      %v3307 = vpow.pop %v3306
      %v3308 = vmul.f32 %v3217, 1.442695
      %v3309 = vpow.pop %v3308
      %v3310 = vmul.f32 %v3218, 1.442695
      %v3311 = vpow.pop %v3310
      %v3312 = vmul.f32 %v3219, 1.442695
      %v3313 = vpow.pop %v3312
      %v3314 = vmul.f32 %v3220, 1.442695
      %v3315 = vpow.pop %v3314
      %v3316 = vmul.f32 %v3221, 1.442695
      %v3317 = vpow.pop %v3316
      %v3318 = vmul.f32 %v3222, 1.442695
      %v3319 = vpow.pop %v3318
      %v3320 = vmul.f32 %v3223, 1.442695
      %v3321 = vpow.pop %v3320
      %v3322 = vmul.f32 %v3224, 1.442695
      %v3323 = vpow.pop %v3322
      %v3324 = vmul.f32 %v3225, 1.442695
      %v3325 = vpow.pop %v3324
      %v3326 = vmul.f32 %v3226, 1.442695
      %v3327 = vpow.pop %v3326
      %v3328 = vmul.f32 %v3227, 1.442695
      %v3329 = vpow.pop %v3328
      %v3330 = vmul.f32 %v3228, 1.442695
      %v3331 = vpow.pop %v3330
      %v3332 = vmul.f32 %v3229, 1.442695
      %v3333 = vpow.pop %v3332
      %v3334 = vmul.f32 %v3230, 1.442695
      %v3335 = vpow.pop %v3334
      %v3336 = vmul.f32 %v3231, 1.442695
      %v3337 = vpow.pop %v3336
      %v3338 = vmul.f32 %v3232, 1.442695
      %v3339 = vpow.pop %v3338
      %v3340 = vmul.f32 %v3233, 1.442695
      %v3341 = vpow.pop %v3340
      %v3342 = vmul.f32 %v3234, 1.442695
      %v3343 = vpow.pop %v3342
      %v3344 = vmul.f32 %v3235, 1.442695
      %v3345 = vpow.pop %v3344
      %v3346 = vmul.f32 %v3236, 1.442695
      %v3347 = vpow.pop %v3346
      %v3348 = vmul.f32 %v3237, 1.442695
      %v3349 = vpow.pop %v3348
      %v3350 = vmul.f32 %v3238, 1.442695
      %v3351 = vpow.pop %v3350
      %v3352 = vmul.f32 %v3239, 1.442695
      %v3353 = vpow.pop %v3352
      %v3354 = vmul.f32 %v3240, 1.442695
      %v3355 = vpow.pop %v3354
      %v3356 = vmul.f32 %v3241, 1.442695
      %v3357 = vpow.pop %v3356
      %v3358 = vmul.f32 %v3242, 1.442695
      %v3359 = vpow.pop %v3358
      %v3360 = vmul.f32 %v3243, 1.442695
      %v3361 = vpow.pop %v3360
      %v3362 = vmul.f32 %v3244, 1.442695
      %v3363 = vpow.pop %v3362
      %v3364 = vmul.f32 %v3245, 1.442695
      %v3365 = vpow.pop %v3364
      %v3366 = vmul.f32 %v3246, 1.442695
      %v3367 = vpow.pop %v3366
      %v3368 = vmul.f32 %v3247, 1.442695
      %v3369 = vpow.pop %v3368
      %v3370 = vmul.f32 %v3248, 1.442695
      %v3371 = vpow.pop %v3370
      %v3372 = vmul.f32 %v3249, 1.442695
      %v3373 = vpow.pop %v3372
      %v3374 = vmul.f32 %v3250, 1.442695
      %v3375 = vpow.pop %v3374
      %v3376 = vmul.f32 %v3251, 1.442695
      %v3377 = vpow.pop %v3376
      %v3378 = vmul.f32 %v3252, 1.442695
      %v3379 = vpow.pop %v3378
      %v3380 = vmul.f32 %v3253, 1.442695
      %v3381 = vpow.pop %v3380
      %v3382 = vld [vmem:[#allocation3] sm:$0xff]
      %v3383 = vld [vmem:[#allocation3 + $0x8] sm:$0xff]
      %v3384 = vld [vmem:[#allocation3 + $0x10] sm:$0xff]
      %v3385 = vld [vmem:[#allocation3 + $0x18] sm:$0xff]
      %v3386 = vld [vmem:[#allocation3 + $0x20] sm:$0xff]
      %v3387 = vld [vmem:[#allocation3 + $0x28] sm:$0xff]
      %v3388 = vld [vmem:[#allocation3 + $0x30] sm:$0xff]
      %v3389 = vld [vmem:[#allocation3 + $0x38] sm:$0xff]
      %v3390 = vld [vmem:[#allocation3 + $0x40] sm:$0xff]
      %v3391 = vld [vmem:[#allocation3 + $0x48] sm:$0xff]
      %v3392 = vld [vmem:[#allocation3 + $0x50] sm:$0xff]
      %v3393 = vld [vmem:[#allocation3 + $0x58] sm:$0xff]
      %v3394 = vld [vmem:[#allocation3 + $0x60] sm:$0xff]
      %v3395 = vld [vmem:[#allocation3 + $0x68] sm:$0xff]
      %v3396 = vld [vmem:[#allocation3 + $0x70] sm:$0xff]
      %v3397 = vld [vmem:[#allocation3 + $0x78] sm:$0xff]
      %v3398 = vld [vmem:[#allocation3 + $0x80] sm:$0xff]
      %v3399 = vld [vmem:[#allocation3 + $0x88] sm:$0xff]
      %v3400 = vld [vmem:[#allocation3 + $0x90] sm:$0xff]
      %v3401 = vld [vmem:[#allocation3 + $0x98] sm:$0xff]
      %v3402 = vld [vmem:[#allocation3 + $0xa0] sm:$0xff]
      %v3403 = vld [vmem:[#allocation3 + $0xa8] sm:$0xff]
      %v3404 = vld [vmem:[#allocation3 + $0xb0] sm:$0xff]
      %v3405 = vld [vmem:[#allocation3 + $0xb8] sm:$0xff]
      %v3406 = vld [vmem:[#allocation3 + $0xc0] sm:$0xff]
      %v3407 = vld [vmem:[#allocation3 + $0xc8] sm:$0xff]
      %v3408 = vld [vmem:[#allocation3 + $0xd0] sm:$0xff]
      %v3409 = vld [vmem:[#allocation3 + $0xd8] sm:$0xff]
      %v3410 = vld [vmem:[#allocation3 + $0xe0] sm:$0xff]
      %v3411 = vld [vmem:[#allocation3 + $0xe8] sm:$0xff]
      %v3412 = vld [vmem:[#allocation3 + $0xf0] sm:$0xff]
      %v3413 = vld [vmem:[#allocation3 + $0xf8] sm:$0xff]
      %v3414 = vmul.f32 %v2967, %v3382
      %v3415 = vmul.f32 %v2969, %v3383
      %v3416 = vmul.f32 %v2971, %v3384
      %v3417 = vmul.f32 %v2973, %v3385
      %v3418 = vmul.f32 %v2975, %v3386
      %v3419 = vmul.f32 %v2977, %v3387
      %v3420 = vmul.f32 %v2979, %v3388
      %v3421 = vmul.f32 %v2981, %v3389
      %v3422 = vmul.f32 %v2983, %v3390
      %v3423 = vmul.f32 %v2985, %v3391
      %v3424 = vmul.f32 %v2987, %v3392
      %v3425 = vmul.f32 %v2989, %v3393
      %v3426 = vmul.f32 %v2991, %v3394
      %v3427 = vmul.f32 %v2993, %v3395
      %v3428 = vmul.f32 %v2995, %v3396
      %v3429 = vmul.f32 %v2997, %v3397
      %v3430 = vmul.f32 %v2999, %v3398
      %v3431 = vmul.f32 %v3001, %v3399
      %v3432 = vmul.f32 %v3003, %v3400
      %v3433 = vmul.f32 %v3005, %v3401
      %v3434 = vmul.f32 %v3007, %v3402
      %v3435 = vmul.f32 %v3009, %v3403
      %v3436 = vmul.f32 %v3011, %v3404
      %v3437 = vmul.f32 %v3013, %v3405
      %v3438 = vmul.f32 %v3015, %v3406
      %v3439 = vmul.f32 %v3017, %v3407
      %v3440 = vmul.f32 %v3019, %v3408
      %v3441 = vmul.f32 %v3021, %v3409
      %v3442 = vmul.f32 %v3023, %v3410
      %v3443 = vmul.f32 %v3025, %v3411
      %v3444 = vmul.f32 %v3027, %v3412
      %v3445 = vmul.f32 %v3029, %v3413
      %v3446 = vadd.f32 %v3255, %v3257
      %3447 = vadd.xlane.f32.xlu0 %v3446
      %v3448 = vpop.xlane.xlu0 %3447
      %v3449 = vadd.f32 %v3259, %v3261
      %3450 = vadd.xlane.f32.xlu0 %v3449
      %v3451 = vpop.xlane.xlu0 %3450
      %v3452 = vadd.f32 %v3263, %v3265
      %3453 = vadd.xlane.f32.xlu0 %v3452
      %v3454 = vpop.xlane.xlu0 %3453
      %v3455 = vadd.f32 %v3267, %v3269
      %3456 = vadd.xlane.f32.xlu0 %v3455
      %v3457 = vpop.xlane.xlu0 %3456
      %v3458 = vadd.f32 %v3271, %v3273
      %3459 = vadd.xlane.f32.xlu0 %v3458
      %v3460 = vpop.xlane.xlu0 %3459
      %v3461 = vadd.f32 %v3275, %v3277
      %3462 = vadd.xlane.f32.xlu0 %v3461
      %v3463 = vpop.xlane.xlu0 %3462
      %v3464 = vadd.f32 %v3279, %v3281
      %3465 = vadd.xlane.f32.xlu0 %v3464
      %v3466 = vpop.xlane.xlu0 %3465
      %v3467 = vadd.f32 %v3283, %v3285
      %3468 = vadd.xlane.f32.xlu0 %v3467
      %v3469 = vpop.xlane.xlu0 %3468
      %v3470 = vadd.f32 %v3287, %v3289
      %3471 = vadd.xlane.f32.xlu0 %v3470
      %v3472 = vpop.xlane.xlu0 %3471
      %v3473 = vadd.f32 %v3291, %v3293
      %3474 = vadd.xlane.f32.xlu0 %v3473
      %v3475 = vpop.xlane.xlu0 %3474
      %v3476 = vadd.f32 %v3295, %v3297
      %3477 = vadd.xlane.f32.xlu0 %v3476
      %v3478 = vpop.xlane.xlu0 %3477
      %v3479 = vadd.f32 %v3299, %v3301
      %3480 = vadd.xlane.f32.xlu0 %v3479
      %v3481 = vpop.xlane.xlu0 %3480
      %v3482 = vadd.f32 %v3303, %v3305
      %3483 = vadd.xlane.f32.xlu0 %v3482
      %v3484 = vpop.xlane.xlu0 %3483
      %v3485 = vadd.f32 %v3307, %v3309
      %3486 = vadd.xlane.f32.xlu0 %v3485
      %v3487 = vpop.xlane.xlu0 %3486
      %v3488 = vadd.f32 %v3311, %v3313
      %3489 = vadd.xlane.f32.xlu0 %v3488
      %v3490 = vpop.xlane.xlu0 %3489
      %v3491 = vadd.f32 %v3315, %v3317
      %3492 = vadd.xlane.f32.xlu0 %v3491
      %v3493 = vpop.xlane.xlu0 %3492
      %v3494 = vadd.f32 %v3319, %v3321
      %3495 = vadd.xlane.f32.xlu0 %v3494
      %v3496 = vpop.xlane.xlu0 %3495
      %v3497 = vadd.f32 %v3323, %v3325
      %3498 = vadd.xlane.f32.xlu0 %v3497
      %v3499 = vpop.xlane.xlu0 %3498
      %v3500 = vadd.f32 %v3327, %v3329
      %3501 = vadd.xlane.f32.xlu0 %v3500
      %v3502 = vpop.xlane.xlu0 %3501
      %v3503 = vadd.f32 %v3331, %v3333
      %3504 = vadd.xlane.f32.xlu0 %v3503
      %v3505 = vpop.xlane.xlu0 %3504
      %v3506 = vadd.f32 %v3335, %v3337
      %3507 = vadd.xlane.f32.xlu0 %v3506
      %v3508 = vpop.xlane.xlu0 %3507
      %v3509 = vadd.f32 %v3339, %v3341
      %3510 = vadd.xlane.f32.xlu0 %v3509
      %v3511 = vpop.xlane.xlu0 %3510
      %v3512 = vadd.f32 %v3343, %v3345
      %3513 = vadd.xlane.f32.xlu0 %v3512
      %v3514 = vpop.xlane.xlu0 %3513
      %v3515 = vadd.f32 %v3347, %v3349
      %3516 = vadd.xlane.f32.xlu0 %v3515
      %v3517 = vpop.xlane.xlu0 %3516
      %v3518 = vadd.f32 %v3351, %v3353
      %3519 = vadd.xlane.f32.xlu0 %v3518
      %v3520 = vpop.xlane.xlu0 %3519
      %v3521 = vadd.f32 %v3355, %v3357
      %3522 = vadd.xlane.f32.xlu0 %v3521
      %v3523 = vpop.xlane.xlu0 %3522
      %v3524 = vadd.f32 %v3359, %v3361
      %3525 = vadd.xlane.f32.xlu0 %v3524
      %v3526 = vpop.xlane.xlu0 %3525
      %v3527 = vadd.f32 %v3363, %v3365
      %3528 = vadd.xlane.f32.xlu0 %v3527
      %v3529 = vpop.xlane.xlu0 %3528
      %v3530 = vadd.f32 %v3367, %v3369
      %3531 = vadd.xlane.f32.xlu0 %v3530
      %v3532 = vpop.xlane.xlu0 %3531
      %v3533 = vadd.f32 %v3371, %v3373
      %3534 = vadd.xlane.f32.xlu0 %v3533
      %v3535 = vpop.xlane.xlu0 %3534
      %v3536 = vadd.f32 %v3375, %v3377
      %3537 = vadd.xlane.f32.xlu0 %v3536
      %v3538 = vpop.xlane.xlu0 %3537
      %v3539 = vadd.f32 %v3379, %v3381
      %3540 = vadd.xlane.f32.xlu0 %v3539
      %v3541 = vpop.xlane.xlu0 %3540
      %v3542 = vadd.f32 %v3414, %v3448
      %v3543 = vadd.f32 %v3415, %v3451
      %v3544 = vadd.f32 %v3416, %v3454
      %v3545 = vadd.f32 %v3417, %v3457
      %v3546 = vadd.f32 %v3418, %v3460
      %v3547 = vadd.f32 %v3419, %v3463
      %v3548 = vadd.f32 %v3420, %v3466
      %v3549 = vadd.f32 %v3421, %v3469
      %v3550 = vadd.f32 %v3422, %v3472
      %v3551 = vadd.f32 %v3423, %v3475
      %v3552 = vadd.f32 %v3424, %v3478
      %v3553 = vadd.f32 %v3425, %v3481
      %v3554 = vadd.f32 %v3426, %v3484
      %v3555 = vadd.f32 %v3427, %v3487
      %v3556 = vadd.f32 %v3428, %v3490
      %v3557 = vadd.f32 %v3429, %v3493
      %v3558 = vadd.f32 %v3430, %v3496
      %v3559 = vadd.f32 %v3431, %v3499
      %v3560 = vadd.f32 %v3432, %v3502
      %v3561 = vadd.f32 %v3433, %v3505
      %v3562 = vadd.f32 %v3434, %v3508
      %v3563 = vadd.f32 %v3435, %v3511
      %v3564 = vadd.f32 %v3436, %v3514
      %v3565 = vadd.f32 %v3437, %v3517
      %v3566 = vadd.f32 %v3438, %v3520
      %v3567 = vadd.f32 %v3439, %v3523
      %v3568 = vadd.f32 %v3440, %v3526
      %v3569 = vadd.f32 %v3441, %v3529
      %v3570 = vadd.f32 %v3442, %v3532
      %v3571 = vadd.f32 %v3443, %v3535
      %v3572 = vadd.f32 %v3444, %v3538
      %v3573 = vadd.f32 %v3445, %v3541
      %3574 = vst.msk [vmem:[#allocation3] sm:$0xff] %vm1715, %v3542
      %3575 = vst.msk [vmem:[#allocation3 + $0x8] sm:$0xff] %vm1715, %v3543
      %3576 = vst.msk [vmem:[#allocation3 + $0x10] sm:$0xff] %vm1715, %v3544
      %3577 = vst.msk [vmem:[#allocation3 + $0x18] sm:$0xff] %vm1715, %v3545
      %3578 = vst.msk [vmem:[#allocation3 + $0x20] sm:$0xff] %vm1715, %v3546
      %3579 = vst.msk [vmem:[#allocation3 + $0x28] sm:$0xff] %vm1715, %v3547
      %3580 = vst.msk [vmem:[#allocation3 + $0x30] sm:$0xff] %vm1715, %v3548
      %3581 = vst.msk [vmem:[#allocation3 + $0x38] sm:$0xff] %vm1715, %v3549
      %3582 = vst.msk [vmem:[#allocation3 + $0x40] sm:$0xff] %vm1715, %v3550
      %3583 = vst.msk [vmem:[#allocation3 + $0x48] sm:$0xff] %vm1715, %v3551
      %3584 = vst.msk [vmem:[#allocation3 + $0x50] sm:$0xff] %vm1715, %v3552
      %3585 = vst.msk [vmem:[#allocation3 + $0x58] sm:$0xff] %vm1715, %v3553
      %3586 = vst.msk [vmem:[#allocation3 + $0x60] sm:$0xff] %vm1715, %v3554
      %3587 = vst.msk [vmem:[#allocation3 + $0x68] sm:$0xff] %vm1715, %v3555
      %3588 = vst.msk [vmem:[#allocation3 + $0x70] sm:$0xff] %vm1715, %v3556
      %3589 = vst.msk [vmem:[#allocation3 + $0x78] sm:$0xff] %vm1715, %v3557
      %3590 = vst.msk [vmem:[#allocation3 + $0x80] sm:$0xff] %vm1715, %v3558
      %3591 = vst.msk [vmem:[#allocation3 + $0x88] sm:$0xff] %vm1715, %v3559
      %3592 = vst.msk [vmem:[#allocation3 + $0x90] sm:$0xff] %vm1715, %v3560
      %3593 = vst.msk [vmem:[#allocation3 + $0x98] sm:$0xff] %vm1715, %v3561
      %3594 = vst.msk [vmem:[#allocation3 + $0xa0] sm:$0xff] %vm1715, %v3562
      %3595 = vst.msk [vmem:[#allocation3 + $0xa8] sm:$0xff] %vm1715, %v3563
      %3596 = vst.msk [vmem:[#allocation3 + $0xb0] sm:$0xff] %vm1715, %v3564
      %3597 = vst.msk [vmem:[#allocation3 + $0xb8] sm:$0xff] %vm1715, %v3565
      %3598 = vst.msk [vmem:[#allocation3 + $0xc0] sm:$0xff] %vm1715, %v3566
      %3599 = vst.msk [vmem:[#allocation3 + $0xc8] sm:$0xff] %vm1715, %v3567
      %3600 = vst.msk [vmem:[#allocation3 + $0xd0] sm:$0xff] %vm1715, %v3568
      %3601 = vst.msk [vmem:[#allocation3 + $0xd8] sm:$0xff] %vm1715, %v3569
      %3602 = vst.msk [vmem:[#allocation3 + $0xe0] sm:$0xff] %vm1715, %v3570
      %3603 = vst.msk [vmem:[#allocation3 + $0xe8] sm:$0xff] %vm1715, %v3571
      %3604 = vst.msk [vmem:[#allocation3 + $0xf0] sm:$0xff] %vm1715, %v3572
      %3605 = vst.msk [vmem:[#allocation3 + $0xf8] sm:$0xff] %vm1715, %v3573
      %v3606 = vld [vmem:[#allocation4] sm:$0xff]
      %v3607 = vld [vmem:[#allocation4 + $0x8] sm:$0xff]
      %v3608 = vld [vmem:[#allocation4 + $0x10] sm:$0xff]
      %v3609 = vld [vmem:[#allocation4 + $0x18] sm:$0xff]
      %v3610 = vld [vmem:[#allocation4 + $0x20] sm:$0xff]
      %v3611 = vld [vmem:[#allocation4 + $0x28] sm:$0xff]
      %v3612 = vld [vmem:[#allocation4 + $0x30] sm:$0xff]
      %v3613 = vld [vmem:[#allocation4 + $0x38] sm:$0xff]
      %v3614 = vld [vmem:[#allocation4 + $0x40] sm:$0xff]
      %v3615 = vld [vmem:[#allocation4 + $0x48] sm:$0xff]
      %v3616 = vld [vmem:[#allocation4 + $0x50] sm:$0xff]
      %v3617 = vld [vmem:[#allocation4 + $0x58] sm:$0xff]
      %v3618 = vld [vmem:[#allocation4 + $0x60] sm:$0xff]
      %v3619 = vld [vmem:[#allocation4 + $0x68] sm:$0xff]
      %v3620 = vld [vmem:[#allocation4 + $0x70] sm:$0xff]
      %v3621 = vld [vmem:[#allocation4 + $0x78] sm:$0xff]
      %v3622 = vld [vmem:[#allocation4 + $0x80] sm:$0xff]
      %v3623 = vld [vmem:[#allocation4 + $0x88] sm:$0xff]
      %v3624 = vld [vmem:[#allocation4 + $0x90] sm:$0xff]
      %v3625 = vld [vmem:[#allocation4 + $0x98] sm:$0xff]
      %v3626 = vld [vmem:[#allocation4 + $0xa0] sm:$0xff]
      %v3627 = vld [vmem:[#allocation4 + $0xa8] sm:$0xff]
      %v3628 = vld [vmem:[#allocation4 + $0xb0] sm:$0xff]
      %v3629 = vld [vmem:[#allocation4 + $0xb8] sm:$0xff]
      %v3630 = vld [vmem:[#allocation4 + $0xc0] sm:$0xff]
      %v3631 = vld [vmem:[#allocation4 + $0xc8] sm:$0xff]
      %v3632 = vld [vmem:[#allocation4 + $0xd0] sm:$0xff]
      %v3633 = vld [vmem:[#allocation4 + $0xd8] sm:$0xff]
      %v3634 = vld [vmem:[#allocation4 + $0xe0] sm:$0xff]
      %v3635 = vld [vmem:[#allocation4 + $0xe8] sm:$0xff]
      %v3636 = vld [vmem:[#allocation4 + $0xf0] sm:$0xff]
      %v3637 = vld [vmem:[#allocation4 + $0xf8] sm:$0xff]
      %3639 = vset.pattern.permute.xlu0 0
      %3640 = vperm.xlu0 %3639, %v2967
      %v3641 = vpop.permute.xlu0 %3640
      %3644 = vset.pattern.permute.xlu0 0
      %3645 = vperm.xlu0 %3644, %v2969
      %v3646 = vpop.permute.xlu0 %3645
      %3649 = vset.pattern.permute.xlu0 0
      %3650 = vperm.xlu0 %3649, %v2971
      %v3651 = vpop.permute.xlu0 %3650
      %3654 = vset.pattern.permute.xlu0 0
      %3655 = vperm.xlu0 %3654, %v2973
      %v3656 = vpop.permute.xlu0 %3655
      %3659 = vset.pattern.permute.xlu0 0
      %3660 = vperm.xlu0 %3659, %v2975
      %v3661 = vpop.permute.xlu0 %3660
      %3664 = vset.pattern.permute.xlu0 0
      %3665 = vperm.xlu0 %3664, %v2977
      %v3666 = vpop.permute.xlu0 %3665
      %3669 = vset.pattern.permute.xlu0 0
      %3670 = vperm.xlu0 %3669, %v2979
      %v3671 = vpop.permute.xlu0 %3670
      %3674 = vset.pattern.permute.xlu0 0
      %3675 = vperm.xlu0 %3674, %v2981
      %v3676 = vpop.permute.xlu0 %3675
      %3679 = vset.pattern.permute.xlu0 0
      %3680 = vperm.xlu0 %3679, %v2983
      %v3681 = vpop.permute.xlu0 %3680
      %3684 = vset.pattern.permute.xlu0 0
      %3685 = vperm.xlu0 %3684, %v2985
      %v3686 = vpop.permute.xlu0 %3685
      %3689 = vset.pattern.permute.xlu0 0
      %3690 = vperm.xlu0 %3689, %v2987
      %v3691 = vpop.permute.xlu0 %3690
      %3694 = vset.pattern.permute.xlu0 0
      %3695 = vperm.xlu0 %3694, %v2989
      %v3696 = vpop.permute.xlu0 %3695
      %3699 = vset.pattern.permute.xlu0 0
      %3700 = vperm.xlu0 %3699, %v2991
      %v3701 = vpop.permute.xlu0 %3700
      %3704 = vset.pattern.permute.xlu0 0
      %3705 = vperm.xlu0 %3704, %v2993
      %v3706 = vpop.permute.xlu0 %3705
      %3709 = vset.pattern.permute.xlu0 0
      %3710 = vperm.xlu0 %3709, %v2995
      %v3711 = vpop.permute.xlu0 %3710
      %3714 = vset.pattern.permute.xlu0 0
      %3715 = vperm.xlu0 %3714, %v2997
      %v3716 = vpop.permute.xlu0 %3715
      %3719 = vset.pattern.permute.xlu0 0
      %3720 = vperm.xlu0 %3719, %v2999
      %v3721 = vpop.permute.xlu0 %3720
      %3724 = vset.pattern.permute.xlu0 0
      %3725 = vperm.xlu0 %3724, %v3001
      %v3726 = vpop.permute.xlu0 %3725
      %3729 = vset.pattern.permute.xlu0 0
      %3730 = vperm.xlu0 %3729, %v3003
      %v3731 = vpop.permute.xlu0 %3730
      %3734 = vset.pattern.permute.xlu0 0
      %3735 = vperm.xlu0 %3734, %v3005
      %v3736 = vpop.permute.xlu0 %3735
      %3739 = vset.pattern.permute.xlu0 0
      %3740 = vperm.xlu0 %3739, %v3007
      %v3741 = vpop.permute.xlu0 %3740
      %3744 = vset.pattern.permute.xlu0 0
      %3745 = vperm.xlu0 %3744, %v3009
      %v3746 = vpop.permute.xlu0 %3745
      %3749 = vset.pattern.permute.xlu0 0
      %3750 = vperm.xlu0 %3749, %v3011
      %v3751 = vpop.permute.xlu0 %3750
      %3754 = vset.pattern.permute.xlu0 0
      %3755 = vperm.xlu0 %3754, %v3013
      %v3756 = vpop.permute.xlu0 %3755
      %3759 = vset.pattern.permute.xlu0 0
      %3760 = vperm.xlu0 %3759, %v3015
      %v3761 = vpop.permute.xlu0 %3760
      %3764 = vset.pattern.permute.xlu0 0
      %3765 = vperm.xlu0 %3764, %v3017
      %v3766 = vpop.permute.xlu0 %3765
      %3769 = vset.pattern.permute.xlu0 0
      %3770 = vperm.xlu0 %3769, %v3019
      %v3771 = vpop.permute.xlu0 %3770
      %3774 = vset.pattern.permute.xlu0 0
      %3775 = vperm.xlu0 %3774, %v3021
      %v3776 = vpop.permute.xlu0 %3775
      %3779 = vset.pattern.permute.xlu0 0
      %3780 = vperm.xlu0 %3779, %v3023
      %v3781 = vpop.permute.xlu0 %3780
      %3784 = vset.pattern.permute.xlu0 0
      %3785 = vperm.xlu0 %3784, %v3025
      %v3786 = vpop.permute.xlu0 %3785
      %3789 = vset.pattern.permute.xlu0 0
      %3790 = vperm.xlu0 %3789, %v3027
      %v3791 = vpop.permute.xlu0 %3790
      %3794 = vset.pattern.permute.xlu0 0
      %3795 = vperm.xlu0 %3794, %v3029
      %v3796 = vpop.permute.xlu0 %3795
      %v3798 = vmul.f32 %v3641, %v3606
      %v3799 = vmul.f32 %v3646, %v3607
      %v3800 = vmul.f32 %v3651, %v3608
      %v3801 = vmul.f32 %v3656, %v3609
      %v3802 = vmul.f32 %v3661, %v3610
      %v3803 = vmul.f32 %v3666, %v3611
      %v3804 = vmul.f32 %v3671, %v3612
      %v3805 = vmul.f32 %v3676, %v3613
      %v3806 = vmul.f32 %v3681, %v3614
      %v3807 = vmul.f32 %v3686, %v3615
      %v3808 = vmul.f32 %v3691, %v3616
      %v3809 = vmul.f32 %v3696, %v3617
      %v3810 = vmul.f32 %v3701, %v3618
      %v3811 = vmul.f32 %v3706, %v3619
      %v3812 = vmul.f32 %v3711, %v3620
      %v3813 = vmul.f32 %v3716, %v3621
      %v3814 = vmul.f32 %v3721, %v3622
      %v3815 = vmul.f32 %v3726, %v3623
      %v3816 = vmul.f32 %v3731, %v3624
      %v3817 = vmul.f32 %v3736, %v3625
      %v3818 = vmul.f32 %v3741, %v3626
      %v3819 = vmul.f32 %v3746, %v3627
      %v3820 = vmul.f32 %v3751, %v3628
      %v3821 = vmul.f32 %v3756, %v3629
      %v3822 = vmul.f32 %v3761, %v3630
      %v3823 = vmul.f32 %v3766, %v3631
      %v3824 = vmul.f32 %v3771, %v3632
      %v3825 = vmul.f32 %v3776, %v3633
      %v3826 = vmul.f32 %v3781, %v3634
      %v3827 = vmul.f32 %v3786, %v3635
      %v3828 = vmul.f32 %v3791, %v3636
      %v3829 = vmul.f32 %v3796, %v3637
      %3830 = vrot.lane.b32.xlu0 %v369, 108
      %v3831 = vpop.permute.xlu0 %3830
      %3832 = vrot.lane.b32.xlu0 %v370, 108
      %v3833 = vpop.permute.xlu0 %3832
      %3834 = vrot.lane.b32.xlu0 %v371, 108
      %v3835 = vpop.permute.xlu0 %3834
      %3836 = vrot.lane.b32.xlu0 %v372, 108
      %v3837 = vpop.permute.xlu0 %3836
      %3838 = vrot.lane.b32.xlu0 %v373, 108
      %v3839 = vpop.permute.xlu0 %3838
      %3840 = vrot.lane.b32.xlu0 %v374, 108
      %v3841 = vpop.permute.xlu0 %3840
      %3842 = vrot.lane.b32.xlu0 %v375, 108
      %v3843 = vpop.permute.xlu0 %3842
      %3844 = vrot.lane.b32.xlu0 %v376, 108
      %v3845 = vpop.permute.xlu0 %3844
      %3846 = vrot.lane.b32.xlu0 %v377, 108
      %v3847 = vpop.permute.xlu0 %3846
      %3848 = vrot.lane.b32.xlu0 %v378, 108
      %v3849 = vpop.permute.xlu0 %3848
      %3850 = vrot.lane.b32.xlu0 %v379, 108
      %v3851 = vpop.permute.xlu0 %3850
      %3852 = vrot.lane.b32.xlu0 %v380, 108
      %v3853 = vpop.permute.xlu0 %3852
      %3854 = vrot.lane.b32.xlu0 %v381, 108
      %v3855 = vpop.permute.xlu0 %3854
      %3856 = vrot.lane.b32.xlu0 %v382, 108
      %v3857 = vpop.permute.xlu0 %3856
      %3858 = vrot.lane.b32.xlu0 %v383, 108
      %v3859 = vpop.permute.xlu0 %3858
      %3860 = vrot.lane.b32.xlu0 %v384, 108
      %v3861 = vpop.permute.xlu0 %3860
      %3862 = vrot.lane.b32.xlu0 %v385, 108
      %v3863 = vpop.permute.xlu0 %3862
      %3864 = vrot.lane.b32.xlu0 %v386, 108
      %v3865 = vpop.permute.xlu0 %3864
      %3866 = vrot.lane.b32.xlu0 %v387, 108
      %v3867 = vpop.permute.xlu0 %3866
      %3868 = vrot.lane.b32.xlu0 %v388, 108
      %v3869 = vpop.permute.xlu0 %3868
      %3870 = vrot.lane.b32.xlu0 %v389, 108
      %v3871 = vpop.permute.xlu0 %3870
      %3872 = vrot.lane.b32.xlu0 %v390, 108
      %v3873 = vpop.permute.xlu0 %3872
      %3874 = vrot.lane.b32.xlu0 %v391, 108
      %v3875 = vpop.permute.xlu0 %3874
      %3876 = vrot.lane.b32.xlu0 %v392, 108
      %v3877 = vpop.permute.xlu0 %3876
      %3878 = vrot.lane.b32.xlu0 %v393, 108
      %v3879 = vpop.permute.xlu0 %3878
      %3880 = vrot.lane.b32.xlu0 %v394, 108
      %v3881 = vpop.permute.xlu0 %3880
      %3882 = vrot.lane.b32.xlu0 %v395, 108
      %v3883 = vpop.permute.xlu0 %3882
      %3884 = vrot.lane.b32.xlu0 %v396, 108
      %v3885 = vpop.permute.xlu0 %3884
      %3886 = vrot.lane.b32.xlu0 %v397, 108
      %v3887 = vpop.permute.xlu0 %3886
      %3888 = vrot.lane.b32.xlu0 %v398, 108
      %v3889 = vpop.permute.xlu0 %3888
      %3890 = vrot.lane.b32.xlu0 %v399, 108
      %v3891 = vpop.permute.xlu0 %3890
      %3892 = vrot.lane.b32.xlu0 %v400, 108
      %v3893 = vpop.permute.xlu0 %3892
      %3926 = vmatprep.subr.mxu0 0.0
      %3927 = vmatpush1.msra.mxu0 %v3861
      %3928 = vmatprep.subr.mxu0 0.0
      %3929 = vmatpush1.msra.mxu0 %v3859
      %3930 = vmatprep.subr.mxu0 0.0
      %3931 = vmatpush1.msra.mxu0 %v3857
      %3932 = vmatprep.subr.mxu0 0.0
      %3933 = vmatpush1.msra.mxu0 %v3855
      %3934 = vmatprep.subr.mxu0 0.0
      %3935 = vmatpush1.msra.mxu0 %v3853
      %3936 = vmatprep.subr.mxu0 0.0
      %3937 = vmatpush1.msra.mxu0 %v3851
      %3938 = vmatprep.subr.mxu0 0.0
      %3939 = vmatpush1.msra.mxu0 %v3849
      %3940 = vmatprep.subr.mxu0 0.0
      %3941 = vmatpush1.msra.mxu0 %v3847
      %3942 = vmatprep.subr.mxu0 0.0
      %3943 = vmatpush1.msra.mxu0 %v3845
      %3944 = vmatprep.subr.mxu0 0.0
      %3945 = vmatpush1.msra.mxu0 %v3843
      %3946 = vmatprep.subr.mxu0 0.0
      %3947 = vmatpush1.msra.mxu0 %v3841
      %3948 = vmatprep.subr.mxu0 0.0
      %3949 = vmatpush1.msra.mxu0 %v3839
      %3950 = vmatprep.subr.mxu0 0.0
      %3951 = vmatpush1.msra.mxu0 %v3837
      %3952 = vmatprep.subr.mxu0 0.0
      %3953 = vmatpush1.msra.mxu0 %v3835
      %3954 = vmatprep.subr.mxu0 0.0
      %3955 = vmatpush1.msra.mxu0 %v3833
      %3956 = vmatprep.subr.mxu0 0.0
      %3957 = vmatpush1.msra.mxu0 %v3831
      %3958 = vmatprep.subr.mxu0 0.0
      %3959 = vmatpush2.msra.mxu0 %v3893
      %3960 = vmatprep.subr.mxu0 0.0
      %3961 = vmatpush2.msra.mxu0 %v3891
      %3962 = vmatprep.subr.mxu0 0.0
      %3963 = vmatpush2.msra.mxu0 %v3889
      %3964 = vmatprep.subr.mxu0 0.0
      %3965 = vmatpush2.msra.mxu0 %v3887
      %3966 = vmatprep.subr.mxu0 0.0
      %3967 = vmatpush2.msra.mxu0 %v3885
      %3968 = vmatprep.subr.mxu0 0.0
      %3969 = vmatpush2.msra.mxu0 %v3883
      %3970 = vmatprep.subr.mxu0 0.0
      %3971 = vmatpush2.msra.mxu0 %v3881
      %3972 = vmatprep.subr.mxu0 0.0
      %3973 = vmatpush2.msra.mxu0 %v3879
      %3974 = vmatprep.subr.mxu0 0.0
      %3975 = vmatpush2.msra.mxu0 %v3877
      %3976 = vmatprep.subr.mxu0 0.0
      %3977 = vmatpush2.msra.mxu0 %v3875
      %3978 = vmatprep.subr.mxu0 0.0
      %3979 = vmatpush2.msra.mxu0 %v3873
      %3980 = vmatprep.subr.mxu0 0.0
      %3981 = vmatpush2.msra.mxu0 %v3871
      %3982 = vmatprep.subr.mxu0 0.0
      %3983 = vmatpush2.msra.mxu0 %v3869
      %3984 = vmatprep.subr.mxu0 0.0
      %3985 = vmatpush2.msra.mxu0 %v3867
      %3986 = vmatprep.subr.mxu0 0.0
      %3987 = vmatpush2.msra.mxu0 %v3865
      %3988 = vmatprep.subr.mxu0 0.0
      %3989 = vmatpush2.msra.mxu0 %v3863
      %3990 = vmatprep.mubr.f32.mxu0 %v3257
      %3991 = vmatmul.mubr.f32.gmra.mxu0 %v3255
      %v3992 = vpop.f32.mrf.mxu0
      %v3993 = vadd.f32 0.0, %v3992
      %v3994 = vpop.f32.mrf.mxu0
      %3995 = vmatprep.mubr.f32.mxu0 %v3261
      %3996 = vmatmul.mubr.f32.gmra.mxu0 %v3259
      %v3997 = vpop.f32.mrf.mxu0
      %v3998 = vadd.f32 0.0, %v3997
      %v3999 = vpop.f32.mrf.mxu0
      %4000 = vmatprep.mubr.f32.mxu0 %v3265
      %4001 = vmatmul.mubr.f32.gmra.mxu0 %v3263
      %v4002 = vpop.f32.mrf.mxu0
      %v4003 = vadd.f32 0.0, %v4002
      %v4004 = vpop.f32.mrf.mxu0
      %4005 = vmatprep.mubr.f32.mxu0 %v3269
      %4006 = vmatmul.mubr.f32.gmra.mxu0 %v3267
      %v4007 = vpop.f32.mrf.mxu0
      %v4008 = vadd.f32 0.0, %v4007
      %v4009 = vpop.f32.mrf.mxu0
      %4010 = vmatprep.mubr.f32.mxu0 %v3273
      %4011 = vmatmul.mubr.f32.gmra.mxu0 %v3271
      %v4012 = vpop.f32.mrf.mxu0
      %v4013 = vadd.f32 0.0, %v4012
      %v4014 = vpop.f32.mrf.mxu0
      %4015 = vmatprep.mubr.f32.mxu0 %v3277
      %4016 = vmatmul.mubr.f32.gmra.mxu0 %v3275
      %v4017 = vpop.f32.mrf.mxu0
      %v4018 = vadd.f32 0.0, %v4017
      %v4019 = vpop.f32.mrf.mxu0
      %4020 = vmatprep.mubr.f32.mxu0 %v3281
      %4021 = vmatmul.mubr.f32.gmra.mxu0 %v3279
      %v4022 = vpop.f32.mrf.mxu0
      %v4023 = vadd.f32 0.0, %v4022
      %v4024 = vpop.f32.mrf.mxu0
      %4025 = vmatprep.mubr.f32.mxu0 %v3285
      %4026 = vmatmul.mubr.f32.gmra.mxu0 %v3283
      %v4027 = vpop.f32.mrf.mxu0
      %v4028 = vadd.f32 0.0, %v4027
      %v4029 = vpop.f32.mrf.mxu0
      %4030 = vmatprep.mubr.f32.mxu0 %v3289
      %4031 = vmatmul.mubr.f32.gmra.mxu0 %v3287
      %v4032 = vpop.f32.mrf.mxu0
      %v4033 = vadd.f32 0.0, %v4032
      %v4034 = vpop.f32.mrf.mxu0
      %4035 = vmatprep.mubr.f32.mxu0 %v3293
      %4036 = vmatmul.mubr.f32.gmra.mxu0 %v3291
      %v4037 = vpop.f32.mrf.mxu0
      %v4038 = vadd.f32 0.0, %v4037
      %v4039 = vpop.f32.mrf.mxu0
      %4040 = vmatprep.mubr.f32.mxu0 %v3297
      %4041 = vmatmul.mubr.f32.gmra.mxu0 %v3295
      %v4042 = vpop.f32.mrf.mxu0
      %v4043 = vadd.f32 0.0, %v4042
      %v4044 = vpop.f32.mrf.mxu0
      %4045 = vmatprep.mubr.f32.mxu0 %v3301
      %4046 = vmatmul.mubr.f32.gmra.mxu0 %v3299
      %v4047 = vpop.f32.mrf.mxu0
      %v4048 = vadd.f32 0.0, %v4047
      %v4049 = vpop.f32.mrf.mxu0
      %4050 = vmatprep.mubr.f32.mxu0 %v3305
      %4051 = vmatmul.mubr.f32.gmra.mxu0 %v3303
      %v4052 = vpop.f32.mrf.mxu0
      %v4053 = vadd.f32 0.0, %v4052
      %v4054 = vpop.f32.mrf.mxu0
      %4055 = vmatprep.mubr.f32.mxu0 %v3309
      %4056 = vmatmul.mubr.f32.gmra.mxu0 %v3307
      %v4057 = vpop.f32.mrf.mxu0
      %v4058 = vadd.f32 0.0, %v4057
      %v4059 = vpop.f32.mrf.mxu0
      %4060 = vmatprep.mubr.f32.mxu0 %v3313
      %4061 = vmatmul.mubr.f32.gmra.mxu0 %v3311
      %v4062 = vpop.f32.mrf.mxu0
      %v4063 = vadd.f32 0.0, %v4062
      %v4064 = vpop.f32.mrf.mxu0
      %4065 = vmatprep.mubr.f32.mxu0 %v3317
      %4066 = vmatmul.mubr.f32.gmra.mxu0 %v3315
      %v4067 = vpop.f32.mrf.mxu0
      %v4068 = vadd.f32 0.0, %v4067
      %v4069 = vpop.f32.mrf.mxu0
      %4070 = vmatprep.mubr.f32.mxu0 %v3321
      %4071 = vmatmul.mubr.f32.gmra.mxu0 %v3319
      %v4072 = vpop.f32.mrf.mxu0
      %v4073 = vadd.f32 0.0, %v4072
      %v4074 = vpop.f32.mrf.mxu0
      %4075 = vmatprep.mubr.f32.mxu0 %v3325
      %4076 = vmatmul.mubr.f32.gmra.mxu0 %v3323
      %v4077 = vpop.f32.mrf.mxu0
      %v4078 = vadd.f32 0.0, %v4077
      %v4079 = vpop.f32.mrf.mxu0
      %4080 = vmatprep.mubr.f32.mxu0 %v3329
      %4081 = vmatmul.mubr.f32.gmra.mxu0 %v3327
      %v4082 = vpop.f32.mrf.mxu0
      %v4083 = vadd.f32 0.0, %v4082
      %v4084 = vpop.f32.mrf.mxu0
      %4085 = vmatprep.mubr.f32.mxu0 %v3333
      %4086 = vmatmul.mubr.f32.gmra.mxu0 %v3331
      %v4087 = vpop.f32.mrf.mxu0
      %v4088 = vadd.f32 0.0, %v4087
      %v4089 = vpop.f32.mrf.mxu0
      %4090 = vmatprep.mubr.f32.mxu0 %v3337
      %4091 = vmatmul.mubr.f32.gmra.mxu0 %v3335
      %v4092 = vpop.f32.mrf.mxu0
      %v4093 = vadd.f32 0.0, %v4092
      %v4094 = vpop.f32.mrf.mxu0
      %4095 = vmatprep.mubr.f32.mxu0 %v3341
      %4096 = vmatmul.mubr.f32.gmra.mxu0 %v3339
      %v4097 = vpop.f32.mrf.mxu0
      %v4098 = vadd.f32 0.0, %v4097
      %v4099 = vpop.f32.mrf.mxu0
      %4100 = vmatprep.mubr.f32.mxu0 %v3345
      %4101 = vmatmul.mubr.f32.gmra.mxu0 %v3343
      %v4102 = vpop.f32.mrf.mxu0
      %v4103 = vadd.f32 0.0, %v4102
      %v4104 = vpop.f32.mrf.mxu0
      %4105 = vmatprep.mubr.f32.mxu0 %v3349
      %4106 = vmatmul.mubr.f32.gmra.mxu0 %v3347
      %v4107 = vpop.f32.mrf.mxu0
      %v4108 = vadd.f32 0.0, %v4107
      %v4109 = vpop.f32.mrf.mxu0
      %4110 = vmatprep.mubr.f32.mxu0 %v3353
      %4111 = vmatmul.mubr.f32.gmra.mxu0 %v3351
      %v4112 = vpop.f32.mrf.mxu0
      %v4113 = vadd.f32 0.0, %v4112
      %v4114 = vpop.f32.mrf.mxu0
      %4115 = vmatprep.mubr.f32.mxu0 %v3357
      %4116 = vmatmul.mubr.f32.gmra.mxu0 %v3355
      %v4117 = vpop.f32.mrf.mxu0
      %v4118 = vadd.f32 0.0, %v4117
      %v4119 = vpop.f32.mrf.mxu0
      %4120 = vmatprep.mubr.f32.mxu0 %v3361
      %4121 = vmatmul.mubr.f32.gmra.mxu0 %v3359
      %v4122 = vpop.f32.mrf.mxu0
      %v4123 = vadd.f32 0.0, %v4122
      %v4124 = vpop.f32.mrf.mxu0
      %4125 = vmatprep.mubr.f32.mxu0 %v3365
      %4126 = vmatmul.mubr.f32.gmra.mxu0 %v3363
      %v4127 = vpop.f32.mrf.mxu0
      %v4128 = vadd.f32 0.0, %v4127
      %v4129 = vpop.f32.mrf.mxu0
      %4130 = vmatprep.mubr.f32.mxu0 %v3369
      %4131 = vmatmul.mubr.f32.gmra.mxu0 %v3367
      %v4132 = vpop.f32.mrf.mxu0
      %v4133 = vadd.f32 0.0, %v4132
      %v4134 = vpop.f32.mrf.mxu0
      %4135 = vmatprep.mubr.f32.mxu0 %v3373
      %4136 = vmatmul.mubr.f32.gmra.mxu0 %v3371
      %v4137 = vpop.f32.mrf.mxu0
      %v4138 = vadd.f32 0.0, %v4137
      %v4139 = vpop.f32.mrf.mxu0
      %4140 = vmatprep.mubr.f32.mxu0 %v3377
      %4141 = vmatmul.mubr.f32.gmra.mxu0 %v3375
      %v4142 = vpop.f32.mrf.mxu0
      %v4143 = vadd.f32 0.0, %v4142
      %v4144 = vpop.f32.mrf.mxu0
      %4145 = vmatprep.mubr.f32.mxu0 %v3381
      %4146 = vmatmul.mubr.f32.gmra.mxu0 %v3379
      %v4147 = vpop.f32.mrf.mxu0
      %v4148 = vadd.f32 0.0, %v4147
      %v4149 = vpop.f32.mrf.mxu0
      %4150 = vdwg.mxu0
      %v4151 = vadd.f32 %v3798, %v3993
      %v4152 = vadd.f32 %v3799, %v3998
      %v4153 = vadd.f32 %v3800, %v4003
      %v4154 = vadd.f32 %v3801, %v4008
      %v4155 = vadd.f32 %v3802, %v4013
      %v4156 = vadd.f32 %v3803, %v4018
      %v4157 = vadd.f32 %v3804, %v4023
      %v4158 = vadd.f32 %v3805, %v4028
      %v4159 = vadd.f32 %v3806, %v4033
      %v4160 = vadd.f32 %v3807, %v4038
      %v4161 = vadd.f32 %v3808, %v4043
      %v4162 = vadd.f32 %v3809, %v4048
      %v4163 = vadd.f32 %v3810, %v4053
      %v4164 = vadd.f32 %v3811, %v4058
      %v4165 = vadd.f32 %v3812, %v4063
      %v4166 = vadd.f32 %v3813, %v4068
      %v4167 = vadd.f32 %v3814, %v4073
      %v4168 = vadd.f32 %v3815, %v4078
      %v4169 = vadd.f32 %v3816, %v4083
      %v4170 = vadd.f32 %v3817, %v4088
      %v4171 = vadd.f32 %v3818, %v4093
      %v4172 = vadd.f32 %v3819, %v4098
      %v4173 = vadd.f32 %v3820, %v4103
      %v4174 = vadd.f32 %v3821, %v4108
      %v4175 = vadd.f32 %v3822, %v4113
      %v4176 = vadd.f32 %v3823, %v4118
      %v4177 = vadd.f32 %v3824, %v4123
      %v4178 = vadd.f32 %v3825, %v4128
      %v4179 = vadd.f32 %v3826, %v4133
      %v4180 = vadd.f32 %v3827, %v4138
      %v4181 = vadd.f32 %v3828, %v4143
      %v4182 = vadd.f32 %v3829, %v4148
      %4183 = vst.msk [vmem:[#allocation4] sm:$0xff] %vm497, %v4151
      %4184 = vst.msk [vmem:[#allocation4 + $0x8] sm:$0xff] %vm497, %v4152
      %4185 = vst.msk [vmem:[#allocation4 + $0x10] sm:$0xff] %vm497, %v4153
      %4186 = vst.msk [vmem:[#allocation4 + $0x18] sm:$0xff] %vm497, %v4154
      %4187 = vst.msk [vmem:[#allocation4 + $0x20] sm:$0xff] %vm497, %v4155
      %4188 = vst.msk [vmem:[#allocation4 + $0x28] sm:$0xff] %vm497, %v4156
      %4189 = vst.msk [vmem:[#allocation4 + $0x30] sm:$0xff] %vm497, %v4157
      %4190 = vst.msk [vmem:[#allocation4 + $0x38] sm:$0xff] %vm497, %v4158
      %4191 = vst.msk [vmem:[#allocation4 + $0x40] sm:$0xff] %vm497, %v4159
      %4192 = vst.msk [vmem:[#allocation4 + $0x48] sm:$0xff] %vm497, %v4160
      %4193 = vst.msk [vmem:[#allocation4 + $0x50] sm:$0xff] %vm497, %v4161
      %4194 = vst.msk [vmem:[#allocation4 + $0x58] sm:$0xff] %vm497, %v4162
      %4195 = vst.msk [vmem:[#allocation4 + $0x60] sm:$0xff] %vm497, %v4163
      %4196 = vst.msk [vmem:[#allocation4 + $0x68] sm:$0xff] %vm497, %v4164
      %4197 = vst.msk [vmem:[#allocation4 + $0x70] sm:$0xff] %vm497, %v4165
      %4198 = vst.msk [vmem:[#allocation4 + $0x78] sm:$0xff] %vm497, %v4166
      %4199 = vst.msk [vmem:[#allocation4 + $0x80] sm:$0xff] %vm497, %v4167
      %4200 = vst.msk [vmem:[#allocation4 + $0x88] sm:$0xff] %vm497, %v4168
      %4201 = vst.msk [vmem:[#allocation4 + $0x90] sm:$0xff] %vm497, %v4169
      %4202 = vst.msk [vmem:[#allocation4 + $0x98] sm:$0xff] %vm497, %v4170
      %4203 = vst.msk [vmem:[#allocation4 + $0xa0] sm:$0xff] %vm497, %v4171
      %4204 = vst.msk [vmem:[#allocation4 + $0xa8] sm:$0xff] %vm497, %v4172
      %4205 = vst.msk [vmem:[#allocation4 + $0xb0] sm:$0xff] %vm497, %v4173
      %4206 = vst.msk [vmem:[#allocation4 + $0xb8] sm:$0xff] %vm497, %v4174
      %4207 = vst.msk [vmem:[#allocation4 + $0xc0] sm:$0xff] %vm497, %v4175
      %4208 = vst.msk [vmem:[#allocation4 + $0xc8] sm:$0xff] %vm497, %v4176
      %4209 = vst.msk [vmem:[#allocation4 + $0xd0] sm:$0xff] %vm497, %v4177
      %4210 = vst.msk [vmem:[#allocation4 + $0xd8] sm:$0xff] %vm497, %v4178
      %4211 = vst.msk [vmem:[#allocation4 + $0xe0] sm:$0xff] %vm497, %v4179
      %4212 = vst.msk [vmem:[#allocation4 + $0xe8] sm:$0xff] %vm497, %v4180
      %4213 = vst.msk [vmem:[#allocation4 + $0xf0] sm:$0xff] %vm497, %v4181
      %4214 = vst.msk [vmem:[#allocation4 + $0xf8] sm:$0xff] %vm497, %v4182
      %4215 = vst.msk [vmem:[#allocation2] sm:$0xff] %vm1715, %v2902
      %4216 = vst.msk [vmem:[#allocation2 + $0x8] sm:$0xff] %vm1715, %v2903
      %4217 = vst.msk [vmem:[#allocation2 + $0x10] sm:$0xff] %vm1715, %v2904
      %4218 = vst.msk [vmem:[#allocation2 + $0x18] sm:$0xff] %vm1715, %v2905
      %4219 = vst.msk [vmem:[#allocation2 + $0x20] sm:$0xff] %vm1715, %v2906
      %4220 = vst.msk [vmem:[#allocation2 + $0x28] sm:$0xff] %vm1715, %v2907
      %4221 = vst.msk [vmem:[#allocation2 + $0x30] sm:$0xff] %vm1715, %v2908
      %4222 = vst.msk [vmem:[#allocation2 + $0x38] sm:$0xff] %vm1715, %v2909
      %4223 = vst.msk [vmem:[#allocation2 + $0x40] sm:$0xff] %vm1715, %v2910
      %4224 = vst.msk [vmem:[#allocation2 + $0x48] sm:$0xff] %vm1715, %v2911
      %4225 = vst.msk [vmem:[#allocation2 + $0x50] sm:$0xff] %vm1715, %v2912
      %4226 = vst.msk [vmem:[#allocation2 + $0x58] sm:$0xff] %vm1715, %v2913
      %4227 = vst.msk [vmem:[#allocation2 + $0x60] sm:$0xff] %vm1715, %v2914
      %4228 = vst.msk [vmem:[#allocation2 + $0x68] sm:$0xff] %vm1715, %v2915
      %4229 = vst.msk [vmem:[#allocation2 + $0x70] sm:$0xff] %vm1715, %v2916
      %4230 = vst.msk [vmem:[#allocation2 + $0x78] sm:$0xff] %vm1715, %v2917
      %4231 = vst.msk [vmem:[#allocation2 + $0x80] sm:$0xff] %vm1715, %v2918
      %4232 = vst.msk [vmem:[#allocation2 + $0x88] sm:$0xff] %vm1715, %v2919
      %4233 = vst.msk [vmem:[#allocation2 + $0x90] sm:$0xff] %vm1715, %v2920
      %4234 = vst.msk [vmem:[#allocation2 + $0x98] sm:$0xff] %vm1715, %v2921
      %4235 = vst.msk [vmem:[#allocation2 + $0xa0] sm:$0xff] %vm1715, %v2922
      %4236 = vst.msk [vmem:[#allocation2 + $0xa8] sm:$0xff] %vm1715, %v2923
      %4237 = vst.msk [vmem:[#allocation2 + $0xb0] sm:$0xff] %vm1715, %v2924
      %4238 = vst.msk [vmem:[#allocation2 + $0xb8] sm:$0xff] %vm1715, %v2925
      %4239 = vst.msk [vmem:[#allocation2 + $0xc0] sm:$0xff] %vm1715, %v2926
      %4240 = vst.msk [vmem:[#allocation2 + $0xc8] sm:$0xff] %vm1715, %v2927
      %4241 = vst.msk [vmem:[#allocation2 + $0xd0] sm:$0xff] %vm1715, %v2928
      %4242 = vst.msk [vmem:[#allocation2 + $0xd8] sm:$0xff] %vm1715, %v2929
      %4243 = vst.msk [vmem:[#allocation2 + $0xe0] sm:$0xff] %vm1715, %v2930
      %4244 = vst.msk [vmem:[#allocation2 + $0xe8] sm:$0xff] %vm1715, %v2931
      %4245 = vst.msk [vmem:[#allocation2 + $0xf0] sm:$0xff] %vm1715, %v2932
      %4246 = vst.msk [vmem:[#allocation2 + $0xf8] sm:$0xff] %vm1715, %v2933
      %4247 = vrot.lane.b32.xlu0 %v337, 124
      %v4248 = vpop.permute.xlu0 %4247
      %4249 = vrot.lane.b32.xlu0 %v338, 124
      %v4250 = vpop.permute.xlu0 %4249
      %4251 = vrot.lane.b32.xlu0 %v339, 124
      %v4252 = vpop.permute.xlu0 %4251
      %4253 = vrot.lane.b32.xlu0 %v340, 124
      %v4254 = vpop.permute.xlu0 %4253
      %4255 = vrot.lane.b32.xlu0 %v341, 124
      %v4256 = vpop.permute.xlu0 %4255
      %4257 = vrot.lane.b32.xlu0 %v342, 124
      %v4258 = vpop.permute.xlu0 %4257
      %4259 = vrot.lane.b32.xlu0 %v343, 124
      %v4260 = vpop.permute.xlu0 %4259
      %4261 = vrot.lane.b32.xlu0 %v344, 124
      %v4262 = vpop.permute.xlu0 %4261
      %4263 = vrot.lane.b32.xlu0 %v345, 124
      %v4264 = vpop.permute.xlu0 %4263
      %4265 = vrot.lane.b32.xlu0 %v346, 124
      %v4266 = vpop.permute.xlu0 %4265
      %4267 = vrot.lane.b32.xlu0 %v347, 124
      %v4268 = vpop.permute.xlu0 %4267
      %4269 = vrot.lane.b32.xlu0 %v348, 124
      %v4270 = vpop.permute.xlu0 %4269
      %4271 = vrot.lane.b32.xlu0 %v349, 124
      %v4272 = vpop.permute.xlu0 %4271
      %4273 = vrot.lane.b32.xlu0 %v350, 124
      %v4274 = vpop.permute.xlu0 %4273
      %4275 = vrot.lane.b32.xlu0 %v351, 124
      %v4276 = vpop.permute.xlu0 %4275
      %4277 = vrot.lane.b32.xlu0 %v352, 124
      %v4278 = vpop.permute.xlu0 %4277
      %4279 = vrot.lane.b32.xlu0 %v353, 124
      %v4280 = vpop.permute.xlu0 %4279
      %4281 = vrot.lane.b32.xlu0 %v354, 124
      %v4282 = vpop.permute.xlu0 %4281
      %4283 = vrot.lane.b32.xlu0 %v355, 124
      %v4284 = vpop.permute.xlu0 %4283
      %4285 = vrot.lane.b32.xlu0 %v356, 124
      %v4286 = vpop.permute.xlu0 %4285
      %4287 = vrot.lane.b32.xlu0 %v357, 124
      %v4288 = vpop.permute.xlu0 %4287
      %4289 = vrot.lane.b32.xlu0 %v358, 124
      %v4290 = vpop.permute.xlu0 %4289
      %4291 = vrot.lane.b32.xlu0 %v359, 124
      %v4292 = vpop.permute.xlu0 %4291
      %4293 = vrot.lane.b32.xlu0 %v360, 124
      %v4294 = vpop.permute.xlu0 %4293
      %4295 = vrot.lane.b32.xlu0 %v361, 124
      %v4296 = vpop.permute.xlu0 %4295
      %4297 = vrot.lane.b32.xlu0 %v362, 124
      %v4298 = vpop.permute.xlu0 %4297
      %4299 = vrot.lane.b32.xlu0 %v363, 124
      %v4300 = vpop.permute.xlu0 %4299
      %4301 = vrot.lane.b32.xlu0 %v364, 124
      %v4302 = vpop.permute.xlu0 %4301
      %4303 = vrot.lane.b32.xlu0 %v365, 124
      %v4304 = vpop.permute.xlu0 %4303
      %4305 = vrot.lane.b32.xlu0 %v366, 124
      %v4306 = vpop.permute.xlu0 %4305
      %4307 = vrot.lane.b32.xlu0 %v367, 124
      %v4308 = vpop.permute.xlu0 %4307
      %4309 = vrot.lane.b32.xlu0 %v368, 124
      %v4310 = vpop.permute.xlu0 %4309
      %v4311 = vsel %vm497, %v4248, 0
      %v4313 = vsel %vm497, %v4250, 0
      %v4315 = vsel %vm497, %v4252, 0
      %v4317 = vsel %vm497, %v4254, 0
      %v4319 = vsel %vm497, %v4256, 0
      %v4321 = vsel %vm497, %v4258, 0
      %v4323 = vsel %vm497, %v4260, 0
      %v4325 = vsel %vm497, %v4262, 0
      %v4327 = vsel %vm497, %v4264, 0
      %v4329 = vsel %vm497, %v4266, 0
      %v4331 = vsel %vm497, %v4268, 0
      %v4333 = vsel %vm497, %v4270, 0
      %v4335 = vsel %vm497, %v4272, 0
      %v4337 = vsel %vm497, %v4274, 0
      %v4339 = vsel %vm497, %v4276, 0
      %v4341 = vsel %vm497, %v4278, 0
      %v4343 = vsel %vm497, %v4280, 0
      %v4345 = vsel %vm497, %v4282, 0
      %v4347 = vsel %vm497, %v4284, 0
      %v4349 = vsel %vm497, %v4286, 0
      %v4351 = vsel %vm497, %v4288, 0
      %v4353 = vsel %vm497, %v4290, 0
      %v4355 = vsel %vm497, %v4292, 0
      %v4357 = vsel %vm497, %v4294, 0
      %v4359 = vsel %vm497, %v4296, 0
      %v4361 = vsel %vm497, %v4298, 0
      %v4363 = vsel %vm497, %v4300, 0
      %v4365 = vsel %vm497, %v4302, 0
      %v4367 = vsel %vm497, %v4304, 0
      %v4369 = vsel %vm497, %v4306, 0
      %v4371 = vsel %vm497, %v4308, 0
      %v4373 = vsel %vm497, %v4310, 0
      %4375 = vmatprep.subr.mxu0 0.0
      %4376 = vmatpush1.xpose.msra.mxu0 %v624
      %4377 = vmatprep.subr.mxu0 0.0
      %4378 = vmatpush1.xpose.msra.mxu0 %v622
      %4379 = vmatprep.subr.mxu0 0.0
      %4380 = vmatpush1.xpose.msra.mxu0 %v620
      %4381 = vmatprep.subr.mxu0 0.0
      %4382 = vmatpush1.xpose.msra.mxu0 %v618
      %4383 = vmatprep.subr.mxu0 0.0
      %4384 = vmatpush1.xpose.msra.mxu0 %v616
      %4385 = vmatprep.subr.mxu0 0.0
      %4386 = vmatpush1.xpose.msra.mxu0 %v614
      %4387 = vmatprep.subr.mxu0 0.0
      %4388 = vmatpush1.xpose.msra.mxu0 %v612
      %4389 = vmatprep.subr.mxu0 0.0
      %4390 = vmatpush1.xpose.msra.mxu0 %v610
      %4391 = vmatprep.subr.mxu0 0.0
      %4392 = vmatpush1.xpose.msra.mxu0 %v608
      %4393 = vmatprep.subr.mxu0 0.0
      %4394 = vmatpush1.xpose.msra.mxu0 %v606
      %4395 = vmatprep.subr.mxu0 0.0
      %4396 = vmatpush1.xpose.msra.mxu0 %v604
      %4397 = vmatprep.subr.mxu0 0.0
      %4398 = vmatpush1.xpose.msra.mxu0 %v602
      %4399 = vmatprep.subr.mxu0 0.0
      %4400 = vmatpush1.xpose.msra.mxu0 %v600
      %4401 = vmatprep.subr.mxu0 0.0
      %4402 = vmatpush1.xpose.msra.mxu0 %v598
      %4403 = vmatprep.subr.mxu0 0.0
      %4404 = vmatpush1.xpose.msra.mxu0 %v596
      %4405 = vmatprep.subr.mxu0 0.0
      %4406 = vmatpush1.xpose.msra.mxu0 %v594
      %4407 = vmatprep.subr.mxu0 0.0
      %4408 = vmatpush2.xpose.msra.mxu0 %v656
      %4409 = vmatprep.subr.mxu0 0.0
      %4410 = vmatpush2.xpose.msra.mxu0 %v654
      %4411 = vmatprep.subr.mxu0 0.0
      %4412 = vmatpush2.xpose.msra.mxu0 %v652
      %4413 = vmatprep.subr.mxu0 0.0
      %4414 = vmatpush2.xpose.msra.mxu0 %v650
      %4415 = vmatprep.subr.mxu0 0.0
      %4416 = vmatpush2.xpose.msra.mxu0 %v648
      %4417 = vmatprep.subr.mxu0 0.0
      %4418 = vmatpush2.xpose.msra.mxu0 %v646
      %4419 = vmatprep.subr.mxu0 0.0
      %4420 = vmatpush2.xpose.msra.mxu0 %v644
      %4421 = vmatprep.subr.mxu0 0.0
      %4422 = vmatpush2.xpose.msra.mxu0 %v642
      %4423 = vmatprep.subr.mxu0 0.0
      %4424 = vmatpush2.xpose.msra.mxu0 %v640
      %4425 = vmatprep.subr.mxu0 0.0
      %4426 = vmatpush2.xpose.msra.mxu0 %v638
      %4427 = vmatprep.subr.mxu0 0.0
      %4428 = vmatpush2.xpose.msra.mxu0 %v636
      %4429 = vmatprep.subr.mxu0 0.0
      %4430 = vmatpush2.xpose.msra.mxu0 %v634
      %4431 = vmatprep.subr.mxu0 0.0
      %4432 = vmatpush2.xpose.msra.mxu0 %v632
      %4433 = vmatprep.subr.mxu0 0.0
      %4434 = vmatpush2.xpose.msra.mxu0 %v630
      %4435 = vmatprep.subr.mxu0 0.0
      %4436 = vmatpush2.xpose.msra.mxu0 %v628
      %4437 = vmatprep.subr.mxu0 0.0
      %4438 = vmatpush2.xpose.msra.mxu0 %v626
      %4439 = vmatprep.mubr.f32.mxu0 0.0
      %4440 = vmatmul.mubr.f32.gmra.mxu0 %v4311
      %v4441 = vpop.f32.mrf.mxu0
      %v4442 = vadd.f32 0.0, %v4441
      %v4443 = vpop.f32.mrf.mxu0
      %v4444 = vadd.f32 0.0, %v4443
      %4445 = vmatprep.mubr.f32.mxu0 0.0
      %4446 = vmatmul.mubr.f32.gmra.mxu0 %v4313
      %v4447 = vpop.f32.mrf.mxu0
      %v4448 = vadd.f32 0.0, %v4447
      %v4449 = vpop.f32.mrf.mxu0
      %v4450 = vadd.f32 0.0, %v4449
      %4451 = vmatprep.mubr.f32.mxu0 0.0
      %4452 = vmatmul.mubr.f32.gmra.mxu0 %v4315
      %v4453 = vpop.f32.mrf.mxu0
      %v4454 = vadd.f32 0.0, %v4453
      %v4455 = vpop.f32.mrf.mxu0
      %v4456 = vadd.f32 0.0, %v4455
      %4457 = vmatprep.mubr.f32.mxu0 0.0
      %4458 = vmatmul.mubr.f32.gmra.mxu0 %v4317
      %v4459 = vpop.f32.mrf.mxu0
      %v4460 = vadd.f32 0.0, %v4459
      %v4461 = vpop.f32.mrf.mxu0
      %v4462 = vadd.f32 0.0, %v4461
      %4463 = vmatprep.mubr.f32.mxu0 0.0
      %4464 = vmatmul.mubr.f32.gmra.mxu0 %v4319
      %v4465 = vpop.f32.mrf.mxu0
      %v4466 = vadd.f32 0.0, %v4465
      %v4467 = vpop.f32.mrf.mxu0
      %v4468 = vadd.f32 0.0, %v4467
      %4469 = vmatprep.mubr.f32.mxu0 0.0
      %4470 = vmatmul.mubr.f32.gmra.mxu0 %v4321
      %v4471 = vpop.f32.mrf.mxu0
      %v4472 = vadd.f32 0.0, %v4471
      %v4473 = vpop.f32.mrf.mxu0
      %v4474 = vadd.f32 0.0, %v4473
      %4475 = vmatprep.mubr.f32.mxu0 0.0
      %4476 = vmatmul.mubr.f32.gmra.mxu0 %v4323
      %v4477 = vpop.f32.mrf.mxu0
      %v4478 = vadd.f32 0.0, %v4477
      %v4479 = vpop.f32.mrf.mxu0
      %v4480 = vadd.f32 0.0, %v4479
      %4481 = vmatprep.mubr.f32.mxu0 0.0
      %4482 = vmatmul.mubr.f32.gmra.mxu0 %v4325
      %v4483 = vpop.f32.mrf.mxu0
      %v4484 = vadd.f32 0.0, %v4483
      %v4485 = vpop.f32.mrf.mxu0
      %v4486 = vadd.f32 0.0, %v4485
      %4487 = vmatprep.mubr.f32.mxu0 0.0
      %4488 = vmatmul.mubr.f32.gmra.mxu0 %v4327
      %v4489 = vpop.f32.mrf.mxu0
      %v4490 = vadd.f32 0.0, %v4489
      %v4491 = vpop.f32.mrf.mxu0
      %v4492 = vadd.f32 0.0, %v4491
      %4493 = vmatprep.mubr.f32.mxu0 0.0
      %4494 = vmatmul.mubr.f32.gmra.mxu0 %v4329
      %v4495 = vpop.f32.mrf.mxu0
      %v4496 = vadd.f32 0.0, %v4495
      %v4497 = vpop.f32.mrf.mxu0
      %v4498 = vadd.f32 0.0, %v4497
      %4499 = vmatprep.mubr.f32.mxu0 0.0
      %4500 = vmatmul.mubr.f32.gmra.mxu0 %v4331
      %v4501 = vpop.f32.mrf.mxu0
      %v4502 = vadd.f32 0.0, %v4501
      %v4503 = vpop.f32.mrf.mxu0
      %v4504 = vadd.f32 0.0, %v4503
      %4505 = vmatprep.mubr.f32.mxu0 0.0
      %4506 = vmatmul.mubr.f32.gmra.mxu0 %v4333
      %v4507 = vpop.f32.mrf.mxu0
      %v4508 = vadd.f32 0.0, %v4507
      %v4509 = vpop.f32.mrf.mxu0
      %v4510 = vadd.f32 0.0, %v4509
      %4511 = vmatprep.mubr.f32.mxu0 0.0
      %4512 = vmatmul.mubr.f32.gmra.mxu0 %v4335
      %v4513 = vpop.f32.mrf.mxu0
      %v4514 = vadd.f32 0.0, %v4513
      %v4515 = vpop.f32.mrf.mxu0
      %v4516 = vadd.f32 0.0, %v4515
      %4517 = vmatprep.mubr.f32.mxu0 0.0
      %4518 = vmatmul.mubr.f32.gmra.mxu0 %v4337
      %v4519 = vpop.f32.mrf.mxu0
      %v4520 = vadd.f32 0.0, %v4519
      %v4521 = vpop.f32.mrf.mxu0
      %v4522 = vadd.f32 0.0, %v4521
      %4523 = vmatprep.mubr.f32.mxu0 0.0
      %4524 = vmatmul.mubr.f32.gmra.mxu0 %v4339
      %v4525 = vpop.f32.mrf.mxu0
      %v4526 = vadd.f32 0.0, %v4525
      %v4527 = vpop.f32.mrf.mxu0
      %v4528 = vadd.f32 0.0, %v4527
      %4529 = vmatprep.mubr.f32.mxu0 0.0
      %4530 = vmatmul.mubr.f32.gmra.mxu0 %v4341
      %v4531 = vpop.f32.mrf.mxu0
      %v4532 = vadd.f32 0.0, %v4531
      %v4533 = vpop.f32.mrf.mxu0
      %v4534 = vadd.f32 0.0, %v4533
      %4535 = vmatprep.mubr.f32.mxu0 0.0
      %4536 = vmatmul.mubr.f32.gmra.mxu0 %v4343
      %v4537 = vpop.f32.mrf.mxu0
      %v4538 = vadd.f32 0.0, %v4537
      %v4539 = vpop.f32.mrf.mxu0
      %v4540 = vadd.f32 0.0, %v4539
      %4541 = vmatprep.mubr.f32.mxu0 0.0
      %4542 = vmatmul.mubr.f32.gmra.mxu0 %v4345
      %v4543 = vpop.f32.mrf.mxu0
      %v4544 = vadd.f32 0.0, %v4543
      %v4545 = vpop.f32.mrf.mxu0
      %v4546 = vadd.f32 0.0, %v4545
      %4547 = vmatprep.mubr.f32.mxu0 0.0
      %4548 = vmatmul.mubr.f32.gmra.mxu0 %v4347
      %v4549 = vpop.f32.mrf.mxu0
      %v4550 = vadd.f32 0.0, %v4549
      %v4551 = vpop.f32.mrf.mxu0
      %v4552 = vadd.f32 0.0, %v4551
      %4553 = vmatprep.mubr.f32.mxu0 0.0
      %4554 = vmatmul.mubr.f32.gmra.mxu0 %v4349
      %v4555 = vpop.f32.mrf.mxu0
      %v4556 = vadd.f32 0.0, %v4555
      %v4557 = vpop.f32.mrf.mxu0
      %v4558 = vadd.f32 0.0, %v4557
      %4559 = vmatprep.mubr.f32.mxu0 0.0
      %4560 = vmatmul.mubr.f32.gmra.mxu0 %v4351
      %v4561 = vpop.f32.mrf.mxu0
      %v4562 = vadd.f32 0.0, %v4561
      %v4563 = vpop.f32.mrf.mxu0
      %v4564 = vadd.f32 0.0, %v4563
      %4565 = vmatprep.mubr.f32.mxu0 0.0
      %4566 = vmatmul.mubr.f32.gmra.mxu0 %v4353
      %v4567 = vpop.f32.mrf.mxu0
      %v4568 = vadd.f32 0.0, %v4567
      %v4569 = vpop.f32.mrf.mxu0
      %v4570 = vadd.f32 0.0, %v4569
      %4571 = vmatprep.mubr.f32.mxu0 0.0
      %4572 = vmatmul.mubr.f32.gmra.mxu0 %v4355
      %v4573 = vpop.f32.mrf.mxu0
      %v4574 = vadd.f32 0.0, %v4573
      %v4575 = vpop.f32.mrf.mxu0
      %v4576 = vadd.f32 0.0, %v4575
      %4577 = vmatprep.mubr.f32.mxu0 0.0
      %4578 = vmatmul.mubr.f32.gmra.mxu0 %v4357
      %v4579 = vpop.f32.mrf.mxu0
      %v4580 = vadd.f32 0.0, %v4579
      %v4581 = vpop.f32.mrf.mxu0
      %v4582 = vadd.f32 0.0, %v4581
      %4583 = vmatprep.mubr.f32.mxu0 0.0
      %4584 = vmatmul.mubr.f32.gmra.mxu0 %v4359
      %v4585 = vpop.f32.mrf.mxu0
      %v4586 = vadd.f32 0.0, %v4585
      %v4587 = vpop.f32.mrf.mxu0
      %v4588 = vadd.f32 0.0, %v4587
      %4589 = vmatprep.mubr.f32.mxu0 0.0
      %4590 = vmatmul.mubr.f32.gmra.mxu0 %v4361
      %v4591 = vpop.f32.mrf.mxu0
      %v4592 = vadd.f32 0.0, %v4591
      %v4593 = vpop.f32.mrf.mxu0
      %v4594 = vadd.f32 0.0, %v4593
      %4595 = vmatprep.mubr.f32.mxu0 0.0
      %4596 = vmatmul.mubr.f32.gmra.mxu0 %v4363
      %v4597 = vpop.f32.mrf.mxu0
      %v4598 = vadd.f32 0.0, %v4597
      %v4599 = vpop.f32.mrf.mxu0
      %v4600 = vadd.f32 0.0, %v4599
      %4601 = vmatprep.mubr.f32.mxu0 0.0
      %4602 = vmatmul.mubr.f32.gmra.mxu0 %v4365
      %v4603 = vpop.f32.mrf.mxu0
      %v4604 = vadd.f32 0.0, %v4603
      %v4605 = vpop.f32.mrf.mxu0
      %v4606 = vadd.f32 0.0, %v4605
      %4607 = vmatprep.mubr.f32.mxu0 0.0
      %4608 = vmatmul.mubr.f32.gmra.mxu0 %v4367
      %v4609 = vpop.f32.mrf.mxu0
      %v4610 = vadd.f32 0.0, %v4609
      %v4611 = vpop.f32.mrf.mxu0
      %v4612 = vadd.f32 0.0, %v4611
      %4613 = vmatprep.mubr.f32.mxu0 0.0
      %4614 = vmatmul.mubr.f32.gmra.mxu0 %v4369
      %v4615 = vpop.f32.mrf.mxu0
      %v4616 = vadd.f32 0.0, %v4615
      %v4617 = vpop.f32.mrf.mxu0
      %v4618 = vadd.f32 0.0, %v4617
      %4619 = vmatprep.mubr.f32.mxu0 0.0
      %4620 = vmatmul.mubr.f32.gmra.mxu0 %v4371
      %v4621 = vpop.f32.mrf.mxu0
      %v4622 = vadd.f32 0.0, %v4621
      %v4623 = vpop.f32.mrf.mxu0
      %v4624 = vadd.f32 0.0, %v4623
      %4625 = vmatprep.mubr.f32.mxu0 0.0
      %4626 = vmatmul.mubr.f32.gmra.mxu0 %v4373
      %v4627 = vpop.f32.mrf.mxu0
      %v4628 = vadd.f32 0.0, %v4627
      %v4629 = vpop.f32.mrf.mxu0
      %v4630 = vadd.f32 0.0, %v4629
      %4631 = vdwg.mxu0
      %v4632 = vld [vmem:[#allocation2] sm:$0xff]
      %v4633 = vld [vmem:[#allocation2 + $0x8] sm:$0xff]
      %v4634 = vld [vmem:[#allocation2 + $0x10] sm:$0xff]
      %v4635 = vld [vmem:[#allocation2 + $0x18] sm:$0xff]
      %v4636 = vld [vmem:[#allocation2 + $0x20] sm:$0xff]
      %v4637 = vld [vmem:[#allocation2 + $0x28] sm:$0xff]
      %v4638 = vld [vmem:[#allocation2 + $0x30] sm:$0xff]
      %v4639 = vld [vmem:[#allocation2 + $0x38] sm:$0xff]
      %v4640 = vld [vmem:[#allocation2 + $0x40] sm:$0xff]
      %v4641 = vld [vmem:[#allocation2 + $0x48] sm:$0xff]
      %v4642 = vld [vmem:[#allocation2 + $0x50] sm:$0xff]
      %v4643 = vld [vmem:[#allocation2 + $0x58] sm:$0xff]
      %v4644 = vld [vmem:[#allocation2 + $0x60] sm:$0xff]
      %v4645 = vld [vmem:[#allocation2 + $0x68] sm:$0xff]
      %v4646 = vld [vmem:[#allocation2 + $0x70] sm:$0xff]
      %v4647 = vld [vmem:[#allocation2 + $0x78] sm:$0xff]
      %v4648 = vld [vmem:[#allocation2 + $0x80] sm:$0xff]
      %v4649 = vld [vmem:[#allocation2 + $0x88] sm:$0xff]
      %v4650 = vld [vmem:[#allocation2 + $0x90] sm:$0xff]
      %v4651 = vld [vmem:[#allocation2 + $0x98] sm:$0xff]
      %v4652 = vld [vmem:[#allocation2 + $0xa0] sm:$0xff]
      %v4653 = vld [vmem:[#allocation2 + $0xa8] sm:$0xff]
      %v4654 = vld [vmem:[#allocation2 + $0xb0] sm:$0xff]
      %v4655 = vld [vmem:[#allocation2 + $0xb8] sm:$0xff]
      %v4656 = vld [vmem:[#allocation2 + $0xc0] sm:$0xff]
      %v4657 = vld [vmem:[#allocation2 + $0xc8] sm:$0xff]
      %v4658 = vld [vmem:[#allocation2 + $0xd0] sm:$0xff]
      %v4659 = vld [vmem:[#allocation2 + $0xd8] sm:$0xff]
      %v4660 = vld [vmem:[#allocation2 + $0xe0] sm:$0xff]
      %v4661 = vld [vmem:[#allocation2 + $0xe8] sm:$0xff]
      %v4662 = vld [vmem:[#allocation2 + $0xf0] sm:$0xff]
      %v4663 = vld [vmem:[#allocation2 + $0xf8] sm:$0xff]
      %v4664 = vmax.f32 %v4442, %v4444
      %4665 = vmax.xlane.f32.xlu0 %v4664
      %v4666 = vpop.xlane.xlu0 %4665
      %v4667 = vmax.f32 %v4448, %v4450
      %4668 = vmax.xlane.f32.xlu0 %v4667
      %v4669 = vpop.xlane.xlu0 %4668
      %v4670 = vmax.f32 %v4454, %v4456
      %4671 = vmax.xlane.f32.xlu0 %v4670
      %v4672 = vpop.xlane.xlu0 %4671
      %v4673 = vmax.f32 %v4460, %v4462
      %4674 = vmax.xlane.f32.xlu0 %v4673
      %v4675 = vpop.xlane.xlu0 %4674
      %v4676 = vmax.f32 %v4466, %v4468
      %4677 = vmax.xlane.f32.xlu0 %v4676
      %v4678 = vpop.xlane.xlu0 %4677
      %v4679 = vmax.f32 %v4472, %v4474
      %4680 = vmax.xlane.f32.xlu0 %v4679
      %v4681 = vpop.xlane.xlu0 %4680
      %v4682 = vmax.f32 %v4478, %v4480
      %4683 = vmax.xlane.f32.xlu0 %v4682
      %v4684 = vpop.xlane.xlu0 %4683
      %v4685 = vmax.f32 %v4484, %v4486
      %4686 = vmax.xlane.f32.xlu0 %v4685
      %v4687 = vpop.xlane.xlu0 %4686
      %v4688 = vmax.f32 %v4490, %v4492
      %4689 = vmax.xlane.f32.xlu0 %v4688
      %v4690 = vpop.xlane.xlu0 %4689
      %v4691 = vmax.f32 %v4496, %v4498
      %4692 = vmax.xlane.f32.xlu0 %v4691
      %v4693 = vpop.xlane.xlu0 %4692
      %v4694 = vmax.f32 %v4502, %v4504
      %4695 = vmax.xlane.f32.xlu0 %v4694
      %v4696 = vpop.xlane.xlu0 %4695
      %v4697 = vmax.f32 %v4508, %v4510
      %4698 = vmax.xlane.f32.xlu0 %v4697
      %v4699 = vpop.xlane.xlu0 %4698
      %v4700 = vmax.f32 %v4514, %v4516
      %4701 = vmax.xlane.f32.xlu0 %v4700
      %v4702 = vpop.xlane.xlu0 %4701
      %v4703 = vmax.f32 %v4520, %v4522
      %4704 = vmax.xlane.f32.xlu0 %v4703
      %v4705 = vpop.xlane.xlu0 %4704
      %v4706 = vmax.f32 %v4526, %v4528
      %4707 = vmax.xlane.f32.xlu0 %v4706
      %v4708 = vpop.xlane.xlu0 %4707
      %v4709 = vmax.f32 %v4532, %v4534
      %4710 = vmax.xlane.f32.xlu0 %v4709
      %v4711 = vpop.xlane.xlu0 %4710
      %v4712 = vmax.f32 %v4538, %v4540
      %4713 = vmax.xlane.f32.xlu0 %v4712
      %v4714 = vpop.xlane.xlu0 %4713
      %v4715 = vmax.f32 %v4544, %v4546
      %4716 = vmax.xlane.f32.xlu0 %v4715
      %v4717 = vpop.xlane.xlu0 %4716
      %v4718 = vmax.f32 %v4550, %v4552
      %4719 = vmax.xlane.f32.xlu0 %v4718
      %v4720 = vpop.xlane.xlu0 %4719
      %v4721 = vmax.f32 %v4556, %v4558
      %4722 = vmax.xlane.f32.xlu0 %v4721
      %v4723 = vpop.xlane.xlu0 %4722
      %v4724 = vmax.f32 %v4562, %v4564
      %4725 = vmax.xlane.f32.xlu0 %v4724
      %v4726 = vpop.xlane.xlu0 %4725
      %v4727 = vmax.f32 %v4568, %v4570
      %4728 = vmax.xlane.f32.xlu0 %v4727
      %v4729 = vpop.xlane.xlu0 %4728
      %v4730 = vmax.f32 %v4574, %v4576
      %4731 = vmax.xlane.f32.xlu0 %v4730
      %v4732 = vpop.xlane.xlu0 %4731
      %v4733 = vmax.f32 %v4580, %v4582
      %4734 = vmax.xlane.f32.xlu0 %v4733
      %v4735 = vpop.xlane.xlu0 %4734
      %v4736 = vmax.f32 %v4586, %v4588
      %4737 = vmax.xlane.f32.xlu0 %v4736
      %v4738 = vpop.xlane.xlu0 %4737
      %v4739 = vmax.f32 %v4592, %v4594
      %4740 = vmax.xlane.f32.xlu0 %v4739
      %v4741 = vpop.xlane.xlu0 %4740
      %v4742 = vmax.f32 %v4598, %v4600
      %4743 = vmax.xlane.f32.xlu0 %v4742
      %v4744 = vpop.xlane.xlu0 %4743
      %v4745 = vmax.f32 %v4604, %v4606
      %4746 = vmax.xlane.f32.xlu0 %v4745
      %v4747 = vpop.xlane.xlu0 %4746
      %v4748 = vmax.f32 %v4610, %v4612
      %4749 = vmax.xlane.f32.xlu0 %v4748
      %v4750 = vpop.xlane.xlu0 %4749
      %v4751 = vmax.f32 %v4616, %v4618
      %4752 = vmax.xlane.f32.xlu0 %v4751
      %v4753 = vpop.xlane.xlu0 %4752
      %v4754 = vmax.f32 %v4622, %v4624
      %4755 = vmax.xlane.f32.xlu0 %v4754
      %v4756 = vpop.xlane.xlu0 %4755
      %v4757 = vmax.f32 %v4628, %v4630
      %4758 = vmax.xlane.f32.xlu0 %v4757
      %v4759 = vpop.xlane.xlu0 %4758
      %v4760 = vmax.f32 %v4632, %v4666
      %v4761 = vmax.f32 %v4633, %v4669
      %v4762 = vmax.f32 %v4634, %v4672
      %v4763 = vmax.f32 %v4635, %v4675
      %v4764 = vmax.f32 %v4636, %v4678
      %v4765 = vmax.f32 %v4637, %v4681
      %v4766 = vmax.f32 %v4638, %v4684
      %v4767 = vmax.f32 %v4639, %v4687
      %v4768 = vmax.f32 %v4640, %v4690
      %v4769 = vmax.f32 %v4641, %v4693
      %v4770 = vmax.f32 %v4642, %v4696
      %v4771 = vmax.f32 %v4643, %v4699
      %v4772 = vmax.f32 %v4644, %v4702
      %v4773 = vmax.f32 %v4645, %v4705
      %v4774 = vmax.f32 %v4646, %v4708
      %v4775 = vmax.f32 %v4647, %v4711
      %v4776 = vmax.f32 %v4648, %v4714
      %v4777 = vmax.f32 %v4649, %v4717
      %v4778 = vmax.f32 %v4650, %v4720
      %v4779 = vmax.f32 %v4651, %v4723
      %v4780 = vmax.f32 %v4652, %v4726
      %v4781 = vmax.f32 %v4653, %v4729
      %v4782 = vmax.f32 %v4654, %v4732
      %v4783 = vmax.f32 %v4655, %v4735
      %v4784 = vmax.f32 %v4656, %v4738
      %v4785 = vmax.f32 %v4657, %v4741
      %v4786 = vmax.f32 %v4658, %v4744
      %v4787 = vmax.f32 %v4659, %v4747
      %v4788 = vmax.f32 %v4660, %v4750
      %v4789 = vmax.f32 %v4661, %v4753
      %v4790 = vmax.f32 %v4662, %v4756
      %v4791 = vmax.f32 %v4663, %v4759
      %v4792 = vsub.f32 %v4632, %v4760
      %v4793 = vsub.f32 %v4633, %v4761
      %v4794 = vsub.f32 %v4634, %v4762
      %v4795 = vsub.f32 %v4635, %v4763
      %v4796 = vsub.f32 %v4636, %v4764
      %v4797 = vsub.f32 %v4637, %v4765
      %v4798 = vsub.f32 %v4638, %v4766
      %v4799 = vsub.f32 %v4639, %v4767
      %v4800 = vsub.f32 %v4640, %v4768
      %v4801 = vsub.f32 %v4641, %v4769
      %v4802 = vsub.f32 %v4642, %v4770
      %v4803 = vsub.f32 %v4643, %v4771
      %v4804 = vsub.f32 %v4644, %v4772
      %v4805 = vsub.f32 %v4645, %v4773
      %v4806 = vsub.f32 %v4646, %v4774
      %v4807 = vsub.f32 %v4647, %v4775
      %v4808 = vsub.f32 %v4648, %v4776
      %v4809 = vsub.f32 %v4649, %v4777
      %v4810 = vsub.f32 %v4650, %v4778
      %v4811 = vsub.f32 %v4651, %v4779
      %v4812 = vsub.f32 %v4652, %v4780
      %v4813 = vsub.f32 %v4653, %v4781
      %v4814 = vsub.f32 %v4654, %v4782
      %v4815 = vsub.f32 %v4655, %v4783
      %v4816 = vsub.f32 %v4656, %v4784
      %v4817 = vsub.f32 %v4657, %v4785
      %v4818 = vsub.f32 %v4658, %v4786
      %v4819 = vsub.f32 %v4659, %v4787
      %v4820 = vsub.f32 %v4660, %v4788
      %v4821 = vsub.f32 %v4661, %v4789
      %v4822 = vsub.f32 %v4662, %v4790
      %v4823 = vsub.f32 %v4663, %v4791
      %v4824 = vmul.f32 %v4792, 1.442695
      %v4825 = vpow.pop %v4824
      %v4826 = vmul.f32 %v4793, 1.442695
      %v4827 = vpow.pop %v4826
      %v4828 = vmul.f32 %v4794, 1.442695
      %v4829 = vpow.pop %v4828
      %v4830 = vmul.f32 %v4795, 1.442695
      %v4831 = vpow.pop %v4830
      %v4832 = vmul.f32 %v4796, 1.442695
      %v4833 = vpow.pop %v4832
      %v4834 = vmul.f32 %v4797, 1.442695
      %v4835 = vpow.pop %v4834
      %v4836 = vmul.f32 %v4798, 1.442695
      %v4837 = vpow.pop %v4836
      %v4838 = vmul.f32 %v4799, 1.442695
      %v4839 = vpow.pop %v4838
      %v4840 = vmul.f32 %v4800, 1.442695
      %v4841 = vpow.pop %v4840
      %v4842 = vmul.f32 %v4801, 1.442695
      %v4843 = vpow.pop %v4842
      %v4844 = vmul.f32 %v4802, 1.442695
      %v4845 = vpow.pop %v4844
      %v4846 = vmul.f32 %v4803, 1.442695
      %v4847 = vpow.pop %v4846
      %v4848 = vmul.f32 %v4804, 1.442695
      %v4849 = vpow.pop %v4848
      %v4850 = vmul.f32 %v4805, 1.442695
      %v4851 = vpow.pop %v4850
      %v4852 = vmul.f32 %v4806, 1.442695
      %v4853 = vpow.pop %v4852
      %v4854 = vmul.f32 %v4807, 1.442695
      %v4855 = vpow.pop %v4854
      %v4856 = vmul.f32 %v4808, 1.442695
      %v4857 = vpow.pop %v4856
      %v4858 = vmul.f32 %v4809, 1.442695
      %v4859 = vpow.pop %v4858
      %v4860 = vmul.f32 %v4810, 1.442695
      %v4861 = vpow.pop %v4860
      %v4862 = vmul.f32 %v4811, 1.442695
      %v4863 = vpow.pop %v4862
      %v4864 = vmul.f32 %v4812, 1.442695
      %v4865 = vpow.pop %v4864
      %v4866 = vmul.f32 %v4813, 1.442695
      %v4867 = vpow.pop %v4866
      %v4868 = vmul.f32 %v4814, 1.442695
      %v4869 = vpow.pop %v4868
      %v4870 = vmul.f32 %v4815, 1.442695
      %v4871 = vpow.pop %v4870
      %v4872 = vmul.f32 %v4816, 1.442695
      %v4873 = vpow.pop %v4872
      %v4874 = vmul.f32 %v4817, 1.442695
      %v4875 = vpow.pop %v4874
      %v4876 = vmul.f32 %v4818, 1.442695
      %v4877 = vpow.pop %v4876
      %v4878 = vmul.f32 %v4819, 1.442695
      %v4879 = vpow.pop %v4878
      %v4880 = vmul.f32 %v4820, 1.442695
      %v4881 = vpow.pop %v4880
      %v4882 = vmul.f32 %v4821, 1.442695
      %v4883 = vpow.pop %v4882
      %v4884 = vmul.f32 %v4822, 1.442695
      %v4885 = vpow.pop %v4884
      %v4886 = vmul.f32 %v4823, 1.442695
      %v4887 = vpow.pop %v4886
      %4889 = vset.pattern.permute.xlu0 1
      %4890 = vperm.xlu0 %4889, %v4760
      %v4891 = vpop.permute.xlu0 %4890
      %4894 = vset.pattern.permute.xlu0 1
      %4895 = vperm.xlu0 %4894, %v4761
      %v4896 = vpop.permute.xlu0 %4895
      %4899 = vset.pattern.permute.xlu0 1
      %4900 = vperm.xlu0 %4899, %v4762
      %v4901 = vpop.permute.xlu0 %4900
      %4904 = vset.pattern.permute.xlu0 1
      %4905 = vperm.xlu0 %4904, %v4763
      %v4906 = vpop.permute.xlu0 %4905
      %4909 = vset.pattern.permute.xlu0 1
      %4910 = vperm.xlu0 %4909, %v4764
      %v4911 = vpop.permute.xlu0 %4910
      %4914 = vset.pattern.permute.xlu0 1
      %4915 = vperm.xlu0 %4914, %v4765
      %v4916 = vpop.permute.xlu0 %4915
      %4919 = vset.pattern.permute.xlu0 1
      %4920 = vperm.xlu0 %4919, %v4766
      %v4921 = vpop.permute.xlu0 %4920
      %4924 = vset.pattern.permute.xlu0 1
      %4925 = vperm.xlu0 %4924, %v4767
      %v4926 = vpop.permute.xlu0 %4925
      %4929 = vset.pattern.permute.xlu0 1
      %4930 = vperm.xlu0 %4929, %v4768
      %v4931 = vpop.permute.xlu0 %4930
      %4934 = vset.pattern.permute.xlu0 1
      %4935 = vperm.xlu0 %4934, %v4769
      %v4936 = vpop.permute.xlu0 %4935
      %4939 = vset.pattern.permute.xlu0 1
      %4940 = vperm.xlu0 %4939, %v4770
      %v4941 = vpop.permute.xlu0 %4940
      %4944 = vset.pattern.permute.xlu0 1
      %4945 = vperm.xlu0 %4944, %v4771
      %v4946 = vpop.permute.xlu0 %4945
      %4949 = vset.pattern.permute.xlu0 1
      %4950 = vperm.xlu0 %4949, %v4772
      %v4951 = vpop.permute.xlu0 %4950
      %4954 = vset.pattern.permute.xlu0 1
      %4955 = vperm.xlu0 %4954, %v4773
      %v4956 = vpop.permute.xlu0 %4955
      %4959 = vset.pattern.permute.xlu0 1
      %4960 = vperm.xlu0 %4959, %v4774
      %v4961 = vpop.permute.xlu0 %4960
      %4964 = vset.pattern.permute.xlu0 1
      %4965 = vperm.xlu0 %4964, %v4775
      %v4966 = vpop.permute.xlu0 %4965
      %4969 = vset.pattern.permute.xlu0 1
      %4970 = vperm.xlu0 %4969, %v4776
      %v4971 = vpop.permute.xlu0 %4970
      %4974 = vset.pattern.permute.xlu0 1
      %4975 = vperm.xlu0 %4974, %v4777
      %v4976 = vpop.permute.xlu0 %4975
      %4979 = vset.pattern.permute.xlu0 1
      %4980 = vperm.xlu0 %4979, %v4778
      %v4981 = vpop.permute.xlu0 %4980
      %4984 = vset.pattern.permute.xlu0 1
      %4985 = vperm.xlu0 %4984, %v4779
      %v4986 = vpop.permute.xlu0 %4985
      %4989 = vset.pattern.permute.xlu0 1
      %4990 = vperm.xlu0 %4989, %v4780
      %v4991 = vpop.permute.xlu0 %4990
      %4994 = vset.pattern.permute.xlu0 1
      %4995 = vperm.xlu0 %4994, %v4781
      %v4996 = vpop.permute.xlu0 %4995
      %4999 = vset.pattern.permute.xlu0 1
      %5000 = vperm.xlu0 %4999, %v4782
      %v5001 = vpop.permute.xlu0 %5000
      %5004 = vset.pattern.permute.xlu0 1
      %5005 = vperm.xlu0 %5004, %v4783
      %v5006 = vpop.permute.xlu0 %5005
      %5009 = vset.pattern.permute.xlu0 1
      %5010 = vperm.xlu0 %5009, %v4784
      %v5011 = vpop.permute.xlu0 %5010
      %5014 = vset.pattern.permute.xlu0 1
      %5015 = vperm.xlu0 %5014, %v4785
      %v5016 = vpop.permute.xlu0 %5015
      %5019 = vset.pattern.permute.xlu0 1
      %5020 = vperm.xlu0 %5019, %v4786
      %v5021 = vpop.permute.xlu0 %5020
      %5024 = vset.pattern.permute.xlu0 1
      %5025 = vperm.xlu0 %5024, %v4787
      %v5026 = vpop.permute.xlu0 %5025
      %5029 = vset.pattern.permute.xlu0 1
      %5030 = vperm.xlu0 %5029, %v4788
      %v5031 = vpop.permute.xlu0 %5030
      %5034 = vset.pattern.permute.xlu0 1
      %5035 = vperm.xlu0 %5034, %v4789
      %v5036 = vpop.permute.xlu0 %5035
      %5039 = vset.pattern.permute.xlu0 1
      %5040 = vperm.xlu0 %5039, %v4790
      %v5041 = vpop.permute.xlu0 %5040
      %5044 = vset.pattern.permute.xlu0 1
      %5045 = vperm.xlu0 %5044, %v4791
      %v5046 = vpop.permute.xlu0 %5045
      %v5048 = vsub.f32 %v4442, %v4891
      %v5049 = vsub.f32 %v4444, %v4891
      %v5050 = vsub.f32 %v4448, %v4896
      %v5051 = vsub.f32 %v4450, %v4896
      %v5052 = vsub.f32 %v4454, %v4901
      %v5053 = vsub.f32 %v4456, %v4901
      %v5054 = vsub.f32 %v4460, %v4906
      %v5055 = vsub.f32 %v4462, %v4906
      %v5056 = vsub.f32 %v4466, %v4911
      %v5057 = vsub.f32 %v4468, %v4911
      %v5058 = vsub.f32 %v4472, %v4916
      %v5059 = vsub.f32 %v4474, %v4916
      %v5060 = vsub.f32 %v4478, %v4921
      %v5061 = vsub.f32 %v4480, %v4921
      %v5062 = vsub.f32 %v4484, %v4926
      %v5063 = vsub.f32 %v4486, %v4926
      %v5064 = vsub.f32 %v4490, %v4931
      %v5065 = vsub.f32 %v4492, %v4931
      %v5066 = vsub.f32 %v4496, %v4936
      %v5067 = vsub.f32 %v4498, %v4936
      %v5068 = vsub.f32 %v4502, %v4941
      %v5069 = vsub.f32 %v4504, %v4941
      %v5070 = vsub.f32 %v4508, %v4946
      %v5071 = vsub.f32 %v4510, %v4946
      %v5072 = vsub.f32 %v4514, %v4951
      %v5073 = vsub.f32 %v4516, %v4951
      %v5074 = vsub.f32 %v4520, %v4956
      %v5075 = vsub.f32 %v4522, %v4956
      %v5076 = vsub.f32 %v4526, %v4961
      %v5077 = vsub.f32 %v4528, %v4961
      %v5078 = vsub.f32 %v4532, %v4966
      %v5079 = vsub.f32 %v4534, %v4966
      %v5080 = vsub.f32 %v4538, %v4971
      %v5081 = vsub.f32 %v4540, %v4971
      %v5082 = vsub.f32 %v4544, %v4976
      %v5083 = vsub.f32 %v4546, %v4976
      %v5084 = vsub.f32 %v4550, %v4981
      %v5085 = vsub.f32 %v4552, %v4981
      %v5086 = vsub.f32 %v4556, %v4986
      %v5087 = vsub.f32 %v4558, %v4986
      %v5088 = vsub.f32 %v4562, %v4991
      %v5089 = vsub.f32 %v4564, %v4991
      %v5090 = vsub.f32 %v4568, %v4996
      %v5091 = vsub.f32 %v4570, %v4996
      %v5092 = vsub.f32 %v4574, %v5001
      %v5093 = vsub.f32 %v4576, %v5001
      %v5094 = vsub.f32 %v4580, %v5006
      %v5095 = vsub.f32 %v4582, %v5006
      %v5096 = vsub.f32 %v4586, %v5011
      %v5097 = vsub.f32 %v4588, %v5011
      %v5098 = vsub.f32 %v4592, %v5016
      %v5099 = vsub.f32 %v4594, %v5016
      %v5100 = vsub.f32 %v4598, %v5021
      %v5101 = vsub.f32 %v4600, %v5021
      %v5102 = vsub.f32 %v4604, %v5026
      %v5103 = vsub.f32 %v4606, %v5026
      %v5104 = vsub.f32 %v4610, %v5031
      %v5105 = vsub.f32 %v4612, %v5031
      %v5106 = vsub.f32 %v4616, %v5036
      %v5107 = vsub.f32 %v4618, %v5036
      %v5108 = vsub.f32 %v4622, %v5041
      %v5109 = vsub.f32 %v4624, %v5041
      %v5110 = vsub.f32 %v4628, %v5046
      %v5111 = vsub.f32 %v4630, %v5046
      %v5112 = vmul.f32 %v5048, 1.442695
      %v5113 = vpow.pop %v5112
      %v5114 = vmul.f32 %v5049, 1.442695
      %v5115 = vpow.pop %v5114
      %v5116 = vmul.f32 %v5050, 1.442695
      %v5117 = vpow.pop %v5116
      %v5118 = vmul.f32 %v5051, 1.442695
      %v5119 = vpow.pop %v5118
      %v5120 = vmul.f32 %v5052, 1.442695
      %v5121 = vpow.pop %v5120
      %v5122 = vmul.f32 %v5053, 1.442695
      %v5123 = vpow.pop %v5122
      %v5124 = vmul.f32 %v5054, 1.442695
      %v5125 = vpow.pop %v5124
      %v5126 = vmul.f32 %v5055, 1.442695
      %v5127 = vpow.pop %v5126
      %v5128 = vmul.f32 %v5056, 1.442695
      %v5129 = vpow.pop %v5128
      %v5130 = vmul.f32 %v5057, 1.442695
      %v5131 = vpow.pop %v5130
      %v5132 = vmul.f32 %v5058, 1.442695
      %v5133 = vpow.pop %v5132
      %v5134 = vmul.f32 %v5059, 1.442695
      %v5135 = vpow.pop %v5134
      %v5136 = vmul.f32 %v5060, 1.442695
      %v5137 = vpow.pop %v5136
      %v5138 = vmul.f32 %v5061, 1.442695
      %v5139 = vpow.pop %v5138
      %v5140 = vmul.f32 %v5062, 1.442695
      %v5141 = vpow.pop %v5140
      %v5142 = vmul.f32 %v5063, 1.442695
      %v5143 = vpow.pop %v5142
      %v5144 = vmul.f32 %v5064, 1.442695
      %v5145 = vpow.pop %v5144
      %v5146 = vmul.f32 %v5065, 1.442695
      %v5147 = vpow.pop %v5146
      %v5148 = vmul.f32 %v5066, 1.442695
      %v5149 = vpow.pop %v5148
      %v5150 = vmul.f32 %v5067, 1.442695
      %v5151 = vpow.pop %v5150
      %v5152 = vmul.f32 %v5068, 1.442695
      %v5153 = vpow.pop %v5152
      %v5154 = vmul.f32 %v5069, 1.442695
      %v5155 = vpow.pop %v5154
      %v5156 = vmul.f32 %v5070, 1.442695
      %v5157 = vpow.pop %v5156
      %v5158 = vmul.f32 %v5071, 1.442695
      %v5159 = vpow.pop %v5158
      %v5160 = vmul.f32 %v5072, 1.442695
      %v5161 = vpow.pop %v5160
      %v5162 = vmul.f32 %v5073, 1.442695
      %v5163 = vpow.pop %v5162
      %v5164 = vmul.f32 %v5074, 1.442695
      %v5165 = vpow.pop %v5164
      %v5166 = vmul.f32 %v5075, 1.442695
      %v5167 = vpow.pop %v5166
      %v5168 = vmul.f32 %v5076, 1.442695
      %v5169 = vpow.pop %v5168
      %v5170 = vmul.f32 %v5077, 1.442695
      %v5171 = vpow.pop %v5170
      %v5172 = vmul.f32 %v5078, 1.442695
      %v5173 = vpow.pop %v5172
      %v5174 = vmul.f32 %v5079, 1.442695
      %v5175 = vpow.pop %v5174
      %v5176 = vmul.f32 %v5080, 1.442695
      %v5177 = vpow.pop %v5176
      %v5178 = vmul.f32 %v5081, 1.442695
      %v5179 = vpow.pop %v5178
      %v5180 = vmul.f32 %v5082, 1.442695
      %v5181 = vpow.pop %v5180
      %v5182 = vmul.f32 %v5083, 1.442695
      %v5183 = vpow.pop %v5182
      %v5184 = vmul.f32 %v5084, 1.442695
      %v5185 = vpow.pop %v5184
      %v5186 = vmul.f32 %v5085, 1.442695
      %v5187 = vpow.pop %v5186
      %v5188 = vmul.f32 %v5086, 1.442695
      %v5189 = vpow.pop %v5188
      %v5190 = vmul.f32 %v5087, 1.442695
      %v5191 = vpow.pop %v5190
      %v5192 = vmul.f32 %v5088, 1.442695
      %v5193 = vpow.pop %v5192
      %v5194 = vmul.f32 %v5089, 1.442695
      %v5195 = vpow.pop %v5194
      %v5196 = vmul.f32 %v5090, 1.442695
      %v5197 = vpow.pop %v5196
      %v5198 = vmul.f32 %v5091, 1.442695
      %v5199 = vpow.pop %v5198
      %v5200 = vmul.f32 %v5092, 1.442695
      %v5201 = vpow.pop %v5200
      %v5202 = vmul.f32 %v5093, 1.442695
      %v5203 = vpow.pop %v5202
      %v5204 = vmul.f32 %v5094, 1.442695
      %v5205 = vpow.pop %v5204
      %v5206 = vmul.f32 %v5095, 1.442695
      %v5207 = vpow.pop %v5206
      %v5208 = vmul.f32 %v5096, 1.442695
      %v5209 = vpow.pop %v5208
      %v5210 = vmul.f32 %v5097, 1.442695
      %v5211 = vpow.pop %v5210
      %v5212 = vmul.f32 %v5098, 1.442695
      %v5213 = vpow.pop %v5212
      %v5214 = vmul.f32 %v5099, 1.442695
      %v5215 = vpow.pop %v5214
      %v5216 = vmul.f32 %v5100, 1.442695
      %v5217 = vpow.pop %v5216
      %v5218 = vmul.f32 %v5101, 1.442695
      %v5219 = vpow.pop %v5218
      %v5220 = vmul.f32 %v5102, 1.442695
      %v5221 = vpow.pop %v5220
      %v5222 = vmul.f32 %v5103, 1.442695
      %v5223 = vpow.pop %v5222
      %v5224 = vmul.f32 %v5104, 1.442695
      %v5225 = vpow.pop %v5224
      %v5226 = vmul.f32 %v5105, 1.442695
      %v5227 = vpow.pop %v5226
      %v5228 = vmul.f32 %v5106, 1.442695
      %v5229 = vpow.pop %v5228
      %v5230 = vmul.f32 %v5107, 1.442695
      %v5231 = vpow.pop %v5230
      %v5232 = vmul.f32 %v5108, 1.442695
      %v5233 = vpow.pop %v5232
      %v5234 = vmul.f32 %v5109, 1.442695
      %v5235 = vpow.pop %v5234
      %v5236 = vmul.f32 %v5110, 1.442695
      %v5237 = vpow.pop %v5236
      %v5238 = vmul.f32 %v5111, 1.442695
      %v5239 = vpow.pop %v5238
      %v5240 = vld [vmem:[#allocation3] sm:$0xff]
      %v5241 = vld [vmem:[#allocation3 + $0x8] sm:$0xff]
      %v5242 = vld [vmem:[#allocation3 + $0x10] sm:$0xff]
      %v5243 = vld [vmem:[#allocation3 + $0x18] sm:$0xff]
      %v5244 = vld [vmem:[#allocation3 + $0x20] sm:$0xff]
      %v5245 = vld [vmem:[#allocation3 + $0x28] sm:$0xff]
      %v5246 = vld [vmem:[#allocation3 + $0x30] sm:$0xff]
      %v5247 = vld [vmem:[#allocation3 + $0x38] sm:$0xff]
      %v5248 = vld [vmem:[#allocation3 + $0x40] sm:$0xff]
      %v5249 = vld [vmem:[#allocation3 + $0x48] sm:$0xff]
      %v5250 = vld [vmem:[#allocation3 + $0x50] sm:$0xff]
      %v5251 = vld [vmem:[#allocation3 + $0x58] sm:$0xff]
      %v5252 = vld [vmem:[#allocation3 + $0x60] sm:$0xff]
      %v5253 = vld [vmem:[#allocation3 + $0x68] sm:$0xff]
      %v5254 = vld [vmem:[#allocation3 + $0x70] sm:$0xff]
      %v5255 = vld [vmem:[#allocation3 + $0x78] sm:$0xff]
      %v5256 = vld [vmem:[#allocation3 + $0x80] sm:$0xff]
      %v5257 = vld [vmem:[#allocation3 + $0x88] sm:$0xff]
      %v5258 = vld [vmem:[#allocation3 + $0x90] sm:$0xff]
      %v5259 = vld [vmem:[#allocation3 + $0x98] sm:$0xff]
      %v5260 = vld [vmem:[#allocation3 + $0xa0] sm:$0xff]
      %v5261 = vld [vmem:[#allocation3 + $0xa8] sm:$0xff]
      %v5262 = vld [vmem:[#allocation3 + $0xb0] sm:$0xff]
      %v5263 = vld [vmem:[#allocation3 + $0xb8] sm:$0xff]
      %v5264 = vld [vmem:[#allocation3 + $0xc0] sm:$0xff]
      %v5265 = vld [vmem:[#allocation3 + $0xc8] sm:$0xff]
      %v5266 = vld [vmem:[#allocation3 + $0xd0] sm:$0xff]
      %v5267 = vld [vmem:[#allocation3 + $0xd8] sm:$0xff]
      %v5268 = vld [vmem:[#allocation3 + $0xe0] sm:$0xff]
      %v5269 = vld [vmem:[#allocation3 + $0xe8] sm:$0xff]
      %v5270 = vld [vmem:[#allocation3 + $0xf0] sm:$0xff]
      %v5271 = vld [vmem:[#allocation3 + $0xf8] sm:$0xff]
      %v5272 = vmul.f32 %v4825, %v5240
      %v5273 = vmul.f32 %v4827, %v5241
      %v5274 = vmul.f32 %v4829, %v5242
      %v5275 = vmul.f32 %v4831, %v5243
      %v5276 = vmul.f32 %v4833, %v5244
      %v5277 = vmul.f32 %v4835, %v5245
      %v5278 = vmul.f32 %v4837, %v5246
      %v5279 = vmul.f32 %v4839, %v5247
      %v5280 = vmul.f32 %v4841, %v5248
      %v5281 = vmul.f32 %v4843, %v5249
      %v5282 = vmul.f32 %v4845, %v5250
      %v5283 = vmul.f32 %v4847, %v5251
      %v5284 = vmul.f32 %v4849, %v5252
      %v5285 = vmul.f32 %v4851, %v5253
      %v5286 = vmul.f32 %v4853, %v5254
      %v5287 = vmul.f32 %v4855, %v5255
      %v5288 = vmul.f32 %v4857, %v5256
      %v5289 = vmul.f32 %v4859, %v5257
      %v5290 = vmul.f32 %v4861, %v5258
      %v5291 = vmul.f32 %v4863, %v5259
      %v5292 = vmul.f32 %v4865, %v5260
      %v5293 = vmul.f32 %v4867, %v5261
      %v5294 = vmul.f32 %v4869, %v5262
      %v5295 = vmul.f32 %v4871, %v5263
      %v5296 = vmul.f32 %v4873, %v5264
      %v5297 = vmul.f32 %v4875, %v5265
      %v5298 = vmul.f32 %v4877, %v5266
      %v5299 = vmul.f32 %v4879, %v5267
      %v5300 = vmul.f32 %v4881, %v5268
      %v5301 = vmul.f32 %v4883, %v5269
      %v5302 = vmul.f32 %v4885, %v5270
      %v5303 = vmul.f32 %v4887, %v5271
      %v5304 = vadd.f32 %v5113, %v5115
      %5305 = vadd.xlane.f32.xlu0 %v5304
      %v5306 = vpop.xlane.xlu0 %5305
      %v5307 = vadd.f32 %v5117, %v5119
      %5308 = vadd.xlane.f32.xlu0 %v5307
      %v5309 = vpop.xlane.xlu0 %5308
      %v5310 = vadd.f32 %v5121, %v5123
      %5311 = vadd.xlane.f32.xlu0 %v5310
      %v5312 = vpop.xlane.xlu0 %5311
      %v5313 = vadd.f32 %v5125, %v5127
      %5314 = vadd.xlane.f32.xlu0 %v5313
      %v5315 = vpop.xlane.xlu0 %5314
      %v5316 = vadd.f32 %v5129, %v5131
      %5317 = vadd.xlane.f32.xlu0 %v5316
      %v5318 = vpop.xlane.xlu0 %5317
      %v5319 = vadd.f32 %v5133, %v5135
      %5320 = vadd.xlane.f32.xlu0 %v5319
      %v5321 = vpop.xlane.xlu0 %5320
      %v5322 = vadd.f32 %v5137, %v5139
      %5323 = vadd.xlane.f32.xlu0 %v5322
      %v5324 = vpop.xlane.xlu0 %5323
      %v5325 = vadd.f32 %v5141, %v5143
      %5326 = vadd.xlane.f32.xlu0 %v5325
      %v5327 = vpop.xlane.xlu0 %5326
      %v5328 = vadd.f32 %v5145, %v5147
      %5329 = vadd.xlane.f32.xlu0 %v5328
      %v5330 = vpop.xlane.xlu0 %5329
      %v5331 = vadd.f32 %v5149, %v5151
      %5332 = vadd.xlane.f32.xlu0 %v5331
      %v5333 = vpop.xlane.xlu0 %5332
      %v5334 = vadd.f32 %v5153, %v5155
      %5335 = vadd.xlane.f32.xlu0 %v5334
      %v5336 = vpop.xlane.xlu0 %5335
      %v5337 = vadd.f32 %v5157, %v5159
      %5338 = vadd.xlane.f32.xlu0 %v5337
      %v5339 = vpop.xlane.xlu0 %5338
      %v5340 = vadd.f32 %v5161, %v5163
      %5341 = vadd.xlane.f32.xlu0 %v5340
      %v5342 = vpop.xlane.xlu0 %5341
      %v5343 = vadd.f32 %v5165, %v5167
      %5344 = vadd.xlane.f32.xlu0 %v5343
      %v5345 = vpop.xlane.xlu0 %5344
      %v5346 = vadd.f32 %v5169, %v5171
      %5347 = vadd.xlane.f32.xlu0 %v5346
      %v5348 = vpop.xlane.xlu0 %5347
      %v5349 = vadd.f32 %v5173, %v5175
      %5350 = vadd.xlane.f32.xlu0 %v5349
      %v5351 = vpop.xlane.xlu0 %5350
      %v5352 = vadd.f32 %v5177, %v5179
      %5353 = vadd.xlane.f32.xlu0 %v5352
      %v5354 = vpop.xlane.xlu0 %5353
      %v5355 = vadd.f32 %v5181, %v5183
      %5356 = vadd.xlane.f32.xlu0 %v5355
      %v5357 = vpop.xlane.xlu0 %5356
      %v5358 = vadd.f32 %v5185, %v5187
      %5359 = vadd.xlane.f32.xlu0 %v5358
      %v5360 = vpop.xlane.xlu0 %5359
      %v5361 = vadd.f32 %v5189, %v5191
      %5362 = vadd.xlane.f32.xlu0 %v5361
      %v5363 = vpop.xlane.xlu0 %5362
      %v5364 = vadd.f32 %v5193, %v5195
      %5365 = vadd.xlane.f32.xlu0 %v5364
      %v5366 = vpop.xlane.xlu0 %5365
      %v5367 = vadd.f32 %v5197, %v5199
      %5368 = vadd.xlane.f32.xlu0 %v5367
      %v5369 = vpop.xlane.xlu0 %5368
      %v5370 = vadd.f32 %v5201, %v5203
      %5371 = vadd.xlane.f32.xlu0 %v5370
      %v5372 = vpop.xlane.xlu0 %5371
      %v5373 = vadd.f32 %v5205, %v5207
      %5374 = vadd.xlane.f32.xlu0 %v5373
      %v5375 = vpop.xlane.xlu0 %5374
      %v5376 = vadd.f32 %v5209, %v5211
      %5377 = vadd.xlane.f32.xlu0 %v5376
      %v5378 = vpop.xlane.xlu0 %5377
      %v5379 = vadd.f32 %v5213, %v5215
      %5380 = vadd.xlane.f32.xlu0 %v5379
      %v5381 = vpop.xlane.xlu0 %5380
      %v5382 = vadd.f32 %v5217, %v5219
      %5383 = vadd.xlane.f32.xlu0 %v5382
      %v5384 = vpop.xlane.xlu0 %5383
      %v5385 = vadd.f32 %v5221, %v5223
      %5386 = vadd.xlane.f32.xlu0 %v5385
      %v5387 = vpop.xlane.xlu0 %5386
      %v5388 = vadd.f32 %v5225, %v5227
      %5389 = vadd.xlane.f32.xlu0 %v5388
      %v5390 = vpop.xlane.xlu0 %5389
      %v5391 = vadd.f32 %v5229, %v5231
      %5392 = vadd.xlane.f32.xlu0 %v5391
      %v5393 = vpop.xlane.xlu0 %5392
      %v5394 = vadd.f32 %v5233, %v5235
      %5395 = vadd.xlane.f32.xlu0 %v5394
      %v5396 = vpop.xlane.xlu0 %5395
      %v5397 = vadd.f32 %v5237, %v5239
      %5398 = vadd.xlane.f32.xlu0 %v5397
      %v5399 = vpop.xlane.xlu0 %5398
      %v5400 = vadd.f32 %v5272, %v5306
      %v5401 = vadd.f32 %v5273, %v5309
      %v5402 = vadd.f32 %v5274, %v5312
      %v5403 = vadd.f32 %v5275, %v5315
      %v5404 = vadd.f32 %v5276, %v5318
      %v5405 = vadd.f32 %v5277, %v5321
      %v5406 = vadd.f32 %v5278, %v5324
      %v5407 = vadd.f32 %v5279, %v5327
      %v5408 = vadd.f32 %v5280, %v5330
      %v5409 = vadd.f32 %v5281, %v5333
      %v5410 = vadd.f32 %v5282, %v5336
      %v5411 = vadd.f32 %v5283, %v5339
      %v5412 = vadd.f32 %v5284, %v5342
      %v5413 = vadd.f32 %v5285, %v5345
      %v5414 = vadd.f32 %v5286, %v5348
      %v5415 = vadd.f32 %v5287, %v5351
      %v5416 = vadd.f32 %v5288, %v5354
      %v5417 = vadd.f32 %v5289, %v5357
      %v5418 = vadd.f32 %v5290, %v5360
      %v5419 = vadd.f32 %v5291, %v5363
      %v5420 = vadd.f32 %v5292, %v5366
      %v5421 = vadd.f32 %v5293, %v5369
      %v5422 = vadd.f32 %v5294, %v5372
      %v5423 = vadd.f32 %v5295, %v5375
      %v5424 = vadd.f32 %v5296, %v5378
      %v5425 = vadd.f32 %v5297, %v5381
      %v5426 = vadd.f32 %v5298, %v5384
      %v5427 = vadd.f32 %v5299, %v5387
      %v5428 = vadd.f32 %v5300, %v5390
      %v5429 = vadd.f32 %v5301, %v5393
      %v5430 = vadd.f32 %v5302, %v5396
      %v5431 = vadd.f32 %v5303, %v5399
      %vm5432 = vcmask 15368
      %5433 = vst.msk [vmem:[#allocation3] sm:$0xff] %vm5432, %v5400
      %5434 = vst.msk [vmem:[#allocation3 + $0x8] sm:$0xff] %vm5432, %v5401
      %5435 = vst.msk [vmem:[#allocation3 + $0x10] sm:$0xff] %vm5432, %v5402
      %5436 = vst.msk [vmem:[#allocation3 + $0x18] sm:$0xff] %vm5432, %v5403
      %5437 = vst.msk [vmem:[#allocation3 + $0x20] sm:$0xff] %vm5432, %v5404
      %5438 = vst.msk [vmem:[#allocation3 + $0x28] sm:$0xff] %vm5432, %v5405
      %5439 = vst.msk [vmem:[#allocation3 + $0x30] sm:$0xff] %vm5432, %v5406
      %5440 = vst.msk [vmem:[#allocation3 + $0x38] sm:$0xff] %vm5432, %v5407
      %5441 = vst.msk [vmem:[#allocation3 + $0x40] sm:$0xff] %vm5432, %v5408
      %5442 = vst.msk [vmem:[#allocation3 + $0x48] sm:$0xff] %vm5432, %v5409
      %5443 = vst.msk [vmem:[#allocation3 + $0x50] sm:$0xff] %vm5432, %v5410
      %5444 = vst.msk [vmem:[#allocation3 + $0x58] sm:$0xff] %vm5432, %v5411
      %5445 = vst.msk [vmem:[#allocation3 + $0x60] sm:$0xff] %vm5432, %v5412
      %5446 = vst.msk [vmem:[#allocation3 + $0x68] sm:$0xff] %vm5432, %v5413
      %5447 = vst.msk [vmem:[#allocation3 + $0x70] sm:$0xff] %vm5432, %v5414
      %5448 = vst.msk [vmem:[#allocation3 + $0x78] sm:$0xff] %vm5432, %v5415
      %5449 = vst.msk [vmem:[#allocation3 + $0x80] sm:$0xff] %vm5432, %v5416
      %5450 = vst.msk [vmem:[#allocation3 + $0x88] sm:$0xff] %vm5432, %v5417
      %5451 = vst.msk [vmem:[#allocation3 + $0x90] sm:$0xff] %vm5432, %v5418
      %5452 = vst.msk [vmem:[#allocation3 + $0x98] sm:$0xff] %vm5432, %v5419
      %5453 = vst.msk [vmem:[#allocation3 + $0xa0] sm:$0xff] %vm5432, %v5420
      %5454 = vst.msk [vmem:[#allocation3 + $0xa8] sm:$0xff] %vm5432, %v5421
      %5455 = vst.msk [vmem:[#allocation3 + $0xb0] sm:$0xff] %vm5432, %v5422
      %5456 = vst.msk [vmem:[#allocation3 + $0xb8] sm:$0xff] %vm5432, %v5423
      %5457 = vst.msk [vmem:[#allocation3 + $0xc0] sm:$0xff] %vm5432, %v5424
      %5458 = vst.msk [vmem:[#allocation3 + $0xc8] sm:$0xff] %vm5432, %v5425
      %5459 = vst.msk [vmem:[#allocation3 + $0xd0] sm:$0xff] %vm5432, %v5426
      %5460 = vst.msk [vmem:[#allocation3 + $0xd8] sm:$0xff] %vm5432, %v5427
      %5461 = vst.msk [vmem:[#allocation3 + $0xe0] sm:$0xff] %vm5432, %v5428
      %5462 = vst.msk [vmem:[#allocation3 + $0xe8] sm:$0xff] %vm5432, %v5429
      %5463 = vst.msk [vmem:[#allocation3 + $0xf0] sm:$0xff] %vm5432, %v5430
      %5464 = vst.msk [vmem:[#allocation3 + $0xf8] sm:$0xff] %vm5432, %v5431
      %v5465 = vld [vmem:[#allocation4] sm:$0xff]
      %v5466 = vld [vmem:[#allocation4 + $0x8] sm:$0xff]
      %v5467 = vld [vmem:[#allocation4 + $0x10] sm:$0xff]
      %v5468 = vld [vmem:[#allocation4 + $0x18] sm:$0xff]
      %v5469 = vld [vmem:[#allocation4 + $0x20] sm:$0xff]
      %v5470 = vld [vmem:[#allocation4 + $0x28] sm:$0xff]
      %v5471 = vld [vmem:[#allocation4 + $0x30] sm:$0xff]
      %v5472 = vld [vmem:[#allocation4 + $0x38] sm:$0xff]
      %v5473 = vld [vmem:[#allocation4 + $0x40] sm:$0xff]
      %v5474 = vld [vmem:[#allocation4 + $0x48] sm:$0xff]
      %v5475 = vld [vmem:[#allocation4 + $0x50] sm:$0xff]
      %v5476 = vld [vmem:[#allocation4 + $0x58] sm:$0xff]
      %v5477 = vld [vmem:[#allocation4 + $0x60] sm:$0xff]
      %v5478 = vld [vmem:[#allocation4 + $0x68] sm:$0xff]
      %v5479 = vld [vmem:[#allocation4 + $0x70] sm:$0xff]
      %v5480 = vld [vmem:[#allocation4 + $0x78] sm:$0xff]
      %v5481 = vld [vmem:[#allocation4 + $0x80] sm:$0xff]
      %v5482 = vld [vmem:[#allocation4 + $0x88] sm:$0xff]
      %v5483 = vld [vmem:[#allocation4 + $0x90] sm:$0xff]
      %v5484 = vld [vmem:[#allocation4 + $0x98] sm:$0xff]
      %v5485 = vld [vmem:[#allocation4 + $0xa0] sm:$0xff]
      %v5486 = vld [vmem:[#allocation4 + $0xa8] sm:$0xff]
      %v5487 = vld [vmem:[#allocation4 + $0xb0] sm:$0xff]
      %v5488 = vld [vmem:[#allocation4 + $0xb8] sm:$0xff]
      %v5489 = vld [vmem:[#allocation4 + $0xc0] sm:$0xff]
      %v5490 = vld [vmem:[#allocation4 + $0xc8] sm:$0xff]
      %v5491 = vld [vmem:[#allocation4 + $0xd0] sm:$0xff]
      %v5492 = vld [vmem:[#allocation4 + $0xd8] sm:$0xff]
      %v5493 = vld [vmem:[#allocation4 + $0xe0] sm:$0xff]
      %v5494 = vld [vmem:[#allocation4 + $0xe8] sm:$0xff]
      %v5495 = vld [vmem:[#allocation4 + $0xf0] sm:$0xff]
      %v5496 = vld [vmem:[#allocation4 + $0xf8] sm:$0xff]
      %5498 = vset.pattern.permute.xlu0 1
      %5499 = vperm.xlu0 %5498, %v4825
      %v5500 = vpop.permute.xlu0 %5499
      %5503 = vset.pattern.permute.xlu0 1
      %5504 = vperm.xlu0 %5503, %v4827
      %v5505 = vpop.permute.xlu0 %5504
      %5508 = vset.pattern.permute.xlu0 1
      %5509 = vperm.xlu0 %5508, %v4829
      %v5510 = vpop.permute.xlu0 %5509
      %5513 = vset.pattern.permute.xlu0 1
      %5514 = vperm.xlu0 %5513, %v4831
      %v5515 = vpop.permute.xlu0 %5514
      %5518 = vset.pattern.permute.xlu0 1
      %5519 = vperm.xlu0 %5518, %v4833
      %v5520 = vpop.permute.xlu0 %5519
      %5523 = vset.pattern.permute.xlu0 1
      %5524 = vperm.xlu0 %5523, %v4835
      %v5525 = vpop.permute.xlu0 %5524
      %5528 = vset.pattern.permute.xlu0 1
      %5529 = vperm.xlu0 %5528, %v4837
      %v5530 = vpop.permute.xlu0 %5529
      %5533 = vset.pattern.permute.xlu0 1
      %5534 = vperm.xlu0 %5533, %v4839
      %v5535 = vpop.permute.xlu0 %5534
      %5538 = vset.pattern.permute.xlu0 1
      %5539 = vperm.xlu0 %5538, %v4841
      %v5540 = vpop.permute.xlu0 %5539
      %5543 = vset.pattern.permute.xlu0 1
      %5544 = vperm.xlu0 %5543, %v4843
      %v5545 = vpop.permute.xlu0 %5544
      %5548 = vset.pattern.permute.xlu0 1
      %5549 = vperm.xlu0 %5548, %v4845
      %v5550 = vpop.permute.xlu0 %5549
      %5553 = vset.pattern.permute.xlu0 1
      %5554 = vperm.xlu0 %5553, %v4847
      %v5555 = vpop.permute.xlu0 %5554
      %5558 = vset.pattern.permute.xlu0 1
      %5559 = vperm.xlu0 %5558, %v4849
      %v5560 = vpop.permute.xlu0 %5559
      %5563 = vset.pattern.permute.xlu0 1
      %5564 = vperm.xlu0 %5563, %v4851
      %v5565 = vpop.permute.xlu0 %5564
      %5568 = vset.pattern.permute.xlu0 1
      %5569 = vperm.xlu0 %5568, %v4853
      %v5570 = vpop.permute.xlu0 %5569
      %5573 = vset.pattern.permute.xlu0 1
      %5574 = vperm.xlu0 %5573, %v4855
      %v5575 = vpop.permute.xlu0 %5574
      %5578 = vset.pattern.permute.xlu0 1
      %5579 = vperm.xlu0 %5578, %v4857
      %v5580 = vpop.permute.xlu0 %5579
      %5583 = vset.pattern.permute.xlu0 1
      %5584 = vperm.xlu0 %5583, %v4859
      %v5585 = vpop.permute.xlu0 %5584
      %5588 = vset.pattern.permute.xlu0 1
      %5589 = vperm.xlu0 %5588, %v4861
      %v5590 = vpop.permute.xlu0 %5589
      %5593 = vset.pattern.permute.xlu0 1
      %5594 = vperm.xlu0 %5593, %v4863
      %v5595 = vpop.permute.xlu0 %5594
      %5598 = vset.pattern.permute.xlu0 1
      %5599 = vperm.xlu0 %5598, %v4865
      %v5600 = vpop.permute.xlu0 %5599
      %5603 = vset.pattern.permute.xlu0 1
      %5604 = vperm.xlu0 %5603, %v4867
      %v5605 = vpop.permute.xlu0 %5604
      %5608 = vset.pattern.permute.xlu0 1
      %5609 = vperm.xlu0 %5608, %v4869
      %v5610 = vpop.permute.xlu0 %5609
      %5613 = vset.pattern.permute.xlu0 1
      %5614 = vperm.xlu0 %5613, %v4871
      %v5615 = vpop.permute.xlu0 %5614
      %5618 = vset.pattern.permute.xlu0 1
      %5619 = vperm.xlu0 %5618, %v4873
      %v5620 = vpop.permute.xlu0 %5619
      %5623 = vset.pattern.permute.xlu0 1
      %5624 = vperm.xlu0 %5623, %v4875
      %v5625 = vpop.permute.xlu0 %5624
      %5628 = vset.pattern.permute.xlu0 1
      %5629 = vperm.xlu0 %5628, %v4877
      %v5630 = vpop.permute.xlu0 %5629
      %5633 = vset.pattern.permute.xlu0 1
      %5634 = vperm.xlu0 %5633, %v4879
      %v5635 = vpop.permute.xlu0 %5634
      %5638 = vset.pattern.permute.xlu0 1
      %5639 = vperm.xlu0 %5638, %v4881
      %v5640 = vpop.permute.xlu0 %5639
      %5643 = vset.pattern.permute.xlu0 1
      %5644 = vperm.xlu0 %5643, %v4883
      %v5645 = vpop.permute.xlu0 %5644
      %5648 = vset.pattern.permute.xlu0 1
      %5649 = vperm.xlu0 %5648, %v4885
      %v5650 = vpop.permute.xlu0 %5649
      %5653 = vset.pattern.permute.xlu0 1
      %5654 = vperm.xlu0 %5653, %v4887
      %v5655 = vpop.permute.xlu0 %5654
      %v5657 = vmul.f32 %v5500, %v5465
      %v5658 = vmul.f32 %v5505, %v5466
      %v5659 = vmul.f32 %v5510, %v5467
      %v5660 = vmul.f32 %v5515, %v5468
      %v5661 = vmul.f32 %v5520, %v5469
      %v5662 = vmul.f32 %v5525, %v5470
      %v5663 = vmul.f32 %v5530, %v5471
      %v5664 = vmul.f32 %v5535, %v5472
      %v5665 = vmul.f32 %v5540, %v5473
      %v5666 = vmul.f32 %v5545, %v5474
      %v5667 = vmul.f32 %v5550, %v5475
      %v5668 = vmul.f32 %v5555, %v5476
      %v5669 = vmul.f32 %v5560, %v5477
      %v5670 = vmul.f32 %v5565, %v5478
      %v5671 = vmul.f32 %v5570, %v5479
      %v5672 = vmul.f32 %v5575, %v5480
      %v5673 = vmul.f32 %v5580, %v5481
      %v5674 = vmul.f32 %v5585, %v5482
      %v5675 = vmul.f32 %v5590, %v5483
      %v5676 = vmul.f32 %v5595, %v5484
      %v5677 = vmul.f32 %v5600, %v5485
      %v5678 = vmul.f32 %v5605, %v5486
      %v5679 = vmul.f32 %v5610, %v5487
      %v5680 = vmul.f32 %v5615, %v5488
      %v5681 = vmul.f32 %v5620, %v5489
      %v5682 = vmul.f32 %v5625, %v5490
      %v5683 = vmul.f32 %v5630, %v5491
      %v5684 = vmul.f32 %v5635, %v5492
      %v5685 = vmul.f32 %v5640, %v5493
      %v5686 = vmul.f32 %v5645, %v5494
      %v5687 = vmul.f32 %v5650, %v5495
      %v5688 = vmul.f32 %v5655, %v5496
      %5689 = vmatprep.subr.mxu0 0.0
      %5690 = vmatpush1.msra.mxu0 %v2003
      %5691 = vmatprep.subr.mxu0 0.0
      %5692 = vmatpush1.msra.mxu0 %v2001
      %5693 = vmatprep.subr.mxu0 0.0
      %5694 = vmatpush1.msra.mxu0 %v1999
      %5695 = vmatprep.subr.mxu0 0.0
      %5696 = vmatpush1.msra.mxu0 %v1997
      %5697 = vmatprep.subr.mxu0 0.0
      %5698 = vmatpush1.msra.mxu0 %v1995
      %5699 = vmatprep.subr.mxu0 0.0
      %5700 = vmatpush1.msra.mxu0 %v1993
      %5701 = vmatprep.subr.mxu0 0.0
      %5702 = vmatpush1.msra.mxu0 %v1991
      %5703 = vmatprep.subr.mxu0 0.0
      %5704 = vmatpush1.msra.mxu0 %v1989
      %5705 = vmatprep.subr.mxu0 0.0
      %5706 = vmatpush1.msra.mxu0 %v1987
      %5707 = vmatprep.subr.mxu0 0.0
      %5708 = vmatpush1.msra.mxu0 %v1985
      %5709 = vmatprep.subr.mxu0 0.0
      %5710 = vmatpush1.msra.mxu0 %v1983
      %5711 = vmatprep.subr.mxu0 0.0
      %5712 = vmatpush1.msra.mxu0 %v1981
      %5713 = vmatprep.subr.mxu0 0.0
      %5714 = vmatpush1.msra.mxu0 %v1979
      %5715 = vmatprep.subr.mxu0 0.0
      %5716 = vmatpush1.msra.mxu0 %v1977
      %5717 = vmatprep.subr.mxu0 0.0
      %5718 = vmatpush1.msra.mxu0 %v1975
      %5719 = vmatprep.subr.mxu0 0.0
      %5720 = vmatpush1.msra.mxu0 %v1973
      %5721 = vmatprep.subr.mxu0 0.0
      %5722 = vmatpush2.msra.mxu0 %v2035
      %5723 = vmatprep.subr.mxu0 0.0
      %5724 = vmatpush2.msra.mxu0 %v2033
      %5725 = vmatprep.subr.mxu0 0.0
      %5726 = vmatpush2.msra.mxu0 %v2031
      %5727 = vmatprep.subr.mxu0 0.0
      %5728 = vmatpush2.msra.mxu0 %v2029
      %5729 = vmatprep.subr.mxu0 0.0
      %5730 = vmatpush2.msra.mxu0 %v2027
      %5731 = vmatprep.subr.mxu0 0.0
      %5732 = vmatpush2.msra.mxu0 %v2025
      %5733 = vmatprep.subr.mxu0 0.0
      %5734 = vmatpush2.msra.mxu0 %v2023
      %5735 = vmatprep.subr.mxu0 0.0
      %5736 = vmatpush2.msra.mxu0 %v2021
      %5737 = vmatprep.subr.mxu0 0.0
      %5738 = vmatpush2.msra.mxu0 %v2019
      %5739 = vmatprep.subr.mxu0 0.0
      %5740 = vmatpush2.msra.mxu0 %v2017
      %5741 = vmatprep.subr.mxu0 0.0
      %5742 = vmatpush2.msra.mxu0 %v2015
      %5743 = vmatprep.subr.mxu0 0.0
      %5744 = vmatpush2.msra.mxu0 %v2013
      %5745 = vmatprep.subr.mxu0 0.0
      %5746 = vmatpush2.msra.mxu0 %v2011
      %5747 = vmatprep.subr.mxu0 0.0
      %5748 = vmatpush2.msra.mxu0 %v2009
      %5749 = vmatprep.subr.mxu0 0.0
      %5750 = vmatpush2.msra.mxu0 %v2007
      %5751 = vmatprep.subr.mxu0 0.0
      %5752 = vmatpush2.msra.mxu0 %v2005
      %5753 = vmatprep.mubr.f32.mxu0 %v5115
      %5754 = vmatmul.mubr.f32.gmra.mxu0 %v5113
      %v5755 = vpop.f32.mrf.mxu0
      %v5756 = vadd.f32 0.0, %v5755
      %v5757 = vpop.f32.mrf.mxu0
      %5758 = vmatprep.mubr.f32.mxu0 %v5119
      %5759 = vmatmul.mubr.f32.gmra.mxu0 %v5117
      %v5760 = vpop.f32.mrf.mxu0
      %v5761 = vadd.f32 0.0, %v5760
      %v5762 = vpop.f32.mrf.mxu0
      %5763 = vmatprep.mubr.f32.mxu0 %v5123
      %5764 = vmatmul.mubr.f32.gmra.mxu0 %v5121
      %v5765 = vpop.f32.mrf.mxu0
      %v5766 = vadd.f32 0.0, %v5765
      %v5767 = vpop.f32.mrf.mxu0
      %5768 = vmatprep.mubr.f32.mxu0 %v5127
      %5769 = vmatmul.mubr.f32.gmra.mxu0 %v5125
      %v5770 = vpop.f32.mrf.mxu0
      %v5771 = vadd.f32 0.0, %v5770
      %v5772 = vpop.f32.mrf.mxu0
      %5773 = vmatprep.mubr.f32.mxu0 %v5131
      %5774 = vmatmul.mubr.f32.gmra.mxu0 %v5129
      %v5775 = vpop.f32.mrf.mxu0
      %v5776 = vadd.f32 0.0, %v5775
      %v5777 = vpop.f32.mrf.mxu0
      %5778 = vmatprep.mubr.f32.mxu0 %v5135
      %5779 = vmatmul.mubr.f32.gmra.mxu0 %v5133
      %v5780 = vpop.f32.mrf.mxu0
      %v5781 = vadd.f32 0.0, %v5780
      %v5782 = vpop.f32.mrf.mxu0
      %5783 = vmatprep.mubr.f32.mxu0 %v5139
      %5784 = vmatmul.mubr.f32.gmra.mxu0 %v5137
      %v5785 = vpop.f32.mrf.mxu0
      %v5786 = vadd.f32 0.0, %v5785
      %v5787 = vpop.f32.mrf.mxu0
      %5788 = vmatprep.mubr.f32.mxu0 %v5143
      %5789 = vmatmul.mubr.f32.gmra.mxu0 %v5141
      %v5790 = vpop.f32.mrf.mxu0
      %v5791 = vadd.f32 0.0, %v5790
      %v5792 = vpop.f32.mrf.mxu0
      %5793 = vmatprep.mubr.f32.mxu0 %v5147
      %5794 = vmatmul.mubr.f32.gmra.mxu0 %v5145
      %v5795 = vpop.f32.mrf.mxu0
      %v5796 = vadd.f32 0.0, %v5795
      %v5797 = vpop.f32.mrf.mxu0
      %5798 = vmatprep.mubr.f32.mxu0 %v5151
      %5799 = vmatmul.mubr.f32.gmra.mxu0 %v5149
      %v5800 = vpop.f32.mrf.mxu0
      %v5801 = vadd.f32 0.0, %v5800
      %v5802 = vpop.f32.mrf.mxu0
      %5803 = vmatprep.mubr.f32.mxu0 %v5155
      %5804 = vmatmul.mubr.f32.gmra.mxu0 %v5153
      %v5805 = vpop.f32.mrf.mxu0
      %v5806 = vadd.f32 0.0, %v5805
      %v5807 = vpop.f32.mrf.mxu0
      %5808 = vmatprep.mubr.f32.mxu0 %v5159
      %5809 = vmatmul.mubr.f32.gmra.mxu0 %v5157
      %v5810 = vpop.f32.mrf.mxu0
      %v5811 = vadd.f32 0.0, %v5810
      %v5812 = vpop.f32.mrf.mxu0
      %5813 = vmatprep.mubr.f32.mxu0 %v5163
      %5814 = vmatmul.mubr.f32.gmra.mxu0 %v5161
      %v5815 = vpop.f32.mrf.mxu0
      %v5816 = vadd.f32 0.0, %v5815
      %v5817 = vpop.f32.mrf.mxu0
      %5818 = vmatprep.mubr.f32.mxu0 %v5167
      %5819 = vmatmul.mubr.f32.gmra.mxu0 %v5165
      %v5820 = vpop.f32.mrf.mxu0
      %v5821 = vadd.f32 0.0, %v5820
      %v5822 = vpop.f32.mrf.mxu0
      %5823 = vmatprep.mubr.f32.mxu0 %v5171
      %5824 = vmatmul.mubr.f32.gmra.mxu0 %v5169
      %v5825 = vpop.f32.mrf.mxu0
      %v5826 = vadd.f32 0.0, %v5825
      %v5827 = vpop.f32.mrf.mxu0
      %5828 = vmatprep.mubr.f32.mxu0 %v5175
      %5829 = vmatmul.mubr.f32.gmra.mxu0 %v5173
      %v5830 = vpop.f32.mrf.mxu0
      %v5831 = vadd.f32 0.0, %v5830
      %v5832 = vpop.f32.mrf.mxu0
      %5833 = vmatprep.mubr.f32.mxu0 %v5179
      %5834 = vmatmul.mubr.f32.gmra.mxu0 %v5177
      %v5835 = vpop.f32.mrf.mxu0
      %v5836 = vadd.f32 0.0, %v5835
      %v5837 = vpop.f32.mrf.mxu0
      %5838 = vmatprep.mubr.f32.mxu0 %v5183
      %5839 = vmatmul.mubr.f32.gmra.mxu0 %v5181
      %v5840 = vpop.f32.mrf.mxu0
      %v5841 = vadd.f32 0.0, %v5840
      %v5842 = vpop.f32.mrf.mxu0
      %5843 = vmatprep.mubr.f32.mxu0 %v5187
      %5844 = vmatmul.mubr.f32.gmra.mxu0 %v5185
      %v5845 = vpop.f32.mrf.mxu0
      %v5846 = vadd.f32 0.0, %v5845
      %v5847 = vpop.f32.mrf.mxu0
      %5848 = vmatprep.mubr.f32.mxu0 %v5191
      %5849 = vmatmul.mubr.f32.gmra.mxu0 %v5189
      %v5850 = vpop.f32.mrf.mxu0
      %v5851 = vadd.f32 0.0, %v5850
      %v5852 = vpop.f32.mrf.mxu0
      %5853 = vmatprep.mubr.f32.mxu0 %v5195
      %5854 = vmatmul.mubr.f32.gmra.mxu0 %v5193
      %v5855 = vpop.f32.mrf.mxu0
      %v5856 = vadd.f32 0.0, %v5855
      %v5857 = vpop.f32.mrf.mxu0
      %5858 = vmatprep.mubr.f32.mxu0 %v5199
      %5859 = vmatmul.mubr.f32.gmra.mxu0 %v5197
      %v5860 = vpop.f32.mrf.mxu0
      %v5861 = vadd.f32 0.0, %v5860
      %v5862 = vpop.f32.mrf.mxu0
      %5863 = vmatprep.mubr.f32.mxu0 %v5203
      %5864 = vmatmul.mubr.f32.gmra.mxu0 %v5201
      %v5865 = vpop.f32.mrf.mxu0
      %v5866 = vadd.f32 0.0, %v5865
      %v5867 = vpop.f32.mrf.mxu0
      %5868 = vmatprep.mubr.f32.mxu0 %v5207
      %5869 = vmatmul.mubr.f32.gmra.mxu0 %v5205
      %v5870 = vpop.f32.mrf.mxu0
      %v5871 = vadd.f32 0.0, %v5870
      %v5872 = vpop.f32.mrf.mxu0
      %5873 = vmatprep.mubr.f32.mxu0 %v5211
      %5874 = vmatmul.mubr.f32.gmra.mxu0 %v5209
      %v5875 = vpop.f32.mrf.mxu0
      %v5876 = vadd.f32 0.0, %v5875
      %v5877 = vpop.f32.mrf.mxu0
      %5878 = vmatprep.mubr.f32.mxu0 %v5215
      %5879 = vmatmul.mubr.f32.gmra.mxu0 %v5213
      %v5880 = vpop.f32.mrf.mxu0
      %v5881 = vadd.f32 0.0, %v5880
      %v5882 = vpop.f32.mrf.mxu0
      %5883 = vmatprep.mubr.f32.mxu0 %v5219
      %5884 = vmatmul.mubr.f32.gmra.mxu0 %v5217
      %v5885 = vpop.f32.mrf.mxu0
      %v5886 = vadd.f32 0.0, %v5885
      %v5887 = vpop.f32.mrf.mxu0
      %5888 = vmatprep.mubr.f32.mxu0 %v5223
      %5889 = vmatmul.mubr.f32.gmra.mxu0 %v5221
      %v5890 = vpop.f32.mrf.mxu0
      %v5891 = vadd.f32 0.0, %v5890
      %v5892 = vpop.f32.mrf.mxu0
      %5893 = vmatprep.mubr.f32.mxu0 %v5227
      %5894 = vmatmul.mubr.f32.gmra.mxu0 %v5225
      %v5895 = vpop.f32.mrf.mxu0
      %v5896 = vadd.f32 0.0, %v5895
      %v5897 = vpop.f32.mrf.mxu0
      %5898 = vmatprep.mubr.f32.mxu0 %v5231
      %5899 = vmatmul.mubr.f32.gmra.mxu0 %v5229
      %v5900 = vpop.f32.mrf.mxu0
      %v5901 = vadd.f32 0.0, %v5900
      %v5902 = vpop.f32.mrf.mxu0
      %5903 = vmatprep.mubr.f32.mxu0 %v5235
      %5904 = vmatmul.mubr.f32.gmra.mxu0 %v5233
      %v5905 = vpop.f32.mrf.mxu0
      %v5906 = vadd.f32 0.0, %v5905
      %v5907 = vpop.f32.mrf.mxu0
      %5908 = vmatprep.mubr.f32.mxu0 %v5239
      %5909 = vmatmul.mubr.f32.gmra.mxu0 %v5237
      %v5910 = vpop.f32.mrf.mxu0
      %v5911 = vadd.f32 0.0, %v5910
      %v5912 = vpop.f32.mrf.mxu0
      %5913 = vdwg.mxu0
      %5946 = vrot.lane.b32.xlu0 %v5756, 4
      %v5947 = vpop.permute.xlu0 %5946
      %5948 = vrot.lane.b32.xlu0 %v5761, 4
      %v5949 = vpop.permute.xlu0 %5948
      %5950 = vrot.lane.b32.xlu0 %v5766, 4
      %v5951 = vpop.permute.xlu0 %5950
      %5952 = vrot.lane.b32.xlu0 %v5771, 4
      %v5953 = vpop.permute.xlu0 %5952
      %5954 = vrot.lane.b32.xlu0 %v5776, 4
      %v5955 = vpop.permute.xlu0 %5954
      %5956 = vrot.lane.b32.xlu0 %v5781, 4
      %v5957 = vpop.permute.xlu0 %5956
      %5958 = vrot.lane.b32.xlu0 %v5786, 4
      %v5959 = vpop.permute.xlu0 %5958
      %5960 = vrot.lane.b32.xlu0 %v5791, 4
      %v5961 = vpop.permute.xlu0 %5960
      %5962 = vrot.lane.b32.xlu0 %v5796, 4
      %v5963 = vpop.permute.xlu0 %5962
      %5964 = vrot.lane.b32.xlu0 %v5801, 4
      %v5965 = vpop.permute.xlu0 %5964
      %5966 = vrot.lane.b32.xlu0 %v5806, 4
      %v5967 = vpop.permute.xlu0 %5966
      %5968 = vrot.lane.b32.xlu0 %v5811, 4
      %v5969 = vpop.permute.xlu0 %5968
      %5970 = vrot.lane.b32.xlu0 %v5816, 4
      %v5971 = vpop.permute.xlu0 %5970
      %5972 = vrot.lane.b32.xlu0 %v5821, 4
      %v5973 = vpop.permute.xlu0 %5972
      %5974 = vrot.lane.b32.xlu0 %v5826, 4
      %v5975 = vpop.permute.xlu0 %5974
      %5976 = vrot.lane.b32.xlu0 %v5831, 4
      %v5977 = vpop.permute.xlu0 %5976
      %5978 = vrot.lane.b32.xlu0 %v5836, 4
      %v5979 = vpop.permute.xlu0 %5978
      %5980 = vrot.lane.b32.xlu0 %v5841, 4
      %v5981 = vpop.permute.xlu0 %5980
      %5982 = vrot.lane.b32.xlu0 %v5846, 4
      %v5983 = vpop.permute.xlu0 %5982
      %5984 = vrot.lane.b32.xlu0 %v5851, 4
      %v5985 = vpop.permute.xlu0 %5984
      %5986 = vrot.lane.b32.xlu0 %v5856, 4
      %v5987 = vpop.permute.xlu0 %5986
      %5988 = vrot.lane.b32.xlu0 %v5861, 4
      %v5989 = vpop.permute.xlu0 %5988
      %5990 = vrot.lane.b32.xlu0 %v5866, 4
      %v5991 = vpop.permute.xlu0 %5990
      %5992 = vrot.lane.b32.xlu0 %v5871, 4
      %v5993 = vpop.permute.xlu0 %5992
      %5994 = vrot.lane.b32.xlu0 %v5876, 4
      %v5995 = vpop.permute.xlu0 %5994
      %5996 = vrot.lane.b32.xlu0 %v5881, 4
      %v5997 = vpop.permute.xlu0 %5996
      %5998 = vrot.lane.b32.xlu0 %v5886, 4
      %v5999 = vpop.permute.xlu0 %5998
      %6000 = vrot.lane.b32.xlu0 %v5891, 4
      %v6001 = vpop.permute.xlu0 %6000
      %6002 = vrot.lane.b32.xlu0 %v5896, 4
      %v6003 = vpop.permute.xlu0 %6002
      %6004 = vrot.lane.b32.xlu0 %v5901, 4
      %v6005 = vpop.permute.xlu0 %6004
      %6006 = vrot.lane.b32.xlu0 %v5906, 4
      %v6007 = vpop.permute.xlu0 %6006
      %6008 = vrot.lane.b32.xlu0 %v5911, 4
      %v6009 = vpop.permute.xlu0 %6008
      %v6042 = vadd.f32 %v5657, %v5947
      %v6043 = vadd.f32 %v5658, %v5949
      %v6044 = vadd.f32 %v5659, %v5951
      %v6045 = vadd.f32 %v5660, %v5953
      %v6046 = vadd.f32 %v5661, %v5955
      %v6047 = vadd.f32 %v5662, %v5957
      %v6048 = vadd.f32 %v5663, %v5959
      %v6049 = vadd.f32 %v5664, %v5961
      %v6050 = vadd.f32 %v5665, %v5963
      %v6051 = vadd.f32 %v5666, %v5965
      %v6052 = vadd.f32 %v5667, %v5967
      %v6053 = vadd.f32 %v5668, %v5969
      %v6054 = vadd.f32 %v5669, %v5971
      %v6055 = vadd.f32 %v5670, %v5973
      %v6056 = vadd.f32 %v5671, %v5975
      %v6057 = vadd.f32 %v5672, %v5977
      %v6058 = vadd.f32 %v5673, %v5979
      %v6059 = vadd.f32 %v5674, %v5981
      %v6060 = vadd.f32 %v5675, %v5983
      %v6061 = vadd.f32 %v5676, %v5985
      %v6062 = vadd.f32 %v5677, %v5987
      %v6063 = vadd.f32 %v5678, %v5989
      %v6064 = vadd.f32 %v5679, %v5991
      %v6065 = vadd.f32 %v5680, %v5993
      %v6066 = vadd.f32 %v5681, %v5995
      %v6067 = vadd.f32 %v5682, %v5997
      %v6068 = vadd.f32 %v5683, %v5999
      %v6069 = vadd.f32 %v5684, %v6001
      %v6070 = vadd.f32 %v5685, %v6003
      %v6071 = vadd.f32 %v5686, %v6005
      %v6072 = vadd.f32 %v5687, %v6007
      %v6073 = vadd.f32 %v5688, %v6009
      %vm6074 = vcmask 64544
      %6075 = vst.msk [vmem:[#allocation4] sm:$0xff] %vm6074, %v6042
      %6076 = vst.msk [vmem:[#allocation4 + $0x8] sm:$0xff] %vm6074, %v6043
      %6077 = vst.msk [vmem:[#allocation4 + $0x10] sm:$0xff] %vm6074, %v6044
      %6078 = vst.msk [vmem:[#allocation4 + $0x18] sm:$0xff] %vm6074, %v6045
      %6079 = vst.msk [vmem:[#allocation4 + $0x20] sm:$0xff] %vm6074, %v6046
      %6080 = vst.msk [vmem:[#allocation4 + $0x28] sm:$0xff] %vm6074, %v6047
      %6081 = vst.msk [vmem:[#allocation4 + $0x30] sm:$0xff] %vm6074, %v6048
      %6082 = vst.msk [vmem:[#allocation4 + $0x38] sm:$0xff] %vm6074, %v6049
      %6083 = vst.msk [vmem:[#allocation4 + $0x40] sm:$0xff] %vm6074, %v6050
      %6084 = vst.msk [vmem:[#allocation4 + $0x48] sm:$0xff] %vm6074, %v6051
      %6085 = vst.msk [vmem:[#allocation4 + $0x50] sm:$0xff] %vm6074, %v6052
      %6086 = vst.msk [vmem:[#allocation4 + $0x58] sm:$0xff] %vm6074, %v6053
      %6087 = vst.msk [vmem:[#allocation4 + $0x60] sm:$0xff] %vm6074, %v6054
      %6088 = vst.msk [vmem:[#allocation4 + $0x68] sm:$0xff] %vm6074, %v6055
      %6089 = vst.msk [vmem:[#allocation4 + $0x70] sm:$0xff] %vm6074, %v6056
      %6090 = vst.msk [vmem:[#allocation4 + $0x78] sm:$0xff] %vm6074, %v6057
      %6091 = vst.msk [vmem:[#allocation4 + $0x80] sm:$0xff] %vm6074, %v6058
      %6092 = vst.msk [vmem:[#allocation4 + $0x88] sm:$0xff] %vm6074, %v6059
      %6093 = vst.msk [vmem:[#allocation4 + $0x90] sm:$0xff] %vm6074, %v6060
      %6094 = vst.msk [vmem:[#allocation4 + $0x98] sm:$0xff] %vm6074, %v6061
      %6095 = vst.msk [vmem:[#allocation4 + $0xa0] sm:$0xff] %vm6074, %v6062
      %6096 = vst.msk [vmem:[#allocation4 + $0xa8] sm:$0xff] %vm6074, %v6063
      %6097 = vst.msk [vmem:[#allocation4 + $0xb0] sm:$0xff] %vm6074, %v6064
      %6098 = vst.msk [vmem:[#allocation4 + $0xb8] sm:$0xff] %vm6074, %v6065
      %6099 = vst.msk [vmem:[#allocation4 + $0xc0] sm:$0xff] %vm6074, %v6066
      %6100 = vst.msk [vmem:[#allocation4 + $0xc8] sm:$0xff] %vm6074, %v6067
      %6101 = vst.msk [vmem:[#allocation4 + $0xd0] sm:$0xff] %vm6074, %v6068
      %6102 = vst.msk [vmem:[#allocation4 + $0xd8] sm:$0xff] %vm6074, %v6069
      %6103 = vst.msk [vmem:[#allocation4 + $0xe0] sm:$0xff] %vm6074, %v6070
      %6104 = vst.msk [vmem:[#allocation4 + $0xe8] sm:$0xff] %vm6074, %v6071
      %6105 = vst.msk [vmem:[#allocation4 + $0xf0] sm:$0xff] %vm6074, %v6072
      %6106 = vst.msk [vmem:[#allocation4 + $0xf8] sm:$0xff] %vm6074, %v6073
      %6107 = vst.msk [vmem:[#allocation2] sm:$0xff] %vm5432, %v4760
      %6108 = vst.msk [vmem:[#allocation2 + $0x8] sm:$0xff] %vm5432, %v4761
      %6109 = vst.msk [vmem:[#allocation2 + $0x10] sm:$0xff] %vm5432, %v4762
      %6110 = vst.msk [vmem:[#allocation2 + $0x18] sm:$0xff] %vm5432, %v4763
      %6111 = vst.msk [vmem:[#allocation2 + $0x20] sm:$0xff] %vm5432, %v4764
      %6112 = vst.msk [vmem:[#allocation2 + $0x28] sm:$0xff] %vm5432, %v4765
      %6113 = vst.msk [vmem:[#allocation2 + $0x30] sm:$0xff] %vm5432, %v4766
      %6114 = vst.msk [vmem:[#allocation2 + $0x38] sm:$0xff] %vm5432, %v4767
      %6115 = vst.msk [vmem:[#allocation2 + $0x40] sm:$0xff] %vm5432, %v4768
      %6116 = vst.msk [vmem:[#allocation2 + $0x48] sm:$0xff] %vm5432, %v4769
      %6117 = vst.msk [vmem:[#allocation2 + $0x50] sm:$0xff] %vm5432, %v4770
      %6118 = vst.msk [vmem:[#allocation2 + $0x58] sm:$0xff] %vm5432, %v4771
      %6119 = vst.msk [vmem:[#allocation2 + $0x60] sm:$0xff] %vm5432, %v4772
      %6120 = vst.msk [vmem:[#allocation2 + $0x68] sm:$0xff] %vm5432, %v4773
      %6121 = vst.msk [vmem:[#allocation2 + $0x70] sm:$0xff] %vm5432, %v4774
      %6122 = vst.msk [vmem:[#allocation2 + $0x78] sm:$0xff] %vm5432, %v4775
      %6123 = vst.msk [vmem:[#allocation2 + $0x80] sm:$0xff] %vm5432, %v4776
      %6124 = vst.msk [vmem:[#allocation2 + $0x88] sm:$0xff] %vm5432, %v4777
      %6125 = vst.msk [vmem:[#allocation2 + $0x90] sm:$0xff] %vm5432, %v4778
      %6126 = vst.msk [vmem:[#allocation2 + $0x98] sm:$0xff] %vm5432, %v4779
      %6127 = vst.msk [vmem:[#allocation2 + $0xa0] sm:$0xff] %vm5432, %v4780
      %6128 = vst.msk [vmem:[#allocation2 + $0xa8] sm:$0xff] %vm5432, %v4781
      %6129 = vst.msk [vmem:[#allocation2 + $0xb0] sm:$0xff] %vm5432, %v4782
      %6130 = vst.msk [vmem:[#allocation2 + $0xb8] sm:$0xff] %vm5432, %v4783
      %6131 = vst.msk [vmem:[#allocation2 + $0xc0] sm:$0xff] %vm5432, %v4784
      %6132 = vst.msk [vmem:[#allocation2 + $0xc8] sm:$0xff] %vm5432, %v4785
      %6133 = vst.msk [vmem:[#allocation2 + $0xd0] sm:$0xff] %vm5432, %v4786
      %6134 = vst.msk [vmem:[#allocation2 + $0xd8] sm:$0xff] %vm5432, %v4787
      %6135 = vst.msk [vmem:[#allocation2 + $0xe0] sm:$0xff] %vm5432, %v4788
      %6136 = vst.msk [vmem:[#allocation2 + $0xe8] sm:$0xff] %vm5432, %v4789
      %6137 = vst.msk [vmem:[#allocation2 + $0xf0] sm:$0xff] %vm5432, %v4790
      %6138 = vst.msk [vmem:[#allocation2 + $0xf8] sm:$0xff] %vm5432, %v4791
      %6139 = vmatprep.subr.mxu0 0.0
      %6140 = vmatpush1.xpose.msra.mxu0 %v2483
      %6141 = vmatprep.subr.mxu0 0.0
      %6142 = vmatpush1.xpose.msra.mxu0 %v2481
      %6143 = vmatprep.subr.mxu0 0.0
      %6144 = vmatpush1.xpose.msra.mxu0 %v2479
      %6145 = vmatprep.subr.mxu0 0.0
      %6146 = vmatpush1.xpose.msra.mxu0 %v2477
      %6147 = vmatprep.subr.mxu0 0.0
      %6148 = vmatpush1.xpose.msra.mxu0 %v2475
      %6149 = vmatprep.subr.mxu0 0.0
      %6150 = vmatpush1.xpose.msra.mxu0 %v2473
      %6151 = vmatprep.subr.mxu0 0.0
      %6152 = vmatpush1.xpose.msra.mxu0 %v2471
      %6153 = vmatprep.subr.mxu0 0.0
      %6154 = vmatpush1.xpose.msra.mxu0 %v2469
      %6155 = vmatprep.subr.mxu0 0.0
      %6156 = vmatpush1.xpose.msra.mxu0 %v2467
      %6157 = vmatprep.subr.mxu0 0.0
      %6158 = vmatpush1.xpose.msra.mxu0 %v2465
      %6159 = vmatprep.subr.mxu0 0.0
      %6160 = vmatpush1.xpose.msra.mxu0 %v2463
      %6161 = vmatprep.subr.mxu0 0.0
      %6162 = vmatpush1.xpose.msra.mxu0 %v2461
      %6163 = vmatprep.subr.mxu0 0.0
      %6164 = vmatpush1.xpose.msra.mxu0 %v2459
      %6165 = vmatprep.subr.mxu0 0.0
      %6166 = vmatpush1.xpose.msra.mxu0 %v2457
      %6167 = vmatprep.subr.mxu0 0.0
      %6168 = vmatpush1.xpose.msra.mxu0 %v2455
      %6169 = vmatprep.subr.mxu0 0.0
      %6170 = vmatpush1.xpose.msra.mxu0 %v2453
      %6171 = vmatprep.subr.mxu0 0.0
      %6172 = vmatpush2.xpose.msra.mxu0 %v2515
      %6173 = vmatprep.subr.mxu0 0.0
      %6174 = vmatpush2.xpose.msra.mxu0 %v2513
      %6175 = vmatprep.subr.mxu0 0.0
      %6176 = vmatpush2.xpose.msra.mxu0 %v2511
      %6177 = vmatprep.subr.mxu0 0.0
      %6178 = vmatpush2.xpose.msra.mxu0 %v2509
      %6179 = vmatprep.subr.mxu0 0.0
      %6180 = vmatpush2.xpose.msra.mxu0 %v2507
      %6181 = vmatprep.subr.mxu0 0.0
      %6182 = vmatpush2.xpose.msra.mxu0 %v2505
      %6183 = vmatprep.subr.mxu0 0.0
      %6184 = vmatpush2.xpose.msra.mxu0 %v2503
      %6185 = vmatprep.subr.mxu0 0.0
      %6186 = vmatpush2.xpose.msra.mxu0 %v2501
      %6187 = vmatprep.subr.mxu0 0.0
      %6188 = vmatpush2.xpose.msra.mxu0 %v2499
      %6189 = vmatprep.subr.mxu0 0.0
      %6190 = vmatpush2.xpose.msra.mxu0 %v2497
      %6191 = vmatprep.subr.mxu0 0.0
      %6192 = vmatpush2.xpose.msra.mxu0 %v2495
      %6193 = vmatprep.subr.mxu0 0.0
      %6194 = vmatpush2.xpose.msra.mxu0 %v2493
      %6195 = vmatprep.subr.mxu0 0.0
      %6196 = vmatpush2.xpose.msra.mxu0 %v2491
      %6197 = vmatprep.subr.mxu0 0.0
      %6198 = vmatpush2.xpose.msra.mxu0 %v2489
      %6199 = vmatprep.subr.mxu0 0.0
      %6200 = vmatpush2.xpose.msra.mxu0 %v2487
      %6201 = vmatprep.subr.mxu0 0.0
      %6202 = vmatpush2.xpose.msra.mxu0 %v2485
      %6203 = vmatprep.mubr.f32.mxu0 0.0
      %6204 = vmatmul.mubr.f32.gmra.mxu0 %v4311
      %v6205 = vpop.f32.mrf.mxu0
      %v6206 = vadd.f32 0.0, %v6205
      %v6207 = vpop.f32.mrf.mxu0
      %v6208 = vadd.f32 0.0, %v6207
      %6209 = vmatprep.mubr.f32.mxu0 0.0
      %6210 = vmatmul.mubr.f32.gmra.mxu0 %v4313
      %v6211 = vpop.f32.mrf.mxu0
      %v6212 = vadd.f32 0.0, %v6211
      %v6213 = vpop.f32.mrf.mxu0
      %v6214 = vadd.f32 0.0, %v6213
      %6215 = vmatprep.mubr.f32.mxu0 0.0
      %6216 = vmatmul.mubr.f32.gmra.mxu0 %v4315
      %v6217 = vpop.f32.mrf.mxu0
      %v6218 = vadd.f32 0.0, %v6217
      %v6219 = vpop.f32.mrf.mxu0
      %v6220 = vadd.f32 0.0, %v6219
      %6221 = vmatprep.mubr.f32.mxu0 0.0
      %6222 = vmatmul.mubr.f32.gmra.mxu0 %v4317
      %v6223 = vpop.f32.mrf.mxu0
      %v6224 = vadd.f32 0.0, %v6223
      %v6225 = vpop.f32.mrf.mxu0
      %v6226 = vadd.f32 0.0, %v6225
      %6227 = vmatprep.mubr.f32.mxu0 0.0
      %6228 = vmatmul.mubr.f32.gmra.mxu0 %v4319
      %v6229 = vpop.f32.mrf.mxu0
      %v6230 = vadd.f32 0.0, %v6229
      %v6231 = vpop.f32.mrf.mxu0
      %v6232 = vadd.f32 0.0, %v6231
      %6233 = vmatprep.mubr.f32.mxu0 0.0
      %6234 = vmatmul.mubr.f32.gmra.mxu0 %v4321
      %v6235 = vpop.f32.mrf.mxu0
      %v6236 = vadd.f32 0.0, %v6235
      %v6237 = vpop.f32.mrf.mxu0
      %v6238 = vadd.f32 0.0, %v6237
      %6239 = vmatprep.mubr.f32.mxu0 0.0
      %6240 = vmatmul.mubr.f32.gmra.mxu0 %v4323
      %v6241 = vpop.f32.mrf.mxu0
      %v6242 = vadd.f32 0.0, %v6241
      %v6243 = vpop.f32.mrf.mxu0
      %v6244 = vadd.f32 0.0, %v6243
      %6245 = vmatprep.mubr.f32.mxu0 0.0
      %6246 = vmatmul.mubr.f32.gmra.mxu0 %v4325
      %v6247 = vpop.f32.mrf.mxu0
      %v6248 = vadd.f32 0.0, %v6247
      %v6249 = vpop.f32.mrf.mxu0
      %v6250 = vadd.f32 0.0, %v6249
      %6251 = vmatprep.mubr.f32.mxu0 0.0
      %6252 = vmatmul.mubr.f32.gmra.mxu0 %v4327
      %v6253 = vpop.f32.mrf.mxu0
      %v6254 = vadd.f32 0.0, %v6253
      %v6255 = vpop.f32.mrf.mxu0
      %v6256 = vadd.f32 0.0, %v6255
      %6257 = vmatprep.mubr.f32.mxu0 0.0
      %6258 = vmatmul.mubr.f32.gmra.mxu0 %v4329
      %v6259 = vpop.f32.mrf.mxu0
      %v6260 = vadd.f32 0.0, %v6259
      %v6261 = vpop.f32.mrf.mxu0
      %v6262 = vadd.f32 0.0, %v6261
      %6263 = vmatprep.mubr.f32.mxu0 0.0
      %6264 = vmatmul.mubr.f32.gmra.mxu0 %v4331
      %v6265 = vpop.f32.mrf.mxu0
      %v6266 = vadd.f32 0.0, %v6265
      %v6267 = vpop.f32.mrf.mxu0
      %v6268 = vadd.f32 0.0, %v6267
      %6269 = vmatprep.mubr.f32.mxu0 0.0
      %6270 = vmatmul.mubr.f32.gmra.mxu0 %v4333
      %v6271 = vpop.f32.mrf.mxu0
      %v6272 = vadd.f32 0.0, %v6271
      %v6273 = vpop.f32.mrf.mxu0
      %v6274 = vadd.f32 0.0, %v6273
      %6275 = vmatprep.mubr.f32.mxu0 0.0
      %6276 = vmatmul.mubr.f32.gmra.mxu0 %v4335
      %v6277 = vpop.f32.mrf.mxu0
      %v6278 = vadd.f32 0.0, %v6277
      %v6279 = vpop.f32.mrf.mxu0
      %v6280 = vadd.f32 0.0, %v6279
      %6281 = vmatprep.mubr.f32.mxu0 0.0
      %6282 = vmatmul.mubr.f32.gmra.mxu0 %v4337
      %v6283 = vpop.f32.mrf.mxu0
      %v6284 = vadd.f32 0.0, %v6283
      %v6285 = vpop.f32.mrf.mxu0
      %v6286 = vadd.f32 0.0, %v6285
      %6287 = vmatprep.mubr.f32.mxu0 0.0
      %6288 = vmatmul.mubr.f32.gmra.mxu0 %v4339
      %v6289 = vpop.f32.mrf.mxu0
      %v6290 = vadd.f32 0.0, %v6289
      %v6291 = vpop.f32.mrf.mxu0
      %v6292 = vadd.f32 0.0, %v6291
      %6293 = vmatprep.mubr.f32.mxu0 0.0
      %6294 = vmatmul.mubr.f32.gmra.mxu0 %v4341
      %v6295 = vpop.f32.mrf.mxu0
      %v6296 = vadd.f32 0.0, %v6295
      %v6297 = vpop.f32.mrf.mxu0
      %v6298 = vadd.f32 0.0, %v6297
      %6299 = vmatprep.mubr.f32.mxu0 0.0
      %6300 = vmatmul.mubr.f32.gmra.mxu0 %v4343
      %v6301 = vpop.f32.mrf.mxu0
      %v6302 = vadd.f32 0.0, %v6301
      %v6303 = vpop.f32.mrf.mxu0
      %v6304 = vadd.f32 0.0, %v6303
      %6305 = vmatprep.mubr.f32.mxu0 0.0
      %6306 = vmatmul.mubr.f32.gmra.mxu0 %v4345
      %v6307 = vpop.f32.mrf.mxu0
      %v6308 = vadd.f32 0.0, %v6307
      %v6309 = vpop.f32.mrf.mxu0
      %v6310 = vadd.f32 0.0, %v6309
      %6311 = vmatprep.mubr.f32.mxu0 0.0
      %6312 = vmatmul.mubr.f32.gmra.mxu0 %v4347
      %v6313 = vpop.f32.mrf.mxu0
      %v6314 = vadd.f32 0.0, %v6313
      %v6315 = vpop.f32.mrf.mxu0
      %v6316 = vadd.f32 0.0, %v6315
      %6317 = vmatprep.mubr.f32.mxu0 0.0
      %6318 = vmatmul.mubr.f32.gmra.mxu0 %v4349
      %v6319 = vpop.f32.mrf.mxu0
      %v6320 = vadd.f32 0.0, %v6319
      %v6321 = vpop.f32.mrf.mxu0
      %v6322 = vadd.f32 0.0, %v6321
      %6323 = vmatprep.mubr.f32.mxu0 0.0
      %6324 = vmatmul.mubr.f32.gmra.mxu0 %v4351
      %v6325 = vpop.f32.mrf.mxu0
      %v6326 = vadd.f32 0.0, %v6325
      %v6327 = vpop.f32.mrf.mxu0
      %v6328 = vadd.f32 0.0, %v6327
      %6329 = vmatprep.mubr.f32.mxu0 0.0
      %6330 = vmatmul.mubr.f32.gmra.mxu0 %v4353
      %v6331 = vpop.f32.mrf.mxu0
      %v6332 = vadd.f32 0.0, %v6331
      %v6333 = vpop.f32.mrf.mxu0
      %v6334 = vadd.f32 0.0, %v6333
      %6335 = vmatprep.mubr.f32.mxu0 0.0
      %6336 = vmatmul.mubr.f32.gmra.mxu0 %v4355
      %v6337 = vpop.f32.mrf.mxu0
      %v6338 = vadd.f32 0.0, %v6337
      %v6339 = vpop.f32.mrf.mxu0
      %v6340 = vadd.f32 0.0, %v6339
      %6341 = vmatprep.mubr.f32.mxu0 0.0
      %6342 = vmatmul.mubr.f32.gmra.mxu0 %v4357
      %v6343 = vpop.f32.mrf.mxu0
      %v6344 = vadd.f32 0.0, %v6343
      %v6345 = vpop.f32.mrf.mxu0
      %v6346 = vadd.f32 0.0, %v6345
      %6347 = vmatprep.mubr.f32.mxu0 0.0
      %6348 = vmatmul.mubr.f32.gmra.mxu0 %v4359
      %v6349 = vpop.f32.mrf.mxu0
      %v6350 = vadd.f32 0.0, %v6349
      %v6351 = vpop.f32.mrf.mxu0
      %v6352 = vadd.f32 0.0, %v6351
      %6353 = vmatprep.mubr.f32.mxu0 0.0
      %6354 = vmatmul.mubr.f32.gmra.mxu0 %v4361
      %v6355 = vpop.f32.mrf.mxu0
      %v6356 = vadd.f32 0.0, %v6355
      %v6357 = vpop.f32.mrf.mxu0
      %v6358 = vadd.f32 0.0, %v6357
      %6359 = vmatprep.mubr.f32.mxu0 0.0
      %6360 = vmatmul.mubr.f32.gmra.mxu0 %v4363
      %v6361 = vpop.f32.mrf.mxu0
      %v6362 = vadd.f32 0.0, %v6361
      %v6363 = vpop.f32.mrf.mxu0
      %v6364 = vadd.f32 0.0, %v6363
      %6365 = vmatprep.mubr.f32.mxu0 0.0
      %6366 = vmatmul.mubr.f32.gmra.mxu0 %v4365
      %v6367 = vpop.f32.mrf.mxu0
      %v6368 = vadd.f32 0.0, %v6367
      %v6369 = vpop.f32.mrf.mxu0
      %v6370 = vadd.f32 0.0, %v6369
      %6371 = vmatprep.mubr.f32.mxu0 0.0
      %6372 = vmatmul.mubr.f32.gmra.mxu0 %v4367
      %v6373 = vpop.f32.mrf.mxu0
      %v6374 = vadd.f32 0.0, %v6373
      %v6375 = vpop.f32.mrf.mxu0
      %v6376 = vadd.f32 0.0, %v6375
      %6377 = vmatprep.mubr.f32.mxu0 0.0
      %6378 = vmatmul.mubr.f32.gmra.mxu0 %v4369
      %v6379 = vpop.f32.mrf.mxu0
      %v6380 = vadd.f32 0.0, %v6379
      %v6381 = vpop.f32.mrf.mxu0
      %v6382 = vadd.f32 0.0, %v6381
      %6383 = vmatprep.mubr.f32.mxu0 0.0
      %6384 = vmatmul.mubr.f32.gmra.mxu0 %v4371
      %v6385 = vpop.f32.mrf.mxu0
      %v6386 = vadd.f32 0.0, %v6385
      %v6387 = vpop.f32.mrf.mxu0
      %v6388 = vadd.f32 0.0, %v6387
      %6389 = vmatprep.mubr.f32.mxu0 0.0
      %6390 = vmatmul.mubr.f32.gmra.mxu0 %v4373
      %v6391 = vpop.f32.mrf.mxu0
      %v6392 = vadd.f32 0.0, %v6391
      %v6393 = vpop.f32.mrf.mxu0
      %v6394 = vadd.f32 0.0, %v6393
      %6395 = vdwg.mxu0
      %v6396 = vld [vmem:[#allocation2] sm:$0xff]
      %v6397 = vld [vmem:[#allocation2 + $0x8] sm:$0xff]
      %v6398 = vld [vmem:[#allocation2 + $0x10] sm:$0xff]
      %v6399 = vld [vmem:[#allocation2 + $0x18] sm:$0xff]
      %v6400 = vld [vmem:[#allocation2 + $0x20] sm:$0xff]
      %v6401 = vld [vmem:[#allocation2 + $0x28] sm:$0xff]
      %v6402 = vld [vmem:[#allocation2 + $0x30] sm:$0xff]
      %v6403 = vld [vmem:[#allocation2 + $0x38] sm:$0xff]
      %v6404 = vld [vmem:[#allocation2 + $0x40] sm:$0xff]
      %v6405 = vld [vmem:[#allocation2 + $0x48] sm:$0xff]
      %v6406 = vld [vmem:[#allocation2 + $0x50] sm:$0xff]
      %v6407 = vld [vmem:[#allocation2 + $0x58] sm:$0xff]
      %v6408 = vld [vmem:[#allocation2 + $0x60] sm:$0xff]
      %v6409 = vld [vmem:[#allocation2 + $0x68] sm:$0xff]
      %v6410 = vld [vmem:[#allocation2 + $0x70] sm:$0xff]
      %v6411 = vld [vmem:[#allocation2 + $0x78] sm:$0xff]
      %v6412 = vld [vmem:[#allocation2 + $0x80] sm:$0xff]
      %v6413 = vld [vmem:[#allocation2 + $0x88] sm:$0xff]
      %v6414 = vld [vmem:[#allocation2 + $0x90] sm:$0xff]
      %v6415 = vld [vmem:[#allocation2 + $0x98] sm:$0xff]
      %v6416 = vld [vmem:[#allocation2 + $0xa0] sm:$0xff]
      %v6417 = vld [vmem:[#allocation2 + $0xa8] sm:$0xff]
      %v6418 = vld [vmem:[#allocation2 + $0xb0] sm:$0xff]
      %v6419 = vld [vmem:[#allocation2 + $0xb8] sm:$0xff]
      %v6420 = vld [vmem:[#allocation2 + $0xc0] sm:$0xff]
      %v6421 = vld [vmem:[#allocation2 + $0xc8] sm:$0xff]
      %v6422 = vld [vmem:[#allocation2 + $0xd0] sm:$0xff]
      %v6423 = vld [vmem:[#allocation2 + $0xd8] sm:$0xff]
      %v6424 = vld [vmem:[#allocation2 + $0xe0] sm:$0xff]
      %v6425 = vld [vmem:[#allocation2 + $0xe8] sm:$0xff]
      %v6426 = vld [vmem:[#allocation2 + $0xf0] sm:$0xff]
      %v6427 = vld [vmem:[#allocation2 + $0xf8] sm:$0xff]
      %v6428 = vmax.f32 %v6206, %v6208
      %6429 = vmax.xlane.f32.xlu0 %v6428
      %v6430 = vpop.xlane.xlu0 %6429
      %v6431 = vmax.f32 %v6212, %v6214
      %6432 = vmax.xlane.f32.xlu0 %v6431
      %v6433 = vpop.xlane.xlu0 %6432
      %v6434 = vmax.f32 %v6218, %v6220
      %6435 = vmax.xlane.f32.xlu0 %v6434
      %v6436 = vpop.xlane.xlu0 %6435
      %v6437 = vmax.f32 %v6224, %v6226
      %6438 = vmax.xlane.f32.xlu0 %v6437
      %v6439 = vpop.xlane.xlu0 %6438
      %v6440 = vmax.f32 %v6230, %v6232
      %6441 = vmax.xlane.f32.xlu0 %v6440
      %v6442 = vpop.xlane.xlu0 %6441
      %v6443 = vmax.f32 %v6236, %v6238
      %6444 = vmax.xlane.f32.xlu0 %v6443
      %v6445 = vpop.xlane.xlu0 %6444
      %v6446 = vmax.f32 %v6242, %v6244
      %6447 = vmax.xlane.f32.xlu0 %v6446
      %v6448 = vpop.xlane.xlu0 %6447
      %v6449 = vmax.f32 %v6248, %v6250
      %6450 = vmax.xlane.f32.xlu0 %v6449
      %v6451 = vpop.xlane.xlu0 %6450
      %v6452 = vmax.f32 %v6254, %v6256
      %6453 = vmax.xlane.f32.xlu0 %v6452
      %v6454 = vpop.xlane.xlu0 %6453
      %v6455 = vmax.f32 %v6260, %v6262
      %6456 = vmax.xlane.f32.xlu0 %v6455
      %v6457 = vpop.xlane.xlu0 %6456
      %v6458 = vmax.f32 %v6266, %v6268
      %6459 = vmax.xlane.f32.xlu0 %v6458
      %v6460 = vpop.xlane.xlu0 %6459
      %v6461 = vmax.f32 %v6272, %v6274
      %6462 = vmax.xlane.f32.xlu0 %v6461
      %v6463 = vpop.xlane.xlu0 %6462
      %v6464 = vmax.f32 %v6278, %v6280
      %6465 = vmax.xlane.f32.xlu0 %v6464
      %v6466 = vpop.xlane.xlu0 %6465
      %v6467 = vmax.f32 %v6284, %v6286
      %6468 = vmax.xlane.f32.xlu0 %v6467
      %v6469 = vpop.xlane.xlu0 %6468
      %v6470 = vmax.f32 %v6290, %v6292
      %6471 = vmax.xlane.f32.xlu0 %v6470
      %v6472 = vpop.xlane.xlu0 %6471
      %v6473 = vmax.f32 %v6296, %v6298
      %6474 = vmax.xlane.f32.xlu0 %v6473
      %v6475 = vpop.xlane.xlu0 %6474
      %v6476 = vmax.f32 %v6302, %v6304
      %6477 = vmax.xlane.f32.xlu0 %v6476
      %v6478 = vpop.xlane.xlu0 %6477
      %v6479 = vmax.f32 %v6308, %v6310
      %6480 = vmax.xlane.f32.xlu0 %v6479
      %v6481 = vpop.xlane.xlu0 %6480
      %v6482 = vmax.f32 %v6314, %v6316
      %6483 = vmax.xlane.f32.xlu0 %v6482
      %v6484 = vpop.xlane.xlu0 %6483
      %v6485 = vmax.f32 %v6320, %v6322
      %6486 = vmax.xlane.f32.xlu0 %v6485
      %v6487 = vpop.xlane.xlu0 %6486
      %v6488 = vmax.f32 %v6326, %v6328
      %6489 = vmax.xlane.f32.xlu0 %v6488
      %v6490 = vpop.xlane.xlu0 %6489
      %v6491 = vmax.f32 %v6332, %v6334
      %6492 = vmax.xlane.f32.xlu0 %v6491
      %v6493 = vpop.xlane.xlu0 %6492
      %v6494 = vmax.f32 %v6338, %v6340
      %6495 = vmax.xlane.f32.xlu0 %v6494
      %v6496 = vpop.xlane.xlu0 %6495
      %v6497 = vmax.f32 %v6344, %v6346
      %6498 = vmax.xlane.f32.xlu0 %v6497
      %v6499 = vpop.xlane.xlu0 %6498
      %v6500 = vmax.f32 %v6350, %v6352
      %6501 = vmax.xlane.f32.xlu0 %v6500
      %v6502 = vpop.xlane.xlu0 %6501
      %v6503 = vmax.f32 %v6356, %v6358
      %6504 = vmax.xlane.f32.xlu0 %v6503
      %v6505 = vpop.xlane.xlu0 %6504
      %v6506 = vmax.f32 %v6362, %v6364
      %6507 = vmax.xlane.f32.xlu0 %v6506
      %v6508 = vpop.xlane.xlu0 %6507
      %v6509 = vmax.f32 %v6368, %v6370
      %6510 = vmax.xlane.f32.xlu0 %v6509
      %v6511 = vpop.xlane.xlu0 %6510
      %v6512 = vmax.f32 %v6374, %v6376
      %6513 = vmax.xlane.f32.xlu0 %v6512
      %v6514 = vpop.xlane.xlu0 %6513
      %v6515 = vmax.f32 %v6380, %v6382
      %6516 = vmax.xlane.f32.xlu0 %v6515
      %v6517 = vpop.xlane.xlu0 %6516
      %v6518 = vmax.f32 %v6386, %v6388
      %6519 = vmax.xlane.f32.xlu0 %v6518
      %v6520 = vpop.xlane.xlu0 %6519
      %v6521 = vmax.f32 %v6392, %v6394
      %6522 = vmax.xlane.f32.xlu0 %v6521
      %v6523 = vpop.xlane.xlu0 %6522
      %v6524 = vmax.f32 %v6396, %v6430
      %v6525 = vmax.f32 %v6397, %v6433
      %v6526 = vmax.f32 %v6398, %v6436
      %v6527 = vmax.f32 %v6399, %v6439
      %v6528 = vmax.f32 %v6400, %v6442
      %v6529 = vmax.f32 %v6401, %v6445
      %v6530 = vmax.f32 %v6402, %v6448
      %v6531 = vmax.f32 %v6403, %v6451
      %v6532 = vmax.f32 %v6404, %v6454
      %v6533 = vmax.f32 %v6405, %v6457
      %v6534 = vmax.f32 %v6406, %v6460
      %v6535 = vmax.f32 %v6407, %v6463
      %v6536 = vmax.f32 %v6408, %v6466
      %v6537 = vmax.f32 %v6409, %v6469
      %v6538 = vmax.f32 %v6410, %v6472
      %v6539 = vmax.f32 %v6411, %v6475
      %v6540 = vmax.f32 %v6412, %v6478
      %v6541 = vmax.f32 %v6413, %v6481
      %v6542 = vmax.f32 %v6414, %v6484
      %v6543 = vmax.f32 %v6415, %v6487
      %v6544 = vmax.f32 %v6416, %v6490
      %v6545 = vmax.f32 %v6417, %v6493
      %v6546 = vmax.f32 %v6418, %v6496
      %v6547 = vmax.f32 %v6419, %v6499
      %v6548 = vmax.f32 %v6420, %v6502
      %v6549 = vmax.f32 %v6421, %v6505
      %v6550 = vmax.f32 %v6422, %v6508
      %v6551 = vmax.f32 %v6423, %v6511
      %v6552 = vmax.f32 %v6424, %v6514
      %v6553 = vmax.f32 %v6425, %v6517
      %v6554 = vmax.f32 %v6426, %v6520
      %v6555 = vmax.f32 %v6427, %v6523
      %v6556 = vsub.f32 %v6396, %v6524
      %v6557 = vsub.f32 %v6397, %v6525
      %v6558 = vsub.f32 %v6398, %v6526
      %v6559 = vsub.f32 %v6399, %v6527
      %v6560 = vsub.f32 %v6400, %v6528
      %v6561 = vsub.f32 %v6401, %v6529
      %v6562 = vsub.f32 %v6402, %v6530
      %v6563 = vsub.f32 %v6403, %v6531
      %v6564 = vsub.f32 %v6404, %v6532
      %v6565 = vsub.f32 %v6405, %v6533
      %v6566 = vsub.f32 %v6406, %v6534
      %v6567 = vsub.f32 %v6407, %v6535
      %v6568 = vsub.f32 %v6408, %v6536
      %v6569 = vsub.f32 %v6409, %v6537
      %v6570 = vsub.f32 %v6410, %v6538
      %v6571 = vsub.f32 %v6411, %v6539
      %v6572 = vsub.f32 %v6412, %v6540
      %v6573 = vsub.f32 %v6413, %v6541
      %v6574 = vsub.f32 %v6414, %v6542
      %v6575 = vsub.f32 %v6415, %v6543
      %v6576 = vsub.f32 %v6416, %v6544
      %v6577 = vsub.f32 %v6417, %v6545
      %v6578 = vsub.f32 %v6418, %v6546
      %v6579 = vsub.f32 %v6419, %v6547
      %v6580 = vsub.f32 %v6420, %v6548
      %v6581 = vsub.f32 %v6421, %v6549
      %v6582 = vsub.f32 %v6422, %v6550
      %v6583 = vsub.f32 %v6423, %v6551
      %v6584 = vsub.f32 %v6424, %v6552
      %v6585 = vsub.f32 %v6425, %v6553
      %v6586 = vsub.f32 %v6426, %v6554
      %v6587 = vsub.f32 %v6427, %v6555
      %v6588 = vmul.f32 %v6556, 1.442695
      %v6589 = vpow.pop %v6588
      %v6590 = vmul.f32 %v6557, 1.442695
      %v6591 = vpow.pop %v6590
      %v6592 = vmul.f32 %v6558, 1.442695
      %v6593 = vpow.pop %v6592
      %v6594 = vmul.f32 %v6559, 1.442695
      %v6595 = vpow.pop %v6594
      %v6596 = vmul.f32 %v6560, 1.442695
      %v6597 = vpow.pop %v6596
      %v6598 = vmul.f32 %v6561, 1.442695
      %v6599 = vpow.pop %v6598
      %v6600 = vmul.f32 %v6562, 1.442695
      %v6601 = vpow.pop %v6600
      %v6602 = vmul.f32 %v6563, 1.442695
      %v6603 = vpow.pop %v6602
      %v6604 = vmul.f32 %v6564, 1.442695
      %v6605 = vpow.pop %v6604
      %v6606 = vmul.f32 %v6565, 1.442695
      %v6607 = vpow.pop %v6606
      %v6608 = vmul.f32 %v6566, 1.442695
      %v6609 = vpow.pop %v6608
      %v6610 = vmul.f32 %v6567, 1.442695
      %v6611 = vpow.pop %v6610
      %v6612 = vmul.f32 %v6568, 1.442695
      %v6613 = vpow.pop %v6612
      %v6614 = vmul.f32 %v6569, 1.442695
      %v6615 = vpow.pop %v6614
      %v6616 = vmul.f32 %v6570, 1.442695
      %v6617 = vpow.pop %v6616
      %v6618 = vmul.f32 %v6571, 1.442695
      %v6619 = vpow.pop %v6618
      %v6620 = vmul.f32 %v6572, 1.442695
      %v6621 = vpow.pop %v6620
      %v6622 = vmul.f32 %v6573, 1.442695
      %v6623 = vpow.pop %v6622
      %v6624 = vmul.f32 %v6574, 1.442695
      %v6625 = vpow.pop %v6624
      %v6626 = vmul.f32 %v6575, 1.442695
      %v6627 = vpow.pop %v6626
      %v6628 = vmul.f32 %v6576, 1.442695
      %v6629 = vpow.pop %v6628
      %v6630 = vmul.f32 %v6577, 1.442695
      %v6631 = vpow.pop %v6630
      %v6632 = vmul.f32 %v6578, 1.442695
      %v6633 = vpow.pop %v6632
      %v6634 = vmul.f32 %v6579, 1.442695
      %v6635 = vpow.pop %v6634
      %v6636 = vmul.f32 %v6580, 1.442695
      %v6637 = vpow.pop %v6636
      %v6638 = vmul.f32 %v6581, 1.442695
      %v6639 = vpow.pop %v6638
      %v6640 = vmul.f32 %v6582, 1.442695
      %v6641 = vpow.pop %v6640
      %v6642 = vmul.f32 %v6583, 1.442695
      %v6643 = vpow.pop %v6642
      %v6644 = vmul.f32 %v6584, 1.442695
      %v6645 = vpow.pop %v6644
      %v6646 = vmul.f32 %v6585, 1.442695
      %v6647 = vpow.pop %v6646
      %v6648 = vmul.f32 %v6586, 1.442695
      %v6649 = vpow.pop %v6648
      %v6650 = vmul.f32 %v6587, 1.442695
      %v6651 = vpow.pop %v6650
      %6653 = vset.pattern.permute.xlu0 1
      %6654 = vperm.xlu0 %6653, %v6524
      %v6655 = vpop.permute.xlu0 %6654
      %6658 = vset.pattern.permute.xlu0 1
      %6659 = vperm.xlu0 %6658, %v6525
      %v6660 = vpop.permute.xlu0 %6659
      %6663 = vset.pattern.permute.xlu0 1
      %6664 = vperm.xlu0 %6663, %v6526
      %v6665 = vpop.permute.xlu0 %6664
      %6668 = vset.pattern.permute.xlu0 1
      %6669 = vperm.xlu0 %6668, %v6527
      %v6670 = vpop.permute.xlu0 %6669
      %6673 = vset.pattern.permute.xlu0 1
      %6674 = vperm.xlu0 %6673, %v6528
      %v6675 = vpop.permute.xlu0 %6674
      %6678 = vset.pattern.permute.xlu0 1
      %6679 = vperm.xlu0 %6678, %v6529
      %v6680 = vpop.permute.xlu0 %6679
      %6683 = vset.pattern.permute.xlu0 1
      %6684 = vperm.xlu0 %6683, %v6530
      %v6685 = vpop.permute.xlu0 %6684
      %6688 = vset.pattern.permute.xlu0 1
      %6689 = vperm.xlu0 %6688, %v6531
      %v6690 = vpop.permute.xlu0 %6689
      %6693 = vset.pattern.permute.xlu0 1
      %6694 = vperm.xlu0 %6693, %v6532
      %v6695 = vpop.permute.xlu0 %6694
      %6698 = vset.pattern.permute.xlu0 1
      %6699 = vperm.xlu0 %6698, %v6533
      %v6700 = vpop.permute.xlu0 %6699
      %6703 = vset.pattern.permute.xlu0 1
      %6704 = vperm.xlu0 %6703, %v6534
      %v6705 = vpop.permute.xlu0 %6704
      %6708 = vset.pattern.permute.xlu0 1
      %6709 = vperm.xlu0 %6708, %v6535
      %v6710 = vpop.permute.xlu0 %6709
      %6713 = vset.pattern.permute.xlu0 1
      %6714 = vperm.xlu0 %6713, %v6536
      %v6715 = vpop.permute.xlu0 %6714
      %6718 = vset.pattern.permute.xlu0 1
      %6719 = vperm.xlu0 %6718, %v6537
      %v6720 = vpop.permute.xlu0 %6719
      %6723 = vset.pattern.permute.xlu0 1
      %6724 = vperm.xlu0 %6723, %v6538
      %v6725 = vpop.permute.xlu0 %6724
      %6728 = vset.pattern.permute.xlu0 1
      %6729 = vperm.xlu0 %6728, %v6539
      %v6730 = vpop.permute.xlu0 %6729
      %6733 = vset.pattern.permute.xlu0 1
      %6734 = vperm.xlu0 %6733, %v6540
      %v6735 = vpop.permute.xlu0 %6734
      %6738 = vset.pattern.permute.xlu0 1
      %6739 = vperm.xlu0 %6738, %v6541
      %v6740 = vpop.permute.xlu0 %6739
      %6743 = vset.pattern.permute.xlu0 1
      %6744 = vperm.xlu0 %6743, %v6542
      %v6745 = vpop.permute.xlu0 %6744
      %6748 = vset.pattern.permute.xlu0 1
      %6749 = vperm.xlu0 %6748, %v6543
      %v6750 = vpop.permute.xlu0 %6749
      %6753 = vset.pattern.permute.xlu0 1
      %6754 = vperm.xlu0 %6753, %v6544
      %v6755 = vpop.permute.xlu0 %6754
      %6758 = vset.pattern.permute.xlu0 1
      %6759 = vperm.xlu0 %6758, %v6545
      %v6760 = vpop.permute.xlu0 %6759
      %6763 = vset.pattern.permute.xlu0 1
      %6764 = vperm.xlu0 %6763, %v6546
      %v6765 = vpop.permute.xlu0 %6764
      %6768 = vset.pattern.permute.xlu0 1
      %6769 = vperm.xlu0 %6768, %v6547
      %v6770 = vpop.permute.xlu0 %6769
      %6773 = vset.pattern.permute.xlu0 1
      %6774 = vperm.xlu0 %6773, %v6548
      %v6775 = vpop.permute.xlu0 %6774
      %6778 = vset.pattern.permute.xlu0 1
      %6779 = vperm.xlu0 %6778, %v6549
      %v6780 = vpop.permute.xlu0 %6779
      %6783 = vset.pattern.permute.xlu0 1
      %6784 = vperm.xlu0 %6783, %v6550
      %v6785 = vpop.permute.xlu0 %6784
      %6788 = vset.pattern.permute.xlu0 1
      %6789 = vperm.xlu0 %6788, %v6551
      %v6790 = vpop.permute.xlu0 %6789
      %6793 = vset.pattern.permute.xlu0 1
      %6794 = vperm.xlu0 %6793, %v6552
      %v6795 = vpop.permute.xlu0 %6794
      %6798 = vset.pattern.permute.xlu0 1
      %6799 = vperm.xlu0 %6798, %v6553
      %v6800 = vpop.permute.xlu0 %6799
      %6803 = vset.pattern.permute.xlu0 1
      %6804 = vperm.xlu0 %6803, %v6554
      %v6805 = vpop.permute.xlu0 %6804
      %6808 = vset.pattern.permute.xlu0 1
      %6809 = vperm.xlu0 %6808, %v6555
      %v6810 = vpop.permute.xlu0 %6809
      %v6812 = vsub.f32 %v6206, %v6655
      %v6813 = vsub.f32 %v6208, %v6655
      %v6814 = vsub.f32 %v6212, %v6660
      %v6815 = vsub.f32 %v6214, %v6660
      %v6816 = vsub.f32 %v6218, %v6665
      %v6817 = vsub.f32 %v6220, %v6665
      %v6818 = vsub.f32 %v6224, %v6670
      %v6819 = vsub.f32 %v6226, %v6670
      %v6820 = vsub.f32 %v6230, %v6675
      %v6821 = vsub.f32 %v6232, %v6675
      %v6822 = vsub.f32 %v6236, %v6680
      %v6823 = vsub.f32 %v6238, %v6680
      %v6824 = vsub.f32 %v6242, %v6685
      %v6825 = vsub.f32 %v6244, %v6685
      %v6826 = vsub.f32 %v6248, %v6690
      %v6827 = vsub.f32 %v6250, %v6690
      %v6828 = vsub.f32 %v6254, %v6695
      %v6829 = vsub.f32 %v6256, %v6695
      %v6830 = vsub.f32 %v6260, %v6700
      %v6831 = vsub.f32 %v6262, %v6700
      %v6832 = vsub.f32 %v6266, %v6705
      %v6833 = vsub.f32 %v6268, %v6705
      %v6834 = vsub.f32 %v6272, %v6710
      %v6835 = vsub.f32 %v6274, %v6710
      %v6836 = vsub.f32 %v6278, %v6715
      %v6837 = vsub.f32 %v6280, %v6715
      %v6838 = vsub.f32 %v6284, %v6720
      %v6839 = vsub.f32 %v6286, %v6720
      %v6840 = vsub.f32 %v6290, %v6725
      %v6841 = vsub.f32 %v6292, %v6725
      %v6842 = vsub.f32 %v6296, %v6730
      %v6843 = vsub.f32 %v6298, %v6730
      %v6844 = vsub.f32 %v6302, %v6735
      %v6845 = vsub.f32 %v6304, %v6735
      %v6846 = vsub.f32 %v6308, %v6740
      %v6847 = vsub.f32 %v6310, %v6740
      %v6848 = vsub.f32 %v6314, %v6745
      %v6849 = vsub.f32 %v6316, %v6745
      %v6850 = vsub.f32 %v6320, %v6750
      %v6851 = vsub.f32 %v6322, %v6750
      %v6852 = vsub.f32 %v6326, %v6755
      %v6853 = vsub.f32 %v6328, %v6755
      %v6854 = vsub.f32 %v6332, %v6760
      %v6855 = vsub.f32 %v6334, %v6760
      %v6856 = vsub.f32 %v6338, %v6765
      %v6857 = vsub.f32 %v6340, %v6765
      %v6858 = vsub.f32 %v6344, %v6770
      %v6859 = vsub.f32 %v6346, %v6770
      %v6860 = vsub.f32 %v6350, %v6775
      %v6861 = vsub.f32 %v6352, %v6775
      %v6862 = vsub.f32 %v6356, %v6780
      %v6863 = vsub.f32 %v6358, %v6780
      %v6864 = vsub.f32 %v6362, %v6785
      %v6865 = vsub.f32 %v6364, %v6785
      %v6866 = vsub.f32 %v6368, %v6790
      %v6867 = vsub.f32 %v6370, %v6790
      %v6868 = vsub.f32 %v6374, %v6795
      %v6869 = vsub.f32 %v6376, %v6795
      %v6870 = vsub.f32 %v6380, %v6800
      %v6871 = vsub.f32 %v6382, %v6800
      %v6872 = vsub.f32 %v6386, %v6805
      %v6873 = vsub.f32 %v6388, %v6805
      %v6874 = vsub.f32 %v6392, %v6810
      %v6875 = vsub.f32 %v6394, %v6810
      %v6876 = vmul.f32 %v6812, 1.442695
      %v6877 = vpow.pop %v6876
      %v6878 = vmul.f32 %v6813, 1.442695
      %v6879 = vpow.pop %v6878
      %v6880 = vmul.f32 %v6814, 1.442695
      %v6881 = vpow.pop %v6880
      %v6882 = vmul.f32 %v6815, 1.442695
      %v6883 = vpow.pop %v6882
      %v6884 = vmul.f32 %v6816, 1.442695
      %v6885 = vpow.pop %v6884
      %v6886 = vmul.f32 %v6817, 1.442695
      %v6887 = vpow.pop %v6886
      %v6888 = vmul.f32 %v6818, 1.442695
      %v6889 = vpow.pop %v6888
      %v6890 = vmul.f32 %v6819, 1.442695
      %v6891 = vpow.pop %v6890
      %v6892 = vmul.f32 %v6820, 1.442695
      %v6893 = vpow.pop %v6892
      %v6894 = vmul.f32 %v6821, 1.442695
      %v6895 = vpow.pop %v6894
      %v6896 = vmul.f32 %v6822, 1.442695
      %v6897 = vpow.pop %v6896
      %v6898 = vmul.f32 %v6823, 1.442695
      %v6899 = vpow.pop %v6898
      %v6900 = vmul.f32 %v6824, 1.442695
      %v6901 = vpow.pop %v6900
      %v6902 = vmul.f32 %v6825, 1.442695
      %v6903 = vpow.pop %v6902
      %v6904 = vmul.f32 %v6826, 1.442695
      %v6905 = vpow.pop %v6904
      %v6906 = vmul.f32 %v6827, 1.442695
      %v6907 = vpow.pop %v6906
      %v6908 = vmul.f32 %v6828, 1.442695
      %v6909 = vpow.pop %v6908
      %v6910 = vmul.f32 %v6829, 1.442695
      %v6911 = vpow.pop %v6910
      %v6912 = vmul.f32 %v6830, 1.442695
      %v6913 = vpow.pop %v6912
      %v6914 = vmul.f32 %v6831, 1.442695
      %v6915 = vpow.pop %v6914
      %v6916 = vmul.f32 %v6832, 1.442695
      %v6917 = vpow.pop %v6916
      %v6918 = vmul.f32 %v6833, 1.442695
      %v6919 = vpow.pop %v6918
      %v6920 = vmul.f32 %v6834, 1.442695
      %v6921 = vpow.pop %v6920
      %v6922 = vmul.f32 %v6835, 1.442695
      %v6923 = vpow.pop %v6922
      %v6924 = vmul.f32 %v6836, 1.442695
      %v6925 = vpow.pop %v6924
      %v6926 = vmul.f32 %v6837, 1.442695
      %v6927 = vpow.pop %v6926
      %v6928 = vmul.f32 %v6838, 1.442695
      %v6929 = vpow.pop %v6928
      %v6930 = vmul.f32 %v6839, 1.442695
      %v6931 = vpow.pop %v6930
      %v6932 = vmul.f32 %v6840, 1.442695
      %v6933 = vpow.pop %v6932
      %v6934 = vmul.f32 %v6841, 1.442695
      %v6935 = vpow.pop %v6934
      %v6936 = vmul.f32 %v6842, 1.442695
      %v6937 = vpow.pop %v6936
      %v6938 = vmul.f32 %v6843, 1.442695
      %v6939 = vpow.pop %v6938
      %v6940 = vmul.f32 %v6844, 1.442695
      %v6941 = vpow.pop %v6940
      %v6942 = vmul.f32 %v6845, 1.442695
      %v6943 = vpow.pop %v6942
      %v6944 = vmul.f32 %v6846, 1.442695
      %v6945 = vpow.pop %v6944
      %v6946 = vmul.f32 %v6847, 1.442695
      %v6947 = vpow.pop %v6946
      %v6948 = vmul.f32 %v6848, 1.442695
      %v6949 = vpow.pop %v6948
      %v6950 = vmul.f32 %v6849, 1.442695
      %v6951 = vpow.pop %v6950
      %v6952 = vmul.f32 %v6850, 1.442695
      %v6953 = vpow.pop %v6952
      %v6954 = vmul.f32 %v6851, 1.442695
      %v6955 = vpow.pop %v6954
      %v6956 = vmul.f32 %v6852, 1.442695
      %v6957 = vpow.pop %v6956
      %v6958 = vmul.f32 %v6853, 1.442695
      %v6959 = vpow.pop %v6958
      %v6960 = vmul.f32 %v6854, 1.442695
      %v6961 = vpow.pop %v6960
      %v6962 = vmul.f32 %v6855, 1.442695
      %v6963 = vpow.pop %v6962
      %v6964 = vmul.f32 %v6856, 1.442695
      %v6965 = vpow.pop %v6964
      %v6966 = vmul.f32 %v6857, 1.442695
      %v6967 = vpow.pop %v6966
      %v6968 = vmul.f32 %v6858, 1.442695
      %v6969 = vpow.pop %v6968
      %v6970 = vmul.f32 %v6859, 1.442695
      %v6971 = vpow.pop %v6970
      %v6972 = vmul.f32 %v6860, 1.442695
      %v6973 = vpow.pop %v6972
      %v6974 = vmul.f32 %v6861, 1.442695
      %v6975 = vpow.pop %v6974
      %v6976 = vmul.f32 %v6862, 1.442695
      %v6977 = vpow.pop %v6976
      %v6978 = vmul.f32 %v6863, 1.442695
      %v6979 = vpow.pop %v6978
      %v6980 = vmul.f32 %v6864, 1.442695
      %v6981 = vpow.pop %v6980
      %v6982 = vmul.f32 %v6865, 1.442695
      %v6983 = vpow.pop %v6982
      %v6984 = vmul.f32 %v6866, 1.442695
      %v6985 = vpow.pop %v6984
      %v6986 = vmul.f32 %v6867, 1.442695
      %v6987 = vpow.pop %v6986
      %v6988 = vmul.f32 %v6868, 1.442695
      %v6989 = vpow.pop %v6988
      %v6990 = vmul.f32 %v6869, 1.442695
      %v6991 = vpow.pop %v6990
      %v6992 = vmul.f32 %v6870, 1.442695
      %v6993 = vpow.pop %v6992
      %v6994 = vmul.f32 %v6871, 1.442695
      %v6995 = vpow.pop %v6994
      %v6996 = vmul.f32 %v6872, 1.442695
      %v6997 = vpow.pop %v6996
      %v6998 = vmul.f32 %v6873, 1.442695
      %v6999 = vpow.pop %v6998
      %v7000 = vmul.f32 %v6874, 1.442695
      %v7001 = vpow.pop %v7000
      %v7002 = vmul.f32 %v6875, 1.442695
      %v7003 = vpow.pop %v7002
      %v7004 = vld [vmem:[#allocation3] sm:$0xff]
      %v7005 = vld [vmem:[#allocation3 + $0x8] sm:$0xff]
      %v7006 = vld [vmem:[#allocation3 + $0x10] sm:$0xff]
      %v7007 = vld [vmem:[#allocation3 + $0x18] sm:$0xff]
      %v7008 = vld [vmem:[#allocation3 + $0x20] sm:$0xff]
      %v7009 = vld [vmem:[#allocation3 + $0x28] sm:$0xff]
      %v7010 = vld [vmem:[#allocation3 + $0x30] sm:$0xff]
      %v7011 = vld [vmem:[#allocation3 + $0x38] sm:$0xff]
      %v7012 = vld [vmem:[#allocation3 + $0x40] sm:$0xff]
      %v7013 = vld [vmem:[#allocation3 + $0x48] sm:$0xff]
      %v7014 = vld [vmem:[#allocation3 + $0x50] sm:$0xff]
      %v7015 = vld [vmem:[#allocation3 + $0x58] sm:$0xff]
      %v7016 = vld [vmem:[#allocation3 + $0x60] sm:$0xff]
      %v7017 = vld [vmem:[#allocation3 + $0x68] sm:$0xff]
      %v7018 = vld [vmem:[#allocation3 + $0x70] sm:$0xff]
      %v7019 = vld [vmem:[#allocation3 + $0x78] sm:$0xff]
      %v7020 = vld [vmem:[#allocation3 + $0x80] sm:$0xff]
      %v7021 = vld [vmem:[#allocation3 + $0x88] sm:$0xff]
      %v7022 = vld [vmem:[#allocation3 + $0x90] sm:$0xff]
      %v7023 = vld [vmem:[#allocation3 + $0x98] sm:$0xff]
      %v7024 = vld [vmem:[#allocation3 + $0xa0] sm:$0xff]
      %v7025 = vld [vmem:[#allocation3 + $0xa8] sm:$0xff]
      %v7026 = vld [vmem:[#allocation3 + $0xb0] sm:$0xff]
      %v7027 = vld [vmem:[#allocation3 + $0xb8] sm:$0xff]
      %v7028 = vld [vmem:[#allocation3 + $0xc0] sm:$0xff]
      %v7029 = vld [vmem:[#allocation3 + $0xc8] sm:$0xff]
      %v7030 = vld [vmem:[#allocation3 + $0xd0] sm:$0xff]
      %v7031 = vld [vmem:[#allocation3 + $0xd8] sm:$0xff]
      %v7032 = vld [vmem:[#allocation3 + $0xe0] sm:$0xff]
      %v7033 = vld [vmem:[#allocation3 + $0xe8] sm:$0xff]
      %v7034 = vld [vmem:[#allocation3 + $0xf0] sm:$0xff]
      %v7035 = vld [vmem:[#allocation3 + $0xf8] sm:$0xff]
      %v7036 = vmul.f32 %v6589, %v7004
      %v7037 = vmul.f32 %v6591, %v7005
      %v7038 = vmul.f32 %v6593, %v7006
      %v7039 = vmul.f32 %v6595, %v7007
      %v7040 = vmul.f32 %v6597, %v7008
      %v7041 = vmul.f32 %v6599, %v7009
      %v7042 = vmul.f32 %v6601, %v7010
      %v7043 = vmul.f32 %v6603, %v7011
      %v7044 = vmul.f32 %v6605, %v7012
      %v7045 = vmul.f32 %v6607, %v7013
      %v7046 = vmul.f32 %v6609, %v7014
      %v7047 = vmul.f32 %v6611, %v7015
      %v7048 = vmul.f32 %v6613, %v7016
      %v7049 = vmul.f32 %v6615, %v7017
      %v7050 = vmul.f32 %v6617, %v7018
      %v7051 = vmul.f32 %v6619, %v7019
      %v7052 = vmul.f32 %v6621, %v7020
      %v7053 = vmul.f32 %v6623, %v7021
      %v7054 = vmul.f32 %v6625, %v7022
      %v7055 = vmul.f32 %v6627, %v7023
      %v7056 = vmul.f32 %v6629, %v7024
      %v7057 = vmul.f32 %v6631, %v7025
      %v7058 = vmul.f32 %v6633, %v7026
      %v7059 = vmul.f32 %v6635, %v7027
      %v7060 = vmul.f32 %v6637, %v7028
      %v7061 = vmul.f32 %v6639, %v7029
      %v7062 = vmul.f32 %v6641, %v7030
      %v7063 = vmul.f32 %v6643, %v7031
      %v7064 = vmul.f32 %v6645, %v7032
      %v7065 = vmul.f32 %v6647, %v7033
      %v7066 = vmul.f32 %v6649, %v7034
      %v7067 = vmul.f32 %v6651, %v7035
      %v7068 = vadd.f32 %v6877, %v6879
      %7069 = vadd.xlane.f32.xlu0 %v7068
      %v7070 = vpop.xlane.xlu0 %7069
      %v7071 = vadd.f32 %v6881, %v6883
      %7072 = vadd.xlane.f32.xlu0 %v7071
      %v7073 = vpop.xlane.xlu0 %7072
      %v7074 = vadd.f32 %v6885, %v6887
      %7075 = vadd.xlane.f32.xlu0 %v7074
      %v7076 = vpop.xlane.xlu0 %7075
      %v7077 = vadd.f32 %v6889, %v6891
      %7078 = vadd.xlane.f32.xlu0 %v7077
      %v7079 = vpop.xlane.xlu0 %7078
      %v7080 = vadd.f32 %v6893, %v6895
      %7081 = vadd.xlane.f32.xlu0 %v7080
      %v7082 = vpop.xlane.xlu0 %7081
      %v7083 = vadd.f32 %v6897, %v6899
      %7084 = vadd.xlane.f32.xlu0 %v7083
      %v7085 = vpop.xlane.xlu0 %7084
      %v7086 = vadd.f32 %v6901, %v6903
      %7087 = vadd.xlane.f32.xlu0 %v7086
      %v7088 = vpop.xlane.xlu0 %7087
      %v7089 = vadd.f32 %v6905, %v6907
      %7090 = vadd.xlane.f32.xlu0 %v7089
      %v7091 = vpop.xlane.xlu0 %7090
      %v7092 = vadd.f32 %v6909, %v6911
      %7093 = vadd.xlane.f32.xlu0 %v7092
      %v7094 = vpop.xlane.xlu0 %7093
      %v7095 = vadd.f32 %v6913, %v6915
      %7096 = vadd.xlane.f32.xlu0 %v7095
      %v7097 = vpop.xlane.xlu0 %7096
      %v7098 = vadd.f32 %v6917, %v6919
      %7099 = vadd.xlane.f32.xlu0 %v7098
      %v7100 = vpop.xlane.xlu0 %7099
      %v7101 = vadd.f32 %v6921, %v6923
      %7102 = vadd.xlane.f32.xlu0 %v7101
      %v7103 = vpop.xlane.xlu0 %7102
      %v7104 = vadd.f32 %v6925, %v6927
      %7105 = vadd.xlane.f32.xlu0 %v7104
      %v7106 = vpop.xlane.xlu0 %7105
      %v7107 = vadd.f32 %v6929, %v6931
      %7108 = vadd.xlane.f32.xlu0 %v7107
      %v7109 = vpop.xlane.xlu0 %7108
      %v7110 = vadd.f32 %v6933, %v6935
      %7111 = vadd.xlane.f32.xlu0 %v7110
      %v7112 = vpop.xlane.xlu0 %7111
      %v7113 = vadd.f32 %v6937, %v6939
      %7114 = vadd.xlane.f32.xlu0 %v7113
      %v7115 = vpop.xlane.xlu0 %7114
      %v7116 = vadd.f32 %v6941, %v6943
      %7117 = vadd.xlane.f32.xlu0 %v7116
      %v7118 = vpop.xlane.xlu0 %7117
      %v7119 = vadd.f32 %v6945, %v6947
      %7120 = vadd.xlane.f32.xlu0 %v7119
      %v7121 = vpop.xlane.xlu0 %7120
      %v7122 = vadd.f32 %v6949, %v6951
      %7123 = vadd.xlane.f32.xlu0 %v7122
      %v7124 = vpop.xlane.xlu0 %7123
      %v7125 = vadd.f32 %v6953, %v6955
      %7126 = vadd.xlane.f32.xlu0 %v7125
      %v7127 = vpop.xlane.xlu0 %7126
      %v7128 = vadd.f32 %v6957, %v6959
      %7129 = vadd.xlane.f32.xlu0 %v7128
      %v7130 = vpop.xlane.xlu0 %7129
      %v7131 = vadd.f32 %v6961, %v6963
      %7132 = vadd.xlane.f32.xlu0 %v7131
      %v7133 = vpop.xlane.xlu0 %7132
      %v7134 = vadd.f32 %v6965, %v6967
      %7135 = vadd.xlane.f32.xlu0 %v7134
      %v7136 = vpop.xlane.xlu0 %7135
      %v7137 = vadd.f32 %v6969, %v6971
      %7138 = vadd.xlane.f32.xlu0 %v7137
      %v7139 = vpop.xlane.xlu0 %7138
      %v7140 = vadd.f32 %v6973, %v6975
      %7141 = vadd.xlane.f32.xlu0 %v7140
      %v7142 = vpop.xlane.xlu0 %7141
      %v7143 = vadd.f32 %v6977, %v6979
      %7144 = vadd.xlane.f32.xlu0 %v7143
      %v7145 = vpop.xlane.xlu0 %7144
      %v7146 = vadd.f32 %v6981, %v6983
      %7147 = vadd.xlane.f32.xlu0 %v7146
      %v7148 = vpop.xlane.xlu0 %7147
      %v7149 = vadd.f32 %v6985, %v6987
      %7150 = vadd.xlane.f32.xlu0 %v7149
      %v7151 = vpop.xlane.xlu0 %7150
      %v7152 = vadd.f32 %v6989, %v6991
      %7153 = vadd.xlane.f32.xlu0 %v7152
      %v7154 = vpop.xlane.xlu0 %7153
      %v7155 = vadd.f32 %v6993, %v6995
      %7156 = vadd.xlane.f32.xlu0 %v7155
      %v7157 = vpop.xlane.xlu0 %7156
      %v7158 = vadd.f32 %v6997, %v6999
      %7159 = vadd.xlane.f32.xlu0 %v7158
      %v7160 = vpop.xlane.xlu0 %7159
      %v7161 = vadd.f32 %v7001, %v7003
      %7162 = vadd.xlane.f32.xlu0 %v7161
      %v7163 = vpop.xlane.xlu0 %7162
      %v7164 = vadd.f32 %v7036, %v7070
      %v7165 = vadd.f32 %v7037, %v7073
      %v7166 = vadd.f32 %v7038, %v7076
      %v7167 = vadd.f32 %v7039, %v7079
      %v7168 = vadd.f32 %v7040, %v7082
      %v7169 = vadd.f32 %v7041, %v7085
      %v7170 = vadd.f32 %v7042, %v7088
      %v7171 = vadd.f32 %v7043, %v7091
      %v7172 = vadd.f32 %v7044, %v7094
      %v7173 = vadd.f32 %v7045, %v7097
      %v7174 = vadd.f32 %v7046, %v7100
      %v7175 = vadd.f32 %v7047, %v7103
      %v7176 = vadd.f32 %v7048, %v7106
      %v7177 = vadd.f32 %v7049, %v7109
      %v7178 = vadd.f32 %v7050, %v7112
      %v7179 = vadd.f32 %v7051, %v7115
      %v7180 = vadd.f32 %v7052, %v7118
      %v7181 = vadd.f32 %v7053, %v7121
      %v7182 = vadd.f32 %v7054, %v7124
      %v7183 = vadd.f32 %v7055, %v7127
      %v7184 = vadd.f32 %v7056, %v7130
      %v7185 = vadd.f32 %v7057, %v7133
      %v7186 = vadd.f32 %v7058, %v7136
      %v7187 = vadd.f32 %v7059, %v7139
      %v7188 = vadd.f32 %v7060, %v7142
      %v7189 = vadd.f32 %v7061, %v7145
      %v7190 = vadd.f32 %v7062, %v7148
      %v7191 = vadd.f32 %v7063, %v7151
      %v7192 = vadd.f32 %v7064, %v7154
      %v7193 = vadd.f32 %v7065, %v7157
      %v7194 = vadd.f32 %v7066, %v7160
      %v7195 = vadd.f32 %v7067, %v7163
      %7196 = vst.msk [vmem:[#allocation3] sm:$0xff] %vm5432, %v7164
      %7197 = vst.msk [vmem:[#allocation3 + $0x8] sm:$0xff] %vm5432, %v7165
      %7198 = vst.msk [vmem:[#allocation3 + $0x10] sm:$0xff] %vm5432, %v7166
      %7199 = vst.msk [vmem:[#allocation3 + $0x18] sm:$0xff] %vm5432, %v7167
      %7200 = vst.msk [vmem:[#allocation3 + $0x20] sm:$0xff] %vm5432, %v7168
      %7201 = vst.msk [vmem:[#allocation3 + $0x28] sm:$0xff] %vm5432, %v7169
      %7202 = vst.msk [vmem:[#allocation3 + $0x30] sm:$0xff] %vm5432, %v7170
      %7203 = vst.msk [vmem:[#allocation3 + $0x38] sm:$0xff] %vm5432, %v7171
      %7204 = vst.msk [vmem:[#allocation3 + $0x40] sm:$0xff] %vm5432, %v7172
      %7205 = vst.msk [vmem:[#allocation3 + $0x48] sm:$0xff] %vm5432, %v7173
      %7206 = vst.msk [vmem:[#allocation3 + $0x50] sm:$0xff] %vm5432, %v7174
      %7207 = vst.msk [vmem:[#allocation3 + $0x58] sm:$0xff] %vm5432, %v7175
      %7208 = vst.msk [vmem:[#allocation3 + $0x60] sm:$0xff] %vm5432, %v7176
      %7209 = vst.msk [vmem:[#allocation3 + $0x68] sm:$0xff] %vm5432, %v7177
      %7210 = vst.msk [vmem:[#allocation3 + $0x70] sm:$0xff] %vm5432, %v7178
      %7211 = vst.msk [vmem:[#allocation3 + $0x78] sm:$0xff] %vm5432, %v7179
      %7212 = vst.msk [vmem:[#allocation3 + $0x80] sm:$0xff] %vm5432, %v7180
      %7213 = vst.msk [vmem:[#allocation3 + $0x88] sm:$0xff] %vm5432, %v7181
      %7214 = vst.msk [vmem:[#allocation3 + $0x90] sm:$0xff] %vm5432, %v7182
      %7215 = vst.msk [vmem:[#allocation3 + $0x98] sm:$0xff] %vm5432, %v7183
      %7216 = vst.msk [vmem:[#allocation3 + $0xa0] sm:$0xff] %vm5432, %v7184
      %7217 = vst.msk [vmem:[#allocation3 + $0xa8] sm:$0xff] %vm5432, %v7185
      %7218 = vst.msk [vmem:[#allocation3 + $0xb0] sm:$0xff] %vm5432, %v7186
      %7219 = vst.msk [vmem:[#allocation3 + $0xb8] sm:$0xff] %vm5432, %v7187
      %7220 = vst.msk [vmem:[#allocation3 + $0xc0] sm:$0xff] %vm5432, %v7188
      %7221 = vst.msk [vmem:[#allocation3 + $0xc8] sm:$0xff] %vm5432, %v7189
      %7222 = vst.msk [vmem:[#allocation3 + $0xd0] sm:$0xff] %vm5432, %v7190
      %7223 = vst.msk [vmem:[#allocation3 + $0xd8] sm:$0xff] %vm5432, %v7191
      %7224 = vst.msk [vmem:[#allocation3 + $0xe0] sm:$0xff] %vm5432, %v7192
      %7225 = vst.msk [vmem:[#allocation3 + $0xe8] sm:$0xff] %vm5432, %v7193
      %7226 = vst.msk [vmem:[#allocation3 + $0xf0] sm:$0xff] %vm5432, %v7194
      %7227 = vst.msk [vmem:[#allocation3 + $0xf8] sm:$0xff] %vm5432, %v7195
      %v7228 = vld [vmem:[#allocation4] sm:$0xff]
      %v7229 = vld [vmem:[#allocation4 + $0x8] sm:$0xff]
      %v7230 = vld [vmem:[#allocation4 + $0x10] sm:$0xff]
      %v7231 = vld [vmem:[#allocation4 + $0x18] sm:$0xff]
      %v7232 = vld [vmem:[#allocation4 + $0x20] sm:$0xff]
      %v7233 = vld [vmem:[#allocation4 + $0x28] sm:$0xff]
      %v7234 = vld [vmem:[#allocation4 + $0x30] sm:$0xff]
      %v7235 = vld [vmem:[#allocation4 + $0x38] sm:$0xff]
      %v7236 = vld [vmem:[#allocation4 + $0x40] sm:$0xff]
      %v7237 = vld [vmem:[#allocation4 + $0x48] sm:$0xff]
      %v7238 = vld [vmem:[#allocation4 + $0x50] sm:$0xff]
      %v7239 = vld [vmem:[#allocation4 + $0x58] sm:$0xff]
      %v7240 = vld [vmem:[#allocation4 + $0x60] sm:$0xff]
      %v7241 = vld [vmem:[#allocation4 + $0x68] sm:$0xff]
      %v7242 = vld [vmem:[#allocation4 + $0x70] sm:$0xff]
      %v7243 = vld [vmem:[#allocation4 + $0x78] sm:$0xff]
      %v7244 = vld [vmem:[#allocation4 + $0x80] sm:$0xff]
      %v7245 = vld [vmem:[#allocation4 + $0x88] sm:$0xff]
      %v7246 = vld [vmem:[#allocation4 + $0x90] sm:$0xff]
      %v7247 = vld [vmem:[#allocation4 + $0x98] sm:$0xff]
      %v7248 = vld [vmem:[#allocation4 + $0xa0] sm:$0xff]
      %v7249 = vld [vmem:[#allocation4 + $0xa8] sm:$0xff]
      %v7250 = vld [vmem:[#allocation4 + $0xb0] sm:$0xff]
      %v7251 = vld [vmem:[#allocation4 + $0xb8] sm:$0xff]
      %v7252 = vld [vmem:[#allocation4 + $0xc0] sm:$0xff]
      %v7253 = vld [vmem:[#allocation4 + $0xc8] sm:$0xff]
      %v7254 = vld [vmem:[#allocation4 + $0xd0] sm:$0xff]
      %v7255 = vld [vmem:[#allocation4 + $0xd8] sm:$0xff]
      %v7256 = vld [vmem:[#allocation4 + $0xe0] sm:$0xff]
      %v7257 = vld [vmem:[#allocation4 + $0xe8] sm:$0xff]
      %v7258 = vld [vmem:[#allocation4 + $0xf0] sm:$0xff]
      %v7259 = vld [vmem:[#allocation4 + $0xf8] sm:$0xff]
      %7261 = vset.pattern.permute.xlu0 1
      %7262 = vperm.xlu0 %7261, %v6589
      %v7263 = vpop.permute.xlu0 %7262
      %7266 = vset.pattern.permute.xlu0 1
      %7267 = vperm.xlu0 %7266, %v6591
      %v7268 = vpop.permute.xlu0 %7267
      %7271 = vset.pattern.permute.xlu0 1
      %7272 = vperm.xlu0 %7271, %v6593
      %v7273 = vpop.permute.xlu0 %7272
      %7276 = vset.pattern.permute.xlu0 1
      %7277 = vperm.xlu0 %7276, %v6595
      %v7278 = vpop.permute.xlu0 %7277
      %7281 = vset.pattern.permute.xlu0 1
      %7282 = vperm.xlu0 %7281, %v6597
      %v7283 = vpop.permute.xlu0 %7282
      %7286 = vset.pattern.permute.xlu0 1
      %7287 = vperm.xlu0 %7286, %v6599
      %v7288 = vpop.permute.xlu0 %7287
      %7291 = vset.pattern.permute.xlu0 1
      %7292 = vperm.xlu0 %7291, %v6601
      %v7293 = vpop.permute.xlu0 %7292
      %7296 = vset.pattern.permute.xlu0 1
      %7297 = vperm.xlu0 %7296, %v6603
      %v7298 = vpop.permute.xlu0 %7297
      %7301 = vset.pattern.permute.xlu0 1
      %7302 = vperm.xlu0 %7301, %v6605
      %v7303 = vpop.permute.xlu0 %7302
      %7306 = vset.pattern.permute.xlu0 1
      %7307 = vperm.xlu0 %7306, %v6607
      %v7308 = vpop.permute.xlu0 %7307
      %7311 = vset.pattern.permute.xlu0 1
      %7312 = vperm.xlu0 %7311, %v6609
      %v7313 = vpop.permute.xlu0 %7312
      %7316 = vset.pattern.permute.xlu0 1
      %7317 = vperm.xlu0 %7316, %v6611
      %v7318 = vpop.permute.xlu0 %7317
      %7321 = vset.pattern.permute.xlu0 1
      %7322 = vperm.xlu0 %7321, %v6613
      %v7323 = vpop.permute.xlu0 %7322
      %7326 = vset.pattern.permute.xlu0 1
      %7327 = vperm.xlu0 %7326, %v6615
      %v7328 = vpop.permute.xlu0 %7327
      %7331 = vset.pattern.permute.xlu0 1
      %7332 = vperm.xlu0 %7331, %v6617
      %v7333 = vpop.permute.xlu0 %7332
      %7336 = vset.pattern.permute.xlu0 1
      %7337 = vperm.xlu0 %7336, %v6619
      %v7338 = vpop.permute.xlu0 %7337
      %7341 = vset.pattern.permute.xlu0 1
      %7342 = vperm.xlu0 %7341, %v6621
      %v7343 = vpop.permute.xlu0 %7342
      %7346 = vset.pattern.permute.xlu0 1
      %7347 = vperm.xlu0 %7346, %v6623
      %v7348 = vpop.permute.xlu0 %7347
      %7351 = vset.pattern.permute.xlu0 1
      %7352 = vperm.xlu0 %7351, %v6625
      %v7353 = vpop.permute.xlu0 %7352
      %7356 = vset.pattern.permute.xlu0 1
      %7357 = vperm.xlu0 %7356, %v6627
      %v7358 = vpop.permute.xlu0 %7357
      %7361 = vset.pattern.permute.xlu0 1
      %7362 = vperm.xlu0 %7361, %v6629
      %v7363 = vpop.permute.xlu0 %7362
      %7366 = vset.pattern.permute.xlu0 1
      %7367 = vperm.xlu0 %7366, %v6631
      %v7368 = vpop.permute.xlu0 %7367
      %7371 = vset.pattern.permute.xlu0 1
      %7372 = vperm.xlu0 %7371, %v6633
      %v7373 = vpop.permute.xlu0 %7372
      %7376 = vset.pattern.permute.xlu0 1
      %7377 = vperm.xlu0 %7376, %v6635
      %v7378 = vpop.permute.xlu0 %7377
      %7381 = vset.pattern.permute.xlu0 1
      %7382 = vperm.xlu0 %7381, %v6637
      %v7383 = vpop.permute.xlu0 %7382
      %7386 = vset.pattern.permute.xlu0 1
      %7387 = vperm.xlu0 %7386, %v6639
      %v7388 = vpop.permute.xlu0 %7387
      %7391 = vset.pattern.permute.xlu0 1
      %7392 = vperm.xlu0 %7391, %v6641
      %v7393 = vpop.permute.xlu0 %7392
      %7396 = vset.pattern.permute.xlu0 1
      %7397 = vperm.xlu0 %7396, %v6643
      %v7398 = vpop.permute.xlu0 %7397
      %7401 = vset.pattern.permute.xlu0 1
      %7402 = vperm.xlu0 %7401, %v6645
      %v7403 = vpop.permute.xlu0 %7402
      %7406 = vset.pattern.permute.xlu0 1
      %7407 = vperm.xlu0 %7406, %v6647
      %v7408 = vpop.permute.xlu0 %7407
      %7411 = vset.pattern.permute.xlu0 1
      %7412 = vperm.xlu0 %7411, %v6649
      %v7413 = vpop.permute.xlu0 %7412
      %7416 = vset.pattern.permute.xlu0 1
      %7417 = vperm.xlu0 %7416, %v6651
      %v7418 = vpop.permute.xlu0 %7417
      %v7420 = vmul.f32 %v7263, %v7228
      %v7421 = vmul.f32 %v7268, %v7229
      %v7422 = vmul.f32 %v7273, %v7230
      %v7423 = vmul.f32 %v7278, %v7231
      %v7424 = vmul.f32 %v7283, %v7232
      %v7425 = vmul.f32 %v7288, %v7233
      %v7426 = vmul.f32 %v7293, %v7234
      %v7427 = vmul.f32 %v7298, %v7235
      %v7428 = vmul.f32 %v7303, %v7236
      %v7429 = vmul.f32 %v7308, %v7237
      %v7430 = vmul.f32 %v7313, %v7238
      %v7431 = vmul.f32 %v7318, %v7239
      %v7432 = vmul.f32 %v7323, %v7240
      %v7433 = vmul.f32 %v7328, %v7241
      %v7434 = vmul.f32 %v7333, %v7242
      %v7435 = vmul.f32 %v7338, %v7243
      %v7436 = vmul.f32 %v7343, %v7244
      %v7437 = vmul.f32 %v7348, %v7245
      %v7438 = vmul.f32 %v7353, %v7246
      %v7439 = vmul.f32 %v7358, %v7247
      %v7440 = vmul.f32 %v7363, %v7248
      %v7441 = vmul.f32 %v7368, %v7249
      %v7442 = vmul.f32 %v7373, %v7250
      %v7443 = vmul.f32 %v7378, %v7251
      %v7444 = vmul.f32 %v7383, %v7252
      %v7445 = vmul.f32 %v7388, %v7253
      %v7446 = vmul.f32 %v7393, %v7254
      %v7447 = vmul.f32 %v7398, %v7255
      %v7448 = vmul.f32 %v7403, %v7256
      %v7449 = vmul.f32 %v7408, %v7257
      %v7450 = vmul.f32 %v7413, %v7258
      %v7451 = vmul.f32 %v7418, %v7259
      %7452 = vmatprep.subr.mxu0 0.0
      %7453 = vmatpush1.msra.mxu0 %v3861
      %7454 = vmatprep.subr.mxu0 0.0
      %7455 = vmatpush1.msra.mxu0 %v3859
      %7456 = vmatprep.subr.mxu0 0.0
      %7457 = vmatpush1.msra.mxu0 %v3857
      %7458 = vmatprep.subr.mxu0 0.0
      %7459 = vmatpush1.msra.mxu0 %v3855
      %7460 = vmatprep.subr.mxu0 0.0
      %7461 = vmatpush1.msra.mxu0 %v3853
      %7462 = vmatprep.subr.mxu0 0.0
      %7463 = vmatpush1.msra.mxu0 %v3851
      %7464 = vmatprep.subr.mxu0 0.0
      %7465 = vmatpush1.msra.mxu0 %v3849
      %7466 = vmatprep.subr.mxu0 0.0
      %7467 = vmatpush1.msra.mxu0 %v3847
      %7468 = vmatprep.subr.mxu0 0.0
      %7469 = vmatpush1.msra.mxu0 %v3845
      %7470 = vmatprep.subr.mxu0 0.0
      %7471 = vmatpush1.msra.mxu0 %v3843
      %7472 = vmatprep.subr.mxu0 0.0
      %7473 = vmatpush1.msra.mxu0 %v3841
      %7474 = vmatprep.subr.mxu0 0.0
      %7475 = vmatpush1.msra.mxu0 %v3839
      %7476 = vmatprep.subr.mxu0 0.0
      %7477 = vmatpush1.msra.mxu0 %v3837
      %7478 = vmatprep.subr.mxu0 0.0
      %7479 = vmatpush1.msra.mxu0 %v3835
      %7480 = vmatprep.subr.mxu0 0.0
      %7481 = vmatpush1.msra.mxu0 %v3833
      %7482 = vmatprep.subr.mxu0 0.0
      %7483 = vmatpush1.msra.mxu0 %v3831
      %7484 = vmatprep.subr.mxu0 0.0
      %7485 = vmatpush2.msra.mxu0 %v3893
      %7486 = vmatprep.subr.mxu0 0.0
      %7487 = vmatpush2.msra.mxu0 %v3891
      %7488 = vmatprep.subr.mxu0 0.0
      %7489 = vmatpush2.msra.mxu0 %v3889
      %7490 = vmatprep.subr.mxu0 0.0
      %7491 = vmatpush2.msra.mxu0 %v3887
      %7492 = vmatprep.subr.mxu0 0.0
      %7493 = vmatpush2.msra.mxu0 %v3885
      %7494 = vmatprep.subr.mxu0 0.0
      %7495 = vmatpush2.msra.mxu0 %v3883
      %7496 = vmatprep.subr.mxu0 0.0
      %7497 = vmatpush2.msra.mxu0 %v3881
      %7498 = vmatprep.subr.mxu0 0.0
      %7499 = vmatpush2.msra.mxu0 %v3879
      %7500 = vmatprep.subr.mxu0 0.0
      %7501 = vmatpush2.msra.mxu0 %v3877
      %7502 = vmatprep.subr.mxu0 0.0
      %7503 = vmatpush2.msra.mxu0 %v3875
      %7504 = vmatprep.subr.mxu0 0.0
      %7505 = vmatpush2.msra.mxu0 %v3873
      %7506 = vmatprep.subr.mxu0 0.0
      %7507 = vmatpush2.msra.mxu0 %v3871
      %7508 = vmatprep.subr.mxu0 0.0
      %7509 = vmatpush2.msra.mxu0 %v3869
      %7510 = vmatprep.subr.mxu0 0.0
      %7511 = vmatpush2.msra.mxu0 %v3867
      %7512 = vmatprep.subr.mxu0 0.0
      %7513 = vmatpush2.msra.mxu0 %v3865
      %7514 = vmatprep.subr.mxu0 0.0
      %7515 = vmatpush2.msra.mxu0 %v3863
      %7516 = vmatprep.mubr.f32.mxu0 %v6879
      %7517 = vmatmul.mubr.f32.gmra.mxu0 %v6877
      %v7518 = vpop.f32.mrf.mxu0
      %v7519 = vadd.f32 0.0, %v7518
      %v7520 = vpop.f32.mrf.mxu0
      %7521 = vmatprep.mubr.f32.mxu0 %v6883
      %7522 = vmatmul.mubr.f32.gmra.mxu0 %v6881
      %v7523 = vpop.f32.mrf.mxu0
      %v7524 = vadd.f32 0.0, %v7523
      %v7525 = vpop.f32.mrf.mxu0
      %7526 = vmatprep.mubr.f32.mxu0 %v6887
      %7527 = vmatmul.mubr.f32.gmra.mxu0 %v6885
      %v7528 = vpop.f32.mrf.mxu0
      %v7529 = vadd.f32 0.0, %v7528
      %v7530 = vpop.f32.mrf.mxu0
      %7531 = vmatprep.mubr.f32.mxu0 %v6891
      %7532 = vmatmul.mubr.f32.gmra.mxu0 %v6889
      %v7533 = vpop.f32.mrf.mxu0
      %v7534 = vadd.f32 0.0, %v7533
      %v7535 = vpop.f32.mrf.mxu0
      %7536 = vmatprep.mubr.f32.mxu0 %v6895
      %7537 = vmatmul.mubr.f32.gmra.mxu0 %v6893
      %v7538 = vpop.f32.mrf.mxu0
      %v7539 = vadd.f32 0.0, %v7538
      %v7540 = vpop.f32.mrf.mxu0
      %7541 = vmatprep.mubr.f32.mxu0 %v6899
      %7542 = vmatmul.mubr.f32.gmra.mxu0 %v6897
      %v7543 = vpop.f32.mrf.mxu0
      %v7544 = vadd.f32 0.0, %v7543
      %v7545 = vpop.f32.mrf.mxu0
      %7546 = vmatprep.mubr.f32.mxu0 %v6903
      %7547 = vmatmul.mubr.f32.gmra.mxu0 %v6901
      %v7548 = vpop.f32.mrf.mxu0
      %v7549 = vadd.f32 0.0, %v7548
      %v7550 = vpop.f32.mrf.mxu0
      %7551 = vmatprep.mubr.f32.mxu0 %v6907
      %7552 = vmatmul.mubr.f32.gmra.mxu0 %v6905
      %v7553 = vpop.f32.mrf.mxu0
      %v7554 = vadd.f32 0.0, %v7553
      %v7555 = vpop.f32.mrf.mxu0
      %7556 = vmatprep.mubr.f32.mxu0 %v6911
      %7557 = vmatmul.mubr.f32.gmra.mxu0 %v6909
      %v7558 = vpop.f32.mrf.mxu0
      %v7559 = vadd.f32 0.0, %v7558
      %v7560 = vpop.f32.mrf.mxu0
      %7561 = vmatprep.mubr.f32.mxu0 %v6915
      %7562 = vmatmul.mubr.f32.gmra.mxu0 %v6913
      %v7563 = vpop.f32.mrf.mxu0
      %v7564 = vadd.f32 0.0, %v7563
      %v7565 = vpop.f32.mrf.mxu0
      %7566 = vmatprep.mubr.f32.mxu0 %v6919
      %7567 = vmatmul.mubr.f32.gmra.mxu0 %v6917
      %v7568 = vpop.f32.mrf.mxu0
      %v7569 = vadd.f32 0.0, %v7568
      %v7570 = vpop.f32.mrf.mxu0
      %7571 = vmatprep.mubr.f32.mxu0 %v6923
      %7572 = vmatmul.mubr.f32.gmra.mxu0 %v6921
      %v7573 = vpop.f32.mrf.mxu0
      %v7574 = vadd.f32 0.0, %v7573
      %v7575 = vpop.f32.mrf.mxu0
      %7576 = vmatprep.mubr.f32.mxu0 %v6927
      %7577 = vmatmul.mubr.f32.gmra.mxu0 %v6925
      %v7578 = vpop.f32.mrf.mxu0
      %v7579 = vadd.f32 0.0, %v7578
      %v7580 = vpop.f32.mrf.mxu0
      %7581 = vmatprep.mubr.f32.mxu0 %v6931
      %7582 = vmatmul.mubr.f32.gmra.mxu0 %v6929
      %v7583 = vpop.f32.mrf.mxu0
      %v7584 = vadd.f32 0.0, %v7583
      %v7585 = vpop.f32.mrf.mxu0
      %7586 = vmatprep.mubr.f32.mxu0 %v6935
      %7587 = vmatmul.mubr.f32.gmra.mxu0 %v6933
      %v7588 = vpop.f32.mrf.mxu0
      %v7589 = vadd.f32 0.0, %v7588
      %v7590 = vpop.f32.mrf.mxu0
      %7591 = vmatprep.mubr.f32.mxu0 %v6939
      %7592 = vmatmul.mubr.f32.gmra.mxu0 %v6937
      %v7593 = vpop.f32.mrf.mxu0
      %v7594 = vadd.f32 0.0, %v7593
      %v7595 = vpop.f32.mrf.mxu0
      %7596 = vmatprep.mubr.f32.mxu0 %v6943
      %7597 = vmatmul.mubr.f32.gmra.mxu0 %v6941
      %v7598 = vpop.f32.mrf.mxu0
      %v7599 = vadd.f32 0.0, %v7598
      %v7600 = vpop.f32.mrf.mxu0
      %7601 = vmatprep.mubr.f32.mxu0 %v6947
      %7602 = vmatmul.mubr.f32.gmra.mxu0 %v6945
      %v7603 = vpop.f32.mrf.mxu0
      %v7604 = vadd.f32 0.0, %v7603
      %v7605 = vpop.f32.mrf.mxu0
      %7606 = vmatprep.mubr.f32.mxu0 %v6951
      %7607 = vmatmul.mubr.f32.gmra.mxu0 %v6949
      %v7608 = vpop.f32.mrf.mxu0
      %v7609 = vadd.f32 0.0, %v7608
      %v7610 = vpop.f32.mrf.mxu0
      %7611 = vmatprep.mubr.f32.mxu0 %v6955
      %7612 = vmatmul.mubr.f32.gmra.mxu0 %v6953
      %v7613 = vpop.f32.mrf.mxu0
      %v7614 = vadd.f32 0.0, %v7613
      %v7615 = vpop.f32.mrf.mxu0
      %7616 = vmatprep.mubr.f32.mxu0 %v6959
      %7617 = vmatmul.mubr.f32.gmra.mxu0 %v6957
      %v7618 = vpop.f32.mrf.mxu0
      %v7619 = vadd.f32 0.0, %v7618
      %v7620 = vpop.f32.mrf.mxu0
      %7621 = vmatprep.mubr.f32.mxu0 %v6963
      %7622 = vmatmul.mubr.f32.gmra.mxu0 %v6961
      %v7623 = vpop.f32.mrf.mxu0
      %v7624 = vadd.f32 0.0, %v7623
      %v7625 = vpop.f32.mrf.mxu0
      %7626 = vmatprep.mubr.f32.mxu0 %v6967
      %7627 = vmatmul.mubr.f32.gmra.mxu0 %v6965
      %v7628 = vpop.f32.mrf.mxu0
      %v7629 = vadd.f32 0.0, %v7628
      %v7630 = vpop.f32.mrf.mxu0
      %7631 = vmatprep.mubr.f32.mxu0 %v6971
      %7632 = vmatmul.mubr.f32.gmra.mxu0 %v6969
      %v7633 = vpop.f32.mrf.mxu0
      %v7634 = vadd.f32 0.0, %v7633
      %v7635 = vpop.f32.mrf.mxu0
      %7636 = vmatprep.mubr.f32.mxu0 %v6975
      %7637 = vmatmul.mubr.f32.gmra.mxu0 %v6973
      %v7638 = vpop.f32.mrf.mxu0
      %v7639 = vadd.f32 0.0, %v7638
      %v7640 = vpop.f32.mrf.mxu0
      %7641 = vmatprep.mubr.f32.mxu0 %v6979
      %7642 = vmatmul.mubr.f32.gmra.mxu0 %v6977
      %v7643 = vpop.f32.mrf.mxu0
      %v7644 = vadd.f32 0.0, %v7643
      %v7645 = vpop.f32.mrf.mxu0
      %7646 = vmatprep.mubr.f32.mxu0 %v6983
      %7647 = vmatmul.mubr.f32.gmra.mxu0 %v6981
      %v7648 = vpop.f32.mrf.mxu0
      %v7649 = vadd.f32 0.0, %v7648
      %v7650 = vpop.f32.mrf.mxu0
      %7651 = vmatprep.mubr.f32.mxu0 %v6987
      %7652 = vmatmul.mubr.f32.gmra.mxu0 %v6985
      %v7653 = vpop.f32.mrf.mxu0
      %v7654 = vadd.f32 0.0, %v7653
      %v7655 = vpop.f32.mrf.mxu0
      %7656 = vmatprep.mubr.f32.mxu0 %v6991
      %7657 = vmatmul.mubr.f32.gmra.mxu0 %v6989
      %v7658 = vpop.f32.mrf.mxu0
      %v7659 = vadd.f32 0.0, %v7658
      %v7660 = vpop.f32.mrf.mxu0
      %7661 = vmatprep.mubr.f32.mxu0 %v6995
      %7662 = vmatmul.mubr.f32.gmra.mxu0 %v6993
      %v7663 = vpop.f32.mrf.mxu0
      %v7664 = vadd.f32 0.0, %v7663
      %v7665 = vpop.f32.mrf.mxu0
      %7666 = vmatprep.mubr.f32.mxu0 %v6999
      %7667 = vmatmul.mubr.f32.gmra.mxu0 %v6997
      %v7668 = vpop.f32.mrf.mxu0
      %v7669 = vadd.f32 0.0, %v7668
      %v7670 = vpop.f32.mrf.mxu0
      %7671 = vmatprep.mubr.f32.mxu0 %v7003
      %7672 = vmatmul.mubr.f32.gmra.mxu0 %v7001
      %v7673 = vpop.f32.mrf.mxu0
      %v7674 = vadd.f32 0.0, %v7673
      %v7675 = vpop.f32.mrf.mxu0
      %7676 = vdwg.mxu0
      %7709 = vrot.lane.b32.xlu0 %v7519, 4
      %v7710 = vpop.permute.xlu0 %7709
      %7711 = vrot.lane.b32.xlu0 %v7524, 4
      %v7712 = vpop.permute.xlu0 %7711
      %7713 = vrot.lane.b32.xlu0 %v7529, 4
      %v7714 = vpop.permute.xlu0 %7713
      %7715 = vrot.lane.b32.xlu0 %v7534, 4
      %v7716 = vpop.permute.xlu0 %7715
      %7717 = vrot.lane.b32.xlu0 %v7539, 4
      %v7718 = vpop.permute.xlu0 %7717
      %7719 = vrot.lane.b32.xlu0 %v7544, 4
      %v7720 = vpop.permute.xlu0 %7719
      %7721 = vrot.lane.b32.xlu0 %v7549, 4
      %v7722 = vpop.permute.xlu0 %7721
      %7723 = vrot.lane.b32.xlu0 %v7554, 4
      %v7724 = vpop.permute.xlu0 %7723
      %7725 = vrot.lane.b32.xlu0 %v7559, 4
      %v7726 = vpop.permute.xlu0 %7725
      %7727 = vrot.lane.b32.xlu0 %v7564, 4
      %v7728 = vpop.permute.xlu0 %7727
      %7729 = vrot.lane.b32.xlu0 %v7569, 4
      %v7730 = vpop.permute.xlu0 %7729
      %7731 = vrot.lane.b32.xlu0 %v7574, 4
      %v7732 = vpop.permute.xlu0 %7731
      %7733 = vrot.lane.b32.xlu0 %v7579, 4
      %v7734 = vpop.permute.xlu0 %7733
      %7735 = vrot.lane.b32.xlu0 %v7584, 4
      %v7736 = vpop.permute.xlu0 %7735
      %7737 = vrot.lane.b32.xlu0 %v7589, 4
      %v7738 = vpop.permute.xlu0 %7737
      %7739 = vrot.lane.b32.xlu0 %v7594, 4
      %v7740 = vpop.permute.xlu0 %7739
      %7741 = vrot.lane.b32.xlu0 %v7599, 4
      %v7742 = vpop.permute.xlu0 %7741
      %7743 = vrot.lane.b32.xlu0 %v7604, 4
      %v7744 = vpop.permute.xlu0 %7743
      %7745 = vrot.lane.b32.xlu0 %v7609, 4
      %v7746 = vpop.permute.xlu0 %7745
      %7747 = vrot.lane.b32.xlu0 %v7614, 4
      %v7748 = vpop.permute.xlu0 %7747
      %7749 = vrot.lane.b32.xlu0 %v7619, 4
      %v7750 = vpop.permute.xlu0 %7749
      %7751 = vrot.lane.b32.xlu0 %v7624, 4
      %v7752 = vpop.permute.xlu0 %7751
      %7753 = vrot.lane.b32.xlu0 %v7629, 4
      %v7754 = vpop.permute.xlu0 %7753
      %7755 = vrot.lane.b32.xlu0 %v7634, 4
      %v7756 = vpop.permute.xlu0 %7755
      %7757 = vrot.lane.b32.xlu0 %v7639, 4
      %v7758 = vpop.permute.xlu0 %7757
      %7759 = vrot.lane.b32.xlu0 %v7644, 4
      %v7760 = vpop.permute.xlu0 %7759
      %7761 = vrot.lane.b32.xlu0 %v7649, 4
      %v7762 = vpop.permute.xlu0 %7761
      %7763 = vrot.lane.b32.xlu0 %v7654, 4
      %v7764 = vpop.permute.xlu0 %7763
      %7765 = vrot.lane.b32.xlu0 %v7659, 4
      %v7766 = vpop.permute.xlu0 %7765
      %7767 = vrot.lane.b32.xlu0 %v7664, 4
      %v7768 = vpop.permute.xlu0 %7767
      %7769 = vrot.lane.b32.xlu0 %v7669, 4
      %v7770 = vpop.permute.xlu0 %7769
      %7771 = vrot.lane.b32.xlu0 %v7674, 4
      %v7772 = vpop.permute.xlu0 %7771
      %v7805 = vadd.f32 %v7420, %v7710
      %v7806 = vadd.f32 %v7421, %v7712
      %v7807 = vadd.f32 %v7422, %v7714
      %v7808 = vadd.f32 %v7423, %v7716
      %v7809 = vadd.f32 %v7424, %v7718
      %v7810 = vadd.f32 %v7425, %v7720
      %v7811 = vadd.f32 %v7426, %v7722
      %v7812 = vadd.f32 %v7427, %v7724
      %v7813 = vadd.f32 %v7428, %v7726
      %v7814 = vadd.f32 %v7429, %v7728
      %v7815 = vadd.f32 %v7430, %v7730
      %v7816 = vadd.f32 %v7431, %v7732
      %v7817 = vadd.f32 %v7432, %v7734
      %v7818 = vadd.f32 %v7433, %v7736
      %v7819 = vadd.f32 %v7434, %v7738
      %v7820 = vadd.f32 %v7435, %v7740
      %v7821 = vadd.f32 %v7436, %v7742
      %v7822 = vadd.f32 %v7437, %v7744
      %v7823 = vadd.f32 %v7438, %v7746
      %v7824 = vadd.f32 %v7439, %v7748
      %v7825 = vadd.f32 %v7440, %v7750
      %v7826 = vadd.f32 %v7441, %v7752
      %v7827 = vadd.f32 %v7442, %v7754
      %v7828 = vadd.f32 %v7443, %v7756
      %v7829 = vadd.f32 %v7444, %v7758
      %v7830 = vadd.f32 %v7445, %v7760
      %v7831 = vadd.f32 %v7446, %v7762
      %v7832 = vadd.f32 %v7447, %v7764
      %v7833 = vadd.f32 %v7448, %v7766
      %v7834 = vadd.f32 %v7449, %v7768
      %v7835 = vadd.f32 %v7450, %v7770
      %v7836 = vadd.f32 %v7451, %v7772
      %7837 = vst.msk [vmem:[#allocation4] sm:$0xff] %vm6074, %v7805
      %7838 = vst.msk [vmem:[#allocation4 + $0x8] sm:$0xff] %vm6074, %v7806
      %7839 = vst.msk [vmem:[#allocation4 + $0x10] sm:$0xff] %vm6074, %v7807
      %7840 = vst.msk [vmem:[#allocation4 + $0x18] sm:$0xff] %vm6074, %v7808
      %7841 = vst.msk [vmem:[#allocation4 + $0x20] sm:$0xff] %vm6074, %v7809
      %7842 = vst.msk [vmem:[#allocation4 + $0x28] sm:$0xff] %vm6074, %v7810
      %7843 = vst.msk [vmem:[#allocation4 + $0x30] sm:$0xff] %vm6074, %v7811
      %7844 = vst.msk [vmem:[#allocation4 + $0x38] sm:$0xff] %vm6074, %v7812
      %7845 = vst.msk [vmem:[#allocation4 + $0x40] sm:$0xff] %vm6074, %v7813
      %7846 = vst.msk [vmem:[#allocation4 + $0x48] sm:$0xff] %vm6074, %v7814
      %7847 = vst.msk [vmem:[#allocation4 + $0x50] sm:$0xff] %vm6074, %v7815
      %7848 = vst.msk [vmem:[#allocation4 + $0x58] sm:$0xff] %vm6074, %v7816
      %7849 = vst.msk [vmem:[#allocation4 + $0x60] sm:$0xff] %vm6074, %v7817
      %7850 = vst.msk [vmem:[#allocation4 + $0x68] sm:$0xff] %vm6074, %v7818
      %7851 = vst.msk [vmem:[#allocation4 + $0x70] sm:$0xff] %vm6074, %v7819
      %7852 = vst.msk [vmem:[#allocation4 + $0x78] sm:$0xff] %vm6074, %v7820
      %7853 = vst.msk [vmem:[#allocation4 + $0x80] sm:$0xff] %vm6074, %v7821
      %7854 = vst.msk [vmem:[#allocation4 + $0x88] sm:$0xff] %vm6074, %v7822
      %7855 = vst.msk [vmem:[#allocation4 + $0x90] sm:$0xff] %vm6074, %v7823
      %7856 = vst.msk [vmem:[#allocation4 + $0x98] sm:$0xff] %vm6074, %v7824
      %7857 = vst.msk [vmem:[#allocation4 + $0xa0] sm:$0xff] %vm6074, %v7825
      %7858 = vst.msk [vmem:[#allocation4 + $0xa8] sm:$0xff] %vm6074, %v7826
      %7859 = vst.msk [vmem:[#allocation4 + $0xb0] sm:$0xff] %vm6074, %v7827
      %7860 = vst.msk [vmem:[#allocation4 + $0xb8] sm:$0xff] %vm6074, %v7828
      %7861 = vst.msk [vmem:[#allocation4 + $0xc0] sm:$0xff] %vm6074, %v7829
      %7862 = vst.msk [vmem:[#allocation4 + $0xc8] sm:$0xff] %vm6074, %v7830
      %7863 = vst.msk [vmem:[#allocation4 + $0xd0] sm:$0xff] %vm6074, %v7831
      %7864 = vst.msk [vmem:[#allocation4 + $0xd8] sm:$0xff] %vm6074, %v7832
      %7865 = vst.msk [vmem:[#allocation4 + $0xe0] sm:$0xff] %vm6074, %v7833
      %7866 = vst.msk [vmem:[#allocation4 + $0xe8] sm:$0xff] %vm6074, %v7834
      %7867 = vst.msk [vmem:[#allocation4 + $0xf0] sm:$0xff] %vm6074, %v7835
      %7868 = vst.msk [vmem:[#allocation4 + $0xf8] sm:$0xff] %vm6074, %v7836
      %7869 = vst.msk [vmem:[#allocation2] sm:$0xff] %vm5432, %v6524
      %7870 = vst.msk [vmem:[#allocation2 + $0x8] sm:$0xff] %vm5432, %v6525
      %7871 = vst.msk [vmem:[#allocation2 + $0x10] sm:$0xff] %vm5432, %v6526
      %7872 = vst.msk [vmem:[#allocation2 + $0x18] sm:$0xff] %vm5432, %v6527
      %7873 = vst.msk [vmem:[#allocation2 + $0x20] sm:$0xff] %vm5432, %v6528
      %7874 = vst.msk [vmem:[#allocation2 + $0x28] sm:$0xff] %vm5432, %v6529
      %7875 = vst.msk [vmem:[#allocation2 + $0x30] sm:$0xff] %vm5432, %v6530
      %7876 = vst.msk [vmem:[#allocation2 + $0x38] sm:$0xff] %vm5432, %v6531
      %7877 = vst.msk [vmem:[#allocation2 + $0x40] sm:$0xff] %vm5432, %v6532
      %7878 = vst.msk [vmem:[#allocation2 + $0x48] sm:$0xff] %vm5432, %v6533
      %7879 = vst.msk [vmem:[#allocation2 + $0x50] sm:$0xff] %vm5432, %v6534
      %7880 = vst.msk [vmem:[#allocation2 + $0x58] sm:$0xff] %vm5432, %v6535
      %7881 = vst.msk [vmem:[#allocation2 + $0x60] sm:$0xff] %vm5432, %v6536
      %7882 = vst.msk [vmem:[#allocation2 + $0x68] sm:$0xff] %vm5432, %v6537
      %7883 = vst.msk [vmem:[#allocation2 + $0x70] sm:$0xff] %vm5432, %v6538
      %7884 = vst.msk [vmem:[#allocation2 + $0x78] sm:$0xff] %vm5432, %v6539
      %7885 = vst.msk [vmem:[#allocation2 + $0x80] sm:$0xff] %vm5432, %v6540
      %7886 = vst.msk [vmem:[#allocation2 + $0x88] sm:$0xff] %vm5432, %v6541
      %7887 = vst.msk [vmem:[#allocation2 + $0x90] sm:$0xff] %vm5432, %v6542
      %7888 = vst.msk [vmem:[#allocation2 + $0x98] sm:$0xff] %vm5432, %v6543
      %7889 = vst.msk [vmem:[#allocation2 + $0xa0] sm:$0xff] %vm5432, %v6544
      %7890 = vst.msk [vmem:[#allocation2 + $0xa8] sm:$0xff] %vm5432, %v6545
      %7891 = vst.msk [vmem:[#allocation2 + $0xb0] sm:$0xff] %vm5432, %v6546
      %7892 = vst.msk [vmem:[#allocation2 + $0xb8] sm:$0xff] %vm5432, %v6547
      %7893 = vst.msk [vmem:[#allocation2 + $0xc0] sm:$0xff] %vm5432, %v6548
      %7894 = vst.msk [vmem:[#allocation2 + $0xc8] sm:$0xff] %vm5432, %v6549
      %7895 = vst.msk [vmem:[#allocation2 + $0xd0] sm:$0xff] %vm5432, %v6550
      %7896 = vst.msk [vmem:[#allocation2 + $0xd8] sm:$0xff] %vm5432, %v6551
      %7897 = vst.msk [vmem:[#allocation2 + $0xe0] sm:$0xff] %vm5432, %v6552
      %7898 = vst.msk [vmem:[#allocation2 + $0xe8] sm:$0xff] %vm5432, %v6553
      %7899 = vst.msk [vmem:[#allocation2 + $0xf0] sm:$0xff] %vm5432, %v6554
      %7900 = vst.msk [vmem:[#allocation2 + $0xf8] sm:$0xff] %vm5432, %v6555
      %p7901 = scmp.eq.s32.totalorder %s20, 3
      // Predicated region
      $region41: #{multi_head_attention_3d.3} parent=35 // pred_check
        %p7902 = pneg %p7901
      $region42: #{multi_head_attention_3d.3} parent=35 // pred_check_branch
        %7904 = sbr.rel (%p7902) target = $region44
      $region43: #{multi_head_attention_3d.3} parent=35 // pred_region
        %v7905 = vld [vmem:[#allocation3] sm:$0xff]
        %v7906 = vld [vmem:[#allocation3 + $0x8] sm:$0xff]
        %v7907 = vld [vmem:[#allocation3 + $0x10] sm:$0xff]
        %v7908 = vld [vmem:[#allocation3 + $0x18] sm:$0xff]
        %v7909 = vld [vmem:[#allocation3 + $0x20] sm:$0xff]
        %v7910 = vld [vmem:[#allocation3 + $0x28] sm:$0xff]
        %v7911 = vld [vmem:[#allocation3 + $0x30] sm:$0xff]
        %v7912 = vld [vmem:[#allocation3 + $0x38] sm:$0xff]
        %v7913 = vld [vmem:[#allocation3 + $0x40] sm:$0xff]
        %v7914 = vld [vmem:[#allocation3 + $0x48] sm:$0xff]
        %v7915 = vld [vmem:[#allocation3 + $0x50] sm:$0xff]
        %v7916 = vld [vmem:[#allocation3 + $0x58] sm:$0xff]
        %v7917 = vld [vmem:[#allocation3 + $0x60] sm:$0xff]
        %v7918 = vld [vmem:[#allocation3 + $0x68] sm:$0xff]
        %v7919 = vld [vmem:[#allocation3 + $0x70] sm:$0xff]
        %v7920 = vld [vmem:[#allocation3 + $0x78] sm:$0xff]
        %v7921 = vld [vmem:[#allocation3 + $0x80] sm:$0xff]
        %v7922 = vld [vmem:[#allocation3 + $0x88] sm:$0xff]
        %v7923 = vld [vmem:[#allocation3 + $0x90] sm:$0xff]
        %v7924 = vld [vmem:[#allocation3 + $0x98] sm:$0xff]
        %v7925 = vld [vmem:[#allocation3 + $0xa0] sm:$0xff]
        %v7926 = vld [vmem:[#allocation3 + $0xa8] sm:$0xff]
        %v7927 = vld [vmem:[#allocation3 + $0xb0] sm:$0xff]
        %v7928 = vld [vmem:[#allocation3 + $0xb8] sm:$0xff]
        %v7929 = vld [vmem:[#allocation3 + $0xc0] sm:$0xff]
        %v7930 = vld [vmem:[#allocation3 + $0xc8] sm:$0xff]
        %v7931 = vld [vmem:[#allocation3 + $0xd0] sm:$0xff]
        %v7932 = vld [vmem:[#allocation3 + $0xd8] sm:$0xff]
        %v7933 = vld [vmem:[#allocation3 + $0xe0] sm:$0xff]
        %v7934 = vld [vmem:[#allocation3 + $0xe8] sm:$0xff]
        %v7935 = vld [vmem:[#allocation3 + $0xf0] sm:$0xff]
        %v7936 = vld [vmem:[#allocation3 + $0xf8] sm:$0xff]
        %v7937 = vrcp.pop %v7905
        %v7938 = vrcp.pop %v7906
        %v7939 = vrcp.pop %v7907
        %v7940 = vrcp.pop %v7908
        %v7941 = vrcp.pop %v7909
        %v7942 = vrcp.pop %v7910
        %v7943 = vrcp.pop %v7911
        %v7944 = vrcp.pop %v7912
        %v7945 = vrcp.pop %v7913
        %v7946 = vrcp.pop %v7914
        %v7947 = vrcp.pop %v7915
        %v7948 = vrcp.pop %v7916
        %v7949 = vrcp.pop %v7917
        %v7950 = vrcp.pop %v7918
        %v7951 = vrcp.pop %v7919
        %v7952 = vrcp.pop %v7920
        %v7953 = vrcp.pop %v7921
        %v7954 = vrcp.pop %v7922
        %v7955 = vrcp.pop %v7923
        %v7956 = vrcp.pop %v7924
        %v7957 = vrcp.pop %v7925
        %v7958 = vrcp.pop %v7926
        %v7959 = vrcp.pop %v7927
        %v7960 = vrcp.pop %v7928
        %v7961 = vrcp.pop %v7929
        %v7962 = vrcp.pop %v7930
        %v7963 = vrcp.pop %v7931
        %v7964 = vrcp.pop %v7932
        %v7965 = vrcp.pop %v7933
        %v7966 = vrcp.pop %v7934
        %v7967 = vrcp.pop %v7935
        %v7968 = vrcp.pop %v7936
        %v7969 = vld [vmem:[#allocation4] sm:$0xff]
        %v7970 = vld [vmem:[#allocation4 + $0x8] sm:$0xff]
        %v7971 = vld [vmem:[#allocation4 + $0x10] sm:$0xff]
        %v7972 = vld [vmem:[#allocation4 + $0x18] sm:$0xff]
        %v7973 = vld [vmem:[#allocation4 + $0x20] sm:$0xff]
        %v7974 = vld [vmem:[#allocation4 + $0x28] sm:$0xff]
        %v7975 = vld [vmem:[#allocation4 + $0x30] sm:$0xff]
        %v7976 = vld [vmem:[#allocation4 + $0x38] sm:$0xff]
        %v7977 = vld [vmem:[#allocation4 + $0x40] sm:$0xff]
        %v7978 = vld [vmem:[#allocation4 + $0x48] sm:$0xff]
        %v7979 = vld [vmem:[#allocation4 + $0x50] sm:$0xff]
        %v7980 = vld [vmem:[#allocation4 + $0x58] sm:$0xff]
        %v7981 = vld [vmem:[#allocation4 + $0x60] sm:$0xff]
        %v7982 = vld [vmem:[#allocation4 + $0x68] sm:$0xff]
        %v7983 = vld [vmem:[#allocation4 + $0x70] sm:$0xff]
        %v7984 = vld [vmem:[#allocation4 + $0x78] sm:$0xff]
        %v7985 = vld [vmem:[#allocation4 + $0x80] sm:$0xff]
        %v7986 = vld [vmem:[#allocation4 + $0x88] sm:$0xff]
        %v7987 = vld [vmem:[#allocation4 + $0x90] sm:$0xff]
        %v7988 = vld [vmem:[#allocation4 + $0x98] sm:$0xff]
        %v7989 = vld [vmem:[#allocation4 + $0xa0] sm:$0xff]
        %v7990 = vld [vmem:[#allocation4 + $0xa8] sm:$0xff]
        %v7991 = vld [vmem:[#allocation4 + $0xb0] sm:$0xff]
        %v7992 = vld [vmem:[#allocation4 + $0xb8] sm:$0xff]
        %v7993 = vld [vmem:[#allocation4 + $0xc0] sm:$0xff]
        %v7994 = vld [vmem:[#allocation4 + $0xc8] sm:$0xff]
        %v7995 = vld [vmem:[#allocation4 + $0xd0] sm:$0xff]
        %v7996 = vld [vmem:[#allocation4 + $0xd8] sm:$0xff]
        %v7997 = vld [vmem:[#allocation4 + $0xe0] sm:$0xff]
        %v7998 = vld [vmem:[#allocation4 + $0xe8] sm:$0xff]
        %v7999 = vld [vmem:[#allocation4 + $0xf0] sm:$0xff]
        %v8000 = vld [vmem:[#allocation4 + $0xf8] sm:$0xff]
        %8002 = vset.pattern.permute.xlu0 0
        %8003 = vperm.xlu0 %8002, %v7937
        %v8004 = vpop.permute.xlu0 %8003
        %8007 = vset.pattern.permute.xlu0 0
        %8008 = vperm.xlu0 %8007, %v7938
        %v8009 = vpop.permute.xlu0 %8008
        %8012 = vset.pattern.permute.xlu0 0
        %8013 = vperm.xlu0 %8012, %v7939
        %v8014 = vpop.permute.xlu0 %8013
        %8017 = vset.pattern.permute.xlu0 0
        %8018 = vperm.xlu0 %8017, %v7940
        %v8019 = vpop.permute.xlu0 %8018
        %8022 = vset.pattern.permute.xlu0 0
        %8023 = vperm.xlu0 %8022, %v7941
        %v8024 = vpop.permute.xlu0 %8023
        %8027 = vset.pattern.permute.xlu0 0
        %8028 = vperm.xlu0 %8027, %v7942
        %v8029 = vpop.permute.xlu0 %8028
        %8032 = vset.pattern.permute.xlu0 0
        %8033 = vperm.xlu0 %8032, %v7943
        %v8034 = vpop.permute.xlu0 %8033
        %8037 = vset.pattern.permute.xlu0 0
        %8038 = vperm.xlu0 %8037, %v7944
        %v8039 = vpop.permute.xlu0 %8038
        %8042 = vset.pattern.permute.xlu0 0
        %8043 = vperm.xlu0 %8042, %v7945
        %v8044 = vpop.permute.xlu0 %8043
        %8047 = vset.pattern.permute.xlu0 0
        %8048 = vperm.xlu0 %8047, %v7946
        %v8049 = vpop.permute.xlu0 %8048
        %8052 = vset.pattern.permute.xlu0 0
        %8053 = vperm.xlu0 %8052, %v7947
        %v8054 = vpop.permute.xlu0 %8053
        %8057 = vset.pattern.permute.xlu0 0
        %8058 = vperm.xlu0 %8057, %v7948
        %v8059 = vpop.permute.xlu0 %8058
        %8062 = vset.pattern.permute.xlu0 0
        %8063 = vperm.xlu0 %8062, %v7949
        %v8064 = vpop.permute.xlu0 %8063
        %8067 = vset.pattern.permute.xlu0 0
        %8068 = vperm.xlu0 %8067, %v7950
        %v8069 = vpop.permute.xlu0 %8068
        %8072 = vset.pattern.permute.xlu0 0
        %8073 = vperm.xlu0 %8072, %v7951
        %v8074 = vpop.permute.xlu0 %8073
        %8077 = vset.pattern.permute.xlu0 0
        %8078 = vperm.xlu0 %8077, %v7952
        %v8079 = vpop.permute.xlu0 %8078
        %8082 = vset.pattern.permute.xlu0 0
        %8083 = vperm.xlu0 %8082, %v7953
        %v8084 = vpop.permute.xlu0 %8083
        %8087 = vset.pattern.permute.xlu0 0
        %8088 = vperm.xlu0 %8087, %v7954
        %v8089 = vpop.permute.xlu0 %8088
        %8092 = vset.pattern.permute.xlu0 0
        %8093 = vperm.xlu0 %8092, %v7955
        %v8094 = vpop.permute.xlu0 %8093
        %8097 = vset.pattern.permute.xlu0 0
        %8098 = vperm.xlu0 %8097, %v7956
        %v8099 = vpop.permute.xlu0 %8098
        %8102 = vset.pattern.permute.xlu0 0
        %8103 = vperm.xlu0 %8102, %v7957
        %v8104 = vpop.permute.xlu0 %8103
        %8107 = vset.pattern.permute.xlu0 0
        %8108 = vperm.xlu0 %8107, %v7958
        %v8109 = vpop.permute.xlu0 %8108
        %8112 = vset.pattern.permute.xlu0 0
        %8113 = vperm.xlu0 %8112, %v7959
        %v8114 = vpop.permute.xlu0 %8113
        %8117 = vset.pattern.permute.xlu0 0
        %8118 = vperm.xlu0 %8117, %v7960
        %v8119 = vpop.permute.xlu0 %8118
        %8122 = vset.pattern.permute.xlu0 0
        %8123 = vperm.xlu0 %8122, %v7961
        %v8124 = vpop.permute.xlu0 %8123
        %8127 = vset.pattern.permute.xlu0 0
        %8128 = vperm.xlu0 %8127, %v7962
        %v8129 = vpop.permute.xlu0 %8128
        %8132 = vset.pattern.permute.xlu0 0
        %8133 = vperm.xlu0 %8132, %v7963
        %v8134 = vpop.permute.xlu0 %8133
        %8137 = vset.pattern.permute.xlu0 0
        %8138 = vperm.xlu0 %8137, %v7964
        %v8139 = vpop.permute.xlu0 %8138
        %8142 = vset.pattern.permute.xlu0 0
        %8143 = vperm.xlu0 %8142, %v7965
        %v8144 = vpop.permute.xlu0 %8143
        %8147 = vset.pattern.permute.xlu0 0
        %8148 = vperm.xlu0 %8147, %v7966
        %v8149 = vpop.permute.xlu0 %8148
        %8152 = vset.pattern.permute.xlu0 0
        %8153 = vperm.xlu0 %8152, %v7967
        %v8154 = vpop.permute.xlu0 %8153
        %8157 = vset.pattern.permute.xlu0 0
        %8158 = vperm.xlu0 %8157, %v7968
        %v8159 = vpop.permute.xlu0 %8158
        %v8161 = vmul.f32 %v7969, %v8004
        %v8162 = vmul.f32 %v7970, %v8009
        %v8163 = vmul.f32 %v7971, %v8014
        %v8164 = vmul.f32 %v7972, %v8019
        %v8165 = vmul.f32 %v7973, %v8024
        %v8166 = vmul.f32 %v7974, %v8029
        %v8167 = vmul.f32 %v7975, %v8034
        %v8168 = vmul.f32 %v7976, %v8039
        %v8169 = vmul.f32 %v7977, %v8044
        %v8170 = vmul.f32 %v7978, %v8049
        %v8171 = vmul.f32 %v7979, %v8054
        %v8172 = vmul.f32 %v7980, %v8059
        %v8173 = vmul.f32 %v7981, %v8064
        %v8174 = vmul.f32 %v7982, %v8069
        %v8175 = vmul.f32 %v7983, %v8074
        %v8176 = vmul.f32 %v7984, %v8079
        %v8177 = vmul.f32 %v7985, %v8084
        %v8178 = vmul.f32 %v7986, %v8089
        %v8179 = vmul.f32 %v7987, %v8094
        %v8180 = vmul.f32 %v7988, %v8099
        %v8181 = vmul.f32 %v7989, %v8104
        %v8182 = vmul.f32 %v7990, %v8109
        %v8183 = vmul.f32 %v7991, %v8114
        %v8184 = vmul.f32 %v7992, %v8119
        %v8185 = vmul.f32 %v7993, %v8124
        %v8186 = vmul.f32 %v7994, %v8129
        %v8187 = vmul.f32 %v7995, %v8134
        %v8188 = vmul.f32 %v7996, %v8139
        %v8189 = vmul.f32 %v7997, %v8144
        %v8190 = vmul.f32 %v7998, %v8149
        %v8191 = vmul.f32 %v7999, %v8154
        %v8192 = vmul.f32 %v8000, %v8159
        %8193 = vst.msk [vmem:[#allocation4] sm:$0xff] %vm497, %v8161
        %8194 = vst.msk [vmem:[#allocation4 + $0x8] sm:$0xff] %vm497, %v8162
        %8195 = vst.msk [vmem:[#allocation4 + $0x10] sm:$0xff] %vm497, %v8163
        %8196 = vst.msk [vmem:[#allocation4 + $0x18] sm:$0xff] %vm497, %v8164
        %8197 = vst.msk [vmem:[#allocation4 + $0x20] sm:$0xff] %vm497, %v8165
        %8198 = vst.msk [vmem:[#allocation4 + $0x28] sm:$0xff] %vm497, %v8166
        %8199 = vst.msk [vmem:[#allocation4 + $0x30] sm:$0xff] %vm497, %v8167
        %8200 = vst.msk [vmem:[#allocation4 + $0x38] sm:$0xff] %vm497, %v8168
        %8201 = vst.msk [vmem:[#allocation4 + $0x40] sm:$0xff] %vm497, %v8169
        %8202 = vst.msk [vmem:[#allocation4 + $0x48] sm:$0xff] %vm497, %v8170
        %8203 = vst.msk [vmem:[#allocation4 + $0x50] sm:$0xff] %vm497, %v8171
        %8204 = vst.msk [vmem:[#allocation4 + $0x58] sm:$0xff] %vm497, %v8172
        %8205 = vst.msk [vmem:[#allocation4 + $0x60] sm:$0xff] %vm497, %v8173
        %8206 = vst.msk [vmem:[#allocation4 + $0x68] sm:$0xff] %vm497, %v8174
        %8207 = vst.msk [vmem:[#allocation4 + $0x70] sm:$0xff] %vm497, %v8175
        %8208 = vst.msk [vmem:[#allocation4 + $0x78] sm:$0xff] %vm497, %v8176
        %8209 = vst.msk [vmem:[#allocation4 + $0x80] sm:$0xff] %vm497, %v8177
        %8210 = vst.msk [vmem:[#allocation4 + $0x88] sm:$0xff] %vm497, %v8178
        %8211 = vst.msk [vmem:[#allocation4 + $0x90] sm:$0xff] %vm497, %v8179
        %8212 = vst.msk [vmem:[#allocation4 + $0x98] sm:$0xff] %vm497, %v8180
        %8213 = vst.msk [vmem:[#allocation4 + $0xa0] sm:$0xff] %vm497, %v8181
        %8214 = vst.msk [vmem:[#allocation4 + $0xa8] sm:$0xff] %vm497, %v8182
        %8215 = vst.msk [vmem:[#allocation4 + $0xb0] sm:$0xff] %vm497, %v8183
        %8216 = vst.msk [vmem:[#allocation4 + $0xb8] sm:$0xff] %vm497, %v8184
        %8217 = vst.msk [vmem:[#allocation4 + $0xc0] sm:$0xff] %vm497, %v8185
        %8218 = vst.msk [vmem:[#allocation4 + $0xc8] sm:$0xff] %vm497, %v8186
        %8219 = vst.msk [vmem:[#allocation4 + $0xd0] sm:$0xff] %vm497, %v8187
        %8220 = vst.msk [vmem:[#allocation4 + $0xd8] sm:$0xff] %vm497, %v8188
        %8221 = vst.msk [vmem:[#allocation4 + $0xe0] sm:$0xff] %vm497, %v8189
        %8222 = vst.msk [vmem:[#allocation4 + $0xe8] sm:$0xff] %vm497, %v8190
        %8223 = vst.msk [vmem:[#allocation4 + $0xf0] sm:$0xff] %vm497, %v8191
        %8224 = vst.msk [vmem:[#allocation4 + $0xf8] sm:$0xff] %vm497, %v8192
        %v8225 = vld [vmem:[#allocation3] sm:$0xff]
        %v8226 = vld [vmem:[#allocation3 + $0x8] sm:$0xff]
        %v8227 = vld [vmem:[#allocation3 + $0x10] sm:$0xff]
        %v8228 = vld [vmem:[#allocation3 + $0x18] sm:$0xff]
        %v8229 = vld [vmem:[#allocation3 + $0x20] sm:$0xff]
        %v8230 = vld [vmem:[#allocation3 + $0x28] sm:$0xff]
        %v8231 = vld [vmem:[#allocation3 + $0x30] sm:$0xff]
        %v8232 = vld [vmem:[#allocation3 + $0x38] sm:$0xff]
        %v8233 = vld [vmem:[#allocation3 + $0x40] sm:$0xff]
        %v8234 = vld [vmem:[#allocation3 + $0x48] sm:$0xff]
        %v8235 = vld [vmem:[#allocation3 + $0x50] sm:$0xff]
        %v8236 = vld [vmem:[#allocation3 + $0x58] sm:$0xff]
        %v8237 = vld [vmem:[#allocation3 + $0x60] sm:$0xff]
        %v8238 = vld [vmem:[#allocation3 + $0x68] sm:$0xff]
        %v8239 = vld [vmem:[#allocation3 + $0x70] sm:$0xff]
        %v8240 = vld [vmem:[#allocation3 + $0x78] sm:$0xff]
        %v8241 = vld [vmem:[#allocation3 + $0x80] sm:$0xff]
        %v8242 = vld [vmem:[#allocation3 + $0x88] sm:$0xff]
        %v8243 = vld [vmem:[#allocation3 + $0x90] sm:$0xff]
        %v8244 = vld [vmem:[#allocation3 + $0x98] sm:$0xff]
        %v8245 = vld [vmem:[#allocation3 + $0xa0] sm:$0xff]
        %v8246 = vld [vmem:[#allocation3 + $0xa8] sm:$0xff]
        %v8247 = vld [vmem:[#allocation3 + $0xb0] sm:$0xff]
        %v8248 = vld [vmem:[#allocation3 + $0xb8] sm:$0xff]
        %v8249 = vld [vmem:[#allocation3 + $0xc0] sm:$0xff]
        %v8250 = vld [vmem:[#allocation3 + $0xc8] sm:$0xff]
        %v8251 = vld [vmem:[#allocation3 + $0xd0] sm:$0xff]
        %v8252 = vld [vmem:[#allocation3 + $0xd8] sm:$0xff]
        %v8253 = vld [vmem:[#allocation3 + $0xe0] sm:$0xff]
        %v8254 = vld [vmem:[#allocation3 + $0xe8] sm:$0xff]
        %v8255 = vld [vmem:[#allocation3 + $0xf0] sm:$0xff]
        %v8256 = vld [vmem:[#allocation3 + $0xf8] sm:$0xff]
        %v8257 = vrcp.pop %v8225
        %v8258 = vrcp.pop %v8226
        %v8259 = vrcp.pop %v8227
        %v8260 = vrcp.pop %v8228
        %v8261 = vrcp.pop %v8229
        %v8262 = vrcp.pop %v8230
        %v8263 = vrcp.pop %v8231
        %v8264 = vrcp.pop %v8232
        %v8265 = vrcp.pop %v8233
        %v8266 = vrcp.pop %v8234
        %v8267 = vrcp.pop %v8235
        %v8268 = vrcp.pop %v8236
        %v8269 = vrcp.pop %v8237
        %v8270 = vrcp.pop %v8238
        %v8271 = vrcp.pop %v8239
        %v8272 = vrcp.pop %v8240
        %v8273 = vrcp.pop %v8241
        %v8274 = vrcp.pop %v8242
        %v8275 = vrcp.pop %v8243
        %v8276 = vrcp.pop %v8244
        %v8277 = vrcp.pop %v8245
        %v8278 = vrcp.pop %v8246
        %v8279 = vrcp.pop %v8247
        %v8280 = vrcp.pop %v8248
        %v8281 = vrcp.pop %v8249
        %v8282 = vrcp.pop %v8250
        %v8283 = vrcp.pop %v8251
        %v8284 = vrcp.pop %v8252
        %v8285 = vrcp.pop %v8253
        %v8286 = vrcp.pop %v8254
        %v8287 = vrcp.pop %v8255
        %v8288 = vrcp.pop %v8256
        %v8289 = vld [vmem:[#allocation4] sm:$0xff]
        %v8290 = vld [vmem:[#allocation4 + $0x8] sm:$0xff]
        %v8291 = vld [vmem:[#allocation4 + $0x10] sm:$0xff]
        %v8292 = vld [vmem:[#allocation4 + $0x18] sm:$0xff]
        %v8293 = vld [vmem:[#allocation4 + $0x20] sm:$0xff]
        %v8294 = vld [vmem:[#allocation4 + $0x28] sm:$0xff]
        %v8295 = vld [vmem:[#allocation4 + $0x30] sm:$0xff]
        %v8296 = vld [vmem:[#allocation4 + $0x38] sm:$0xff]
        %v8297 = vld [vmem:[#allocation4 + $0x40] sm:$0xff]
        %v8298 = vld [vmem:[#allocation4 + $0x48] sm:$0xff]
        %v8299 = vld [vmem:[#allocation4 + $0x50] sm:$0xff]
        %v8300 = vld [vmem:[#allocation4 + $0x58] sm:$0xff]
        %v8301 = vld [vmem:[#allocation4 + $0x60] sm:$0xff]
        %v8302 = vld [vmem:[#allocation4 + $0x68] sm:$0xff]
        %v8303 = vld [vmem:[#allocation4 + $0x70] sm:$0xff]
        %v8304 = vld [vmem:[#allocation4 + $0x78] sm:$0xff]
        %v8305 = vld [vmem:[#allocation4 + $0x80] sm:$0xff]
        %v8306 = vld [vmem:[#allocation4 + $0x88] sm:$0xff]
        %v8307 = vld [vmem:[#allocation4 + $0x90] sm:$0xff]
        %v8308 = vld [vmem:[#allocation4 + $0x98] sm:$0xff]
        %v8309 = vld [vmem:[#allocation4 + $0xa0] sm:$0xff]
        %v8310 = vld [vmem:[#allocation4 + $0xa8] sm:$0xff]
        %v8311 = vld [vmem:[#allocation4 + $0xb0] sm:$0xff]
        %v8312 = vld [vmem:[#allocation4 + $0xb8] sm:$0xff]
        %v8313 = vld [vmem:[#allocation4 + $0xc0] sm:$0xff]
        %v8314 = vld [vmem:[#allocation4 + $0xc8] sm:$0xff]
        %v8315 = vld [vmem:[#allocation4 + $0xd0] sm:$0xff]
        %v8316 = vld [vmem:[#allocation4 + $0xd8] sm:$0xff]
        %v8317 = vld [vmem:[#allocation4 + $0xe0] sm:$0xff]
        %v8318 = vld [vmem:[#allocation4 + $0xe8] sm:$0xff]
        %v8319 = vld [vmem:[#allocation4 + $0xf0] sm:$0xff]
        %v8320 = vld [vmem:[#allocation4 + $0xf8] sm:$0xff]
        %8322 = vset.pattern.permute.xlu0 1
        %8323 = vperm.xlu0 %8322, %v8257
        %v8324 = vpop.permute.xlu0 %8323
        %8327 = vset.pattern.permute.xlu0 1
        %8328 = vperm.xlu0 %8327, %v8258
        %v8329 = vpop.permute.xlu0 %8328
        %8332 = vset.pattern.permute.xlu0 1
        %8333 = vperm.xlu0 %8332, %v8259
        %v8334 = vpop.permute.xlu0 %8333
        %8337 = vset.pattern.permute.xlu0 1
        %8338 = vperm.xlu0 %8337, %v8260
        %v8339 = vpop.permute.xlu0 %8338
        %8342 = vset.pattern.permute.xlu0 1
        %8343 = vperm.xlu0 %8342, %v8261
        %v8344 = vpop.permute.xlu0 %8343
        %8347 = vset.pattern.permute.xlu0 1
        %8348 = vperm.xlu0 %8347, %v8262
        %v8349 = vpop.permute.xlu0 %8348
        %8352 = vset.pattern.permute.xlu0 1
        %8353 = vperm.xlu0 %8352, %v8263
        %v8354 = vpop.permute.xlu0 %8353
        %8357 = vset.pattern.permute.xlu0 1
        %8358 = vperm.xlu0 %8357, %v8264
        %v8359 = vpop.permute.xlu0 %8358
        %8362 = vset.pattern.permute.xlu0 1
        %8363 = vperm.xlu0 %8362, %v8265
        %v8364 = vpop.permute.xlu0 %8363
        %8367 = vset.pattern.permute.xlu0 1
        %8368 = vperm.xlu0 %8367, %v8266
        %v8369 = vpop.permute.xlu0 %8368
        %8372 = vset.pattern.permute.xlu0 1
        %8373 = vperm.xlu0 %8372, %v8267
        %v8374 = vpop.permute.xlu0 %8373
        %8377 = vset.pattern.permute.xlu0 1
        %8378 = vperm.xlu0 %8377, %v8268
        %v8379 = vpop.permute.xlu0 %8378
        %8382 = vset.pattern.permute.xlu0 1
        %8383 = vperm.xlu0 %8382, %v8269
        %v8384 = vpop.permute.xlu0 %8383
        %8387 = vset.pattern.permute.xlu0 1
        %8388 = vperm.xlu0 %8387, %v8270
        %v8389 = vpop.permute.xlu0 %8388
        %8392 = vset.pattern.permute.xlu0 1
        %8393 = vperm.xlu0 %8392, %v8271
        %v8394 = vpop.permute.xlu0 %8393
        %8397 = vset.pattern.permute.xlu0 1
        %8398 = vperm.xlu0 %8397, %v8272
        %v8399 = vpop.permute.xlu0 %8398
        %8402 = vset.pattern.permute.xlu0 1
        %8403 = vperm.xlu0 %8402, %v8273
        %v8404 = vpop.permute.xlu0 %8403
        %8407 = vset.pattern.permute.xlu0 1
        %8408 = vperm.xlu0 %8407, %v8274
        %v8409 = vpop.permute.xlu0 %8408
        %8412 = vset.pattern.permute.xlu0 1
        %8413 = vperm.xlu0 %8412, %v8275
        %v8414 = vpop.permute.xlu0 %8413
        %8417 = vset.pattern.permute.xlu0 1
        %8418 = vperm.xlu0 %8417, %v8276
        %v8419 = vpop.permute.xlu0 %8418
        %8422 = vset.pattern.permute.xlu0 1
        %8423 = vperm.xlu0 %8422, %v8277
        %v8424 = vpop.permute.xlu0 %8423
        %8427 = vset.pattern.permute.xlu0 1
        %8428 = vperm.xlu0 %8427, %v8278
        %v8429 = vpop.permute.xlu0 %8428
        %8432 = vset.pattern.permute.xlu0 1
        %8433 = vperm.xlu0 %8432, %v8279
        %v8434 = vpop.permute.xlu0 %8433
        %8437 = vset.pattern.permute.xlu0 1
        %8438 = vperm.xlu0 %8437, %v8280
        %v8439 = vpop.permute.xlu0 %8438
        %8442 = vset.pattern.permute.xlu0 1
        %8443 = vperm.xlu0 %8442, %v8281
        %v8444 = vpop.permute.xlu0 %8443
        %8447 = vset.pattern.permute.xlu0 1
        %8448 = vperm.xlu0 %8447, %v8282
        %v8449 = vpop.permute.xlu0 %8448
        %8452 = vset.pattern.permute.xlu0 1
        %8453 = vperm.xlu0 %8452, %v8283
        %v8454 = vpop.permute.xlu0 %8453
        %8457 = vset.pattern.permute.xlu0 1
        %8458 = vperm.xlu0 %8457, %v8284
        %v8459 = vpop.permute.xlu0 %8458
        %8462 = vset.pattern.permute.xlu0 1
        %8463 = vperm.xlu0 %8462, %v8285
        %v8464 = vpop.permute.xlu0 %8463
        %8467 = vset.pattern.permute.xlu0 1
        %8468 = vperm.xlu0 %8467, %v8286
        %v8469 = vpop.permute.xlu0 %8468
        %8472 = vset.pattern.permute.xlu0 1
        %8473 = vperm.xlu0 %8472, %v8287
        %v8474 = vpop.permute.xlu0 %8473
        %8477 = vset.pattern.permute.xlu0 1
        %8478 = vperm.xlu0 %8477, %v8288
        %v8479 = vpop.permute.xlu0 %8478
        %v8481 = vmul.f32 %v8289, %v8324
        %v8482 = vmul.f32 %v8290, %v8329
        %v8483 = vmul.f32 %v8291, %v8334
        %v8484 = vmul.f32 %v8292, %v8339
        %v8485 = vmul.f32 %v8293, %v8344
        %v8486 = vmul.f32 %v8294, %v8349
        %v8487 = vmul.f32 %v8295, %v8354
        %v8488 = vmul.f32 %v8296, %v8359
        %v8489 = vmul.f32 %v8297, %v8364
        %v8490 = vmul.f32 %v8298, %v8369
        %v8491 = vmul.f32 %v8299, %v8374
        %v8492 = vmul.f32 %v8300, %v8379
        %v8493 = vmul.f32 %v8301, %v8384
        %v8494 = vmul.f32 %v8302, %v8389
        %v8495 = vmul.f32 %v8303, %v8394
        %v8496 = vmul.f32 %v8304, %v8399
        %v8497 = vmul.f32 %v8305, %v8404
        %v8498 = vmul.f32 %v8306, %v8409
        %v8499 = vmul.f32 %v8307, %v8414
        %v8500 = vmul.f32 %v8308, %v8419
        %v8501 = vmul.f32 %v8309, %v8424
        %v8502 = vmul.f32 %v8310, %v8429
        %v8503 = vmul.f32 %v8311, %v8434
        %v8504 = vmul.f32 %v8312, %v8439
        %v8505 = vmul.f32 %v8313, %v8444
        %v8506 = vmul.f32 %v8314, %v8449
        %v8507 = vmul.f32 %v8315, %v8454
        %v8508 = vmul.f32 %v8316, %v8459
        %v8509 = vmul.f32 %v8317, %v8464
        %v8510 = vmul.f32 %v8318, %v8469
        %v8511 = vmul.f32 %v8319, %v8474
        %v8512 = vmul.f32 %v8320, %v8479
        %8513 = vst.msk [vmem:[#allocation4] sm:$0xff] %vm6074, %v8481
        %8514 = vst.msk [vmem:[#allocation4 + $0x8] sm:$0xff] %vm6074, %v8482
        %8515 = vst.msk [vmem:[#allocation4 + $0x10] sm:$0xff] %vm6074, %v8483
        %8516 = vst.msk [vmem:[#allocation4 + $0x18] sm:$0xff] %vm6074, %v8484
        %8517 = vst.msk [vmem:[#allocation4 + $0x20] sm:$0xff] %vm6074, %v8485
        %8518 = vst.msk [vmem:[#allocation4 + $0x28] sm:$0xff] %vm6074, %v8486
        %8519 = vst.msk [vmem:[#allocation4 + $0x30] sm:$0xff] %vm6074, %v8487
        %8520 = vst.msk [vmem:[#allocation4 + $0x38] sm:$0xff] %vm6074, %v8488
        %8521 = vst.msk [vmem:[#allocation4 + $0x40] sm:$0xff] %vm6074, %v8489
        %8522 = vst.msk [vmem:[#allocation4 + $0x48] sm:$0xff] %vm6074, %v8490
        %8523 = vst.msk [vmem:[#allocation4 + $0x50] sm:$0xff] %vm6074, %v8491
        %8524 = vst.msk [vmem:[#allocation4 + $0x58] sm:$0xff] %vm6074, %v8492
        %8525 = vst.msk [vmem:[#allocation4 + $0x60] sm:$0xff] %vm6074, %v8493
        %8526 = vst.msk [vmem:[#allocation4 + $0x68] sm:$0xff] %vm6074, %v8494
        %8527 = vst.msk [vmem:[#allocation4 + $0x70] sm:$0xff] %vm6074, %v8495
        %8528 = vst.msk [vmem:[#allocation4 + $0x78] sm:$0xff] %vm6074, %v8496
        %8529 = vst.msk [vmem:[#allocation4 + $0x80] sm:$0xff] %vm6074, %v8497
        %8530 = vst.msk [vmem:[#allocation4 + $0x88] sm:$0xff] %vm6074, %v8498
        %8531 = vst.msk [vmem:[#allocation4 + $0x90] sm:$0xff] %vm6074, %v8499
        %8532 = vst.msk [vmem:[#allocation4 + $0x98] sm:$0xff] %vm6074, %v8500
        %8533 = vst.msk [vmem:[#allocation4 + $0xa0] sm:$0xff] %vm6074, %v8501
        %8534 = vst.msk [vmem:[#allocation4 + $0xa8] sm:$0xff] %vm6074, %v8502
        %8535 = vst.msk [vmem:[#allocation4 + $0xb0] sm:$0xff] %vm6074, %v8503
        %8536 = vst.msk [vmem:[#allocation4 + $0xb8] sm:$0xff] %vm6074, %v8504
        %8537 = vst.msk [vmem:[#allocation4 + $0xc0] sm:$0xff] %vm6074, %v8505
        %8538 = vst.msk [vmem:[#allocation4 + $0xc8] sm:$0xff] %vm6074, %v8506
        %8539 = vst.msk [vmem:[#allocation4 + $0xd0] sm:$0xff] %vm6074, %v8507
        %8540 = vst.msk [vmem:[#allocation4 + $0xd8] sm:$0xff] %vm6074, %v8508
        %8541 = vst.msk [vmem:[#allocation4 + $0xe0] sm:$0xff] %vm6074, %v8509
        %8542 = vst.msk [vmem:[#allocation4 + $0xe8] sm:$0xff] %vm6074, %v8510
        %8543 = vst.msk [vmem:[#allocation4 + $0xf0] sm:$0xff] %vm6074, %v8511
        %8544 = vst.msk [vmem:[#allocation4 + $0xf8] sm:$0xff] %vm6074, %v8512
        %v8545 = vld [vmem:[#allocation4] sm:$0xff]
        %v8546 = vld [vmem:[#allocation4 + $0x8] sm:$0xff]
        %v8547 = vld [vmem:[#allocation4 + $0x10] sm:$0xff]
        %v8548 = vld [vmem:[#allocation4 + $0x18] sm:$0xff]
        %v8549 = vld [vmem:[#allocation4 + $0x20] sm:$0xff]
        %v8550 = vld [vmem:[#allocation4 + $0x28] sm:$0xff]
        %v8551 = vld [vmem:[#allocation4 + $0x30] sm:$0xff]
        %v8552 = vld [vmem:[#allocation4 + $0x38] sm:$0xff]
        %v8553 = vld [vmem:[#allocation4 + $0x40] sm:$0xff]
        %v8554 = vld [vmem:[#allocation4 + $0x48] sm:$0xff]
        %v8555 = vld [vmem:[#allocation4 + $0x50] sm:$0xff]
        %v8556 = vld [vmem:[#allocation4 + $0x58] sm:$0xff]
        %v8557 = vld [vmem:[#allocation4 + $0x60] sm:$0xff]
        %v8558 = vld [vmem:[#allocation4 + $0x68] sm:$0xff]
        %v8559 = vld [vmem:[#allocation4 + $0x70] sm:$0xff]
        %v8560 = vld [vmem:[#allocation4 + $0x78] sm:$0xff]
        %v8561 = vld [vmem:[#allocation4 + $0x80] sm:$0xff]
        %v8562 = vld [vmem:[#allocation4 + $0x88] sm:$0xff]
        %v8563 = vld [vmem:[#allocation4 + $0x90] sm:$0xff]
        %v8564 = vld [vmem:[#allocation4 + $0x98] sm:$0xff]
        %v8565 = vld [vmem:[#allocation4 + $0xa0] sm:$0xff]
        %v8566 = vld [vmem:[#allocation4 + $0xa8] sm:$0xff]
        %v8567 = vld [vmem:[#allocation4 + $0xb0] sm:$0xff]
        %v8568 = vld [vmem:[#allocation4 + $0xb8] sm:$0xff]
        %v8569 = vld [vmem:[#allocation4 + $0xc0] sm:$0xff]
        %v8570 = vld [vmem:[#allocation4 + $0xc8] sm:$0xff]
        %v8571 = vld [vmem:[#allocation4 + $0xd0] sm:$0xff]
        %v8572 = vld [vmem:[#allocation4 + $0xd8] sm:$0xff]
        %v8573 = vld [vmem:[#allocation4 + $0xe0] sm:$0xff]
        %v8574 = vld [vmem:[#allocation4 + $0xe8] sm:$0xff]
        %v8575 = vld [vmem:[#allocation4 + $0xf0] sm:$0xff]
        %v8576 = vld [vmem:[#allocation4 + $0xf8] sm:$0xff]
        %v8577 = vld [vmem:[%s2] sm:$0xff]
        %v8578 = vld [vmem:[%s3] sm:$0x1]
        %v8580 = vlaneseq
        %v8581 = vshrl.u32 %v8580, 7
        %v8582 = vsub.s32 0, %v8581
        %v8583 = vrot.slane %v8578, %v8582
        %vm8585 = vcmask 64512
        %v8587 = vsel %vm8585, %v8545, 0
        %v8590 = vsel %vm8585, %v8546, 0
        %v8593 = vsel %vm8585, %v8547, 0
        %v8596 = vsel %vm8585, %v8548, 0
        %v8599 = vsel %vm8585, %v8549, 0
        %v8602 = vsel %vm8585, %v8550, 0
        %v8605 = vsel %vm8585, %v8551, 0
        %v8608 = vsel %vm8585, %v8552, 0
        %v8611 = vsel %vm8585, %v8553, 0
        %v8614 = vsel %vm8585, %v8554, 0
        %v8617 = vsel %vm8585, %v8555, 0
        %v8620 = vsel %vm8585, %v8556, 0
        %v8623 = vsel %vm8585, %v8557, 0
        %v8626 = vsel %vm8585, %v8558, 0
        %v8629 = vsel %vm8585, %v8559, 0
        %v8632 = vsel %vm8585, %v8560, 0
        %v8635 = vsel %vm8585, %v8561, 0
        %v8638 = vsel %vm8585, %v8562, 0
        %v8641 = vsel %vm8585, %v8563, 0
        %v8644 = vsel %vm8585, %v8564, 0
        %v8647 = vsel %vm8585, %v8565, 0
        %v8650 = vsel %vm8585, %v8566, 0
        %v8653 = vsel %vm8585, %v8567, 0
        %v8656 = vsel %vm8585, %v8568, 0
        %v8659 = vsel %vm8585, %v8569, 0
        %v8662 = vsel %vm8585, %v8570, 0
        %v8665 = vsel %vm8585, %v8571, 0
        %v8668 = vsel %vm8585, %v8572, 0
        %v8671 = vsel %vm8585, %v8573, 0
        %v8674 = vsel %vm8585, %v8574, 0
        %v8677 = vsel %vm8585, %v8575, 0
        %v8680 = vsel %vm8585, %v8576, 0
        %8682 = vmatprep.subr.mxu0 0.0
        %8683 = vmatpush1.msra.mxu0 0.0
        %8684 = vmatprep.subr.mxu0 0.0
        %8685 = vmatpush1.msra.mxu0 0.0
        %8686 = vmatprep.subr.mxu0 0.0
        %8687 = vmatpush1.msra.mxu0 0.0
        %8688 = vmatprep.subr.mxu0 0.0
        %8689 = vmatpush1.msra.mxu0 0.0
        %8690 = vmatprep.subr.mxu0 0.0
        %8691 = vmatpush1.msra.mxu0 0.0
        %8692 = vmatprep.subr.mxu0 0.0
        %8693 = vmatpush1.msra.mxu0 0.0
        %8694 = vmatprep.subr.mxu0 0.0
        %8695 = vmatpush1.msra.mxu0 0.0
        %8696 = vmatprep.subr.mxu0 0.0
        %8697 = vmatpush1.msra.mxu0 0.0
        %8698 = vmatprep.subr.mxu0 0.0
        %8699 = vmatpush1.msra.mxu0 0.0
        %8700 = vmatprep.subr.mxu0 0.0
        %8701 = vmatpush1.msra.mxu0 0.0
        %8702 = vmatprep.subr.mxu0 0.0
        %8703 = vmatpush1.msra.mxu0 0.0
        %8704 = vmatprep.subr.mxu0 0.0
        %8705 = vmatpush1.msra.mxu0 0.0
        %8706 = vmatprep.subr.mxu0 0.0
        %8707 = vmatpush1.msra.mxu0 0.0
        %8708 = vmatprep.subr.mxu0 0.0
        %8709 = vmatpush1.msra.mxu0 0.0
        %8710 = vmatprep.subr.mxu0 0.0
        %8711 = vmatpush1.msra.mxu0 0.0
        %8712 = vmatprep.subr.mxu0 0.0
        %8713 = vmatpush1.msra.mxu0 %v8577
        %8714 = vmatprep.subr.mxu0 0.0
        %8715 = vmatpush2.msra.mxu0 0.0
        %8716 = vmatprep.subr.mxu0 0.0
        %8717 = vmatpush2.msra.mxu0 0.0
        %8718 = vmatprep.subr.mxu0 0.0
        %8719 = vmatpush2.msra.mxu0 0.0
        %8720 = vmatprep.subr.mxu0 0.0
        %8721 = vmatpush2.msra.mxu0 0.0
        %8722 = vmatprep.subr.mxu0 0.0
        %8723 = vmatpush2.msra.mxu0 0.0
        %8724 = vmatprep.subr.mxu0 0.0
        %8725 = vmatpush2.msra.mxu0 0.0
        %8726 = vmatprep.subr.mxu0 0.0
        %8727 = vmatpush2.msra.mxu0 0.0
        %8728 = vmatprep.subr.mxu0 0.0
        %8729 = vmatpush2.msra.mxu0 0.0
        %8730 = vmatprep.subr.mxu0 0.0
        %8731 = vmatpush2.msra.mxu0 0.0
        %8732 = vmatprep.subr.mxu0 0.0
        %8733 = vmatpush2.msra.mxu0 0.0
        %8734 = vmatprep.subr.mxu0 0.0
        %8735 = vmatpush2.msra.mxu0 0.0
        %8736 = vmatprep.subr.mxu0 0.0
        %8737 = vmatpush2.msra.mxu0 0.0
        %8738 = vmatprep.subr.mxu0 0.0
        %8739 = vmatpush2.msra.mxu0 0.0
        %8740 = vmatprep.subr.mxu0 0.0
        %8741 = vmatpush2.msra.mxu0 0.0
        %8742 = vmatprep.subr.mxu0 0.0
        %8743 = vmatpush2.msra.mxu0 0.0
        %8744 = vmatprep.subr.mxu0 0.0
        %8745 = vmatpush2.msra.mxu0 0.0
        %8746 = vmatprep.mubr.f32.mxu0 0.0
        %8747 = vmatmul.mubr.f32.gmra.mxu0 %v8587
        %v8748 = vpop.f32.mrf.mxu0
        %v8749 = vadd.f32 %v8583, %v8748
        %v8750 = vpop.f32.mrf.mxu0
        %8751 = vmatprep.mubr.f32.mxu0 0.0
        %8752 = vmatmul.mubr.f32.gmra.mxu0 %v8590
        %v8753 = vpop.f32.mrf.mxu0
        %v8754 = vadd.f32 %v8583, %v8753
        %v8755 = vpop.f32.mrf.mxu0
        %8756 = vmatprep.mubr.f32.mxu0 0.0
        %8757 = vmatmul.mubr.f32.gmra.mxu0 %v8593
        %v8758 = vpop.f32.mrf.mxu0
        %v8759 = vadd.f32 %v8583, %v8758
        %v8760 = vpop.f32.mrf.mxu0
        %8761 = vmatprep.mubr.f32.mxu0 0.0
        %8762 = vmatmul.mubr.f32.gmra.mxu0 %v8596
        %v8763 = vpop.f32.mrf.mxu0
        %v8764 = vadd.f32 %v8583, %v8763
        %v8765 = vpop.f32.mrf.mxu0
        %8766 = vmatprep.mubr.f32.mxu0 0.0
        %8767 = vmatmul.mubr.f32.gmra.mxu0 %v8599
        %v8768 = vpop.f32.mrf.mxu0
        %v8769 = vadd.f32 %v8583, %v8768
        %v8770 = vpop.f32.mrf.mxu0
        %8771 = vmatprep.mubr.f32.mxu0 0.0
        %8772 = vmatmul.mubr.f32.gmra.mxu0 %v8602
        %v8773 = vpop.f32.mrf.mxu0
        %v8774 = vadd.f32 %v8583, %v8773
        %v8775 = vpop.f32.mrf.mxu0
        %8776 = vmatprep.mubr.f32.mxu0 0.0
        %8777 = vmatmul.mubr.f32.gmra.mxu0 %v8605
        %v8778 = vpop.f32.mrf.mxu0
        %v8779 = vadd.f32 %v8583, %v8778
        %v8780 = vpop.f32.mrf.mxu0
        %8781 = vmatprep.mubr.f32.mxu0 0.0
        %8782 = vmatmul.mubr.f32.gmra.mxu0 %v8608
        %v8783 = vpop.f32.mrf.mxu0
        %v8784 = vadd.f32 %v8583, %v8783
        %v8785 = vpop.f32.mrf.mxu0
        %8786 = vmatprep.mubr.f32.mxu0 0.0
        %8787 = vmatmul.mubr.f32.gmra.mxu0 %v8611
        %v8788 = vpop.f32.mrf.mxu0
        %v8789 = vadd.f32 %v8583, %v8788
        %v8790 = vpop.f32.mrf.mxu0
        %8791 = vmatprep.mubr.f32.mxu0 0.0
        %8792 = vmatmul.mubr.f32.gmra.mxu0 %v8614
        %v8793 = vpop.f32.mrf.mxu0
        %v8794 = vadd.f32 %v8583, %v8793
        %v8795 = vpop.f32.mrf.mxu0
        %8796 = vmatprep.mubr.f32.mxu0 0.0
        %8797 = vmatmul.mubr.f32.gmra.mxu0 %v8617
        %v8798 = vpop.f32.mrf.mxu0
        %v8799 = vadd.f32 %v8583, %v8798
        %v8800 = vpop.f32.mrf.mxu0
        %8801 = vmatprep.mubr.f32.mxu0 0.0
        %8802 = vmatmul.mubr.f32.gmra.mxu0 %v8620
        %v8803 = vpop.f32.mrf.mxu0
        %v8804 = vadd.f32 %v8583, %v8803
        %v8805 = vpop.f32.mrf.mxu0
        %8806 = vmatprep.mubr.f32.mxu0 0.0
        %8807 = vmatmul.mubr.f32.gmra.mxu0 %v8623
        %v8808 = vpop.f32.mrf.mxu0
        %v8809 = vadd.f32 %v8583, %v8808
        %v8810 = vpop.f32.mrf.mxu0
        %8811 = vmatprep.mubr.f32.mxu0 0.0
        %8812 = vmatmul.mubr.f32.gmra.mxu0 %v8626
        %v8813 = vpop.f32.mrf.mxu0
        %v8814 = vadd.f32 %v8583, %v8813
        %v8815 = vpop.f32.mrf.mxu0
        %8816 = vmatprep.mubr.f32.mxu0 0.0
        %8817 = vmatmul.mubr.f32.gmra.mxu0 %v8629
        %v8818 = vpop.f32.mrf.mxu0
        %v8819 = vadd.f32 %v8583, %v8818
        %v8820 = vpop.f32.mrf.mxu0
        %8821 = vmatprep.mubr.f32.mxu0 0.0
        %8822 = vmatmul.mubr.f32.gmra.mxu0 %v8632
        %v8823 = vpop.f32.mrf.mxu0
        %v8824 = vadd.f32 %v8583, %v8823
        %v8825 = vpop.f32.mrf.mxu0
        %8826 = vmatprep.mubr.f32.mxu0 0.0
        %8827 = vmatmul.mubr.f32.gmra.mxu0 %v8635
        %v8828 = vpop.f32.mrf.mxu0
        %v8829 = vadd.f32 %v8583, %v8828
        %v8830 = vpop.f32.mrf.mxu0
        %8831 = vmatprep.mubr.f32.mxu0 0.0
        %8832 = vmatmul.mubr.f32.gmra.mxu0 %v8638
        %v8833 = vpop.f32.mrf.mxu0
        %v8834 = vadd.f32 %v8583, %v8833
        %v8835 = vpop.f32.mrf.mxu0
        %8836 = vmatprep.mubr.f32.mxu0 0.0
        %8837 = vmatmul.mubr.f32.gmra.mxu0 %v8641
        %v8838 = vpop.f32.mrf.mxu0
        %v8839 = vadd.f32 %v8583, %v8838
        %v8840 = vpop.f32.mrf.mxu0
        %8841 = vmatprep.mubr.f32.mxu0 0.0
        %8842 = vmatmul.mubr.f32.gmra.mxu0 %v8644
        %v8843 = vpop.f32.mrf.mxu0
        %v8844 = vadd.f32 %v8583, %v8843
        %v8845 = vpop.f32.mrf.mxu0
        %8846 = vmatprep.mubr.f32.mxu0 0.0
        %8847 = vmatmul.mubr.f32.gmra.mxu0 %v8647
        %v8848 = vpop.f32.mrf.mxu0
        %v8849 = vadd.f32 %v8583, %v8848
        %v8850 = vpop.f32.mrf.mxu0
        %8851 = vmatprep.mubr.f32.mxu0 0.0
        %8852 = vmatmul.mubr.f32.gmra.mxu0 %v8650
        %v8853 = vpop.f32.mrf.mxu0
        %v8854 = vadd.f32 %v8583, %v8853
        %v8855 = vpop.f32.mrf.mxu0
        %8856 = vmatprep.mubr.f32.mxu0 0.0
        %8857 = vmatmul.mubr.f32.gmra.mxu0 %v8653
        %v8858 = vpop.f32.mrf.mxu0
        %v8859 = vadd.f32 %v8583, %v8858
        %v8860 = vpop.f32.mrf.mxu0
        %8861 = vmatprep.mubr.f32.mxu0 0.0
        %8862 = vmatmul.mubr.f32.gmra.mxu0 %v8656
        %v8863 = vpop.f32.mrf.mxu0
        %v8864 = vadd.f32 %v8583, %v8863
        %v8865 = vpop.f32.mrf.mxu0
        %8866 = vmatprep.mubr.f32.mxu0 0.0
        %8867 = vmatmul.mubr.f32.gmra.mxu0 %v8659
        %v8868 = vpop.f32.mrf.mxu0
        %v8869 = vadd.f32 %v8583, %v8868
        %v8870 = vpop.f32.mrf.mxu0
        %8871 = vmatprep.mubr.f32.mxu0 0.0
        %8872 = vmatmul.mubr.f32.gmra.mxu0 %v8662
        %v8873 = vpop.f32.mrf.mxu0
        %v8874 = vadd.f32 %v8583, %v8873
        %v8875 = vpop.f32.mrf.mxu0
        %8876 = vmatprep.mubr.f32.mxu0 0.0
        %8877 = vmatmul.mubr.f32.gmra.mxu0 %v8665
        %v8878 = vpop.f32.mrf.mxu0
        %v8879 = vadd.f32 %v8583, %v8878
        %v8880 = vpop.f32.mrf.mxu0
        %8881 = vmatprep.mubr.f32.mxu0 0.0
        %8882 = vmatmul.mubr.f32.gmra.mxu0 %v8668
        %v8883 = vpop.f32.mrf.mxu0
        %v8884 = vadd.f32 %v8583, %v8883
        %v8885 = vpop.f32.mrf.mxu0
        %8886 = vmatprep.mubr.f32.mxu0 0.0
        %8887 = vmatmul.mubr.f32.gmra.mxu0 %v8671
        %v8888 = vpop.f32.mrf.mxu0
        %v8889 = vadd.f32 %v8583, %v8888
        %v8890 = vpop.f32.mrf.mxu0
        %8891 = vmatprep.mubr.f32.mxu0 0.0
        %8892 = vmatmul.mubr.f32.gmra.mxu0 %v8674
        %v8893 = vpop.f32.mrf.mxu0
        %v8894 = vadd.f32 %v8583, %v8893
        %v8895 = vpop.f32.mrf.mxu0
        %8896 = vmatprep.mubr.f32.mxu0 0.0
        %8897 = vmatmul.mubr.f32.gmra.mxu0 %v8677
        %v8898 = vpop.f32.mrf.mxu0
        %v8899 = vadd.f32 %v8583, %v8898
        %v8900 = vpop.f32.mrf.mxu0
        %8901 = vmatprep.mubr.f32.mxu0 0.0
        %8902 = vmatmul.mubr.f32.gmra.mxu0 %v8680
        %v8903 = vpop.f32.mrf.mxu0
        %v8904 = vadd.f32 %v8583, %v8903
        %v8905 = vpop.f32.mrf.mxu0
        %8906 = vdwg.mxu0
        %8907 = vst.msk [vmem:[%s233] sm:$0xff] %vm497, %v8749
        %8908 = vst.msk [vmem:[%s233 + $0x8] sm:$0xff] %vm497, %v8754
        %8909 = vst.msk [vmem:[%s233 + $0x10] sm:$0xff] %vm497, %v8759
        %8910 = vst.msk [vmem:[%s233 + $0x18] sm:$0xff] %vm497, %v8764
        %8911 = vst.msk [vmem:[%s233 + $0x20] sm:$0xff] %vm497, %v8769
        %8912 = vst.msk [vmem:[%s233 + $0x28] sm:$0xff] %vm497, %v8774
        %8913 = vst.msk [vmem:[%s233 + $0x30] sm:$0xff] %vm497, %v8779
        %8914 = vst.msk [vmem:[%s233 + $0x38] sm:$0xff] %vm497, %v8784
        %8915 = vst.msk [vmem:[%s233 + $0x40] sm:$0xff] %vm497, %v8789
        %8916 = vst.msk [vmem:[%s233 + $0x48] sm:$0xff] %vm497, %v8794
        %8917 = vst.msk [vmem:[%s233 + $0x50] sm:$0xff] %vm497, %v8799
        %8918 = vst.msk [vmem:[%s233 + $0x58] sm:$0xff] %vm497, %v8804
        %8919 = vst.msk [vmem:[%s233 + $0x60] sm:$0xff] %vm497, %v8809
        %8920 = vst.msk [vmem:[%s233 + $0x68] sm:$0xff] %vm497, %v8814
        %8921 = vst.msk [vmem:[%s233 + $0x70] sm:$0xff] %vm497, %v8819
        %8922 = vst.msk [vmem:[%s233 + $0x78] sm:$0xff] %vm497, %v8824
        %8923 = vst.msk [vmem:[%s233 + $0x80] sm:$0xff] %vm497, %v8829
        %8924 = vst.msk [vmem:[%s233 + $0x88] sm:$0xff] %vm497, %v8834
        %8925 = vst.msk [vmem:[%s233 + $0x90] sm:$0xff] %vm497, %v8839
        %8926 = vst.msk [vmem:[%s233 + $0x98] sm:$0xff] %vm497, %v8844
        %8927 = vst.msk [vmem:[%s233 + $0xa0] sm:$0xff] %vm497, %v8849
        %8928 = vst.msk [vmem:[%s233 + $0xa8] sm:$0xff] %vm497, %v8854
        %8929 = vst.msk [vmem:[%s233 + $0xb0] sm:$0xff] %vm497, %v8859
        %8930 = vst.msk [vmem:[%s233 + $0xb8] sm:$0xff] %vm497, %v8864
        %8931 = vst.msk [vmem:[%s233 + $0xc0] sm:$0xff] %vm497, %v8869
        %8932 = vst.msk [vmem:[%s233 + $0xc8] sm:$0xff] %vm497, %v8874
        %8933 = vst.msk [vmem:[%s233 + $0xd0] sm:$0xff] %vm497, %v8879
        %8934 = vst.msk [vmem:[%s233 + $0xd8] sm:$0xff] %vm497, %v8884
        %8935 = vst.msk [vmem:[%s233 + $0xe0] sm:$0xff] %vm497, %v8889
        %8936 = vst.msk [vmem:[%s233 + $0xe8] sm:$0xff] %vm497, %v8894
        %8937 = vst.msk [vmem:[%s233 + $0xf0] sm:$0xff] %vm497, %v8899
        %8938 = vst.msk [vmem:[%s233 + $0xf8] sm:$0xff] %vm497, %v8904
      $region44: #{multi_head_attention_3d.3} parent=35 // pred_fallthru
        _
      %s8939 = smul.u32 32, %s19
      %p8940 = scmp.lt.s32.totalorder %s8939, 127
      %s8941 = scalar_select %p8940, %s8939, 127
      %s8942 = smul.addr %s8941, 8
      %s8943 = scalar_lea.vmem %s4, %s8942
      // Predicated region
      $region45: #{multi_head_attention_3d.3} parent=35 // pred_check
        %p8944 = pneg %p139
      $region46: #{multi_head_attention_3d.3} parent=35 // pred_check_branch
        %8946 = sbr.rel (%p8944) target = $region48
      $region47: #{multi_head_attention_3d.3} parent=35 // pred_region
        %s8947 = smul.u32 32, %s19
      $region48: #{multi_head_attention_3d.3} parent=35 // pred_fallthru
        _
    $region36: #{multi_head_attention_3d.3} parent=5 // pred_fallthru
      _
    %p8948 = scmp.le.s32.totalorder 2, %s10
    // Predicated region
    $region49: #{multi_head_attention_3d.3} parent=5 // pred_check
      %p8949 = pneg %p8948
    $region50: #{multi_head_attention_3d.3} parent=5 // pred_check_branch
      %8951 = sbr.rel (%p8949) target = $region52
    $region51: #{multi_head_attention_3d.3} parent=5 // pred_region
      %s8952 = ssub.s32 %s10, 2
      // Predicated region
      $region53: #{multi_head_attention_3d.3} parent=51 // pred_check
        %p8953 = pneg %p145
      $region54: #{multi_head_attention_3d.3} parent=51 // pred_check_branch
        %8955 = sbr.rel (%p8953) target = $region56
      $region55: #{multi_head_attention_3d.3} parent=51 // pred_region
        %s8956 = smul.u32 32, %s21
        %p8957 = scmp.lt.s32.totalorder %s8956, 127
        %s8958 = scalar_select %p8957, %s8956, 127
        %s8959 = smul.addr %s8958, 8
        %s8960 = scalar_lea.vmem %s4, %s8959
      $region56: #{multi_head_attention_3d.3} parent=51 // pred_fallthru
        _
    $region52: #{multi_head_attention_3d.3} parent=5 // pred_fallthru
      _
  $region6: #{multi_head_attention_3d.3} parent=0 // loop_footer
    %s14 = sadd.s32 1, %s10
  $region7: #{multi_head_attention_3d.3} parent=0 // loop_footer_branch
    %9 = sbr.rel target = $region3
  $region8: #{multi_head_attention_3d.3} parent=0 // loop_exit
    _

</llo_original>
